<compile_context>
chip_gen: v6e
topology: v6e:2x2x1
jax: 0.10.0
libtpu: 0.0.40
codegen_flags: <defaults>
</compile_context>

<pallas_src>
import math

import jax
import jax.numpy as jnp
from jax.experimental import pallas as pl
from jax.experimental.pallas import tpu as pltpu


def _pick_tile(n, cap, align):
    """Largest multiple of `align` that divides n and is <= cap (or n itself if n <= cap)."""
    if n <= cap:
        return n
    t = cap - (cap % align)
    while t >= align:
        if n % t == 0:
            return t
        t -= align
    return n   # fallback: no tiling along this axis (awkward n); acceptable for small subgraphs


# ----------------------------- Pallas kernels -----------------------------

def _row_norm_branch(z, b, s, o):
    """relu -> row-wise standardize (population var + 1e-9) -> scale/offset ('norm' bias mode)."""
    z = jnp.maximum(z + b, 0.0)
    mean = jnp.mean(z, axis=1, keepdims=True)
    var = jnp.mean((z - mean) * (z - mean), axis=1, keepdims=True) + 1e-9
    return (z - mean) * (s * jax.lax.rsqrt(var)) + o


def _layer_branches(feat_ref, adj_ref, w0_ref, w1_ref, prm_ref):
    """Shared body: fused projection + aggregation + both branch norms for one row tile."""
    i = pl.program_id(0)
    tm = adj_ref.shape[0]
    d = w0_ref.shape[1]

    # hop-1 branch, reassociated: adj[i-tile, :] @ (feat @ W1)   (f32 accumulation on MXU)
    pre1 = jnp.dot(feat_ref[...], w1_ref[...], preferred_element_type=jnp.float32)
    agg = jnp.dot(adj_ref[...], pre1.astype(jnp.bfloat16),
                  preferred_element_type=jnp.float32)

    # hop-0 branch: only this i-tile's rows of feat
    row0 = pl.multiple_of(i * tm, tm)
    feat_i = feat_ref[pl.ds(row0, tm), :]
    pre0 = jnp.dot(feat_i, w0_ref[...], preferred_element_type=jnp.float32)

    prm = prm_ref[...]                       # rows: [b0|b1], [s0|s1], [o0|o1]
    h0 = _row_norm_branch(pre0, prm[0:1, :d], prm[1:2, :d], prm[2:3, :d])
    h1 = _row_norm_branch(agg, prm[0:1, d:], prm[1:2, d:], prm[2:3, d:])
    return h0, h1


def _layer_kernel(feat_ref, adj_ref, w0_ref, w1_ref, prm_ref, out_ref):
    """Intermediate HighOrderAggregator layer: concat output written as one lane-dense store."""
    h0, h1 = _layer_branches(feat_ref, adj_ref, w0_ref, w1_ref, prm_ref)
    out_ref[...] = jnp.concatenate([h0, h1], axis=1).astype(out_ref.dtype)


def _layer_cls_kernel(feat_ref, adj_ref, w0_ref, w1_ref, prm_ref, wc_ref, bc_ref, out_ref):
    """Last layer: aggregator fused with F.normalize + order-0 classifier (single bf16 dot)."""
    h0, h1 = _layer_branches(feat_ref, adj_ref, w0_ref, w1_ref, prm_ref)
    # F.normalize(p=2, dim=1): x / max(||x||, 1e-12)  -> rsqrt (EUP) + multiply, no divide.
    sumsq = (jnp.sum(h0 * h0, axis=1, keepdims=True)
             + jnp.sum(h1 * h1, axis=1, keepdims=True))
    inv = jax.lax.rsqrt(jnp.maximum(sumsq, 1e-24))
    hcat = jnp.concatenate([h0 * inv, h1 * inv], axis=1).astype(jnp.bfloat16)
    out_ref[...] = (jnp.dot(hcat, wc_ref[...], preferred_element_type=jnp.float32)
                    + bc_ref[...])


# ----------------------------- JAX wrappers -----------------------------

def _layer_call(adj_bf, feat_bf, layer, *, cls=None, tm_cap=256):
    """One fused pallas_call per layer.  cls is not None -> classifier-fused last layer."""
    n = adj_bf.shape[0]
    f_in = feat_bf.shape[1]
    d = layer["w0"].shape[1]
    tm = _pick_tile(n, tm_cap, 16)          # 16: bf16 sublane packing; tm<=n/2 keeps 2 TCs busy
    grid = (n // tm,)

    feat_spec = pl.BlockSpec((n, f_in), lambda i: (0, 0))      # resident across grid steps
    adj_spec = pl.BlockSpec((tm, n), lambda i: (i, 0))         # only large HBM stream
    w_spec = pl.BlockSpec((f_in, d), lambda i: (0, 0))
    prm_spec = pl.BlockSpec((3, 2 * d), lambda i: (0, 0))
    cparams = pltpu.CompilerParams(dimension_semantics=("parallel",))

    if cls is None:
        return pl.pallas_call(
            _layer_kernel,
            out_shape=jax.ShapeDtypeStruct((n, 2 * d), jnp.bfloat16),
            grid=grid,
            in_specs=[feat_spec, adj_spec, w_spec, w_spec, prm_spec],
            out_specs=pl.BlockSpec((tm, 2 * d), lambda i: (i, 0)),
            compiler_params=cparams,
        )(feat_bf, adj_bf, layer["w0"], layer["w1"], layer["prm"])

    nclsp = cls["w"].shape[1]
    return pl.pallas_call(
        _layer_cls_kernel,
        out_shape=jax.ShapeDtypeStruct((n, nclsp), jnp.float32),
        grid=grid,
        in_specs=[feat_spec, adj_spec, w_spec, w_spec, prm_spec,
                  pl.BlockSpec((2 * d, nclsp), lambda i: (0, 0)),
                  pl.BlockSpec((1, nclsp), lambda i: (0, 0))],
        out_specs=pl.BlockSpec((tm, nclsp), lambda i: (i, 0)),
        compiler_params=cparams,
    )(feat_bf, adj_bf, layer["w0"], layer["w1"], layer["prm"], cls["w"], cls["b"])


def graphsaint_forward(adj_bf, feat_bf, layers, cls, *, tm_cap=256):
    """GraphSAINT inference forward: HO-aggregator layers -> L2-normalize -> classifier.

    Returns the 128-lane-padded classifier logits; caller slices [:, :num_classes].
    """
    h = feat_bf
    n_layers = len(layers)
    for li, layer in enumerate(layers):
        last = (li == n_layers - 1)
        h = _layer_call(adj_bf, h, layer, cls=cls if last else None, tm_cap=tm_cap)
    return h


def prepare_inputs(adj, feat, layer_params, cls_params):
    """Pre-cast / pack everything OUTSIDE the jitted forward (hoists the big adj f32->bf16 cast)."""
    adj_bf = adj.astype(jnp.bfloat16)
    feat_bf = feat.astype(jnp.bfloat16)
    layers = []
    for p in layer_params:
        prm = jnp.concatenate(
            [jnp.concatenate([p["b0"], p["b1"]], axis=1),
             jnp.concatenate([p["s0"], p["s1"]], axis=1),
             jnp.concatenate([p["o0"], p["o1"]], axis=1)], axis=0).astype(jnp.float32)
        layers.append({"w0": p["w0"].astype(jnp.bfloat16),
                       "w1": p["w1"].astype(jnp.bfloat16),
                       "prm": prm})
    d_last = layer_params[-1]["w0"].shape[1]
    ncls = cls_params["w"].shape[1]
    nclsp = pl.cdiv(ncls, 128) * 128        # lane-dense classifier output (slice afterwards)
    wc = (jnp.zeros((2 * d_last, nclsp), jnp.float32)
          .at[:, :ncls].set(cls_params["w"])).astype(jnp.bfloat16)
    bc = jnp.zeros((1, nclsp), jnp.float32).at[:, :ncls].set(cls_params["b"])
    return adj_bf, feat_bf, layers, {"w": wc, "b": bc}


# ----------------------------- parameter init -----------------------------

def xavier_uniform(key, dim_in, dim_out):
    # matches torch.nn.init.xavier_uniform_ on a Linear weight of shape (dim_out, dim_in);
    # stored transposed as (dim_in, dim_out) for the kernels.
    bound = math.sqrt(6.0 / (dim_in + dim_out))
    return jax.random.uniform(key, (dim_in, dim_out), jnp.float32, -bound, bound)


def make_layer_params(key, dim_in, dim_out):
    ks = jax.random.split(key, 8)
    small = lambda k: 0.1 * jax.random.normal(k, (1, dim_out), jnp.float32)
    return {
        "w0": xavier_uniform(ks[0], dim_in, dim_out),
        "b0": small(ks[1]), "s0": 1.0 + small(ks[2]), "o0": small(ks[3]),
        "w1": xavier_uniform(ks[4], dim_in, dim_out),
        "b1": small(ks[5]), "s1": 1.0 + small(ks[6]), "o1": small(ks[7]),
    }


# ----------------------------- pure-JAX reference (original f32 semantics) ----------------

def _ref_forward(adj, feat, layer_params, cls_params):
    h = feat
    for p in layer_params:
        hop1 = adj @ h

        def trans(x, w, b, s, off):
            z = jnp.maximum(x @ w + b, 0.0)
            mean = jnp.mean(z, axis=1, keepdims=True)
            var = jnp.mean((z - mean) ** 2, axis=1, keepdims=True) + 1e-9
            return (z - mean) * s * jax.lax.rsqrt(var) + off

        h = jnp.concatenate([trans(h, p["w0"], p["b0"], p["s0"], p["o0"]),
                             trans(hop1, p["w1"], p["b1"], p["s1"], p["o1"])], axis=1)
    nrm = jnp.maximum(jnp.linalg.norm(h, axis=1, keepdims=True), 1e-12)
    return (h / nrm) @ cls_params["w"] + cls_params["b"]


# ----------------------------- main -----------------------------

if __name__ == "__main__":
    key = jax.random.PRNGKey(0)
    # subgraph nodes, input feats, arch dim, classes
    # arch_gcn equivalent: {'arch': '1-1', 'dim': 32, 'aggr': 'concat',
    #                       'act': 'relu', 'bias': 'norm', 'loss': 'softmax'}
    # dims_feat = [16, 64, 64]; dims_weight = [(16, 32), (64, 32)]; classifier (64, 8)
    N, F_IN, HID, NCLS = 1024, 16, 32, 8

    k_adj, k_feat, k_l1, k_l2, k_cls = jax.random.split(key, 5)

    # dense, row-normalized symmetric adjacency with self loops (stand-in for the sparse adj)
    a = (jax.random.uniform(k_adj, (N, N)) < 0.05).astype(jnp.float32)
    a = jnp.maximum(a, a.T) + jnp.eye(N, dtype=jnp.float32)
    adj = a / jnp.sum(a, axis=1, keepdims=True)

    feat = jax.random.normal(k_feat, (N, F_IN), jnp.float32)

    layer_params = [make_layer_params(k_l1, F_IN, HID),
                    make_layer_params(k_l2, 2 * HID, HID)]
    cls_params = {"w": xavier_uniform(k_cls, 2 * HID, NCLS),
                  "b": jnp.zeros((1, NCLS), jnp.float32)}

    # Hoisted bf16 casts / packing: done once, outside the jitted forward.
    adj_bf, feat_bf, layers, cls = prepare_inputs(adj, feat, layer_params, cls_params)
    adj_bf, feat_bf = jax.block_until_ready((adj_bf, feat_bf))

    pred_pad = jax.jit(graphsaint_forward)(adj_bf, feat_bf, layers, cls)
    pred_pad = jax.block_until_ready(pred_pad)
    pred = pred_pad[:, :NCLS]

    ref = _ref_forward(adj, feat, layer_params, cls_params)
    assert pred.shape == (N, NCLS)
    max_err = float(jnp.max(jnp.abs(pred - ref)))
    # bf16 adjacency + bf16 inter-layer activations (f32 accumulation) -> ~0.5-1% relative error;
    # acceptable for inference, hence the loose tolerance vs. the pure-f32 reference.
    assert jnp.allclose(pred, ref, atol=5e-2, rtol=5e-2), f"max abs err {max_err}"

    print("KERNEL_OK")
</pallas_src>

<mosaic_0001>
module attributes {stable_mosaic.version = 11 : i64} {
  func.func @_layer_cls_kernel(%arg0: i32, %arg1: memref<1024x64xbf16, #tpu.memory_space<vmem>>, %arg2: memref<256x1024xbf16, #tpu.memory_space<vmem>>, %arg3: memref<64x32xbf16, #tpu.memory_space<vmem>>, %arg4: memref<64x32xbf16, #tpu.memory_space<vmem>>, %arg5: memref<3x64xf32, #tpu.memory_space<vmem>>, %arg6: memref<64x128xbf16, #tpu.memory_space<vmem>>, %arg7: memref<1x128xf32, #tpu.memory_space<vmem>>, %arg8: memref<256x128xf32, #tpu.memory_space<vmem>>) attributes {dimension_semantics = [#tpu.dimension_semantics<parallel>], iteration_bounds = array<i64: 4>, scalar_prefetch = 0 : i64, scratch_operands = 0 : i64, tpu.core_type = #tpu.core_type<tc>, window_params = [{pipeline_mode = #tpu.pipeline_mode<synchronous>, transform_indices = @transform_0, window_bounds = array<i64: 1024, 64>}, {transform_indices = @transform_1, window_bounds = array<i64: 256, 1024>}, {pipeline_mode = #tpu.pipeline_mode<synchronous>, transform_indices = @transform_2, window_bounds = array<i64: 64, 32>}, {pipeline_mode = #tpu.pipeline_mode<synchronous>, transform_indices = @transform_3, window_bounds = array<i64: 64, 32>}, {pipeline_mode = #tpu.pipeline_mode<synchronous>, transform_indices = @transform_4, window_bounds = array<i64: 3, 64>}, {pipeline_mode = #tpu.pipeline_mode<synchronous>, transform_indices = @transform_5, window_bounds = array<i64: 64, 128>}, {pipeline_mode = #tpu.pipeline_mode<synchronous>, transform_indices = @transform_6, window_bounds = array<i64: 1, 128>}, {transform_indices = @transform_7, window_bounds = array<i64: 256, 128>}]} {
    %c0 = arith.constant 0 : index
    %c0_0 = arith.constant 0 : index
    %0 = vector.load %arg1[%c0, %c0_0] : memref<1024x64xbf16, #tpu.memory_space<vmem>>, vector<1024x64xbf16>
    %c0_1 = arith.constant 0 : index
    %c0_2 = arith.constant 0 : index
    %1 = vector.load %arg4[%c0_1, %c0_2] : memref<64x32xbf16, #tpu.memory_space<vmem>>, vector<64x32xbf16>
    %cst = arith.constant dense<0.000000e+00> : vector<1024x32xf32>
    %2 = tpu.matmul %0, %1, %cst {dimension_numbers = #tpu.dot_dimension_numbers<[1], [0], [0], [1], [0, 0, 1, 1], [], []>} : vector<1024x64xbf16>, vector<64x32xbf16>, vector<1024x32xf32> -> vector<1024x32xf32>
    %c0_3 = arith.constant 0 : index
    %c0_4 = arith.constant 0 : index
    %3 = vector.load %arg2[%c0_3, %c0_4] : memref<256x1024xbf16, #tpu.memory_space<vmem>>, vector<256x1024xbf16>
    %4 = arith.truncf %2 : vector<1024x32xf32> to vector<1024x32xbf16>
    %cst_5 = arith.constant dense<0.000000e+00> : vector<256x32xf32>
    %5 = tpu.matmul %3, %4, %cst_5 {dimension_numbers = #tpu.dot_dimension_numbers<[1], [0], [0], [1], [0, 0, 1, 1], [], []>} : vector<256x1024xbf16>, vector<1024x32xbf16>, vector<256x32xf32> -> vector<256x32xf32>
    %c256_i32 = arith.constant 256 : i32
    %6 = arith.muli %arg0, %c256_i32 : i32
    %7 = tpu.assume_multiple %6, 256 : i32
    %8 = arith.index_cast %7 : i32 to index
    %c0_6 = arith.constant 0 : index
    %9 = vector.load %arg1[%8, %c0_6] : memref<1024x64xbf16, #tpu.memory_space<vmem>>, vector<256x64xbf16>
    %c0_7 = arith.constant 0 : index
    %c0_8 = arith.constant 0 : index
    %10 = vector.load %arg3[%c0_7, %c0_8] : memref<64x32xbf16, #tpu.memory_space<vmem>>, vector<64x32xbf16>
    %cst_9 = arith.constant dense<0.000000e+00> : vector<256x32xf32>
    %11 = tpu.matmul %9, %10, %cst_9 {dimension_numbers = #tpu.dot_dimension_numbers<[1], [0], [0], [1], [0, 0, 1, 1], [], []>} : vector<256x64xbf16>, vector<64x32xbf16>, vector<256x32xf32> -> vector<256x32xf32>
    %c0_10 = arith.constant 0 : index
    %c0_11 = arith.constant 0 : index
    %12 = vector.load %arg5[%c0_10, %c0_11] : memref<3x64xf32, #tpu.memory_space<vmem>>, vector<3x64xf32>
    %13 = vector.extract_strided_slice %12 {offsets = [0, 0], sizes = [1, 32], strides = [1, 1]} : vector<3x64xf32> to vector<1x32xf32>
    %14 = vector.extract_strided_slice %12 {offsets = [1, 0], sizes = [1, 32], strides = [1, 1]} : vector<3x64xf32> to vector<1x32xf32>
    %15 = vector.extract_strided_slice %12 {offsets = [2, 0], sizes = [1, 32], strides = [1, 1]} : vector<3x64xf32> to vector<1x32xf32>
    %16 = vector.broadcast %13 : vector<1x32xf32> to vector<256x32xf32>
    %17 = arith.addf %11, %16 : vector<256x32xf32>
    %cst_12 = arith.constant 0.000000e+00 : f32
    %18 = vector.broadcast %cst_12 : f32 to vector<256x32xf32>
    %19 = arith.maximumf %17, %18 : vector<256x32xf32>
    %cst_13 = arith.constant dense<0.000000e+00> : vector<256xf32>
    %20 = vector.multi_reduction <add>, %19, %cst_13 [1] : vector<256x32xf32> to vector<256xf32>
    %21 = vector.shape_cast %20 : vector<256xf32> to vector<256x1xf32>
    %cst_14 = arith.constant 3.200000e+01 : f32
    %22 = vector.broadcast %cst_14 : f32 to vector<256x1xf32>
    %23 = arith.divf %21, %22 : vector<256x1xf32>
    %24 = vector.broadcast %23 : vector<256x1xf32> to vector<256x32xf32>
    %25 = arith.subf %19, %24 : vector<256x32xf32>
    %26 = vector.broadcast %23 : vector<256x1xf32> to vector<256x32xf32>
    %27 = arith.subf %19, %26 : vector<256x32xf32>
    %28 = arith.mulf %25, %27 : vector<256x32xf32>
    %cst_15 = arith.constant dense<0.000000e+00> : vector<256xf32>
    %29 = vector.multi_reduction <add>, %28, %cst_15 [1] : vector<256x32xf32> to vector<256xf32>
    %30 = vector.shape_cast %29 : vector<256xf32> to vector<256x1xf32>
    %cst_16 = arith.constant 3.200000e+01 : f32
    %31 = vector.broadcast %cst_16 : f32 to vector<256x1xf32>
    %32 = arith.divf %30, %31 : vector<256x1xf32>
    %cst_17 = arith.constant 9.99999971E-10 : f32
    %33 = vector.broadcast %cst_17 : f32 to vector<256x1xf32>
    %34 = arith.addf %32, %33 : vector<256x1xf32>
    %35 = vector.broadcast %23 : vector<256x1xf32> to vector<256x32xf32>
    %36 = arith.subf %19, %35 : vector<256x32xf32>
    %37 = math.rsqrt %34 : vector<256x1xf32>
    %38 = vector.broadcast %14 : vector<1x32xf32> to vector<256x32xf32>
    %39 = vector.broadcast %37 : vector<256x1xf32> to vector<256x32xf32>
    %40 = arith.mulf %38, %39 : vector<256x32xf32>
    %41 = arith.mulf %36, %40 : vector<256x32xf32>
    %42 = vector.broadcast %15 : vector<1x32xf32> to vector<256x32xf32>
    %43 = arith.addf %41, %42 : vector<256x32xf32>
    %44 = vector.extract_strided_slice %12 {offsets = [0, 32], sizes = [1, 32], strides = [1, 1]} : vector<3x64xf32> to vector<1x32xf32>
    %45 = vector.extract_strided_slice %12 {offsets = [1, 32], sizes = [1, 32], strides = [1, 1]} : vector<3x64xf32> to vector<1x32xf32>
    %46 = vector.extract_strided_slice %12 {offsets = [2, 32], sizes = [1, 32], strides = [1, 1]} : vector<3x64xf32> to vector<1x32xf32>
    %47 = vector.broadcast %44 : vector<1x32xf32> to vector<256x32xf32>
    %48 = arith.addf %5, %47 : vector<256x32xf32>
    %cst_18 = arith.constant 0.000000e+00 : f32
    %49 = vector.broadcast %cst_18 : f32 to vector<256x32xf32>
    %50 = arith.maximumf %48, %49 : vector<256x32xf32>
    %cst_19 = arith.constant dense<0.000000e+00> : vector<256xf32>
    %51 = vector.multi_reduction <add>, %50, %cst_19 [1] : vector<256x32xf32> to vector<256xf32>
    %52 = vector.shape_cast %51 : vector<256xf32> to vector<256x1xf32>
    %cst_20 = arith.constant 3.200000e+01 : f32
    %53 = vector.broadcast %cst_20 : f32 to vector<256x1xf32>
    %54 = arith.divf %52, %53 : vector<256x1xf32>
    %55 = vector.broadcast %54 : vector<256x1xf32> to vector<256x32xf32>
    %56 = arith.subf %50, %55 : vector<256x32xf32>
    %57 = vector.broadcast %54 : vector<256x1xf32> to vector<256x32xf32>
    %58 = arith.subf %50, %57 : vector<256x32xf32>
    %59 = arith.mulf %56, %58 : vector<256x32xf32>
    %cst_21 = arith.constant dense<0.000000e+00> : vector<256xf32>
    %60 = vector.multi_reduction <add>, %59, %cst_21 [1] : vector<256x32xf32> to vector<256xf32>
    %61 = vector.shape_cast %60 : vector<256xf32> to vector<256x1xf32>
    %cst_22 = arith.constant 3.200000e+01 : f32
    %62 = vector.broadcast %cst_22 : f32 to vector<256x1xf32>
    %63 = arith.divf %61, %62 : vector<256x1xf32>
    %cst_23 = arith.constant 9.99999971E-10 : f32
    %64 = vector.broadcast %cst_23 : f32 to vector<256x1xf32>
    %65 = arith.addf %63, %64 : vector<256x1xf32>
    %66 = vector.broadcast %54 : vector<256x1xf32> to vector<256x32xf32>
    %67 = arith.subf %50, %66 : vector<256x32xf32>
    %68 = math.rsqrt %65 : vector<256x1xf32>
    %69 = vector.broadcast %45 : vector<1x32xf32> to vector<256x32xf32>
    %70 = vector.broadcast %68 : vector<256x1xf32> to vector<256x32xf32>
    %71 = arith.mulf %69, %70 : vector<256x32xf32>
    %72 = arith.mulf %67, %71 : vector<256x32xf32>
    %73 = vector.broadcast %46 : vector<1x32xf32> to vector<256x32xf32>
    %74 = arith.addf %72, %73 : vector<256x32xf32>
    %75 = arith.mulf %43, %43 : vector<256x32xf32>
    %cst_24 = arith.constant dense<0.000000e+00> : vector<256xf32>
    %76 = vector.multi_reduction <add>, %75, %cst_24 [1] : vector<256x32xf32> to vector<256xf32>
    %77 = vector.shape_cast %76 : vector<256xf32> to vector<256x1xf32>
    %78 = arith.mulf %74, %74 : vector<256x32xf32>
    %cst_25 = arith.constant dense<0.000000e+00> : vector<256xf32>
    %79 = vector.multi_reduction <add>, %78, %cst_25 [1] : vector<256x32xf32> to vector<256xf32>
    %80 = vector.shape_cast %79 : vector<256xf32> to vector<256x1xf32>
    %81 = arith.addf %77, %80 : vector<256x1xf32>
    %cst_26 = arith.constant 1.000000e-24 : f32
    %82 = vector.broadcast %cst_26 : f32 to vector<256x1xf32>
    %83 = arith.maximumf %81, %82 : vector<256x1xf32>
    %84 = math.rsqrt %83 : vector<256x1xf32>
    %85 = vector.broadcast %84 : vector<256x1xf32> to vector<256x32xf32>
    %86 = arith.mulf %43, %85 : vector<256x32xf32>
    %87 = vector.broadcast %84 : vector<256x1xf32> to vector<256x32xf32>
    %88 = arith.mulf %74, %87 : vector<256x32xf32>
    %89 = tpu.concatenate %86, %88 in 1 : vector<256x32xf32>, vector<256x32xf32> -> vector<256x64xf32>
    %90 = arith.truncf %89 : vector<256x64xf32> to vector<256x64xbf16>
    %c0_27 = arith.constant 0 : index
    %c0_28 = arith.constant 0 : index
    %91 = vector.load %arg6[%c0_27, %c0_28] : memref<64x128xbf16, #tpu.memory_space<vmem>>, vector<64x128xbf16>
    %cst_29 = arith.constant dense<0.000000e+00> : vector<256x128xf32>
    %92 = tpu.matmul %90, %91, %cst_29 {dimension_numbers = #tpu.dot_dimension_numbers<[1], [0], [0], [1], [0, 0, 1, 1], [], []>} : vector<256x64xbf16>, vector<64x128xbf16>, vector<256x128xf32> -> vector<256x128xf32>
    %c0_30 = arith.constant 0 : index
    %c0_31 = arith.constant 0 : index
    %93 = vector.load %arg7[%c0_30, %c0_31] : memref<1x128xf32, #tpu.memory_space<vmem>>, vector<1x128xf32>
    %94 = vector.broadcast %93 : vector<1x128xf32> to vector<256x128xf32>
    %95 = arith.addf %92, %94 : vector<256x128xf32>
    %c0_32 = arith.constant 0 : index
    %c0_33 = arith.constant 0 : index
    %96 = vector.load %arg8[%c0_32, %c0_33] : memref<256x128xf32, #tpu.memory_space<vmem>>, vector<256x128xf32>
    tpu.vector_store %arg8[%c0_32, %c0_33], %95 {strides = array<i32>} : memref<256x128xf32, #tpu.memory_space<vmem>>, vector<256x128xf32>,
    return
  }
  func.func @transform_0(%arg0: i32) -> (i32, i32) {
    %c0_i32 = arith.constant 0 : i32
    %c0_i32_0 = arith.constant 0 : i32
    %c0_i32_1 = arith.constant 0 : i32
    return %c0_i32, %c0_i32_0 : i32, i32
  }
  func.func @transform_1(%arg0: i32) -> (i32, i32) {
    %c0_i32 = arith.constant 0 : i32
    %c0_i32_0 = arith.constant 0 : i32
    return %arg0, %c0_i32 : i32, i32
  }
  func.func @transform_2(%arg0: i32) -> (i32, i32) {
    %c0_i32 = arith.constant 0 : i32
    %c0_i32_0 = arith.constant 0 : i32
    %c0_i32_1 = arith.constant 0 : i32
    return %c0_i32, %c0_i32_0 : i32, i32
  }
  func.func @transform_3(%arg0: i32) -> (i32, i32) {
    %c0_i32 = arith.constant 0 : i32
    %c0_i32_0 = arith.constant 0 : i32
    %c0_i32_1 = arith.constant 0 : i32
    return %c0_i32, %c0_i32_0 : i32, i32
  }
  func.func @transform_4(%arg0: i32) -> (i32, i32) {
    %c0_i32 = arith.constant 0 : i32
    %c0_i32_0 = arith.constant 0 : i32
    %c0_i32_1 = arith.constant 0 : i32
    return %c0_i32, %c0_i32_0 : i32, i32
  }
  func.func @transform_5(%arg0: i32) -> (i32, i32) {
    %c0_i32 = arith.constant 0 : i32
    %c0_i32_0 = arith.constant 0 : i32
    %c0_i32_1 = arith.constant 0 : i32
    return %c0_i32, %c0_i32_0 : i32, i32
  }
  func.func @transform_6(%arg0: i32) -> (i32, i32) {
    %c0_i32 = arith.constant 0 : i32
    %c0_i32_0 = arith.constant 0 : i32
    %c0_i32_1 = arith.constant 0 : i32
    return %c0_i32, %c0_i32_0 : i32, i32
  }
  func.func @transform_7(%arg0: i32) -> (i32, i32) {
    %c0_i32 = arith.constant 0 : i32
    %c0_i32_0 = arith.constant 0 : i32
    return %arg0, %c0_i32 : i32, i32
  }
}

module attributes {stable_mosaic.version = 11 : i64} {
  func.func @_layer_kernel(%arg0: i32, %arg1: memref<1024x16xbf16, #tpu.memory_space<vmem>>, %arg2: memref<256x1024xbf16, #tpu.memory_space<vmem>>, %arg3: memref<16x32xbf16, #tpu.memory_space<vmem>>, %arg4: memref<16x32xbf16, #tpu.memory_space<vmem>>, %arg5: memref<3x64xf32, #tpu.memory_space<vmem>>, %arg6: memref<256x64xbf16, #tpu.memory_space<vmem>>) attributes {dimension_semantics = [#tpu.dimension_semantics<parallel>], iteration_bounds = array<i64: 4>, scalar_prefetch = 0 : i64, scratch_operands = 0 : i64, tpu.core_type = #tpu.core_type<tc>, window_params = [{pipeline_mode = #tpu.pipeline_mode<synchronous>, transform_indices = @transform_0, window_bounds = array<i64: 1024, 16>}, {transform_indices = @transform_1, window_bounds = array<i64: 256, 1024>}, {pipeline_mode = #tpu.pipeline_mode<synchronous>, transform_indices = @transform_2, window_bounds = array<i64: 16, 32>}, {pipeline_mode = #tpu.pipeline_mode<synchronous>, transform_indices = @transform_3, window_bounds = array<i64: 16, 32>}, {pipeline_mode = #tpu.pipeline_mode<synchronous>, transform_indices = @transform_4, window_bounds = array<i64: 3, 64>}, {transform_indices = @transform_5, window_bounds = array<i64: 256, 64>}]} {
    %c0 = arith.constant 0 : index
    %c0_0 = arith.constant 0 : index
    %0 = vector.load %arg1[%c0, %c0_0] : memref<1024x16xbf16, #tpu.memory_space<vmem>>, vector<1024x16xbf16>
    %c0_1 = arith.constant 0 : index
    %c0_2 = arith.constant 0 : index
    %1 = vector.load %arg4[%c0_1, %c0_2] : memref<16x32xbf16, #tpu.memory_space<vmem>>, vector<16x32xbf16>
    %cst = arith.constant dense<0.000000e+00> : vector<1024x32xf32>
    %2 = tpu.matmul %0, %1, %cst {dimension_numbers = #tpu.dot_dimension_numbers<[1], [0], [0], [1], [0, 0, 1, 1], [], []>} : vector<1024x16xbf16>, vector<16x32xbf16>, vector<1024x32xf32> -> vector<1024x32xf32>
    %c0_3 = arith.constant 0 : index
    %c0_4 = arith.constant 0 : index
    %3 = vector.load %arg2[%c0_3, %c0_4] : memref<256x1024xbf16, #tpu.memory_space<vmem>>, vector<256x1024xbf16>
    %4 = arith.truncf %2 : vector<1024x32xf32> to vector<1024x32xbf16>
    %cst_5 = arith.constant dense<0.000000e+00> : vector<256x32xf32>
    %5 = tpu.matmul %3, %4, %cst_5 {dimension_numbers = #tpu.dot_dimension_numbers<[1], [0], [0], [1], [0, 0, 1, 1], [], []>} : vector<256x1024xbf16>, vector<1024x32xbf16>, vector<256x32xf32> -> vector<256x32xf32>
    %c256_i32 = arith.constant 256 : i32
    %6 = arith.muli %arg0, %c256_i32 : i32
    %7 = tpu.assume_multiple %6, 256 : i32
    %8 = arith.index_cast %7 : i32 to index
    %c0_6 = arith.constant 0 : index
    %9 = vector.load %arg1[%8, %c0_6] : memref<1024x16xbf16, #tpu.memory_space<vmem>>, vector<256x16xbf16>
    %c0_7 = arith.constant 0 : index
    %c0_8 = arith.constant 0 : index
    %10 = vector.load %arg3[%c0_7, %c0_8] : memref<16x32xbf16, #tpu.memory_space<vmem>>, vector<16x32xbf16>
    %cst_9 = arith.constant dense<0.000000e+00> : vector<256x32xf32>
    %11 = tpu.matmul %9, %10, %cst_9 {dimension_numbers = #tpu.dot_dimension_numbers<[1], [0], [0], [1], [0, 0, 1, 1], [], []>} : vector<256x16xbf16>, vector<16x32xbf16>, vector<256x32xf32> -> vector<256x32xf32>
    %c0_10 = arith.constant 0 : index
    %c0_11 = arith.constant 0 : index
    %12 = vector.load %arg5[%c0_10, %c0_11] : memref<3x64xf32, #tpu.memory_space<vmem>>, vector<3x64xf32>
    %13 = vector.extract_strided_slice %12 {offsets = [0, 0], sizes = [1, 32], strides = [1, 1]} : vector<3x64xf32> to vector<1x32xf32>
    %14 = vector.extract_strided_slice %12 {offsets = [1, 0], sizes = [1, 32], strides = [1, 1]} : vector<3x64xf32> to vector<1x32xf32>
    %15 = vector.extract_strided_slice %12 {offsets = [2, 0], sizes = [1, 32], strides = [1, 1]} : vector<3x64xf32> to vector<1x32xf32>
    %16 = vector.broadcast %13 : vector<1x32xf32> to vector<256x32xf32>
    %17 = arith.addf %11, %16 : vector<256x32xf32>
    %cst_12 = arith.constant 0.000000e+00 : f32
    %18 = vector.broadcast %cst_12 : f32 to vector<256x32xf32>
    %19 = arith.maximumf %17, %18 : vector<256x32xf32>
    %cst_13 = arith.constant dense<0.000000e+00> : vector<256xf32>
    %20 = vector.multi_reduction <add>, %19, %cst_13 [1] : vector<256x32xf32> to vector<256xf32>
    %21 = vector.shape_cast %20 : vector<256xf32> to vector<256x1xf32>
    %cst_14 = arith.constant 3.200000e+01 : f32
    %22 = vector.broadcast %cst_14 : f32 to vector<256x1xf32>
    %23 = arith.divf %21, %22 : vector<256x1xf32>
    %24 = vector.broadcast %23 : vector<256x1xf32> to vector<256x32xf32>
    %25 = arith.subf %19, %24 : vector<256x32xf32>
    %26 = vector.broadcast %23 : vector<256x1xf32> to vector<256x32xf32>
    %27 = arith.subf %19, %26 : vector<256x32xf32>
    %28 = arith.mulf %25, %27 : vector<256x32xf32>
    %cst_15 = arith.constant dense<0.000000e+00> : vector<256xf32>
    %29 = vector.multi_reduction <add>, %28, %cst_15 [1] : vector<256x32xf32> to vector<256xf32>
    %30 = vector.shape_cast %29 : vector<256xf32> to vector<256x1xf32>
    %cst_16 = arith.constant 3.200000e+01 : f32
    %31 = vector.broadcast %cst_16 : f32 to vector<256x1xf32>
    %32 = arith.divf %30, %31 : vector<256x1xf32>
    %cst_17 = arith.constant 9.99999971E-10 : f32
    %33 = vector.broadcast %cst_17 : f32 to vector<256x1xf32>
    %34 = arith.addf %32, %33 : vector<256x1xf32>
    %35 = vector.broadcast %23 : vector<256x1xf32> to vector<256x32xf32>
    %36 = arith.subf %19, %35 : vector<256x32xf32>
    %37 = math.rsqrt %34 : vector<256x1xf32>
    %38 = vector.broadcast %14 : vector<1x32xf32> to vector<256x32xf32>
    %39 = vector.broadcast %37 : vector<256x1xf32> to vector<256x32xf32>
    %40 = arith.mulf %38, %39 : vector<256x32xf32>
    %41 = arith.mulf %36, %40 : vector<256x32xf32>
    %42 = vector.broadcast %15 : vector<1x32xf32> to vector<256x32xf32>
    %43 = arith.addf %41, %42 : vector<256x32xf32>
    %44 = vector.extract_strided_slice %12 {offsets = [0, 32], sizes = [1, 32], strides = [1, 1]} : vector<3x64xf32> to vector<1x32xf32>
    %45 = vector.extract_strided_slice %12 {offsets = [1, 32], sizes = [1, 32], strides = [1, 1]} : vector<3x64xf32> to vector<1x32xf32>
    %46 = vector.extract_strided_slice %12 {offsets = [2, 32], sizes = [1, 32], strides = [1, 1]} : vector<3x64xf32> to vector<1x32xf32>
    %47 = vector.broadcast %44 : vector<1x32xf32> to vector<256x32xf32>
    %48 = arith.addf %5, %47 : vector<256x32xf32>
    %cst_18 = arith.constant 0.000000e+00 : f32
    %49 = vector.broadcast %cst_18 : f32 to vector<256x32xf32>
    %50 = arith.maximumf %48, %49 : vector<256x32xf32>
    %cst_19 = arith.constant dense<0.000000e+00> : vector<256xf32>
    %51 = vector.multi_reduction <add>, %50, %cst_19 [1] : vector<256x32xf32> to vector<256xf32>
    %52 = vector.shape_cast %51 : vector<256xf32> to vector<256x1xf32>
    %cst_20 = arith.constant 3.200000e+01 : f32
    %53 = vector.broadcast %cst_20 : f32 to vector<256x1xf32>
    %54 = arith.divf %52, %53 : vector<256x1xf32>
    %55 = vector.broadcast %54 : vector<256x1xf32> to vector<256x32xf32>
    %56 = arith.subf %50, %55 : vector<256x32xf32>
    %57 = vector.broadcast %54 : vector<256x1xf32> to vector<256x32xf32>
    %58 = arith.subf %50, %57 : vector<256x32xf32>
    %59 = arith.mulf %56, %58 : vector<256x32xf32>
    %cst_21 = arith.constant dense<0.000000e+00> : vector<256xf32>
    %60 = vector.multi_reduction <add>, %59, %cst_21 [1] : vector<256x32xf32> to vector<256xf32>
    %61 = vector.shape_cast %60 : vector<256xf32> to vector<256x1xf32>
    %cst_22 = arith.constant 3.200000e+01 : f32
    %62 = vector.broadcast %cst_22 : f32 to vector<256x1xf32>
    %63 = arith.divf %61, %62 : vector<256x1xf32>
    %cst_23 = arith.constant 9.99999971E-10 : f32
    %64 = vector.broadcast %cst_23 : f32 to vector<256x1xf32>
    %65 = arith.addf %63, %64 : vector<256x1xf32>
    %66 = vector.broadcast %54 : vector<256x1xf32> to vector<256x32xf32>
    %67 = arith.subf %50, %66 : vector<256x32xf32>
    %68 = math.rsqrt %65 : vector<256x1xf32>
    %69 = vector.broadcast %45 : vector<1x32xf32> to vector<256x32xf32>
    %70 = vector.broadcast %68 : vector<256x1xf32> to vector<256x32xf32>
    %71 = arith.mulf %69, %70 : vector<256x32xf32>
    %72 = arith.mulf %67, %71 : vector<256x32xf32>
    %73 = vector.broadcast %46 : vector<1x32xf32> to vector<256x32xf32>
    %74 = arith.addf %72, %73 : vector<256x32xf32>
    %75 = tpu.concatenate %43, %74 in 1 : vector<256x32xf32>, vector<256x32xf32> -> vector<256x64xf32>
    %76 = arith.truncf %75 : vector<256x64xf32> to vector<256x64xbf16>
    %c0_24 = arith.constant 0 : index
    %c0_25 = arith.constant 0 : index
    %77 = vector.load %arg6[%c0_24, %c0_25] : memref<256x64xbf16, #tpu.memory_space<vmem>>, vector<256x64xbf16>
    tpu.vector_store %arg6[%c0_24, %c0_25], %76 {strides = array<i32>} : memref<256x64xbf16, #tpu.memory_space<vmem>>, vector<256x64xbf16>,
    return
  }
  func.func @transform_0(%arg0: i32) -> (i32, i32) {
    %c0_i32 = arith.constant 0 : i32
    %c0_i32_0 = arith.constant 0 : i32
    %c0_i32_1 = arith.constant 0 : i32
    return %c0_i32, %c0_i32_0 : i32, i32
  }
  func.func @transform_1(%arg0: i32) -> (i32, i32) {
    %c0_i32 = arith.constant 0 : i32
    %c0_i32_0 = arith.constant 0 : i32
    return %arg0, %c0_i32 : i32, i32
  }
  func.func @transform_2(%arg0: i32) -> (i32, i32) {
    %c0_i32 = arith.constant 0 : i32
    %c0_i32_0 = arith.constant 0 : i32
    %c0_i32_1 = arith.constant 0 : i32
    return %c0_i32, %c0_i32_0 : i32, i32
  }
  func.func @transform_3(%arg0: i32) -> (i32, i32) {
    %c0_i32 = arith.constant 0 : i32
    %c0_i32_0 = arith.constant 0 : i32
    %c0_i32_1 = arith.constant 0 : i32
    return %c0_i32, %c0_i32_0 : i32, i32
  }
  func.func @transform_4(%arg0: i32) -> (i32, i32) {
    %c0_i32 = arith.constant 0 : i32
    %c0_i32_0 = arith.constant 0 : i32
    %c0_i32_1 = arith.constant 0 : i32
    return %c0_i32, %c0_i32_0 : i32, i32
  }
  func.func @transform_5(%arg0: i32) -> (i32, i32) {
    %c0_i32 = arith.constant 0 : i32
    %c0_i32_0 = arith.constant 0 : i32
    return %arg0, %c0_i32 : i32, i32
  }
}

</mosaic_0001>

<llo_original>
// kernel: graphsaint_forward.2
$region0: #{graphsaint_forward.2}
  #allocation0 [shape = 'u32[]', space=smem, size = 0x4, offset = 0x4, fixed_abs, tag = 'smem constant byte address 0x4 - core index']
  #allocation1 [shape = 'u32[144,128]{1,0:T(1,128)}', space=vmem, size = 0x12000, scoped, tag = 'internal scratch']
  %s0 = inlined_call_operand.vmem [shape: bf16[1024,16], index: 0, kind: input, shape index: {}]
  %s1 = inlined_call_operand.hbm [shape: bf16[1024,1024], index: 1, kind: input, shape index: {}]
  %s2 = inlined_call_operand.hbm [shape: bf16[16,32], index: 2, kind: input, shape index: {}]
  %s3 = inlined_call_operand.hbm [shape: bf16[16,32], index: 3, kind: input, shape index: {}]
  %s4 = inlined_call_operand.hbm [shape: f32[3,64], index: 4, kind: input, shape index: {}]
  %s5 = inlined_call_operand.vmem [shape: bf16[1024,64], index: 5, kind: output, shape index: {}]
  %s6 = sld [smem:[#allocation0]]
  $region69: #{graphsaint_forward.2} parent=0
    _
  %s8 = ssub.s32 1, %s6
  %s9 = scalar_select 0, %s8, %s6
  $region1: #{graphsaint_forward.2} parent=0
    #allocation2 [shape = 'u8[1048576]{0}', space=vmem, size = 0x100000, scoped, tag = 'input window, operand 1']
    #allocation3 [shape = 's32[2]{0}', space=sflag, size = 0x8, scoped, tag = 'scoped memory for graphsaint_forward.2']
    #allocation4 [shape = 'u8[4096]{0}', space=vmem, size = 0x1000, scoped, tag = 'input window, operand 2, single buffered']
    #allocation5 [shape = 's32[1]{0}', space=sflag, size = 0x4, scoped, tag = 'scoped memory for graphsaint_forward.2']
    #allocation6 [shape = 'u8[4096]{0}', space=vmem, size = 0x1000, scoped, tag = 'input window, operand 3, single buffered']
    #allocation7 [shape = 'u8[2048]{0}', space=vmem, size = 0x800, scoped, tag = 'input window, operand 4, single buffered']
    #allocation8 [shape = 's32[1]{0}', space=sflag, size = 0x4, scoped, tag = 'scoped memory for graphsaint_forward.2']
    %10 = vsyncpa [#allocation3], 0
    %s11 = scalar_lea.sflag [#allocation3], 1
    %12 = vsyncpa %s11, 0
    %13 = vsyncpa [#allocation5], 0
    %14 = vsyncpa [#allocation8], 0
    loop: start=0, step=1, limit=6
    $region2: #{graphsaint_forward.2} parent=1 // loop_pre_header
      _
    $region3: #{graphsaint_forward.2} parent=1 // loop_header
      %s16 = sphi 0, %s20
      %p17 = scmp.ge.s32.totalorder %s16, 6
      %s24 = sphi 0, %s24
      %s26 = sphi 0, %s24
      %s27 = sphi 0, %s26
      %s41 = sphi 0, %s27
      %s47 = sphi 0, %s49
      %s50 = sphi 0, %s47
      %s51 = sphi 0, %s50
      %s67 = sphi 0, %s51
      %s71 = sphi 0, %s71
      %s73 = sphi 0, %s71
      %s74 = sphi 0, %s73
      %s88 = sphi 0, %s74
      %s92 = sphi 0, %s92
      %s94 = sphi 0, %s92
      %s95 = sphi 0, %s94
      %s109 = sphi 0, %s95
      %s113 = sphi 0, %s113
      %s115 = sphi 0, %s113
      %s116 = sphi 0, %s115
      %s130 = sphi 0, %s116
      %s136 = sphi 0, %s138
      %s139 = sphi 0, %s136
      %s140 = sphi 0, %s139
      %s156 = sphi 0, %s140
    $region4: #{graphsaint_forward.2} parent=1 // loop_header_branch
      %19 = sbr.rel (%p17) target = $region8
    $region5: #{graphsaint_forward.2} parent=1 // loop_body
      %s21 = ssub.s32 %s16, 1
      %s22 = ssub.s32 %s16, 2
      %s23 = sadd.s32 %s16, 1
      %s25 = sadd.s32 %s24, 1
      %p28 = scmp.eq.s32.totalorder %s16, 3
      %p29 = scmp.ne.s32.totalorder %s24, %s26
      %p30 = scmp.eq.s32.totalorder %s16, 0
      %p31 = por %p29, %p30
      %p32 = scmp.ne.s32.totalorder %s24, %s26
      %p33 = scmp.eq.s32.totalorder %s21, 3
      %p34 = por %p32, %p33
      %p35 = scmp.ne.s32.totalorder %s26, %s27
      %p36 = scmp.eq.s32.totalorder %s21, 0
      %p37 = por %p35, %p36
      %p38 = scmp.ne.s32.totalorder %s26, %s27
      %p39 = scmp.eq.s32.totalorder %s22, 3
      %p40 = por %p38, %p39
      %p42 = scmp.ne.s32.totalorder %s27, %s41
      %p43 = scmp.eq.s32.totalorder %s22, 0
      %p44 = por %p42, %p43
      %s45 = ssub.s32 %s16, %s23
      %p46 = scmp.eq.s32.totalorder %s45, 0
      %s48 = sadd.s32 %s47, 1
      %s49 = scalar_select %p46, %s47, %s48
      %p52 = pneg %p46
      %p53 = scmp.eq.s32.totalorder %s16, 3
      %p54 = por %p52, %p53
      %p55 = scmp.ne.s32.totalorder %s47, %s50
      %p56 = scmp.eq.s32.totalorder %s16, 0
      %p57 = por %p55, %p56
      %p58 = scmp.ne.s32.totalorder %s47, %s50
      %p59 = scmp.eq.s32.totalorder %s21, 3
      %p60 = por %p58, %p59
      %p61 = scmp.ne.s32.totalorder %s50, %s51
      %p62 = scmp.eq.s32.totalorder %s21, 0
      %p63 = por %p61, %p62
      %p64 = scmp.ne.s32.totalorder %s50, %s51
      %p65 = scmp.eq.s32.totalorder %s22, 3
      %p66 = por %p64, %p65
      %p68 = scmp.ne.s32.totalorder %s51, %s67
      %p69 = scmp.eq.s32.totalorder %s22, 0
      %p70 = por %p68, %p69
      %s72 = sadd.s32 %s71, 1
      %p75 = scmp.eq.s32.totalorder %s16, 3
      %p76 = scmp.ne.s32.totalorder %s71, %s73
      %p77 = scmp.eq.s32.totalorder %s16, 0
      %p78 = por %p76, %p77
      %p79 = scmp.ne.s32.totalorder %s71, %s73
      %p80 = scmp.eq.s32.totalorder %s21, 3
      %p81 = por %p79, %p80
      %p82 = scmp.ne.s32.totalorder %s73, %s74
      %p83 = scmp.eq.s32.totalorder %s21, 0
      %p84 = por %p82, %p83
      %p85 = scmp.ne.s32.totalorder %s73, %s74
      %p86 = scmp.eq.s32.totalorder %s22, 3
      %p87 = por %p85, %p86
      %p89 = scmp.ne.s32.totalorder %s74, %s88
      %p90 = scmp.eq.s32.totalorder %s22, 0
      %p91 = por %p89, %p90
      %s93 = sadd.s32 %s92, 1
      %p96 = scmp.eq.s32.totalorder %s16, 3
      %p97 = scmp.ne.s32.totalorder %s92, %s94
      %p98 = scmp.eq.s32.totalorder %s16, 0
      %p99 = por %p97, %p98
      %p100 = scmp.ne.s32.totalorder %s92, %s94
      %p101 = scmp.eq.s32.totalorder %s21, 3
      %p102 = por %p100, %p101
      %p103 = scmp.ne.s32.totalorder %s94, %s95
      %p104 = scmp.eq.s32.totalorder %s21, 0
      %p105 = por %p103, %p104
      %p106 = scmp.ne.s32.totalorder %s94, %s95
      %p107 = scmp.eq.s32.totalorder %s22, 3
      %p108 = por %p106, %p107
      %p110 = scmp.ne.s32.totalorder %s95, %s109
      %p111 = scmp.eq.s32.totalorder %s22, 0
      %p112 = por %p110, %p111
      %s114 = sadd.s32 %s113, 1
      %p117 = scmp.eq.s32.totalorder %s16, 3
      %p118 = scmp.ne.s32.totalorder %s113, %s115
      %p119 = scmp.eq.s32.totalorder %s16, 0
      %p120 = por %p118, %p119
      %p121 = scmp.ne.s32.totalorder %s113, %s115
      %p122 = scmp.eq.s32.totalorder %s21, 3
      %p123 = por %p121, %p122
      %p124 = scmp.ne.s32.totalorder %s115, %s116
      %p125 = scmp.eq.s32.totalorder %s21, 0
      %p126 = por %p124, %p125
      %p127 = scmp.ne.s32.totalorder %s115, %s116
      %p128 = scmp.eq.s32.totalorder %s22, 3
      %p129 = por %p127, %p128
      %p131 = scmp.ne.s32.totalorder %s116, %s130
      %p132 = scmp.eq.s32.totalorder %s22, 0
      %p133 = por %p131, %p132
      %s134 = ssub.s32 %s16, %s23
      %p135 = scmp.eq.s32.totalorder %s134, 0
      %s137 = sadd.s32 %s136, 1
      %s138 = scalar_select %p135, %s136, %s137
      %p141 = pneg %p135
      %p142 = scmp.eq.s32.totalorder %s16, 3
      %p143 = por %p141, %p142
      %p144 = scmp.ne.s32.totalorder %s136, %s139
      %p145 = scmp.eq.s32.totalorder %s16, 0
      %p146 = por %p144, %p145
      %p147 = scmp.ne.s32.totalorder %s136, %s139
      %p148 = scmp.eq.s32.totalorder %s21, 3
      %p149 = por %p147, %p148
      %p150 = scmp.ne.s32.totalorder %s139, %s140
      %p151 = scmp.eq.s32.totalorder %s21, 0
      %p152 = por %p150, %p151
      %p153 = scmp.ne.s32.totalorder %s139, %s140
      %p154 = scmp.eq.s32.totalorder %s22, 3
      %p155 = por %p153, %p154
      %p157 = scmp.ne.s32.totalorder %s140, %s156
      %p158 = scmp.eq.s32.totalorder %s22, 0
      %p159 = por %p157, %p158
      %p160 = scmp.le.s32.totalorder 1, %s16
      %p161 = scmp.lt.s32.totalorder %s16, 5
      %p162 = pnand %p160, %p161
      %p163 = pneg %p162
      // Predicated region
      $region9: #{graphsaint_forward.2} parent=5 // pred_check
        _
      $region10: #{graphsaint_forward.2} parent=5 // pred_check_branch
        %165 = sbr.rel (%p162) target = $region12
      $region11: #{graphsaint_forward.2} parent=5 // pred_region
        %s166 = ssub.s32 %s16, 1
        // Predicated region
        $region13: #{graphsaint_forward.2} parent=11 // pred_check
          %p167 = pneg %p37
        $region14: #{graphsaint_forward.2} parent=11 // pred_check_branch
          %169 = sbr.rel (%p167) target = $region16
        $region15: #{graphsaint_forward.2} parent=11 // pred_region
          _
        $region16: #{graphsaint_forward.2} parent=11 // pred_fallthru
          _
        // Predicated region
        $region17: #{graphsaint_forward.2} parent=11 // pred_check
          %p170 = pneg %p84
        $region18: #{graphsaint_forward.2} parent=11 // pred_check_branch
          %172 = sbr.rel (%p170) target = $region20
        $region19: #{graphsaint_forward.2} parent=11 // pred_region
          %s174 = ssub.s32 128, 128
          %175 = vsyncadd [#allocation5], %s174
          %s176 = sshll.u32 [#allocation4], 4
          %s177 = int_to_ptr.vmem [resolvable:$true] %s176
          %182 = dma.hbm_to_vmem [thread:$0]  %s2, 128, %s177, [#allocation5], 64, 64, 4
        $region20: #{graphsaint_forward.2} parent=11 // pred_fallthru
          _
        // Predicated region
        $region21: #{graphsaint_forward.2} parent=11 // pred_check
          %p183 = pneg %p105
        $region22: #{graphsaint_forward.2} parent=11 // pred_check_branch
          %185 = sbr.rel (%p183) target = $region24
        $region23: #{graphsaint_forward.2} parent=11 // pred_region
          %s187 = ssub.s32 128, 128
          %188 = vsyncadd [#allocation5], %s187
          %s189 = sshll.u32 [#allocation6], 4
          %s190 = int_to_ptr.vmem [resolvable:$true] %s189
          %195 = dma.hbm_to_vmem [thread:$0]  %s3, 128, %s190, [#allocation5], 64, 64, 4
        $region24: #{graphsaint_forward.2} parent=11 // pred_fallthru
          _
        // Predicated region
        $region25: #{graphsaint_forward.2} parent=11 // pred_check
          %p196 = pneg %p126
        $region26: #{graphsaint_forward.2} parent=11 // pred_check_branch
          %198 = sbr.rel (%p196) target = $region28
        $region27: #{graphsaint_forward.2} parent=11 // pred_region
          %s200 = ssub.s32 64, 64
          %201 = vsyncadd [#allocation8], %s200
          %s203 = sshll.u32 [#allocation7], 4
          %s204 = int_to_ptr.vmem [resolvable:$true] %s203
          %206 = dma.hbm_to_vmem [thread:$0]  %s4, 64, %s204, [#allocation8]
        $region28: #{graphsaint_forward.2} parent=11 // pred_fallthru
          _
      $region12: #{graphsaint_forward.2} parent=5 // pred_fallthru
        _
      %p207 = scmp.lt.s32.totalorder %s16, 4
      // Predicated region
      $region29: #{graphsaint_forward.2} parent=5 // pred_check
        %p208 = pneg %p207
      $region30: #{graphsaint_forward.2} parent=5 // pred_check_branch
        %210 = sbr.rel (%p208) target = $region32
      $region31: #{graphsaint_forward.2} parent=5 // pred_region
        // Predicated region
        $region33: #{graphsaint_forward.2} parent=31 // pred_check
          %p211 = pneg %p57
        $region34: #{graphsaint_forward.2} parent=31 // pred_check_branch
          %213 = sbr.rel (%p211) target = $region36
        $region35: #{graphsaint_forward.2} parent=31 // pred_region
          %s214 = sand.u32 %s47, 1
          %s215 = scalar_lea.sflag [#allocation3], %s214
          %s216 = sand.u32 %s47, 1
          %s217 = smul.addr %s216, 1024
          %s218 = scalar_lea.vmem [#allocation2], %s217
          %s219 = smul.u32 32, %s16
          %s221 = ssub.s32 16384, 16384
          %222 = vsyncadd %s215, %s221
          %s223 = smul.addr %s219, 8
          %s224 = smul.addr %s223, 64
          %s225 = scalar_lea.hbm %s1, %s224
          %s226 = sshll.u32 %s218, 4
          %s227 = int_to_ptr.vmem [resolvable:$true] %s226
          %232 = dma.hbm_to_vmem [thread:$0]  %s225, 16384, %s227, %s215, 512, 512, 32
        $region36: #{graphsaint_forward.2} parent=31 // pred_fallthru
          _
      $region32: #{graphsaint_forward.2} parent=5 // pred_fallthru
        _
      %p233 = scmp.le.s32.totalorder 1, %s16
      %p234 = scmp.lt.s32.totalorder %s16, 5
      %p235 = pnand %p233, %p234
      %p236 = pneg %p235
      // Predicated region
      $region37: #{graphsaint_forward.2} parent=5 // pred_check
        _
      $region38: #{graphsaint_forward.2} parent=5 // pred_check_branch
        %238 = sbr.rel (%p235) target = $region40
      $region39: #{graphsaint_forward.2} parent=5 // pred_region
        %s239 = ssub.s32 %s16, 1
        %s240 = sand.u32 %s50, 1
        %s241 = scalar_lea.sflag [#allocation3], %s240
        %s242 = sand.u32 %s50, 1
        %s243 = smul.addr %s242, 1024
        %s244 = scalar_lea.vmem [#allocation2], %s243
        // Predicated region
        $region41: #{graphsaint_forward.2} parent=39 // pred_check
          %p245 = pneg %p63
        $region42: #{graphsaint_forward.2} parent=39 // pred_check_branch
          %247 = sbr.rel (%p245) target = $region44
        $region43: #{graphsaint_forward.2} parent=39 // pred_region
          %248 = dma.done %s241, 16384
        $region44: #{graphsaint_forward.2} parent=39 // pred_fallthru
          _
        // Predicated region
        $region45: #{graphsaint_forward.2} parent=39 // pred_check
          %p249 = pneg %p84
        $region46: #{graphsaint_forward.2} parent=39 // pred_check_branch
          %251 = sbr.rel (%p249) target = $region48
        $region47: #{graphsaint_forward.2} parent=39 // pred_region
          %252 = dma.done [#allocation5], 128
        $region48: #{graphsaint_forward.2} parent=39 // pred_fallthru
          _
        // Predicated region
        $region49: #{graphsaint_forward.2} parent=39 // pred_check
          %p253 = pneg %p105
        $region50: #{graphsaint_forward.2} parent=39 // pred_check_branch
          %255 = sbr.rel (%p253) target = $region52
        $region51: #{graphsaint_forward.2} parent=39 // pred_region
          %256 = dma.done [#allocation5], 128
        $region52: #{graphsaint_forward.2} parent=39 // pred_fallthru
          _
        // Predicated region
        $region53: #{graphsaint_forward.2} parent=39 // pred_check
          %p257 = pneg %p126
        $region54: #{graphsaint_forward.2} parent=39 // pred_check_branch
          %259 = sbr.rel (%p257) target = $region56
        $region55: #{graphsaint_forward.2} parent=39 // pred_region
          %260 = dma.done [#allocation8], 64
        $region56: #{graphsaint_forward.2} parent=39 // pred_fallthru
          _
        %p261 = pneg %p37
        %p262 = pneg %p34
        %s263 = sand.u32 %s50, 1
        %s264 = scalar_lea.sflag [#allocation3], %s263
        %s265 = sand.u32 %s50, 1
        %s266 = smul.addr %s265, 1024
        %s267 = scalar_lea.vmem [#allocation2], %s266
        %p268 = pneg %p63
        %p269 = pneg %p60
        %p270 = pneg %p84
        %p271 = pneg %p81
        %p272 = pneg %p105
        %p273 = pneg %p102
        %p274 = pneg %p126
        %p275 = pneg %p123
        %p276 = pneg %p152
        %p277 = pneg %p149
        %s278 = smul.u32 32, %s21
        %p279 = scmp.lt.s32.totalorder %s278, 127
        %s280 = scalar_select %p279, %s278, 127
        %s281 = smul.addr %s280, 4
        %s282 = scalar_lea.vmem %s5, %s281
        %s283 = smul.u32 32, %s21
        %s284 = smul.u32 32, %s21
        %p285 = scmp.lt.s32.totalorder %s284, 127
        %s286 = scalar_select %p285, %s284, 127
        %s287 = smul.addr %s286, 4
        %s288 = scalar_lea.vmem %s5, %s287
        %s289 = smul.u32 32, %s21
        %v291 = vld [vmem:[%s0] sm:$0xf]
        %v292 = vld [vmem:[%s0 + $0x4] sm:$0xf]
        %v293 = vld [vmem:[%s0 + $0x8] sm:$0xf]
        %v294 = vld [vmem:[%s0 + $0xc] sm:$0xf]
        %v295 = vld [vmem:[%s0 + $0x10] sm:$0xf]
        %v296 = vld [vmem:[%s0 + $0x14] sm:$0xf]
        %v297 = vld [vmem:[%s0 + $0x18] sm:$0xf]
        %v298 = vld [vmem:[%s0 + $0x1c] sm:$0xf]
        %v299 = vld [vmem:[%s0 + $0x20] sm:$0xf]
        %v300 = vld [vmem:[%s0 + $0x24] sm:$0xf]
        %v301 = vld [vmem:[%s0 + $0x28] sm:$0xf]
        %v302 = vld [vmem:[%s0 + $0x2c] sm:$0xf]
        %v303 = vld [vmem:[%s0 + $0x30] sm:$0xf]
        %v304 = vld [vmem:[%s0 + $0x34] sm:$0xf]
        %v305 = vld [vmem:[%s0 + $0x38] sm:$0xf]
        %v306 = vld [vmem:[%s0 + $0x3c] sm:$0xf]
        %v307 = vld [vmem:[%s0 + $0x40] sm:$0xf]
        %v308 = vld [vmem:[%s0 + $0x44] sm:$0xf]
        %v309 = vld [vmem:[%s0 + $0x48] sm:$0xf]
        %v310 = vld [vmem:[%s0 + $0x4c] sm:$0xf]
        %v311 = vld [vmem:[%s0 + $0x50] sm:$0xf]
        %v312 = vld [vmem:[%s0 + $0x54] sm:$0xf]
        %v313 = vld [vmem:[%s0 + $0x58] sm:$0xf]
        %v314 = vld [vmem:[%s0 + $0x5c] sm:$0xf]
        %v315 = vld [vmem:[%s0 + $0x60] sm:$0xf]
        %v316 = vld [vmem:[%s0 + $0x64] sm:$0xf]
        %v317 = vld [vmem:[%s0 + $0x68] sm:$0xf]
        %v318 = vld [vmem:[%s0 + $0x6c] sm:$0xf]
        %v319 = vld [vmem:[%s0 + $0x70] sm:$0xf]
        %v320 = vld [vmem:[%s0 + $0x74] sm:$0xf]
        %v321 = vld [vmem:[%s0 + $0x78] sm:$0xf]
        %v322 = vld [vmem:[%s0 + $0x7c] sm:$0xf]
        %v323 = vld [vmem:[%s0 + $0x80] sm:$0xf]
        %v324 = vld [vmem:[%s0 + $0x84] sm:$0xf]
        %v325 = vld [vmem:[%s0 + $0x88] sm:$0xf]
        %v326 = vld [vmem:[%s0 + $0x8c] sm:$0xf]
        %v327 = vld [vmem:[%s0 + $0x90] sm:$0xf]
        %v328 = vld [vmem:[%s0 + $0x94] sm:$0xf]
        %v329 = vld [vmem:[%s0 + $0x98] sm:$0xf]
        %v330 = vld [vmem:[%s0 + $0x9c] sm:$0xf]
        %v331 = vld [vmem:[%s0 + $0xa0] sm:$0xf]
        %v332 = vld [vmem:[%s0 + $0xa4] sm:$0xf]
        %v333 = vld [vmem:[%s0 + $0xa8] sm:$0xf]
        %v334 = vld [vmem:[%s0 + $0xac] sm:$0xf]
        %v335 = vld [vmem:[%s0 + $0xb0] sm:$0xf]
        %v336 = vld [vmem:[%s0 + $0xb4] sm:$0xf]
        %v337 = vld [vmem:[%s0 + $0xb8] sm:$0xf]
        %v338 = vld [vmem:[%s0 + $0xbc] sm:$0xf]
        %v339 = vld [vmem:[%s0 + $0xc0] sm:$0xf]
        %v340 = vld [vmem:[%s0 + $0xc4] sm:$0xf]
        %v341 = vld [vmem:[%s0 + $0xc8] sm:$0xf]
        %v342 = vld [vmem:[%s0 + $0xcc] sm:$0xf]
        %v343 = vld [vmem:[%s0 + $0xd0] sm:$0xf]
        %v344 = vld [vmem:[%s0 + $0xd4] sm:$0xf]
        %v345 = vld [vmem:[%s0 + $0xd8] sm:$0xf]
        %v346 = vld [vmem:[%s0 + $0xdc] sm:$0xf]
        %v347 = vld [vmem:[%s0 + $0xe0] sm:$0xf]
        %v348 = vld [vmem:[%s0 + $0xe4] sm:$0xf]
        %v349 = vld [vmem:[%s0 + $0xe8] sm:$0xf]
        %v350 = vld [vmem:[%s0 + $0xec] sm:$0xf]
        %v351 = vld [vmem:[%s0 + $0xf0] sm:$0xf]
        %v352 = vld [vmem:[%s0 + $0xf4] sm:$0xf]
        %v353 = vld [vmem:[%s0 + $0xf8] sm:$0xf]
        %v354 = vld [vmem:[%s0 + $0xfc] sm:$0xf]
        %v355 = vld [vmem:[%s0 + $0x100] sm:$0xf]
        %v356 = vld [vmem:[%s0 + $0x104] sm:$0xf]
        %v357 = vld [vmem:[%s0 + $0x108] sm:$0xf]
        %v358 = vld [vmem:[%s0 + $0x10c] sm:$0xf]
        %v359 = vld [vmem:[%s0 + $0x110] sm:$0xf]
        %v360 = vld [vmem:[%s0 + $0x114] sm:$0xf]
        %v361 = vld [vmem:[%s0 + $0x118] sm:$0xf]
        %v362 = vld [vmem:[%s0 + $0x11c] sm:$0xf]
        %v363 = vld [vmem:[%s0 + $0x120] sm:$0xf]
        %v364 = vld [vmem:[%s0 + $0x124] sm:$0xf]
        %v365 = vld [vmem:[%s0 + $0x128] sm:$0xf]
        %v366 = vld [vmem:[%s0 + $0x12c] sm:$0xf]
        %v367 = vld [vmem:[%s0 + $0x130] sm:$0xf]
        %v368 = vld [vmem:[%s0 + $0x134] sm:$0xf]
        %v369 = vld [vmem:[%s0 + $0x138] sm:$0xf]
        %v370 = vld [vmem:[%s0 + $0x13c] sm:$0xf]
        %v371 = vld [vmem:[%s0 + $0x140] sm:$0xf]
        %v372 = vld [vmem:[%s0 + $0x144] sm:$0xf]
        %v373 = vld [vmem:[%s0 + $0x148] sm:$0xf]
        %v374 = vld [vmem:[%s0 + $0x14c] sm:$0xf]
        %v375 = vld [vmem:[%s0 + $0x150] sm:$0xf]
        %v376 = vld [vmem:[%s0 + $0x154] sm:$0xf]
        %v377 = vld [vmem:[%s0 + $0x158] sm:$0xf]
        %v378 = vld [vmem:[%s0 + $0x15c] sm:$0xf]
        %v379 = vld [vmem:[%s0 + $0x160] sm:$0xf]
        %v380 = vld [vmem:[%s0 + $0x164] sm:$0xf]
        %v381 = vld [vmem:[%s0 + $0x168] sm:$0xf]
        %v382 = vld [vmem:[%s0 + $0x16c] sm:$0xf]
        %v383 = vld [vmem:[%s0 + $0x170] sm:$0xf]
        %v384 = vld [vmem:[%s0 + $0x174] sm:$0xf]
        %v385 = vld [vmem:[%s0 + $0x178] sm:$0xf]
        %v386 = vld [vmem:[%s0 + $0x17c] sm:$0xf]
        %v387 = vld [vmem:[%s0 + $0x180] sm:$0xf]
        %v388 = vld [vmem:[%s0 + $0x184] sm:$0xf]
        %v389 = vld [vmem:[%s0 + $0x188] sm:$0xf]
        %v390 = vld [vmem:[%s0 + $0x18c] sm:$0xf]
        %v391 = vld [vmem:[%s0 + $0x190] sm:$0xf]
        %v392 = vld [vmem:[%s0 + $0x194] sm:$0xf]
        %v393 = vld [vmem:[%s0 + $0x198] sm:$0xf]
        %v394 = vld [vmem:[%s0 + $0x19c] sm:$0xf]
        %v395 = vld [vmem:[%s0 + $0x1a0] sm:$0xf]
        %v396 = vld [vmem:[%s0 + $0x1a4] sm:$0xf]
        %v397 = vld [vmem:[%s0 + $0x1a8] sm:$0xf]
        %v398 = vld [vmem:[%s0 + $0x1ac] sm:$0xf]
        %v399 = vld [vmem:[%s0 + $0x1b0] sm:$0xf]
        %v400 = vld [vmem:[%s0 + $0x1b4] sm:$0xf]
        %v401 = vld [vmem:[%s0 + $0x1b8] sm:$0xf]
        %v402 = vld [vmem:[%s0 + $0x1bc] sm:$0xf]
        %v403 = vld [vmem:[%s0 + $0x1c0] sm:$0xf]
        %v404 = vld [vmem:[%s0 + $0x1c4] sm:$0xf]
        %v405 = vld [vmem:[%s0 + $0x1c8] sm:$0xf]
        %v406 = vld [vmem:[%s0 + $0x1cc] sm:$0xf]
        %v407 = vld [vmem:[%s0 + $0x1d0] sm:$0xf]
        %v408 = vld [vmem:[%s0 + $0x1d4] sm:$0xf]
        %v409 = vld [vmem:[%s0 + $0x1d8] sm:$0xf]
        %v410 = vld [vmem:[%s0 + $0x1dc] sm:$0xf]
        %v411 = vld [vmem:[%s0 + $0x1e0] sm:$0xf]
        %v412 = vld [vmem:[%s0 + $0x1e4] sm:$0xf]
        %v413 = vld [vmem:[%s0 + $0x1e8] sm:$0xf]
        %v414 = vld [vmem:[%s0 + $0x1ec] sm:$0xf]
        %v415 = vld [vmem:[%s0 + $0x1f0] sm:$0xf]
        %v416 = vld [vmem:[%s0 + $0x1f4] sm:$0xf]
        %v417 = vld [vmem:[%s0 + $0x1f8] sm:$0xf]
        %v418 = vld [vmem:[%s0 + $0x1fc] sm:$0xf]
        %v419 = vld [vmem:[#allocation6] sm:$0xf]
        %v420 = vld [vmem:[#allocation6 + $0x4] sm:$0xf]
        %v549 = vunpack.c.l.b16 %v291
        %v550 = vunpack.c.l.b16 %v292
        %v551 = vunpack.c.l.b16 %v293
        %v552 = vunpack.c.l.b16 %v294
        %v553 = vunpack.c.l.b16 %v295
        %v554 = vunpack.c.l.b16 %v296
        %v555 = vunpack.c.l.b16 %v297
        %v556 = vunpack.c.l.b16 %v298
        %v557 = vunpack.c.l.b16 %v299
        %v558 = vunpack.c.l.b16 %v300
        %v559 = vunpack.c.l.b16 %v301
        %v560 = vunpack.c.l.b16 %v302
        %v561 = vunpack.c.l.b16 %v303
        %v562 = vunpack.c.l.b16 %v304
        %v563 = vunpack.c.l.b16 %v305
        %v564 = vunpack.c.l.b16 %v306
        %v565 = vunpack.c.l.b16 %v307
        %v566 = vunpack.c.l.b16 %v308
        %v567 = vunpack.c.l.b16 %v309
        %v568 = vunpack.c.l.b16 %v310
        %v569 = vunpack.c.l.b16 %v311
        %v570 = vunpack.c.l.b16 %v312
        %v571 = vunpack.c.l.b16 %v313
        %v572 = vunpack.c.l.b16 %v314
        %v573 = vunpack.c.l.b16 %v315
        %v574 = vunpack.c.l.b16 %v316
        %v575 = vunpack.c.l.b16 %v317
        %v576 = vunpack.c.l.b16 %v318
        %v577 = vunpack.c.l.b16 %v319
        %v578 = vunpack.c.l.b16 %v320
        %v579 = vunpack.c.l.b16 %v321
        %v580 = vunpack.c.l.b16 %v322
        %v581 = vunpack.c.l.b16 %v323
        %v582 = vunpack.c.l.b16 %v324
        %v583 = vunpack.c.l.b16 %v325
        %v584 = vunpack.c.l.b16 %v326
        %v585 = vunpack.c.l.b16 %v327
        %v586 = vunpack.c.l.b16 %v328
        %v587 = vunpack.c.l.b16 %v329
        %v588 = vunpack.c.l.b16 %v330
        %v589 = vunpack.c.l.b16 %v331
        %v590 = vunpack.c.l.b16 %v332
        %v591 = vunpack.c.l.b16 %v333
        %v592 = vunpack.c.l.b16 %v334
        %v593 = vunpack.c.l.b16 %v335
        %v594 = vunpack.c.l.b16 %v336
        %v595 = vunpack.c.l.b16 %v337
        %v596 = vunpack.c.l.b16 %v338
        %v597 = vunpack.c.l.b16 %v339
        %v598 = vunpack.c.l.b16 %v340
        %v599 = vunpack.c.l.b16 %v341
        %v600 = vunpack.c.l.b16 %v342
        %v601 = vunpack.c.l.b16 %v343
        %v602 = vunpack.c.l.b16 %v344
        %v603 = vunpack.c.l.b16 %v345
        %v604 = vunpack.c.l.b16 %v346
        %v605 = vunpack.c.l.b16 %v347
        %v606 = vunpack.c.l.b16 %v348
        %v607 = vunpack.c.l.b16 %v349
        %v608 = vunpack.c.l.b16 %v350
        %v609 = vunpack.c.l.b16 %v351
        %v610 = vunpack.c.l.b16 %v352
        %v611 = vunpack.c.l.b16 %v353
        %v612 = vunpack.c.l.b16 %v354
        %v613 = vunpack.c.l.b16 %v355
        %v614 = vunpack.c.l.b16 %v356
        %v615 = vunpack.c.l.b16 %v357
        %v616 = vunpack.c.l.b16 %v358
        %v617 = vunpack.c.l.b16 %v359
        %v618 = vunpack.c.l.b16 %v360
        %v619 = vunpack.c.l.b16 %v361
        %v620 = vunpack.c.l.b16 %v362
        %v621 = vunpack.c.l.b16 %v363
        %v622 = vunpack.c.l.b16 %v364
        %v623 = vunpack.c.l.b16 %v365
        %v624 = vunpack.c.l.b16 %v366
        %v625 = vunpack.c.l.b16 %v367
        %v626 = vunpack.c.l.b16 %v368
        %v627 = vunpack.c.l.b16 %v369
        %v628 = vunpack.c.l.b16 %v370
        %v629 = vunpack.c.l.b16 %v371
        %v630 = vunpack.c.l.b16 %v372
        %v631 = vunpack.c.l.b16 %v373
        %v632 = vunpack.c.l.b16 %v374
        %v633 = vunpack.c.l.b16 %v375
        %v634 = vunpack.c.l.b16 %v376
        %v635 = vunpack.c.l.b16 %v377
        %v636 = vunpack.c.l.b16 %v378
        %v637 = vunpack.c.l.b16 %v379
        %v638 = vunpack.c.l.b16 %v380
        %v639 = vunpack.c.l.b16 %v381
        %v640 = vunpack.c.l.b16 %v382
        %v641 = vunpack.c.l.b16 %v383
        %v642 = vunpack.c.l.b16 %v384
        %v643 = vunpack.c.l.b16 %v385
        %v644 = vunpack.c.l.b16 %v386
        %v645 = vunpack.c.l.b16 %v387
        %v646 = vunpack.c.l.b16 %v388
        %v647 = vunpack.c.l.b16 %v389
        %v648 = vunpack.c.l.b16 %v390
        %v649 = vunpack.c.l.b16 %v391
        %v650 = vunpack.c.l.b16 %v392
        %v651 = vunpack.c.l.b16 %v393
        %v652 = vunpack.c.l.b16 %v394
        %v653 = vunpack.c.l.b16 %v395
        %v654 = vunpack.c.l.b16 %v396
        %v655 = vunpack.c.l.b16 %v397
        %v656 = vunpack.c.l.b16 %v398
        %v657 = vunpack.c.l.b16 %v399
        %v658 = vunpack.c.l.b16 %v400
        %v659 = vunpack.c.l.b16 %v401
        %v660 = vunpack.c.l.b16 %v402
        %v661 = vunpack.c.l.b16 %v403
        %v662 = vunpack.c.l.b16 %v404
        %v663 = vunpack.c.l.b16 %v405
        %v664 = vunpack.c.l.b16 %v406
        %v665 = vunpack.c.l.b16 %v407
        %v666 = vunpack.c.l.b16 %v408
        %v667 = vunpack.c.l.b16 %v409
        %v668 = vunpack.c.l.b16 %v410
        %v669 = vunpack.c.l.b16 %v411
        %v670 = vunpack.c.l.b16 %v412
        %v671 = vunpack.c.l.b16 %v413
        %v672 = vunpack.c.l.b16 %v414
        %v673 = vunpack.c.l.b16 %v415
        %v674 = vunpack.c.l.b16 %v416
        %v675 = vunpack.c.l.b16 %v417
        %v676 = vunpack.c.l.b16 %v418
        %v677 = vpack.c.b16 %v550, %v549
        %v678 = vpack.c.b16 %v552, %v551
        %v679 = vpack.c.b16 %v554, %v553
        %v680 = vpack.c.b16 %v556, %v555
        %v681 = vpack.c.b16 %v558, %v557
        %v682 = vpack.c.b16 %v560, %v559
        %v683 = vpack.c.b16 %v562, %v561
        %v684 = vpack.c.b16 %v564, %v563
        %v685 = vpack.c.b16 %v566, %v565
        %v686 = vpack.c.b16 %v568, %v567
        %v687 = vpack.c.b16 %v570, %v569
        %v688 = vpack.c.b16 %v572, %v571
        %v689 = vpack.c.b16 %v574, %v573
        %v690 = vpack.c.b16 %v576, %v575
        %v691 = vpack.c.b16 %v578, %v577
        %v692 = vpack.c.b16 %v580, %v579
        %v693 = vpack.c.b16 %v582, %v581
        %v694 = vpack.c.b16 %v584, %v583
        %v695 = vpack.c.b16 %v586, %v585
        %v696 = vpack.c.b16 %v588, %v587
        %v697 = vpack.c.b16 %v590, %v589
        %v698 = vpack.c.b16 %v592, %v591
        %v699 = vpack.c.b16 %v594, %v593
        %v700 = vpack.c.b16 %v596, %v595
        %v701 = vpack.c.b16 %v598, %v597
        %v702 = vpack.c.b16 %v600, %v599
        %v703 = vpack.c.b16 %v602, %v601
        %v704 = vpack.c.b16 %v604, %v603
        %v705 = vpack.c.b16 %v606, %v605
        %v706 = vpack.c.b16 %v608, %v607
        %v707 = vpack.c.b16 %v610, %v609
        %v708 = vpack.c.b16 %v612, %v611
        %v709 = vpack.c.b16 %v614, %v613
        %v710 = vpack.c.b16 %v616, %v615
        %v711 = vpack.c.b16 %v618, %v617
        %v712 = vpack.c.b16 %v620, %v619
        %v713 = vpack.c.b16 %v622, %v621
        %v714 = vpack.c.b16 %v624, %v623
        %v715 = vpack.c.b16 %v626, %v625
        %v716 = vpack.c.b16 %v628, %v627
        %v717 = vpack.c.b16 %v630, %v629
        %v718 = vpack.c.b16 %v632, %v631
        %v719 = vpack.c.b16 %v634, %v633
        %v720 = vpack.c.b16 %v636, %v635
        %v721 = vpack.c.b16 %v638, %v637
        %v722 = vpack.c.b16 %v640, %v639
        %v723 = vpack.c.b16 %v642, %v641
        %v724 = vpack.c.b16 %v644, %v643
        %v725 = vpack.c.b16 %v646, %v645
        %v726 = vpack.c.b16 %v648, %v647
        %v727 = vpack.c.b16 %v650, %v649
        %v728 = vpack.c.b16 %v652, %v651
        %v729 = vpack.c.b16 %v654, %v653
        %v730 = vpack.c.b16 %v656, %v655
        %v731 = vpack.c.b16 %v658, %v657
        %v732 = vpack.c.b16 %v660, %v659
        %v733 = vpack.c.b16 %v662, %v661
        %v734 = vpack.c.b16 %v664, %v663
        %v735 = vpack.c.b16 %v666, %v665
        %v736 = vpack.c.b16 %v668, %v667
        %v737 = vpack.c.b16 %v670, %v669
        %v738 = vpack.c.b16 %v672, %v671
        %v739 = vpack.c.b16 %v674, %v673
        %v740 = vpack.c.b16 %v676, %v675
        %v743 = vunpack.c.l.b16 %v419
        %v744 = vunpack.c.l.b16 %v420
        %v745 = vpack.c.b16 %v744, %v743
        %vm747 = vcmask 130048
        %v749 = vsel %vm747, %v677, 0
        %v752 = vsel %vm747, %v678, 0
        %v755 = vsel %vm747, %v679, 0
        %v758 = vsel %vm747, %v680, 0
        %v761 = vsel %vm747, %v681, 0
        %v764 = vsel %vm747, %v682, 0
        %v767 = vsel %vm747, %v683, 0
        %v770 = vsel %vm747, %v684, 0
        %v773 = vsel %vm747, %v685, 0
        %v776 = vsel %vm747, %v686, 0
        %v779 = vsel %vm747, %v687, 0
        %v782 = vsel %vm747, %v688, 0
        %v785 = vsel %vm747, %v689, 0
        %v788 = vsel %vm747, %v690, 0
        %v791 = vsel %vm747, %v691, 0
        %v794 = vsel %vm747, %v692, 0
        %v797 = vsel %vm747, %v693, 0
        %v800 = vsel %vm747, %v694, 0
        %v803 = vsel %vm747, %v695, 0
        %v806 = vsel %vm747, %v696, 0
        %v809 = vsel %vm747, %v697, 0
        %v812 = vsel %vm747, %v698, 0
        %v815 = vsel %vm747, %v699, 0
        %v818 = vsel %vm747, %v700, 0
        %v821 = vsel %vm747, %v701, 0
        %v824 = vsel %vm747, %v702, 0
        %v827 = vsel %vm747, %v703, 0
        %v830 = vsel %vm747, %v704, 0
        %v833 = vsel %vm747, %v705, 0
        %v836 = vsel %vm747, %v706, 0
        %v839 = vsel %vm747, %v707, 0
        %v842 = vsel %vm747, %v708, 0
        %v845 = vsel %vm747, %v709, 0
        %v848 = vsel %vm747, %v710, 0
        %v851 = vsel %vm747, %v711, 0
        %v854 = vsel %vm747, %v712, 0
        %v857 = vsel %vm747, %v713, 0
        %v860 = vsel %vm747, %v714, 0
        %v863 = vsel %vm747, %v715, 0
        %v866 = vsel %vm747, %v716, 0
        %v869 = vsel %vm747, %v717, 0
        %v872 = vsel %vm747, %v718, 0
        %v875 = vsel %vm747, %v719, 0
        %v878 = vsel %vm747, %v720, 0
        %v881 = vsel %vm747, %v721, 0
        %v884 = vsel %vm747, %v722, 0
        %v887 = vsel %vm747, %v723, 0
        %v890 = vsel %vm747, %v724, 0
        %v893 = vsel %vm747, %v725, 0
        %v896 = vsel %vm747, %v726, 0
        %v899 = vsel %vm747, %v727, 0
        %v902 = vsel %vm747, %v728, 0
        %v905 = vsel %vm747, %v729, 0
        %v908 = vsel %vm747, %v730, 0
        %v911 = vsel %vm747, %v731, 0
        %v914 = vsel %vm747, %v732, 0
        %v917 = vsel %vm747, %v733, 0
        %v920 = vsel %vm747, %v734, 0
        %v923 = vsel %vm747, %v735, 0
        %v926 = vsel %vm747, %v736, 0
        %v929 = vsel %vm747, %v737, 0
        %v932 = vsel %vm747, %v738, 0
        %v935 = vsel %vm747, %v739, 0
        %v938 = vsel %vm747, %v740, 0
        %940 = vmatprep.subr.bf16.mxu0 0
        %941 = vmatpush1.bf16.msra.mxu0 0
        %942 = vmatprep.subr.bf16.mxu0 0
        %943 = vmatpush1.bf16.msra.mxu0 0
        %944 = vmatprep.subr.bf16.mxu0 0
        %945 = vmatpush1.bf16.msra.mxu0 0
        %946 = vmatprep.subr.bf16.mxu0 0
        %947 = vmatpush1.bf16.msra.mxu0 0
        %948 = vmatprep.subr.bf16.mxu0 0
        %949 = vmatpush1.bf16.msra.mxu0 0
        %950 = vmatprep.subr.bf16.mxu0 0
        %951 = vmatpush1.bf16.msra.mxu0 0
        %952 = vmatprep.subr.bf16.mxu0 0
        %953 = vmatpush1.bf16.msra.mxu0 0
        %954 = vmatprep.subr.bf16.mxu0 0
        %955 = vmatpush1.bf16.msra.mxu0 %v745
        %956 = vmatprep.subr.bf16.mxu0 0
        %957 = vmatpush2.bf16.msra.mxu0 0
        %958 = vmatprep.subr.bf16.mxu0 0
        %959 = vmatpush2.bf16.msra.mxu0 0
        %960 = vmatprep.subr.bf16.mxu0 0
        %961 = vmatpush2.bf16.msra.mxu0 0
        %962 = vmatprep.subr.bf16.mxu0 0
        %963 = vmatpush2.bf16.msra.mxu0 0
        %964 = vmatprep.subr.bf16.mxu0 0
        %965 = vmatpush2.bf16.msra.mxu0 0
        %966 = vmatprep.subr.bf16.mxu0 0
        %967 = vmatpush2.bf16.msra.mxu0 0
        %968 = vmatprep.subr.bf16.mxu0 0
        %969 = vmatpush2.bf16.msra.mxu0 0
        %970 = vmatprep.subr.bf16.mxu0 0
        %971 = vmatpush2.bf16.msra.mxu0 0
        %972 = vmatprep.mubr.bf16.mxu0 0
        %973 = vmatmul.mubr.bf16.gmra.mxu0 %v749
        %v974 = vpop.f32.mrf.mxu0
        %v975 = vadd.f32 0.0, %v974
        %v976 = vpop.f32.mrf.mxu0
        %v977 = vpop.f32.mrf.mxu0
        %v978 = vadd.f32 0.0, %v977
        %v979 = vpop.f32.mrf.mxu0
        %980 = vmatprep.mubr.bf16.mxu0 0
        %981 = vmatmul.mubr.bf16.gmra.mxu0 %v752
        %v982 = vpop.f32.mrf.mxu0
        %v983 = vadd.f32 0.0, %v982
        %v984 = vpop.f32.mrf.mxu0
        %v985 = vpop.f32.mrf.mxu0
        %v986 = vadd.f32 0.0, %v985
        %v987 = vpop.f32.mrf.mxu0
        %988 = vmatprep.mubr.bf16.mxu0 0
        %989 = vmatmul.mubr.bf16.gmra.mxu0 %v755
        %v990 = vpop.f32.mrf.mxu0
        %v991 = vadd.f32 0.0, %v990
        %v992 = vpop.f32.mrf.mxu0
        %v993 = vpop.f32.mrf.mxu0
        %v994 = vadd.f32 0.0, %v993
        %v995 = vpop.f32.mrf.mxu0
        %996 = vmatprep.mubr.bf16.mxu0 0
        %997 = vmatmul.mubr.bf16.gmra.mxu0 %v758
        %v998 = vpop.f32.mrf.mxu0
        %v999 = vadd.f32 0.0, %v998
        %v1000 = vpop.f32.mrf.mxu0
        %v1001 = vpop.f32.mrf.mxu0
        %v1002 = vadd.f32 0.0, %v1001
        %v1003 = vpop.f32.mrf.mxu0
        %1004 = vmatprep.mubr.bf16.mxu0 0
        %1005 = vmatmul.mubr.bf16.gmra.mxu0 %v761
        %v1006 = vpop.f32.mrf.mxu0
        %v1007 = vadd.f32 0.0, %v1006
        %v1008 = vpop.f32.mrf.mxu0
        %v1009 = vpop.f32.mrf.mxu0
        %v1010 = vadd.f32 0.0, %v1009
        %v1011 = vpop.f32.mrf.mxu0
        %1012 = vmatprep.mubr.bf16.mxu0 0
        %1013 = vmatmul.mubr.bf16.gmra.mxu0 %v764
        %v1014 = vpop.f32.mrf.mxu0
        %v1015 = vadd.f32 0.0, %v1014
        %v1016 = vpop.f32.mrf.mxu0
        %v1017 = vpop.f32.mrf.mxu0
        %v1018 = vadd.f32 0.0, %v1017
        %v1019 = vpop.f32.mrf.mxu0
        %1020 = vmatprep.mubr.bf16.mxu0 0
        %1021 = vmatmul.mubr.bf16.gmra.mxu0 %v767
        %v1022 = vpop.f32.mrf.mxu0
        %v1023 = vadd.f32 0.0, %v1022
        %v1024 = vpop.f32.mrf.mxu0
        %v1025 = vpop.f32.mrf.mxu0
        %v1026 = vadd.f32 0.0, %v1025
        %v1027 = vpop.f32.mrf.mxu0
        %1028 = vmatprep.mubr.bf16.mxu0 0
        %1029 = vmatmul.mubr.bf16.gmra.mxu0 %v770
        %v1030 = vpop.f32.mrf.mxu0
        %v1031 = vadd.f32 0.0, %v1030
        %v1032 = vpop.f32.mrf.mxu0
        %v1033 = vpop.f32.mrf.mxu0
        %v1034 = vadd.f32 0.0, %v1033
        %v1035 = vpop.f32.mrf.mxu0
        %1036 = vmatprep.mubr.bf16.mxu0 0
        %1037 = vmatmul.mubr.bf16.gmra.mxu0 %v773
        %v1038 = vpop.f32.mrf.mxu0
        %v1039 = vadd.f32 0.0, %v1038
        %v1040 = vpop.f32.mrf.mxu0
        %v1041 = vpop.f32.mrf.mxu0
        %v1042 = vadd.f32 0.0, %v1041
        %v1043 = vpop.f32.mrf.mxu0
        %1044 = vmatprep.mubr.bf16.mxu0 0
        %1045 = vmatmul.mubr.bf16.gmra.mxu0 %v776
        %v1046 = vpop.f32.mrf.mxu0
        %v1047 = vadd.f32 0.0, %v1046
        %v1048 = vpop.f32.mrf.mxu0
        %v1049 = vpop.f32.mrf.mxu0
        %v1050 = vadd.f32 0.0, %v1049
        %v1051 = vpop.f32.mrf.mxu0
        %1052 = vmatprep.mubr.bf16.mxu0 0
        %1053 = vmatmul.mubr.bf16.gmra.mxu0 %v779
        %v1054 = vpop.f32.mrf.mxu0
        %v1055 = vadd.f32 0.0, %v1054
        %v1056 = vpop.f32.mrf.mxu0
        %v1057 = vpop.f32.mrf.mxu0
        %v1058 = vadd.f32 0.0, %v1057
        %v1059 = vpop.f32.mrf.mxu0
        %1060 = vmatprep.mubr.bf16.mxu0 0
        %1061 = vmatmul.mubr.bf16.gmra.mxu0 %v782
        %v1062 = vpop.f32.mrf.mxu0
        %v1063 = vadd.f32 0.0, %v1062
        %v1064 = vpop.f32.mrf.mxu0
        %v1065 = vpop.f32.mrf.mxu0
        %v1066 = vadd.f32 0.0, %v1065
        %v1067 = vpop.f32.mrf.mxu0
        %1068 = vmatprep.mubr.bf16.mxu0 0
        %1069 = vmatmul.mubr.bf16.gmra.mxu0 %v785
        %v1070 = vpop.f32.mrf.mxu0
        %v1071 = vadd.f32 0.0, %v1070
        %v1072 = vpop.f32.mrf.mxu0
        %v1073 = vpop.f32.mrf.mxu0
        %v1074 = vadd.f32 0.0, %v1073
        %v1075 = vpop.f32.mrf.mxu0
        %1076 = vmatprep.mubr.bf16.mxu0 0
        %1077 = vmatmul.mubr.bf16.gmra.mxu0 %v788
        %v1078 = vpop.f32.mrf.mxu0
        %v1079 = vadd.f32 0.0, %v1078
        %v1080 = vpop.f32.mrf.mxu0
        %v1081 = vpop.f32.mrf.mxu0
        %v1082 = vadd.f32 0.0, %v1081
        %v1083 = vpop.f32.mrf.mxu0
        %1084 = vmatprep.mubr.bf16.mxu0 0
        %1085 = vmatmul.mubr.bf16.gmra.mxu0 %v791
        %v1086 = vpop.f32.mrf.mxu0
        %v1087 = vadd.f32 0.0, %v1086
        %v1088 = vpop.f32.mrf.mxu0
        %v1089 = vpop.f32.mrf.mxu0
        %v1090 = vadd.f32 0.0, %v1089
        %v1091 = vpop.f32.mrf.mxu0
        %1092 = vmatprep.mubr.bf16.mxu0 0
        %1093 = vmatmul.mubr.bf16.gmra.mxu0 %v794
        %v1094 = vpop.f32.mrf.mxu0
        %v1095 = vadd.f32 0.0, %v1094
        %v1096 = vpop.f32.mrf.mxu0
        %v1097 = vpop.f32.mrf.mxu0
        %v1098 = vadd.f32 0.0, %v1097
        %v1099 = vpop.f32.mrf.mxu0
        %1100 = vmatprep.mubr.bf16.mxu0 0
        %1101 = vmatmul.mubr.bf16.gmra.mxu0 %v797
        %v1102 = vpop.f32.mrf.mxu0
        %v1103 = vadd.f32 0.0, %v1102
        %v1104 = vpop.f32.mrf.mxu0
        %v1105 = vpop.f32.mrf.mxu0
        %v1106 = vadd.f32 0.0, %v1105
        %v1107 = vpop.f32.mrf.mxu0
        %1108 = vmatprep.mubr.bf16.mxu0 0
        %1109 = vmatmul.mubr.bf16.gmra.mxu0 %v800
        %v1110 = vpop.f32.mrf.mxu0
        %v1111 = vadd.f32 0.0, %v1110
        %v1112 = vpop.f32.mrf.mxu0
        %v1113 = vpop.f32.mrf.mxu0
        %v1114 = vadd.f32 0.0, %v1113
        %v1115 = vpop.f32.mrf.mxu0
        %1116 = vmatprep.mubr.bf16.mxu0 0
        %1117 = vmatmul.mubr.bf16.gmra.mxu0 %v803
        %v1118 = vpop.f32.mrf.mxu0
        %v1119 = vadd.f32 0.0, %v1118
        %v1120 = vpop.f32.mrf.mxu0
        %v1121 = vpop.f32.mrf.mxu0
        %v1122 = vadd.f32 0.0, %v1121
        %v1123 = vpop.f32.mrf.mxu0
        %1124 = vmatprep.mubr.bf16.mxu0 0
        %1125 = vmatmul.mubr.bf16.gmra.mxu0 %v806
        %v1126 = vpop.f32.mrf.mxu0
        %v1127 = vadd.f32 0.0, %v1126
        %v1128 = vpop.f32.mrf.mxu0
        %v1129 = vpop.f32.mrf.mxu0
        %v1130 = vadd.f32 0.0, %v1129
        %v1131 = vpop.f32.mrf.mxu0
        %1132 = vmatprep.mubr.bf16.mxu0 0
        %1133 = vmatmul.mubr.bf16.gmra.mxu0 %v809
        %v1134 = vpop.f32.mrf.mxu0
        %v1135 = vadd.f32 0.0, %v1134
        %v1136 = vpop.f32.mrf.mxu0
        %v1137 = vpop.f32.mrf.mxu0
        %v1138 = vadd.f32 0.0, %v1137
        %v1139 = vpop.f32.mrf.mxu0
        %1140 = vmatprep.mubr.bf16.mxu0 0
        %1141 = vmatmul.mubr.bf16.gmra.mxu0 %v812
        %v1142 = vpop.f32.mrf.mxu0
        %v1143 = vadd.f32 0.0, %v1142
        %v1144 = vpop.f32.mrf.mxu0
        %v1145 = vpop.f32.mrf.mxu0
        %v1146 = vadd.f32 0.0, %v1145
        %v1147 = vpop.f32.mrf.mxu0
        %1148 = vmatprep.mubr.bf16.mxu0 0
        %1149 = vmatmul.mubr.bf16.gmra.mxu0 %v815
        %v1150 = vpop.f32.mrf.mxu0
        %v1151 = vadd.f32 0.0, %v1150
        %v1152 = vpop.f32.mrf.mxu0
        %v1153 = vpop.f32.mrf.mxu0
        %v1154 = vadd.f32 0.0, %v1153
        %v1155 = vpop.f32.mrf.mxu0
        %1156 = vmatprep.mubr.bf16.mxu0 0
        %1157 = vmatmul.mubr.bf16.gmra.mxu0 %v818
        %v1158 = vpop.f32.mrf.mxu0
        %v1159 = vadd.f32 0.0, %v1158
        %v1160 = vpop.f32.mrf.mxu0
        %v1161 = vpop.f32.mrf.mxu0
        %v1162 = vadd.f32 0.0, %v1161
        %v1163 = vpop.f32.mrf.mxu0
        %1164 = vmatprep.mubr.bf16.mxu0 0
        %1165 = vmatmul.mubr.bf16.gmra.mxu0 %v821
        %v1166 = vpop.f32.mrf.mxu0
        %v1167 = vadd.f32 0.0, %v1166
        %v1168 = vpop.f32.mrf.mxu0
        %v1169 = vpop.f32.mrf.mxu0
        %v1170 = vadd.f32 0.0, %v1169
        %v1171 = vpop.f32.mrf.mxu0
        %1172 = vmatprep.mubr.bf16.mxu0 0
        %1173 = vmatmul.mubr.bf16.gmra.mxu0 %v824
        %v1174 = vpop.f32.mrf.mxu0
        %v1175 = vadd.f32 0.0, %v1174
        %v1176 = vpop.f32.mrf.mxu0
        %v1177 = vpop.f32.mrf.mxu0
        %v1178 = vadd.f32 0.0, %v1177
        %v1179 = vpop.f32.mrf.mxu0
        %1180 = vmatprep.mubr.bf16.mxu0 0
        %1181 = vmatmul.mubr.bf16.gmra.mxu0 %v827
        %v1182 = vpop.f32.mrf.mxu0
        %v1183 = vadd.f32 0.0, %v1182
        %v1184 = vpop.f32.mrf.mxu0
        %v1185 = vpop.f32.mrf.mxu0
        %v1186 = vadd.f32 0.0, %v1185
        %v1187 = vpop.f32.mrf.mxu0
        %1188 = vmatprep.mubr.bf16.mxu0 0
        %1189 = vmatmul.mubr.bf16.gmra.mxu0 %v830
        %v1190 = vpop.f32.mrf.mxu0
        %v1191 = vadd.f32 0.0, %v1190
        %v1192 = vpop.f32.mrf.mxu0
        %v1193 = vpop.f32.mrf.mxu0
        %v1194 = vadd.f32 0.0, %v1193
        %v1195 = vpop.f32.mrf.mxu0
        %1196 = vmatprep.mubr.bf16.mxu0 0
        %1197 = vmatmul.mubr.bf16.gmra.mxu0 %v833
        %v1198 = vpop.f32.mrf.mxu0
        %v1199 = vadd.f32 0.0, %v1198
        %v1200 = vpop.f32.mrf.mxu0
        %v1201 = vpop.f32.mrf.mxu0
        %v1202 = vadd.f32 0.0, %v1201
        %v1203 = vpop.f32.mrf.mxu0
        %1204 = vmatprep.mubr.bf16.mxu0 0
        %1205 = vmatmul.mubr.bf16.gmra.mxu0 %v836
        %v1206 = vpop.f32.mrf.mxu0
        %v1207 = vadd.f32 0.0, %v1206
        %v1208 = vpop.f32.mrf.mxu0
        %v1209 = vpop.f32.mrf.mxu0
        %v1210 = vadd.f32 0.0, %v1209
        %v1211 = vpop.f32.mrf.mxu0
        %1212 = vmatprep.mubr.bf16.mxu0 0
        %1213 = vmatmul.mubr.bf16.gmra.mxu0 %v839
        %v1214 = vpop.f32.mrf.mxu0
        %v1215 = vadd.f32 0.0, %v1214
        %v1216 = vpop.f32.mrf.mxu0
        %v1217 = vpop.f32.mrf.mxu0
        %v1218 = vadd.f32 0.0, %v1217
        %v1219 = vpop.f32.mrf.mxu0
        %1220 = vmatprep.mubr.bf16.mxu0 0
        %1221 = vmatmul.mubr.bf16.gmra.mxu0 %v842
        %v1222 = vpop.f32.mrf.mxu0
        %v1223 = vadd.f32 0.0, %v1222
        %v1224 = vpop.f32.mrf.mxu0
        %v1225 = vpop.f32.mrf.mxu0
        %v1226 = vadd.f32 0.0, %v1225
        %v1227 = vpop.f32.mrf.mxu0
        %1228 = vmatprep.mubr.bf16.mxu0 0
        %1229 = vmatmul.mubr.bf16.gmra.mxu0 %v845
        %v1230 = vpop.f32.mrf.mxu0
        %v1231 = vadd.f32 0.0, %v1230
        %v1232 = vpop.f32.mrf.mxu0
        %v1233 = vpop.f32.mrf.mxu0
        %v1234 = vadd.f32 0.0, %v1233
        %v1235 = vpop.f32.mrf.mxu0
        %1236 = vmatprep.mubr.bf16.mxu0 0
        %1237 = vmatmul.mubr.bf16.gmra.mxu0 %v848
        %v1238 = vpop.f32.mrf.mxu0
        %v1239 = vadd.f32 0.0, %v1238
        %v1240 = vpop.f32.mrf.mxu0
        %v1241 = vpop.f32.mrf.mxu0
        %v1242 = vadd.f32 0.0, %v1241
        %v1243 = vpop.f32.mrf.mxu0
        %1244 = vmatprep.mubr.bf16.mxu0 0
        %1245 = vmatmul.mubr.bf16.gmra.mxu0 %v851
        %v1246 = vpop.f32.mrf.mxu0
        %v1247 = vadd.f32 0.0, %v1246
        %v1248 = vpop.f32.mrf.mxu0
        %v1249 = vpop.f32.mrf.mxu0
        %v1250 = vadd.f32 0.0, %v1249
        %v1251 = vpop.f32.mrf.mxu0
        %1252 = vmatprep.mubr.bf16.mxu0 0
        %1253 = vmatmul.mubr.bf16.gmra.mxu0 %v854
        %v1254 = vpop.f32.mrf.mxu0
        %v1255 = vadd.f32 0.0, %v1254
        %v1256 = vpop.f32.mrf.mxu0
        %v1257 = vpop.f32.mrf.mxu0
        %v1258 = vadd.f32 0.0, %v1257
        %v1259 = vpop.f32.mrf.mxu0
        %1260 = vmatprep.mubr.bf16.mxu0 0
        %1261 = vmatmul.mubr.bf16.gmra.mxu0 %v857
        %v1262 = vpop.f32.mrf.mxu0
        %v1263 = vadd.f32 0.0, %v1262
        %v1264 = vpop.f32.mrf.mxu0
        %v1265 = vpop.f32.mrf.mxu0
        %v1266 = vadd.f32 0.0, %v1265
        %v1267 = vpop.f32.mrf.mxu0
        %1268 = vmatprep.mubr.bf16.mxu0 0
        %1269 = vmatmul.mubr.bf16.gmra.mxu0 %v860
        %v1270 = vpop.f32.mrf.mxu0
        %v1271 = vadd.f32 0.0, %v1270
        %v1272 = vpop.f32.mrf.mxu0
        %v1273 = vpop.f32.mrf.mxu0
        %v1274 = vadd.f32 0.0, %v1273
        %v1275 = vpop.f32.mrf.mxu0
        %1276 = vmatprep.mubr.bf16.mxu0 0
        %1277 = vmatmul.mubr.bf16.gmra.mxu0 %v863
        %v1278 = vpop.f32.mrf.mxu0
        %v1279 = vadd.f32 0.0, %v1278
        %v1280 = vpop.f32.mrf.mxu0
        %v1281 = vpop.f32.mrf.mxu0
        %v1282 = vadd.f32 0.0, %v1281
        %v1283 = vpop.f32.mrf.mxu0
        %1284 = vmatprep.mubr.bf16.mxu0 0
        %1285 = vmatmul.mubr.bf16.gmra.mxu0 %v866
        %v1286 = vpop.f32.mrf.mxu0
        %v1287 = vadd.f32 0.0, %v1286
        %v1288 = vpop.f32.mrf.mxu0
        %v1289 = vpop.f32.mrf.mxu0
        %v1290 = vadd.f32 0.0, %v1289
        %v1291 = vpop.f32.mrf.mxu0
        %1292 = vmatprep.mubr.bf16.mxu0 0
        %1293 = vmatmul.mubr.bf16.gmra.mxu0 %v869
        %v1294 = vpop.f32.mrf.mxu0
        %v1295 = vadd.f32 0.0, %v1294
        %v1296 = vpop.f32.mrf.mxu0
        %v1297 = vpop.f32.mrf.mxu0
        %v1298 = vadd.f32 0.0, %v1297
        %v1299 = vpop.f32.mrf.mxu0
        %1300 = vmatprep.mubr.bf16.mxu0 0
        %1301 = vmatmul.mubr.bf16.gmra.mxu0 %v872
        %v1302 = vpop.f32.mrf.mxu0
        %v1303 = vadd.f32 0.0, %v1302
        %v1304 = vpop.f32.mrf.mxu0
        %v1305 = vpop.f32.mrf.mxu0
        %v1306 = vadd.f32 0.0, %v1305
        %v1307 = vpop.f32.mrf.mxu0
        %1308 = vmatprep.mubr.bf16.mxu0 0
        %1309 = vmatmul.mubr.bf16.gmra.mxu0 %v875
        %v1310 = vpop.f32.mrf.mxu0
        %v1311 = vadd.f32 0.0, %v1310
        %v1312 = vpop.f32.mrf.mxu0
        %v1313 = vpop.f32.mrf.mxu0
        %v1314 = vadd.f32 0.0, %v1313
        %v1315 = vpop.f32.mrf.mxu0
        %1316 = vmatprep.mubr.bf16.mxu0 0
        %1317 = vmatmul.mubr.bf16.gmra.mxu0 %v878
        %v1318 = vpop.f32.mrf.mxu0
        %v1319 = vadd.f32 0.0, %v1318
        %v1320 = vpop.f32.mrf.mxu0
        %v1321 = vpop.f32.mrf.mxu0
        %v1322 = vadd.f32 0.0, %v1321
        %v1323 = vpop.f32.mrf.mxu0
        %1324 = vmatprep.mubr.bf16.mxu0 0
        %1325 = vmatmul.mubr.bf16.gmra.mxu0 %v881
        %v1326 = vpop.f32.mrf.mxu0
        %v1327 = vadd.f32 0.0, %v1326
        %v1328 = vpop.f32.mrf.mxu0
        %v1329 = vpop.f32.mrf.mxu0
        %v1330 = vadd.f32 0.0, %v1329
        %v1331 = vpop.f32.mrf.mxu0
        %1332 = vmatprep.mubr.bf16.mxu0 0
        %1333 = vmatmul.mubr.bf16.gmra.mxu0 %v884
        %v1334 = vpop.f32.mrf.mxu0
        %v1335 = vadd.f32 0.0, %v1334
        %v1336 = vpop.f32.mrf.mxu0
        %v1337 = vpop.f32.mrf.mxu0
        %v1338 = vadd.f32 0.0, %v1337
        %v1339 = vpop.f32.mrf.mxu0
        %1340 = vmatprep.mubr.bf16.mxu0 0
        %1341 = vmatmul.mubr.bf16.gmra.mxu0 %v887
        %v1342 = vpop.f32.mrf.mxu0
        %v1343 = vadd.f32 0.0, %v1342
        %v1344 = vpop.f32.mrf.mxu0
        %v1345 = vpop.f32.mrf.mxu0
        %v1346 = vadd.f32 0.0, %v1345
        %v1347 = vpop.f32.mrf.mxu0
        %1348 = vmatprep.mubr.bf16.mxu0 0
        %1349 = vmatmul.mubr.bf16.gmra.mxu0 %v890
        %v1350 = vpop.f32.mrf.mxu0
        %v1351 = vadd.f32 0.0, %v1350
        %v1352 = vpop.f32.mrf.mxu0
        %v1353 = vpop.f32.mrf.mxu0
        %v1354 = vadd.f32 0.0, %v1353
        %v1355 = vpop.f32.mrf.mxu0
        %1356 = vmatprep.mubr.bf16.mxu0 0
        %1357 = vmatmul.mubr.bf16.gmra.mxu0 %v893
        %v1358 = vpop.f32.mrf.mxu0
        %v1359 = vadd.f32 0.0, %v1358
        %v1360 = vpop.f32.mrf.mxu0
        %v1361 = vpop.f32.mrf.mxu0
        %v1362 = vadd.f32 0.0, %v1361
        %v1363 = vpop.f32.mrf.mxu0
        %1364 = vmatprep.mubr.bf16.mxu0 0
        %1365 = vmatmul.mubr.bf16.gmra.mxu0 %v896
        %v1366 = vpop.f32.mrf.mxu0
        %v1367 = vadd.f32 0.0, %v1366
        %v1368 = vpop.f32.mrf.mxu0
        %v1369 = vpop.f32.mrf.mxu0
        %v1370 = vadd.f32 0.0, %v1369
        %v1371 = vpop.f32.mrf.mxu0
        %1372 = vmatprep.mubr.bf16.mxu0 0
        %1373 = vmatmul.mubr.bf16.gmra.mxu0 %v899
        %v1374 = vpop.f32.mrf.mxu0
        %v1375 = vadd.f32 0.0, %v1374
        %v1376 = vpop.f32.mrf.mxu0
        %v1377 = vpop.f32.mrf.mxu0
        %v1378 = vadd.f32 0.0, %v1377
        %v1379 = vpop.f32.mrf.mxu0
        %1380 = vmatprep.mubr.bf16.mxu0 0
        %1381 = vmatmul.mubr.bf16.gmra.mxu0 %v902
        %v1382 = vpop.f32.mrf.mxu0
        %v1383 = vadd.f32 0.0, %v1382
        %v1384 = vpop.f32.mrf.mxu0
        %v1385 = vpop.f32.mrf.mxu0
        %v1386 = vadd.f32 0.0, %v1385
        %v1387 = vpop.f32.mrf.mxu0
        %1388 = vmatprep.mubr.bf16.mxu0 0
        %1389 = vmatmul.mubr.bf16.gmra.mxu0 %v905
        %v1390 = vpop.f32.mrf.mxu0
        %v1391 = vadd.f32 0.0, %v1390
        %v1392 = vpop.f32.mrf.mxu0
        %v1393 = vpop.f32.mrf.mxu0
        %v1394 = vadd.f32 0.0, %v1393
        %v1395 = vpop.f32.mrf.mxu0
        %1396 = vmatprep.mubr.bf16.mxu0 0
        %1397 = vmatmul.mubr.bf16.gmra.mxu0 %v908
        %v1398 = vpop.f32.mrf.mxu0
        %v1399 = vadd.f32 0.0, %v1398
        %v1400 = vpop.f32.mrf.mxu0
        %v1401 = vpop.f32.mrf.mxu0
        %v1402 = vadd.f32 0.0, %v1401
        %v1403 = vpop.f32.mrf.mxu0
        %1404 = vmatprep.mubr.bf16.mxu0 0
        %1405 = vmatmul.mubr.bf16.gmra.mxu0 %v911
        %v1406 = vpop.f32.mrf.mxu0
        %v1407 = vadd.f32 0.0, %v1406
        %v1408 = vpop.f32.mrf.mxu0
        %v1409 = vpop.f32.mrf.mxu0
        %v1410 = vadd.f32 0.0, %v1409
        %v1411 = vpop.f32.mrf.mxu0
        %1412 = vmatprep.mubr.bf16.mxu0 0
        %1413 = vmatmul.mubr.bf16.gmra.mxu0 %v914
        %v1414 = vpop.f32.mrf.mxu0
        %v1415 = vadd.f32 0.0, %v1414
        %v1416 = vpop.f32.mrf.mxu0
        %v1417 = vpop.f32.mrf.mxu0
        %v1418 = vadd.f32 0.0, %v1417
        %v1419 = vpop.f32.mrf.mxu0
        %1420 = vmatprep.mubr.bf16.mxu0 0
        %1421 = vmatmul.mubr.bf16.gmra.mxu0 %v917
        %v1422 = vpop.f32.mrf.mxu0
        %v1423 = vadd.f32 0.0, %v1422
        %v1424 = vpop.f32.mrf.mxu0
        %v1425 = vpop.f32.mrf.mxu0
        %v1426 = vadd.f32 0.0, %v1425
        %v1427 = vpop.f32.mrf.mxu0
        %1428 = vmatprep.mubr.bf16.mxu0 0
        %1429 = vmatmul.mubr.bf16.gmra.mxu0 %v920
        %v1430 = vpop.f32.mrf.mxu0
        %v1431 = vadd.f32 0.0, %v1430
        %v1432 = vpop.f32.mrf.mxu0
        %v1433 = vpop.f32.mrf.mxu0
        %v1434 = vadd.f32 0.0, %v1433
        %v1435 = vpop.f32.mrf.mxu0
        %1436 = vmatprep.mubr.bf16.mxu0 0
        %1437 = vmatmul.mubr.bf16.gmra.mxu0 %v923
        %v1438 = vpop.f32.mrf.mxu0
        %v1439 = vadd.f32 0.0, %v1438
        %v1440 = vpop.f32.mrf.mxu0
        %v1441 = vpop.f32.mrf.mxu0
        %v1442 = vadd.f32 0.0, %v1441
        %v1443 = vpop.f32.mrf.mxu0
        %1444 = vmatprep.mubr.bf16.mxu0 0
        %1445 = vmatmul.mubr.bf16.gmra.mxu0 %v926
        %v1446 = vpop.f32.mrf.mxu0
        %v1447 = vadd.f32 0.0, %v1446
        %v1448 = vpop.f32.mrf.mxu0
        %v1449 = vpop.f32.mrf.mxu0
        %v1450 = vadd.f32 0.0, %v1449
        %v1451 = vpop.f32.mrf.mxu0
        %1452 = vmatprep.mubr.bf16.mxu0 0
        %1453 = vmatmul.mubr.bf16.gmra.mxu0 %v929
        %v1454 = vpop.f32.mrf.mxu0
        %v1455 = vadd.f32 0.0, %v1454
        %v1456 = vpop.f32.mrf.mxu0
        %v1457 = vpop.f32.mrf.mxu0
        %v1458 = vadd.f32 0.0, %v1457
        %v1459 = vpop.f32.mrf.mxu0
        %1460 = vmatprep.mubr.bf16.mxu0 0
        %1461 = vmatmul.mubr.bf16.gmra.mxu0 %v932
        %v1462 = vpop.f32.mrf.mxu0
        %v1463 = vadd.f32 0.0, %v1462
        %v1464 = vpop.f32.mrf.mxu0
        %v1465 = vpop.f32.mrf.mxu0
        %v1466 = vadd.f32 0.0, %v1465
        %v1467 = vpop.f32.mrf.mxu0
        %1468 = vmatprep.mubr.bf16.mxu0 0
        %1469 = vmatmul.mubr.bf16.gmra.mxu0 %v935
        %v1470 = vpop.f32.mrf.mxu0
        %v1471 = vadd.f32 0.0, %v1470
        %v1472 = vpop.f32.mrf.mxu0
        %v1473 = vpop.f32.mrf.mxu0
        %v1474 = vadd.f32 0.0, %v1473
        %v1475 = vpop.f32.mrf.mxu0
        %1476 = vmatprep.mubr.bf16.mxu0 0
        %1477 = vmatmul.mubr.bf16.gmra.mxu0 %v938
        %v1478 = vpop.f32.mrf.mxu0
        %v1479 = vadd.f32 0.0, %v1478
        %v1480 = vpop.f32.mrf.mxu0
        %v1481 = vpop.f32.mrf.mxu0
        %v1482 = vadd.f32 0.0, %v1481
        %v1483 = vpop.f32.mrf.mxu0
        %1484 = vdwg.mxu0
        %v1485 = vld [vmem:[%s244] sm:$0xff]
        %v1486 = vld [vmem:[%s244 + $0x8] sm:$0xff]
        %v1487 = vld [vmem:[%s244 + $0x10] sm:$0xff]
        %v1488 = vld [vmem:[%s244 + $0x18] sm:$0xff]
        %v1489 = vld [vmem:[%s244 + $0x20] sm:$0xff]
        %v1490 = vld [vmem:[%s244 + $0x28] sm:$0xff]
        %v1491 = vld [vmem:[%s244 + $0x30] sm:$0xff]
        %v1492 = vld [vmem:[%s244 + $0x38] sm:$0xff]
        %v1493 = vld [vmem:[%s244 + $0x40] sm:$0xff]
        %v1494 = vld [vmem:[%s244 + $0x48] sm:$0xff]
        %v1495 = vld [vmem:[%s244 + $0x50] sm:$0xff]
        %v1496 = vld [vmem:[%s244 + $0x58] sm:$0xff]
        %v1497 = vld [vmem:[%s244 + $0x60] sm:$0xff]
        %v1498 = vld [vmem:[%s244 + $0x68] sm:$0xff]
        %v1499 = vld [vmem:[%s244 + $0x70] sm:$0xff]
        %v1500 = vld [vmem:[%s244 + $0x78] sm:$0xff]
        %v1501 = vld [vmem:[%s244 + $0x80] sm:$0xff]
        %v1502 = vld [vmem:[%s244 + $0x88] sm:$0xff]
        %v1503 = vld [vmem:[%s244 + $0x90] sm:$0xff]
        %v1504 = vld [vmem:[%s244 + $0x98] sm:$0xff]
        %v1505 = vld [vmem:[%s244 + $0xa0] sm:$0xff]
        %v1506 = vld [vmem:[%s244 + $0xa8] sm:$0xff]
        %v1507 = vld [vmem:[%s244 + $0xb0] sm:$0xff]
        %v1508 = vld [vmem:[%s244 + $0xb8] sm:$0xff]
        %v1509 = vld [vmem:[%s244 + $0xc0] sm:$0xff]
        %v1510 = vld [vmem:[%s244 + $0xc8] sm:$0xff]
        %v1511 = vld [vmem:[%s244 + $0xd0] sm:$0xff]
        %v1512 = vld [vmem:[%s244 + $0xd8] sm:$0xff]
        %v1513 = vld [vmem:[%s244 + $0xe0] sm:$0xff]
        %v1514 = vld [vmem:[%s244 + $0xe8] sm:$0xff]
        %v1515 = vld [vmem:[%s244 + $0xf0] sm:$0xff]
        %v1516 = vld [vmem:[%s244 + $0xf8] sm:$0xff]
        %v1517 = vld [vmem:[%s244 + $0x100] sm:$0xff]
        %v1518 = vld [vmem:[%s244 + $0x108] sm:$0xff]
        %v1519 = vld [vmem:[%s244 + $0x110] sm:$0xff]
        %v1520 = vld [vmem:[%s244 + $0x118] sm:$0xff]
        %v1521 = vld [vmem:[%s244 + $0x120] sm:$0xff]
        %v1522 = vld [vmem:[%s244 + $0x128] sm:$0xff]
        %v1523 = vld [vmem:[%s244 + $0x130] sm:$0xff]
        %v1524 = vld [vmem:[%s244 + $0x138] sm:$0xff]
        %v1525 = vld [vmem:[%s244 + $0x140] sm:$0xff]
        %v1526 = vld [vmem:[%s244 + $0x148] sm:$0xff]
        %v1527 = vld [vmem:[%s244 + $0x150] sm:$0xff]
        %v1528 = vld [vmem:[%s244 + $0x158] sm:$0xff]
        %v1529 = vld [vmem:[%s244 + $0x160] sm:$0xff]
        %v1530 = vld [vmem:[%s244 + $0x168] sm:$0xff]
        %v1531 = vld [vmem:[%s244 + $0x170] sm:$0xff]
        %v1532 = vld [vmem:[%s244 + $0x178] sm:$0xff]
        %v1533 = vld [vmem:[%s244 + $0x180] sm:$0xff]
        %v1534 = vld [vmem:[%s244 + $0x188] sm:$0xff]
        %v1535 = vld [vmem:[%s244 + $0x190] sm:$0xff]
        %v1536 = vld [vmem:[%s244 + $0x198] sm:$0xff]
        %v1537 = vld [vmem:[%s244 + $0x1a0] sm:$0xff]
        %v1538 = vld [vmem:[%s244 + $0x1a8] sm:$0xff]
        %v1539 = vld [vmem:[%s244 + $0x1b0] sm:$0xff]
        %v1540 = vld [vmem:[%s244 + $0x1b8] sm:$0xff]
        %v1541 = vld [vmem:[%s244 + $0x1c0] sm:$0xff]
        %v1542 = vld [vmem:[%s244 + $0x1c8] sm:$0xff]
        %v1543 = vld [vmem:[%s244 + $0x1d0] sm:$0xff]
        %v1544 = vld [vmem:[%s244 + $0x1d8] sm:$0xff]
        %v1545 = vld [vmem:[%s244 + $0x1e0] sm:$0xff]
        %v1546 = vld [vmem:[%s244 + $0x1e8] sm:$0xff]
        %v1547 = vld [vmem:[%s244 + $0x1f0] sm:$0xff]
        %v1548 = vld [vmem:[%s244 + $0x1f8] sm:$0xff]
        %v1549 = vld [vmem:[%s244 + $0x200] sm:$0xff]
        %v1550 = vld [vmem:[%s244 + $0x208] sm:$0xff]
        %v1551 = vld [vmem:[%s244 + $0x210] sm:$0xff]
        %v1552 = vld [vmem:[%s244 + $0x218] sm:$0xff]
        %v1553 = vld [vmem:[%s244 + $0x220] sm:$0xff]
        %v1554 = vld [vmem:[%s244 + $0x228] sm:$0xff]
        %v1555 = vld [vmem:[%s244 + $0x230] sm:$0xff]
        %v1556 = vld [vmem:[%s244 + $0x238] sm:$0xff]
        %v1557 = vld [vmem:[%s244 + $0x240] sm:$0xff]
        %v1558 = vld [vmem:[%s244 + $0x248] sm:$0xff]
        %v1559 = vld [vmem:[%s244 + $0x250] sm:$0xff]
        %v1560 = vld [vmem:[%s244 + $0x258] sm:$0xff]
        %v1561 = vld [vmem:[%s244 + $0x260] sm:$0xff]
        %v1562 = vld [vmem:[%s244 + $0x268] sm:$0xff]
        %v1563 = vld [vmem:[%s244 + $0x270] sm:$0xff]
        %v1564 = vld [vmem:[%s244 + $0x278] sm:$0xff]
        %v1565 = vld [vmem:[%s244 + $0x280] sm:$0xff]
        %v1566 = vld [vmem:[%s244 + $0x288] sm:$0xff]
        %v1567 = vld [vmem:[%s244 + $0x290] sm:$0xff]
        %v1568 = vld [vmem:[%s244 + $0x298] sm:$0xff]
        %v1569 = vld [vmem:[%s244 + $0x2a0] sm:$0xff]
        %v1570 = vld [vmem:[%s244 + $0x2a8] sm:$0xff]
        %v1571 = vld [vmem:[%s244 + $0x2b0] sm:$0xff]
        %v1572 = vld [vmem:[%s244 + $0x2b8] sm:$0xff]
        %v1573 = vld [vmem:[%s244 + $0x2c0] sm:$0xff]
        %v1574 = vld [vmem:[%s244 + $0x2c8] sm:$0xff]
        %v1575 = vld [vmem:[%s244 + $0x2d0] sm:$0xff]
        %v1576 = vld [vmem:[%s244 + $0x2d8] sm:$0xff]
        %v1577 = vld [vmem:[%s244 + $0x2e0] sm:$0xff]
        %v1578 = vld [vmem:[%s244 + $0x2e8] sm:$0xff]
        %v1579 = vld [vmem:[%s244 + $0x2f0] sm:$0xff]
        %v1580 = vld [vmem:[%s244 + $0x2f8] sm:$0xff]
        %v1581 = vld [vmem:[%s244 + $0x300] sm:$0xff]
        %v1582 = vld [vmem:[%s244 + $0x308] sm:$0xff]
        %v1583 = vld [vmem:[%s244 + $0x310] sm:$0xff]
        %v1584 = vld [vmem:[%s244 + $0x318] sm:$0xff]
        %v1585 = vld [vmem:[%s244 + $0x320] sm:$0xff]
        %v1586 = vld [vmem:[%s244 + $0x328] sm:$0xff]
        %v1587 = vld [vmem:[%s244 + $0x330] sm:$0xff]
        %v1588 = vld [vmem:[%s244 + $0x338] sm:$0xff]
        %v1589 = vld [vmem:[%s244 + $0x340] sm:$0xff]
        %v1590 = vld [vmem:[%s244 + $0x348] sm:$0xff]
        %v1591 = vld [vmem:[%s244 + $0x350] sm:$0xff]
        %v1592 = vld [vmem:[%s244 + $0x358] sm:$0xff]
        %v1593 = vld [vmem:[%s244 + $0x360] sm:$0xff]
        %v1594 = vld [vmem:[%s244 + $0x368] sm:$0xff]
        %v1595 = vld [vmem:[%s244 + $0x370] sm:$0xff]
        %v1596 = vld [vmem:[%s244 + $0x378] sm:$0xff]
        %v1597 = vld [vmem:[%s244 + $0x380] sm:$0xff]
        %v1598 = vld [vmem:[%s244 + $0x388] sm:$0xff]
        %v1599 = vld [vmem:[%s244 + $0x390] sm:$0xff]
        %v1600 = vld [vmem:[%s244 + $0x398] sm:$0xff]
        %v1601 = vld [vmem:[%s244 + $0x3a0] sm:$0xff]
        %v1602 = vld [vmem:[%s244 + $0x3a8] sm:$0xff]
        %v1603 = vld [vmem:[%s244 + $0x3b0] sm:$0xff]
        %v1604 = vld [vmem:[%s244 + $0x3b8] sm:$0xff]
        %v1605 = vld [vmem:[%s244 + $0x3c0] sm:$0xff]
        %v1606 = vld [vmem:[%s244 + $0x3c8] sm:$0xff]
        %v1607 = vld [vmem:[%s244 + $0x3d0] sm:$0xff]
        %v1608 = vld [vmem:[%s244 + $0x3d8] sm:$0xff]
        %v1609 = vld [vmem:[%s244 + $0x3e0] sm:$0xff]
        %v1610 = vld [vmem:[%s244 + $0x3e8] sm:$0xff]
        %v1611 = vld [vmem:[%s244 + $0x3f0] sm:$0xff]
        %v1612 = vld [vmem:[%s244 + $0x3f8] sm:$0xff]
        %v1613 = vpack.c.bf16 %v978, %v975
        %v1614 = vpack.c.bf16 %v986, %v983
        %v1615 = vpack.c.bf16 %v994, %v991
        %v1616 = vpack.c.bf16 %v1002, %v999
        %v1617 = vpack.c.bf16 %v1010, %v1007
        %v1618 = vpack.c.bf16 %v1018, %v1015
        %v1619 = vpack.c.bf16 %v1026, %v1023
        %v1620 = vpack.c.bf16 %v1034, %v1031
        %v1621 = vpack.c.bf16 %v1042, %v1039
        %v1622 = vpack.c.bf16 %v1050, %v1047
        %v1623 = vpack.c.bf16 %v1058, %v1055
        %v1624 = vpack.c.bf16 %v1066, %v1063
        %v1625 = vpack.c.bf16 %v1074, %v1071
        %v1626 = vpack.c.bf16 %v1082, %v1079
        %v1627 = vpack.c.bf16 %v1090, %v1087
        %v1628 = vpack.c.bf16 %v1098, %v1095
        %v1629 = vpack.c.bf16 %v1106, %v1103
        %v1630 = vpack.c.bf16 %v1114, %v1111
        %v1631 = vpack.c.bf16 %v1122, %v1119
        %v1632 = vpack.c.bf16 %v1130, %v1127
        %v1633 = vpack.c.bf16 %v1138, %v1135
        %v1634 = vpack.c.bf16 %v1146, %v1143
        %v1635 = vpack.c.bf16 %v1154, %v1151
        %v1636 = vpack.c.bf16 %v1162, %v1159
        %v1637 = vpack.c.bf16 %v1170, %v1167
        %v1638 = vpack.c.bf16 %v1178, %v1175
        %v1639 = vpack.c.bf16 %v1186, %v1183
        %v1640 = vpack.c.bf16 %v1194, %v1191
        %v1641 = vpack.c.bf16 %v1202, %v1199
        %v1642 = vpack.c.bf16 %v1210, %v1207
        %v1643 = vpack.c.bf16 %v1218, %v1215
        %v1644 = vpack.c.bf16 %v1226, %v1223
        %v1645 = vpack.c.bf16 %v1234, %v1231
        %v1646 = vpack.c.bf16 %v1242, %v1239
        %v1647 = vpack.c.bf16 %v1250, %v1247
        %v1648 = vpack.c.bf16 %v1258, %v1255
        %v1649 = vpack.c.bf16 %v1266, %v1263
        %v1650 = vpack.c.bf16 %v1274, %v1271
        %v1651 = vpack.c.bf16 %v1282, %v1279
        %v1652 = vpack.c.bf16 %v1290, %v1287
        %v1653 = vpack.c.bf16 %v1298, %v1295
        %v1654 = vpack.c.bf16 %v1306, %v1303
        %v1655 = vpack.c.bf16 %v1314, %v1311
        %v1656 = vpack.c.bf16 %v1322, %v1319
        %v1657 = vpack.c.bf16 %v1330, %v1327
        %v1658 = vpack.c.bf16 %v1338, %v1335
        %v1659 = vpack.c.bf16 %v1346, %v1343
        %v1660 = vpack.c.bf16 %v1354, %v1351
        %v1661 = vpack.c.bf16 %v1362, %v1359
        %v1662 = vpack.c.bf16 %v1370, %v1367
        %v1663 = vpack.c.bf16 %v1378, %v1375
        %v1664 = vpack.c.bf16 %v1386, %v1383
        %v1665 = vpack.c.bf16 %v1394, %v1391
        %v1666 = vpack.c.bf16 %v1402, %v1399
        %v1667 = vpack.c.bf16 %v1410, %v1407
        %v1668 = vpack.c.bf16 %v1418, %v1415
        %v1669 = vpack.c.bf16 %v1426, %v1423
        %v1670 = vpack.c.bf16 %v1434, %v1431
        %v1671 = vpack.c.bf16 %v1442, %v1439
        %v1672 = vpack.c.bf16 %v1450, %v1447
        %v1673 = vpack.c.bf16 %v1458, %v1455
        %v1674 = vpack.c.bf16 %v1466, %v1463
        %v1675 = vpack.c.bf16 %v1474, %v1471
        %v1676 = vpack.c.bf16 %v1482, %v1479
        %s1677 = smul.u32 %s21, 256
        %s1678 = sshra.s32 %s1677, 3
        %s1679 = sand.u32 %s1677, 7
        %s1680 = smul.addr %s1678, 4
        %s1681 = scalar_lea.vmem %s0, %s1680
        %v1682 = vld [vmem:[%s1681] sm:$0xf]
        %v1683 = vld [vmem:[%s1681 + $0x4] sm:$0xf]
        %v1684 = vld [vmem:[%s1681 + $0x8] sm:$0xf]
        %v1685 = vld [vmem:[%s1681 + $0xc] sm:$0xf]
        %v1686 = vld [vmem:[%s1681 + $0x10] sm:$0xf]
        %v1687 = vld [vmem:[%s1681 + $0x14] sm:$0xf]
        %v1688 = vld [vmem:[%s1681 + $0x18] sm:$0xf]
        %v1689 = vld [vmem:[%s1681 + $0x1c] sm:$0xf]
        %v1690 = vld [vmem:[%s1681 + $0x20] sm:$0xf]
        %v1691 = vld [vmem:[%s1681 + $0x24] sm:$0xf]
        %v1692 = vld [vmem:[%s1681 + $0x28] sm:$0xf]
        %v1693 = vld [vmem:[%s1681 + $0x2c] sm:$0xf]
        %v1694 = vld [vmem:[%s1681 + $0x30] sm:$0xf]
        %v1695 = vld [vmem:[%s1681 + $0x34] sm:$0xf]
        %v1696 = vld [vmem:[%s1681 + $0x38] sm:$0xf]
        %v1697 = vld [vmem:[%s1681 + $0x3c] sm:$0xf]
        %v1698 = vld [vmem:[%s1681 + $0x40] sm:$0xf]
        %v1699 = vld [vmem:[%s1681 + $0x44] sm:$0xf]
        %v1700 = vld [vmem:[%s1681 + $0x48] sm:$0xf]
        %v1701 = vld [vmem:[%s1681 + $0x4c] sm:$0xf]
        %v1702 = vld [vmem:[%s1681 + $0x50] sm:$0xf]
        %v1703 = vld [vmem:[%s1681 + $0x54] sm:$0xf]
        %v1704 = vld [vmem:[%s1681 + $0x58] sm:$0xf]
        %v1705 = vld [vmem:[%s1681 + $0x5c] sm:$0xf]
        %v1706 = vld [vmem:[%s1681 + $0x60] sm:$0xf]
        %v1707 = vld [vmem:[%s1681 + $0x64] sm:$0xf]
        %v1708 = vld [vmem:[%s1681 + $0x68] sm:$0xf]
        %v1709 = vld [vmem:[%s1681 + $0x6c] sm:$0xf]
        %v1710 = vld [vmem:[%s1681 + $0x70] sm:$0xf]
        %v1711 = vld [vmem:[%s1681 + $0x74] sm:$0xf]
        %v1712 = vld [vmem:[%s1681 + $0x78] sm:$0xf]
        %v1713 = vld [vmem:[%s1681 + $0x7c] sm:$0xf]
        %v1714 = vld [vmem:[#allocation4] sm:$0xf]
        %v1715 = vld [vmem:[#allocation4 + $0x4] sm:$0xf]
        %v1716 = vld [vmem:[#allocation7] sm:$0x7]
        %v1717 = vlaneseq
        %v1718 = vshrl.u32 %v1717, 7
        %v1719 = vsub.s32 0, %v1718
        %v1720 = vrot.slane %v1716, %v1719
        %v1753 = vunpack.c.l.b16 %v1682
        %v1754 = vunpack.c.l.b16 %v1683
        %v1755 = vunpack.c.l.b16 %v1684
        %v1756 = vunpack.c.l.b16 %v1685
        %v1757 = vunpack.c.l.b16 %v1686
        %v1758 = vunpack.c.l.b16 %v1687
        %v1759 = vunpack.c.l.b16 %v1688
        %v1760 = vunpack.c.l.b16 %v1689
        %v1761 = vunpack.c.l.b16 %v1690
        %v1762 = vunpack.c.l.b16 %v1691
        %v1763 = vunpack.c.l.b16 %v1692
        %v1764 = vunpack.c.l.b16 %v1693
        %v1765 = vunpack.c.l.b16 %v1694
        %v1766 = vunpack.c.l.b16 %v1695
        %v1767 = vunpack.c.l.b16 %v1696
        %v1768 = vunpack.c.l.b16 %v1697
        %v1769 = vunpack.c.l.b16 %v1698
        %v1770 = vunpack.c.l.b16 %v1699
        %v1771 = vunpack.c.l.b16 %v1700
        %v1772 = vunpack.c.l.b16 %v1701
        %v1773 = vunpack.c.l.b16 %v1702
        %v1774 = vunpack.c.l.b16 %v1703
        %v1775 = vunpack.c.l.b16 %v1704
        %v1776 = vunpack.c.l.b16 %v1705
        %v1777 = vunpack.c.l.b16 %v1706
        %v1778 = vunpack.c.l.b16 %v1707
        %v1779 = vunpack.c.l.b16 %v1708
        %v1780 = vunpack.c.l.b16 %v1709
        %v1781 = vunpack.c.l.b16 %v1710
        %v1782 = vunpack.c.l.b16 %v1711
        %v1783 = vunpack.c.l.b16 %v1712
        %v1784 = vunpack.c.l.b16 %v1713
        %v1785 = vpack.c.b16 %v1754, %v1753
        %v1786 = vpack.c.b16 %v1756, %v1755
        %v1787 = vpack.c.b16 %v1758, %v1757
        %v1788 = vpack.c.b16 %v1760, %v1759
        %v1789 = vpack.c.b16 %v1762, %v1761
        %v1790 = vpack.c.b16 %v1764, %v1763
        %v1791 = vpack.c.b16 %v1766, %v1765
        %v1792 = vpack.c.b16 %v1768, %v1767
        %v1793 = vpack.c.b16 %v1770, %v1769
        %v1794 = vpack.c.b16 %v1772, %v1771
        %v1795 = vpack.c.b16 %v1774, %v1773
        %v1796 = vpack.c.b16 %v1776, %v1775
        %v1797 = vpack.c.b16 %v1778, %v1777
        %v1798 = vpack.c.b16 %v1780, %v1779
        %v1799 = vpack.c.b16 %v1782, %v1781
        %v1800 = vpack.c.b16 %v1784, %v1783
        %v1803 = vunpack.c.l.b16 %v1714
        %v1804 = vunpack.c.l.b16 %v1715
        %v1805 = vpack.c.b16 %v1804, %v1803
        %v1808 = vsel %vm747, %v1785, 0
        %v1811 = vsel %vm747, %v1786, 0
        %v1814 = vsel %vm747, %v1787, 0
        %v1817 = vsel %vm747, %v1788, 0
        %v1820 = vsel %vm747, %v1789, 0
        %v1823 = vsel %vm747, %v1790, 0
        %v1826 = vsel %vm747, %v1791, 0
        %v1829 = vsel %vm747, %v1792, 0
        %v1832 = vsel %vm747, %v1793, 0
        %v1835 = vsel %vm747, %v1794, 0
        %v1838 = vsel %vm747, %v1795, 0
        %v1841 = vsel %vm747, %v1796, 0
        %v1844 = vsel %vm747, %v1797, 0
        %v1847 = vsel %vm747, %v1798, 0
        %v1850 = vsel %vm747, %v1799, 0
        %v1853 = vsel %vm747, %v1800, 0
        %1855 = vmatprep.subr.bf16.mxu0 0
        %1856 = vmatpush1.bf16.msra.mxu0 0
        %1857 = vmatprep.subr.bf16.mxu0 0
        %1858 = vmatpush1.bf16.msra.mxu0 0
        %1859 = vmatprep.subr.bf16.mxu0 0
        %1860 = vmatpush1.bf16.msra.mxu0 0
        %1861 = vmatprep.subr.bf16.mxu0 0
        %1862 = vmatpush1.bf16.msra.mxu0 0
        %1863 = vmatprep.subr.bf16.mxu0 0
        %1864 = vmatpush1.bf16.msra.mxu0 0
        %1865 = vmatprep.subr.bf16.mxu0 0
        %1866 = vmatpush1.bf16.msra.mxu0 0
        %1867 = vmatprep.subr.bf16.mxu0 0
        %1868 = vmatpush1.bf16.msra.mxu0 0
        %1869 = vmatprep.subr.bf16.mxu0 0
        %1870 = vmatpush1.bf16.msra.mxu0 %v1805
        %1871 = vmatprep.subr.bf16.mxu0 0
        %1872 = vmatpush2.bf16.msra.mxu0 0
        %1873 = vmatprep.subr.bf16.mxu0 0
        %1874 = vmatpush2.bf16.msra.mxu0 0
        %1875 = vmatprep.subr.bf16.mxu0 0
        %1876 = vmatpush2.bf16.msra.mxu0 0
        %1877 = vmatprep.subr.bf16.mxu0 0
        %1878 = vmatpush2.bf16.msra.mxu0 0
        %1879 = vmatprep.subr.bf16.mxu0 0
        %1880 = vmatpush2.bf16.msra.mxu0 0
        %1881 = vmatprep.subr.bf16.mxu0 0
        %1882 = vmatpush2.bf16.msra.mxu0 0
        %1883 = vmatprep.subr.bf16.mxu0 0
        %1884 = vmatpush2.bf16.msra.mxu0 0
        %1885 = vmatprep.subr.bf16.mxu0 0
        %1886 = vmatpush2.bf16.msra.mxu0 0
        %1887 = vmatprep.mubr.bf16.mxu0 0
        %1888 = vmatmul.mubr.bf16.gmra.mxu0 %v1808
        %v1889 = vpop.f32.mrf.mxu0
        %v1890 = vadd.f32 %v1720, %v1889
        %v1891 = vpop.f32.mrf.mxu0
        %v1892 = vpop.f32.mrf.mxu0
        %v1893 = vadd.f32 %v1720, %v1892
        %v1894 = vpop.f32.mrf.mxu0
        %1895 = vmatprep.mubr.bf16.mxu0 0
        %1896 = vmatmul.mubr.bf16.gmra.mxu0 %v1811
        %v1897 = vpop.f32.mrf.mxu0
        %v1898 = vadd.f32 %v1720, %v1897
        %v1899 = vpop.f32.mrf.mxu0
        %v1900 = vpop.f32.mrf.mxu0
        %v1901 = vadd.f32 %v1720, %v1900
        %v1902 = vpop.f32.mrf.mxu0
        %1903 = vmatprep.mubr.bf16.mxu0 0
        %1904 = vmatmul.mubr.bf16.gmra.mxu0 %v1814
        %v1905 = vpop.f32.mrf.mxu0
        %v1906 = vadd.f32 %v1720, %v1905
        %v1907 = vpop.f32.mrf.mxu0
        %v1908 = vpop.f32.mrf.mxu0
        %v1909 = vadd.f32 %v1720, %v1908
        %v1910 = vpop.f32.mrf.mxu0
        %1911 = vmatprep.mubr.bf16.mxu0 0
        %1912 = vmatmul.mubr.bf16.gmra.mxu0 %v1817
        %v1913 = vpop.f32.mrf.mxu0
        %v1914 = vadd.f32 %v1720, %v1913
        %v1915 = vpop.f32.mrf.mxu0
        %v1916 = vpop.f32.mrf.mxu0
        %v1917 = vadd.f32 %v1720, %v1916
        %v1918 = vpop.f32.mrf.mxu0
        %1919 = vmatprep.mubr.bf16.mxu0 0
        %1920 = vmatmul.mubr.bf16.gmra.mxu0 %v1820
        %v1921 = vpop.f32.mrf.mxu0
        %v1922 = vadd.f32 %v1720, %v1921
        %v1923 = vpop.f32.mrf.mxu0
        %v1924 = vpop.f32.mrf.mxu0
        %v1925 = vadd.f32 %v1720, %v1924
        %v1926 = vpop.f32.mrf.mxu0
        %1927 = vmatprep.mubr.bf16.mxu0 0
        %1928 = vmatmul.mubr.bf16.gmra.mxu0 %v1823
        %v1929 = vpop.f32.mrf.mxu0
        %v1930 = vadd.f32 %v1720, %v1929
        %v1931 = vpop.f32.mrf.mxu0
        %v1932 = vpop.f32.mrf.mxu0
        %v1933 = vadd.f32 %v1720, %v1932
        %v1934 = vpop.f32.mrf.mxu0
        %1935 = vmatprep.mubr.bf16.mxu0 0
        %1936 = vmatmul.mubr.bf16.gmra.mxu0 %v1826
        %v1937 = vpop.f32.mrf.mxu0
        %v1938 = vadd.f32 %v1720, %v1937
        %v1939 = vpop.f32.mrf.mxu0
        %v1940 = vpop.f32.mrf.mxu0
        %v1941 = vadd.f32 %v1720, %v1940
        %v1942 = vpop.f32.mrf.mxu0
        %1943 = vmatprep.mubr.bf16.mxu0 0
        %1944 = vmatmul.mubr.bf16.gmra.mxu0 %v1829
        %v1945 = vpop.f32.mrf.mxu0
        %v1946 = vadd.f32 %v1720, %v1945
        %v1947 = vpop.f32.mrf.mxu0
        %v1948 = vpop.f32.mrf.mxu0
        %v1949 = vadd.f32 %v1720, %v1948
        %v1950 = vpop.f32.mrf.mxu0
        %1951 = vmatprep.mubr.bf16.mxu0 0
        %1952 = vmatmul.mubr.bf16.gmra.mxu0 %v1832
        %v1953 = vpop.f32.mrf.mxu0
        %v1954 = vadd.f32 %v1720, %v1953
        %v1955 = vpop.f32.mrf.mxu0
        %v1956 = vpop.f32.mrf.mxu0
        %v1957 = vadd.f32 %v1720, %v1956
        %v1958 = vpop.f32.mrf.mxu0
        %1959 = vmatprep.mubr.bf16.mxu0 0
        %1960 = vmatmul.mubr.bf16.gmra.mxu0 %v1835
        %v1961 = vpop.f32.mrf.mxu0
        %v1962 = vadd.f32 %v1720, %v1961
        %v1963 = vpop.f32.mrf.mxu0
        %v1964 = vpop.f32.mrf.mxu0
        %v1965 = vadd.f32 %v1720, %v1964
        %v1966 = vpop.f32.mrf.mxu0
        %1967 = vmatprep.mubr.bf16.mxu0 0
        %1968 = vmatmul.mubr.bf16.gmra.mxu0 %v1838
        %v1969 = vpop.f32.mrf.mxu0
        %v1970 = vadd.f32 %v1720, %v1969
        %v1971 = vpop.f32.mrf.mxu0
        %v1972 = vpop.f32.mrf.mxu0
        %v1973 = vadd.f32 %v1720, %v1972
        %v1974 = vpop.f32.mrf.mxu0
        %1975 = vmatprep.mubr.bf16.mxu0 0
        %1976 = vmatmul.mubr.bf16.gmra.mxu0 %v1841
        %v1977 = vpop.f32.mrf.mxu0
        %v1978 = vadd.f32 %v1720, %v1977
        %v1979 = vpop.f32.mrf.mxu0
        %v1980 = vpop.f32.mrf.mxu0
        %v1981 = vadd.f32 %v1720, %v1980
        %v1982 = vpop.f32.mrf.mxu0
        %1983 = vmatprep.mubr.bf16.mxu0 0
        %1984 = vmatmul.mubr.bf16.gmra.mxu0 %v1844
        %v1985 = vpop.f32.mrf.mxu0
        %v1986 = vadd.f32 %v1720, %v1985
        %v1987 = vpop.f32.mrf.mxu0
        %v1988 = vpop.f32.mrf.mxu0
        %v1989 = vadd.f32 %v1720, %v1988
        %v1990 = vpop.f32.mrf.mxu0
        %1991 = vmatprep.mubr.bf16.mxu0 0
        %1992 = vmatmul.mubr.bf16.gmra.mxu0 %v1847
        %v1993 = vpop.f32.mrf.mxu0
        %v1994 = vadd.f32 %v1720, %v1993
        %v1995 = vpop.f32.mrf.mxu0
        %v1996 = vpop.f32.mrf.mxu0
        %v1997 = vadd.f32 %v1720, %v1996
        %v1998 = vpop.f32.mrf.mxu0
        %1999 = vmatprep.mubr.bf16.mxu0 0
        %2000 = vmatmul.mubr.bf16.gmra.mxu0 %v1850
        %v2001 = vpop.f32.mrf.mxu0
        %v2002 = vadd.f32 %v1720, %v2001
        %v2003 = vpop.f32.mrf.mxu0
        %v2004 = vpop.f32.mrf.mxu0
        %v2005 = vadd.f32 %v1720, %v2004
        %v2006 = vpop.f32.mrf.mxu0
        %2007 = vmatprep.mubr.bf16.mxu0 0
        %2008 = vmatmul.mubr.bf16.gmra.mxu0 %v1853
        %v2009 = vpop.f32.mrf.mxu0
        %v2010 = vadd.f32 %v1720, %v2009
        %v2011 = vpop.f32.mrf.mxu0
        %v2012 = vpop.f32.mrf.mxu0
        %v2013 = vadd.f32 %v1720, %v2012
        %v2014 = vpop.f32.mrf.mxu0
        %2015 = vdwg.mxu0
        %v2016 = vmax.f32 %v1890, 0.0
        %v2017 = vmax.f32 %v1893, 0.0
        %v2018 = vmax.f32 %v1898, 0.0
        %v2019 = vmax.f32 %v1901, 0.0
        %v2020 = vmax.f32 %v1906, 0.0
        %v2021 = vmax.f32 %v1909, 0.0
        %v2022 = vmax.f32 %v1914, 0.0
        %v2023 = vmax.f32 %v1917, 0.0
        %v2024 = vmax.f32 %v1922, 0.0
        %v2025 = vmax.f32 %v1925, 0.0
        %v2026 = vmax.f32 %v1930, 0.0
        %v2027 = vmax.f32 %v1933, 0.0
        %v2028 = vmax.f32 %v1938, 0.0
        %v2029 = vmax.f32 %v1941, 0.0
        %v2030 = vmax.f32 %v1946, 0.0
        %v2031 = vmax.f32 %v1949, 0.0
        %v2032 = vmax.f32 %v1954, 0.0
        %v2033 = vmax.f32 %v1957, 0.0
        %v2034 = vmax.f32 %v1962, 0.0
        %v2035 = vmax.f32 %v1965, 0.0
        %v2036 = vmax.f32 %v1970, 0.0
        %v2037 = vmax.f32 %v1973, 0.0
        %v2038 = vmax.f32 %v1978, 0.0
        %v2039 = vmax.f32 %v1981, 0.0
        %v2040 = vmax.f32 %v1986, 0.0
        %v2041 = vmax.f32 %v1989, 0.0
        %v2042 = vmax.f32 %v1994, 0.0
        %v2043 = vmax.f32 %v1997, 0.0
        %v2044 = vmax.f32 %v2002, 0.0
        %v2045 = vmax.f32 %v2005, 0.0
        %v2046 = vmax.f32 %v2010, 0.0
        %v2047 = vmax.f32 %v2013, 0.0
        %vm2048 = vcmask 261120
        %v2049 = vsel %vm2048, %v2016, 0.0
        %2050 = vadd.xlane.f32.xlu0 %v2049
        %v2051 = vpop.xlane.xlu0 %2050
        %v2052 = vsel %vm2048, %v2017, 0.0
        %2053 = vadd.xlane.f32.xlu0 %v2052
        %v2054 = vpop.xlane.xlu0 %2053
        %v2055 = vsel %vm2048, %v2018, 0.0
        %2056 = vadd.xlane.f32.xlu0 %v2055
        %v2057 = vpop.xlane.xlu0 %2056
        %v2058 = vsel %vm2048, %v2019, 0.0
        %2059 = vadd.xlane.f32.xlu0 %v2058
        %v2060 = vpop.xlane.xlu0 %2059
        %v2061 = vsel %vm2048, %v2020, 0.0
        %2062 = vadd.xlane.f32.xlu0 %v2061
        %v2063 = vpop.xlane.xlu0 %2062
        %v2064 = vsel %vm2048, %v2021, 0.0
        %2065 = vadd.xlane.f32.xlu0 %v2064
        %v2066 = vpop.xlane.xlu0 %2065
        %v2067 = vsel %vm2048, %v2022, 0.0
        %2068 = vadd.xlane.f32.xlu0 %v2067
        %v2069 = vpop.xlane.xlu0 %2068
        %v2070 = vsel %vm2048, %v2023, 0.0
        %2071 = vadd.xlane.f32.xlu0 %v2070
        %v2072 = vpop.xlane.xlu0 %2071
        %v2073 = vsel %vm2048, %v2024, 0.0
        %2074 = vadd.xlane.f32.xlu0 %v2073
        %v2075 = vpop.xlane.xlu0 %2074
        %v2076 = vsel %vm2048, %v2025, 0.0
        %2077 = vadd.xlane.f32.xlu0 %v2076
        %v2078 = vpop.xlane.xlu0 %2077
        %v2079 = vsel %vm2048, %v2026, 0.0
        %2080 = vadd.xlane.f32.xlu0 %v2079
        %v2081 = vpop.xlane.xlu0 %2080
        %v2082 = vsel %vm2048, %v2027, 0.0
        %2083 = vadd.xlane.f32.xlu0 %v2082
        %v2084 = vpop.xlane.xlu0 %2083
        %v2085 = vsel %vm2048, %v2028, 0.0
        %2086 = vadd.xlane.f32.xlu0 %v2085
        %v2087 = vpop.xlane.xlu0 %2086
        %v2088 = vsel %vm2048, %v2029, 0.0
        %2089 = vadd.xlane.f32.xlu0 %v2088
        %v2090 = vpop.xlane.xlu0 %2089
        %v2091 = vsel %vm2048, %v2030, 0.0
        %2092 = vadd.xlane.f32.xlu0 %v2091
        %v2093 = vpop.xlane.xlu0 %2092
        %v2094 = vsel %vm2048, %v2031, 0.0
        %2095 = vadd.xlane.f32.xlu0 %v2094
        %v2096 = vpop.xlane.xlu0 %2095
        %v2097 = vsel %vm2048, %v2032, 0.0
        %2098 = vadd.xlane.f32.xlu0 %v2097
        %v2099 = vpop.xlane.xlu0 %2098
        %v2100 = vsel %vm2048, %v2033, 0.0
        %2101 = vadd.xlane.f32.xlu0 %v2100
        %v2102 = vpop.xlane.xlu0 %2101
        %v2103 = vsel %vm2048, %v2034, 0.0
        %2104 = vadd.xlane.f32.xlu0 %v2103
        %v2105 = vpop.xlane.xlu0 %2104
        %v2106 = vsel %vm2048, %v2035, 0.0
        %2107 = vadd.xlane.f32.xlu0 %v2106
        %v2108 = vpop.xlane.xlu0 %2107
        %v2109 = vsel %vm2048, %v2036, 0.0
        %2110 = vadd.xlane.f32.xlu0 %v2109
        %v2111 = vpop.xlane.xlu0 %2110
        %v2112 = vsel %vm2048, %v2037, 0.0
        %2113 = vadd.xlane.f32.xlu0 %v2112
        %v2114 = vpop.xlane.xlu0 %2113
        %v2115 = vsel %vm2048, %v2038, 0.0
        %2116 = vadd.xlane.f32.xlu0 %v2115
        %v2117 = vpop.xlane.xlu0 %2116
        %v2118 = vsel %vm2048, %v2039, 0.0
        %2119 = vadd.xlane.f32.xlu0 %v2118
        %v2120 = vpop.xlane.xlu0 %2119
        %v2121 = vsel %vm2048, %v2040, 0.0
        %2122 = vadd.xlane.f32.xlu0 %v2121
        %v2123 = vpop.xlane.xlu0 %2122
        %v2124 = vsel %vm2048, %v2041, 0.0
        %2125 = vadd.xlane.f32.xlu0 %v2124
        %v2126 = vpop.xlane.xlu0 %2125
        %v2127 = vsel %vm2048, %v2042, 0.0
        %2128 = vadd.xlane.f32.xlu0 %v2127
        %v2129 = vpop.xlane.xlu0 %2128
        %v2130 = vsel %vm2048, %v2043, 0.0
        %2131 = vadd.xlane.f32.xlu0 %v2130
        %v2132 = vpop.xlane.xlu0 %2131
        %v2133 = vsel %vm2048, %v2044, 0.0
        %2134 = vadd.xlane.f32.xlu0 %v2133
        %v2135 = vpop.xlane.xlu0 %2134
        %v2136 = vsel %vm2048, %v2045, 0.0
        %2137 = vadd.xlane.f32.xlu0 %v2136
        %v2138 = vpop.xlane.xlu0 %2137
        %v2139 = vsel %vm2048, %v2046, 0.0
        %2140 = vadd.xlane.f32.xlu0 %v2139
        %v2141 = vpop.xlane.xlu0 %2140
        %v2142 = vsel %vm2048, %v2047, 0.0
        %2143 = vadd.xlane.f32.xlu0 %v2142
        %v2144 = vpop.xlane.xlu0 %2143
        %v2145 = vrcp.pop 32.0
        %v2146 = vmul.f32 %v2051, %v2145
        %v2147 = vmul.f32 %v2054, %v2145
        %v2148 = vmul.f32 %v2057, %v2145
        %v2149 = vmul.f32 %v2060, %v2145
        %v2150 = vmul.f32 %v2063, %v2145
        %v2151 = vmul.f32 %v2066, %v2145
        %v2152 = vmul.f32 %v2069, %v2145
        %v2153 = vmul.f32 %v2072, %v2145
        %v2154 = vmul.f32 %v2075, %v2145
        %v2155 = vmul.f32 %v2078, %v2145
        %v2156 = vmul.f32 %v2081, %v2145
        %v2157 = vmul.f32 %v2084, %v2145
        %v2158 = vmul.f32 %v2087, %v2145
        %v2159 = vmul.f32 %v2090, %v2145
        %v2160 = vmul.f32 %v2093, %v2145
        %v2161 = vmul.f32 %v2096, %v2145
        %v2162 = vmul.f32 %v2099, %v2145
        %v2163 = vmul.f32 %v2102, %v2145
        %v2164 = vmul.f32 %v2105, %v2145
        %v2165 = vmul.f32 %v2108, %v2145
        %v2166 = vmul.f32 %v2111, %v2145
        %v2167 = vmul.f32 %v2114, %v2145
        %v2168 = vmul.f32 %v2117, %v2145
        %v2169 = vmul.f32 %v2120, %v2145
        %v2170 = vmul.f32 %v2123, %v2145
        %v2171 = vmul.f32 %v2126, %v2145
        %v2172 = vmul.f32 %v2129, %v2145
        %v2173 = vmul.f32 %v2132, %v2145
        %v2174 = vmul.f32 %v2135, %v2145
        %v2175 = vmul.f32 %v2138, %v2145
        %v2176 = vmul.f32 %v2141, %v2145
        %v2177 = vmul.f32 %v2144, %v2145
        %v2178 = vsub.f32 %v2016, %v2146
        %v2179 = vsub.f32 %v2017, %v2147
        %v2180 = vsub.f32 %v2018, %v2148
        %v2181 = vsub.f32 %v2019, %v2149
        %v2182 = vsub.f32 %v2020, %v2150
        %v2183 = vsub.f32 %v2021, %v2151
        %v2184 = vsub.f32 %v2022, %v2152
        %v2185 = vsub.f32 %v2023, %v2153
        %v2186 = vsub.f32 %v2024, %v2154
        %v2187 = vsub.f32 %v2025, %v2155
        %v2188 = vsub.f32 %v2026, %v2156
        %v2189 = vsub.f32 %v2027, %v2157
        %v2190 = vsub.f32 %v2028, %v2158
        %v2191 = vsub.f32 %v2029, %v2159
        %v2192 = vsub.f32 %v2030, %v2160
        %v2193 = vsub.f32 %v2031, %v2161
        %v2194 = vsub.f32 %v2032, %v2162
        %v2195 = vsub.f32 %v2033, %v2163
        %v2196 = vsub.f32 %v2034, %v2164
        %v2197 = vsub.f32 %v2035, %v2165
        %v2198 = vsub.f32 %v2036, %v2166
        %v2199 = vsub.f32 %v2037, %v2167
        %v2200 = vsub.f32 %v2038, %v2168
        %v2201 = vsub.f32 %v2039, %v2169
        %v2202 = vsub.f32 %v2040, %v2170
        %v2203 = vsub.f32 %v2041, %v2171
        %v2204 = vsub.f32 %v2042, %v2172
        %v2205 = vsub.f32 %v2043, %v2173
        %v2206 = vsub.f32 %v2044, %v2174
        %v2207 = vsub.f32 %v2045, %v2175
        %v2208 = vsub.f32 %v2046, %v2176
        %v2209 = vsub.f32 %v2047, %v2177
        %v2210 = vmul.f32 %v2178, %v2178
        %v2211 = vmul.f32 %v2179, %v2179
        %v2212 = vmul.f32 %v2180, %v2180
        %v2213 = vmul.f32 %v2181, %v2181
        %v2214 = vmul.f32 %v2182, %v2182
        %v2215 = vmul.f32 %v2183, %v2183
        %v2216 = vmul.f32 %v2184, %v2184
        %v2217 = vmul.f32 %v2185, %v2185
        %v2218 = vmul.f32 %v2186, %v2186
        %v2219 = vmul.f32 %v2187, %v2187
        %v2220 = vmul.f32 %v2188, %v2188
        %v2221 = vmul.f32 %v2189, %v2189
        %v2222 = vmul.f32 %v2190, %v2190
        %v2223 = vmul.f32 %v2191, %v2191
        %v2224 = vmul.f32 %v2192, %v2192
        %v2225 = vmul.f32 %v2193, %v2193
        %v2226 = vmul.f32 %v2194, %v2194
        %v2227 = vmul.f32 %v2195, %v2195
        %v2228 = vmul.f32 %v2196, %v2196
        %v2229 = vmul.f32 %v2197, %v2197
        %v2230 = vmul.f32 %v2198, %v2198
        %v2231 = vmul.f32 %v2199, %v2199
        %v2232 = vmul.f32 %v2200, %v2200
        %v2233 = vmul.f32 %v2201, %v2201
        %v2234 = vmul.f32 %v2202, %v2202
        %v2235 = vmul.f32 %v2203, %v2203
        %v2236 = vmul.f32 %v2204, %v2204
        %v2237 = vmul.f32 %v2205, %v2205
        %v2238 = vmul.f32 %v2206, %v2206
        %v2239 = vmul.f32 %v2207, %v2207
        %v2240 = vmul.f32 %v2208, %v2208
        %v2241 = vmul.f32 %v2209, %v2209
        %v2242 = vsel %vm2048, %v2210, 0.0
        %2243 = vadd.xlane.f32.xlu0 %v2242
        %v2244 = vpop.xlane.xlu0 %2243
        %v2245 = vsel %vm2048, %v2211, 0.0
        %2246 = vadd.xlane.f32.xlu0 %v2245
        %v2247 = vpop.xlane.xlu0 %2246
        %v2248 = vsel %vm2048, %v2212, 0.0
        %2249 = vadd.xlane.f32.xlu0 %v2248
        %v2250 = vpop.xlane.xlu0 %2249
        %v2251 = vsel %vm2048, %v2213, 0.0
        %2252 = vadd.xlane.f32.xlu0 %v2251
        %v2253 = vpop.xlane.xlu0 %2252
        %v2254 = vsel %vm2048, %v2214, 0.0
        %2255 = vadd.xlane.f32.xlu0 %v2254
        %v2256 = vpop.xlane.xlu0 %2255
        %v2257 = vsel %vm2048, %v2215, 0.0
        %2258 = vadd.xlane.f32.xlu0 %v2257
        %v2259 = vpop.xlane.xlu0 %2258
        %v2260 = vsel %vm2048, %v2216, 0.0
        %2261 = vadd.xlane.f32.xlu0 %v2260
        %v2262 = vpop.xlane.xlu0 %2261
        %v2263 = vsel %vm2048, %v2217, 0.0
        %2264 = vadd.xlane.f32.xlu0 %v2263
        %v2265 = vpop.xlane.xlu0 %2264
        %v2266 = vsel %vm2048, %v2218, 0.0
        %2267 = vadd.xlane.f32.xlu0 %v2266
        %v2268 = vpop.xlane.xlu0 %2267
        %v2269 = vsel %vm2048, %v2219, 0.0
        %2270 = vadd.xlane.f32.xlu0 %v2269
        %v2271 = vpop.xlane.xlu0 %2270
        %v2272 = vsel %vm2048, %v2220, 0.0
        %2273 = vadd.xlane.f32.xlu0 %v2272
        %v2274 = vpop.xlane.xlu0 %2273
        %v2275 = vsel %vm2048, %v2221, 0.0
        %2276 = vadd.xlane.f32.xlu0 %v2275
        %v2277 = vpop.xlane.xlu0 %2276
        %v2278 = vsel %vm2048, %v2222, 0.0
        %2279 = vadd.xlane.f32.xlu0 %v2278
        %v2280 = vpop.xlane.xlu0 %2279
        %v2281 = vsel %vm2048, %v2223, 0.0
        %2282 = vadd.xlane.f32.xlu0 %v2281
        %v2283 = vpop.xlane.xlu0 %2282
        %v2284 = vsel %vm2048, %v2224, 0.0
        %2285 = vadd.xlane.f32.xlu0 %v2284
        %v2286 = vpop.xlane.xlu0 %2285
        %v2287 = vsel %vm2048, %v2225, 0.0
        %2288 = vadd.xlane.f32.xlu0 %v2287
        %v2289 = vpop.xlane.xlu0 %2288
        %v2290 = vsel %vm2048, %v2226, 0.0
        %2291 = vadd.xlane.f32.xlu0 %v2290
        %v2292 = vpop.xlane.xlu0 %2291
        %v2293 = vsel %vm2048, %v2227, 0.0
        %2294 = vadd.xlane.f32.xlu0 %v2293
        %v2295 = vpop.xlane.xlu0 %2294
        %v2296 = vsel %vm2048, %v2228, 0.0
        %2297 = vadd.xlane.f32.xlu0 %v2296
        %v2298 = vpop.xlane.xlu0 %2297
        %v2299 = vsel %vm2048, %v2229, 0.0
        %2300 = vadd.xlane.f32.xlu0 %v2299
        %v2301 = vpop.xlane.xlu0 %2300
        %v2302 = vsel %vm2048, %v2230, 0.0
        %2303 = vadd.xlane.f32.xlu0 %v2302
        %v2304 = vpop.xlane.xlu0 %2303
        %v2305 = vsel %vm2048, %v2231, 0.0
        %2306 = vadd.xlane.f32.xlu0 %v2305
        %v2307 = vpop.xlane.xlu0 %2306
        %v2308 = vsel %vm2048, %v2232, 0.0
        %2309 = vadd.xlane.f32.xlu0 %v2308
        %v2310 = vpop.xlane.xlu0 %2309
        %v2311 = vsel %vm2048, %v2233, 0.0
        %2312 = vadd.xlane.f32.xlu0 %v2311
        %v2313 = vpop.xlane.xlu0 %2312
        %v2314 = vsel %vm2048, %v2234, 0.0
        %2315 = vadd.xlane.f32.xlu0 %v2314
        %v2316 = vpop.xlane.xlu0 %2315
        %v2317 = vsel %vm2048, %v2235, 0.0
        %2318 = vadd.xlane.f32.xlu0 %v2317
        %v2319 = vpop.xlane.xlu0 %2318
        %v2320 = vsel %vm2048, %v2236, 0.0
        %2321 = vadd.xlane.f32.xlu0 %v2320
        %v2322 = vpop.xlane.xlu0 %2321
        %v2323 = vsel %vm2048, %v2237, 0.0
        %2324 = vadd.xlane.f32.xlu0 %v2323
        %v2325 = vpop.xlane.xlu0 %2324
        %v2326 = vsel %vm2048, %v2238, 0.0
        %2327 = vadd.xlane.f32.xlu0 %v2326
        %v2328 = vpop.xlane.xlu0 %2327
        %v2329 = vsel %vm2048, %v2239, 0.0
        %2330 = vadd.xlane.f32.xlu0 %v2329
        %v2331 = vpop.xlane.xlu0 %2330
        %v2332 = vsel %vm2048, %v2240, 0.0
        %2333 = vadd.xlane.f32.xlu0 %v2332
        %v2334 = vpop.xlane.xlu0 %2333
        %v2335 = vsel %vm2048, %v2241, 0.0
        %2336 = vadd.xlane.f32.xlu0 %v2335
        %v2337 = vpop.xlane.xlu0 %2336
        %v2338 = vmul.f32 %v2244, %v2145
        %v2339 = vmul.f32 %v2247, %v2145
        %v2340 = vmul.f32 %v2250, %v2145
        %v2341 = vmul.f32 %v2253, %v2145
        %v2342 = vmul.f32 %v2256, %v2145
        %v2343 = vmul.f32 %v2259, %v2145
        %v2344 = vmul.f32 %v2262, %v2145
        %v2345 = vmul.f32 %v2265, %v2145
        %v2346 = vmul.f32 %v2268, %v2145
        %v2347 = vmul.f32 %v2271, %v2145
        %v2348 = vmul.f32 %v2274, %v2145
        %v2349 = vmul.f32 %v2277, %v2145
        %v2350 = vmul.f32 %v2280, %v2145
        %v2351 = vmul.f32 %v2283, %v2145
        %v2352 = vmul.f32 %v2286, %v2145
        %v2353 = vmul.f32 %v2289, %v2145
        %v2354 = vmul.f32 %v2292, %v2145
        %v2355 = vmul.f32 %v2295, %v2145
        %v2356 = vmul.f32 %v2298, %v2145
        %v2357 = vmul.f32 %v2301, %v2145
        %v2358 = vmul.f32 %v2304, %v2145
        %v2359 = vmul.f32 %v2307, %v2145
        %v2360 = vmul.f32 %v2310, %v2145
        %v2361 = vmul.f32 %v2313, %v2145
        %v2362 = vmul.f32 %v2316, %v2145
        %v2363 = vmul.f32 %v2319, %v2145
        %v2364 = vmul.f32 %v2322, %v2145
        %v2365 = vmul.f32 %v2325, %v2145
        %v2366 = vmul.f32 %v2328, %v2145
        %v2367 = vmul.f32 %v2331, %v2145
        %v2368 = vmul.f32 %v2334, %v2145
        %v2369 = vmul.f32 %v2337, %v2145
        %v2370 = vadd.f32 %v2338, 1e-09
        %v2371 = vadd.f32 %v2339, 1e-09
        %v2372 = vadd.f32 %v2340, 1e-09
        %v2373 = vadd.f32 %v2341, 1e-09
        %v2374 = vadd.f32 %v2342, 1e-09
        %v2375 = vadd.f32 %v2343, 1e-09
        %v2376 = vadd.f32 %v2344, 1e-09
        %v2377 = vadd.f32 %v2345, 1e-09
        %v2378 = vadd.f32 %v2346, 1e-09
        %v2379 = vadd.f32 %v2347, 1e-09
        %v2380 = vadd.f32 %v2348, 1e-09
        %v2381 = vadd.f32 %v2349, 1e-09
        %v2382 = vadd.f32 %v2350, 1e-09
        %v2383 = vadd.f32 %v2351, 1e-09
        %v2384 = vadd.f32 %v2352, 1e-09
        %v2385 = vadd.f32 %v2353, 1e-09
        %v2386 = vadd.f32 %v2354, 1e-09
        %v2387 = vadd.f32 %v2355, 1e-09
        %v2388 = vadd.f32 %v2356, 1e-09
        %v2389 = vadd.f32 %v2357, 1e-09
        %v2390 = vadd.f32 %v2358, 1e-09
        %v2391 = vadd.f32 %v2359, 1e-09
        %v2392 = vadd.f32 %v2360, 1e-09
        %v2393 = vadd.f32 %v2361, 1e-09
        %v2394 = vadd.f32 %v2362, 1e-09
        %v2395 = vadd.f32 %v2363, 1e-09
        %v2396 = vadd.f32 %v2364, 1e-09
        %v2397 = vadd.f32 %v2365, 1e-09
        %v2398 = vadd.f32 %v2366, 1e-09
        %v2399 = vadd.f32 %v2367, 1e-09
        %v2400 = vadd.f32 %v2368, 1e-09
        %v2401 = vadd.f32 %v2369, 1e-09
        %v2402 = vrsqrt.pop %v2370
        %v2403 = vrsqrt.pop %v2371
        %v2404 = vrsqrt.pop %v2372
        %v2405 = vrsqrt.pop %v2373
        %v2406 = vrsqrt.pop %v2374
        %v2407 = vrsqrt.pop %v2375
        %v2408 = vrsqrt.pop %v2376
        %v2409 = vrsqrt.pop %v2377
        %v2410 = vrsqrt.pop %v2378
        %v2411 = vrsqrt.pop %v2379
        %v2412 = vrsqrt.pop %v2380
        %v2413 = vrsqrt.pop %v2381
        %v2414 = vrsqrt.pop %v2382
        %v2415 = vrsqrt.pop %v2383
        %v2416 = vrsqrt.pop %v2384
        %v2417 = vrsqrt.pop %v2385
        %v2418 = vrsqrt.pop %v2386
        %v2419 = vrsqrt.pop %v2387
        %v2420 = vrsqrt.pop %v2388
        %v2421 = vrsqrt.pop %v2389
        %v2422 = vrsqrt.pop %v2390
        %v2423 = vrsqrt.pop %v2391
        %v2424 = vrsqrt.pop %v2392
        %v2425 = vrsqrt.pop %v2393
        %v2426 = vrsqrt.pop %v2394
        %v2427 = vrsqrt.pop %v2395
        %v2428 = vrsqrt.pop %v2396
        %v2429 = vrsqrt.pop %v2397
        %v2430 = vrsqrt.pop %v2398
        %v2431 = vrsqrt.pop %v2399
        %v2432 = vrsqrt.pop %v2400
        %v2433 = vrsqrt.pop %v2401
        %v2434 = vlaneseq
        %v2435 = vshrl.u32 %v2434, 7
        %v2436 = vsub.s32 1, %v2435
        %v2437 = vrot.slane %v1716, %v2436
        %v2438 = vmul.f32 %v2437, %v2402
        %v2439 = vmul.f32 %v2437, %v2403
        %v2440 = vmul.f32 %v2437, %v2404
        %v2441 = vmul.f32 %v2437, %v2405
        %v2442 = vmul.f32 %v2437, %v2406
        %v2443 = vmul.f32 %v2437, %v2407
        %v2444 = vmul.f32 %v2437, %v2408
        %v2445 = vmul.f32 %v2437, %v2409
        %v2446 = vmul.f32 %v2437, %v2410
        %v2447 = vmul.f32 %v2437, %v2411
        %v2448 = vmul.f32 %v2437, %v2412
        %v2449 = vmul.f32 %v2437, %v2413
        %v2450 = vmul.f32 %v2437, %v2414
        %v2451 = vmul.f32 %v2437, %v2415
        %v2452 = vmul.f32 %v2437, %v2416
        %v2453 = vmul.f32 %v2437, %v2417
        %v2454 = vmul.f32 %v2437, %v2418
        %v2455 = vmul.f32 %v2437, %v2419
        %v2456 = vmul.f32 %v2437, %v2420
        %v2457 = vmul.f32 %v2437, %v2421
        %v2458 = vmul.f32 %v2437, %v2422
        %v2459 = vmul.f32 %v2437, %v2423
        %v2460 = vmul.f32 %v2437, %v2424
        %v2461 = vmul.f32 %v2437, %v2425
        %v2462 = vmul.f32 %v2437, %v2426
        %v2463 = vmul.f32 %v2437, %v2427
        %v2464 = vmul.f32 %v2437, %v2428
        %v2465 = vmul.f32 %v2437, %v2429
        %v2466 = vmul.f32 %v2437, %v2430
        %v2467 = vmul.f32 %v2437, %v2431
        %v2468 = vmul.f32 %v2437, %v2432
        %v2469 = vmul.f32 %v2437, %v2433
        %v2470 = vmul.f32 %v2178, %v2438
        %v2471 = vmul.f32 %v2179, %v2439
        %v2472 = vmul.f32 %v2180, %v2440
        %v2473 = vmul.f32 %v2181, %v2441
        %v2474 = vmul.f32 %v2182, %v2442
        %v2475 = vmul.f32 %v2183, %v2443
        %v2476 = vmul.f32 %v2184, %v2444
        %v2477 = vmul.f32 %v2185, %v2445
        %v2478 = vmul.f32 %v2186, %v2446
        %v2479 = vmul.f32 %v2187, %v2447
        %v2480 = vmul.f32 %v2188, %v2448
        %v2481 = vmul.f32 %v2189, %v2449
        %v2482 = vmul.f32 %v2190, %v2450
        %v2483 = vmul.f32 %v2191, %v2451
        %v2484 = vmul.f32 %v2192, %v2452
        %v2485 = vmul.f32 %v2193, %v2453
        %v2486 = vmul.f32 %v2194, %v2454
        %v2487 = vmul.f32 %v2195, %v2455
        %v2488 = vmul.f32 %v2196, %v2456
        %v2489 = vmul.f32 %v2197, %v2457
        %v2490 = vmul.f32 %v2198, %v2458
        %v2491 = vmul.f32 %v2199, %v2459
        %v2492 = vmul.f32 %v2200, %v2460
        %v2493 = vmul.f32 %v2201, %v2461
        %v2494 = vmul.f32 %v2202, %v2462
        %v2495 = vmul.f32 %v2203, %v2463
        %v2496 = vmul.f32 %v2204, %v2464
        %v2497 = vmul.f32 %v2205, %v2465
        %v2498 = vmul.f32 %v2206, %v2466
        %v2499 = vmul.f32 %v2207, %v2467
        %v2500 = vmul.f32 %v2208, %v2468
        %v2501 = vmul.f32 %v2209, %v2469
        %v2502 = vlaneseq
        %v2503 = vshrl.u32 %v2502, 7
        %v2504 = vsub.s32 2, %v2503
        %v2505 = vrot.slane %v1716, %v2504
        %v2506 = vadd.f32 %v2470, %v2505
        %v2507 = vadd.f32 %v2471, %v2505
        %v2508 = vadd.f32 %v2472, %v2505
        %v2509 = vadd.f32 %v2473, %v2505
        %v2510 = vadd.f32 %v2474, %v2505
        %v2511 = vadd.f32 %v2475, %v2505
        %v2512 = vadd.f32 %v2476, %v2505
        %v2513 = vadd.f32 %v2477, %v2505
        %v2514 = vadd.f32 %v2478, %v2505
        %v2515 = vadd.f32 %v2479, %v2505
        %v2516 = vadd.f32 %v2480, %v2505
        %v2517 = vadd.f32 %v2481, %v2505
        %v2518 = vadd.f32 %v2482, %v2505
        %v2519 = vadd.f32 %v2483, %v2505
        %v2520 = vadd.f32 %v2484, %v2505
        %v2521 = vadd.f32 %v2485, %v2505
        %v2522 = vadd.f32 %v2486, %v2505
        %v2523 = vadd.f32 %v2487, %v2505
        %v2524 = vadd.f32 %v2488, %v2505
        %v2525 = vadd.f32 %v2489, %v2505
        %v2526 = vadd.f32 %v2490, %v2505
        %v2527 = vadd.f32 %v2491, %v2505
        %v2528 = vadd.f32 %v2492, %v2505
        %v2529 = vadd.f32 %v2493, %v2505
        %v2530 = vadd.f32 %v2494, %v2505
        %v2531 = vadd.f32 %v2495, %v2505
        %v2532 = vadd.f32 %v2496, %v2505
        %v2533 = vadd.f32 %v2497, %v2505
        %v2534 = vadd.f32 %v2498, %v2505
        %v2535 = vadd.f32 %v2499, %v2505
        %v2536 = vadd.f32 %v2500, %v2505
        %v2537 = vadd.f32 %v2501, %v2505
        %v2666 = vunpack.c.l.b16 %v1485
        %v2667 = vunpack.c.h.b16 %v1485
        %v2668 = vunpack.c.l.b16 %v1486
        %v2669 = vunpack.c.h.b16 %v1486
        %v2670 = vunpack.c.l.b16 %v1487
        %v2671 = vunpack.c.h.b16 %v1487
        %v2672 = vunpack.c.l.b16 %v1488
        %v2673 = vunpack.c.h.b16 %v1488
        %v2674 = vunpack.c.l.b16 %v1489
        %v2675 = vunpack.c.h.b16 %v1489
        %v2676 = vunpack.c.l.b16 %v1490
        %v2677 = vunpack.c.h.b16 %v1490
        %v2678 = vunpack.c.l.b16 %v1491
        %v2679 = vunpack.c.h.b16 %v1491
        %v2680 = vunpack.c.l.b16 %v1492
        %v2681 = vunpack.c.h.b16 %v1492
        %v2682 = vunpack.c.l.b16 %v1493
        %v2683 = vunpack.c.h.b16 %v1493
        %v2684 = vunpack.c.l.b16 %v1494
        %v2685 = vunpack.c.h.b16 %v1494
        %v2686 = vunpack.c.l.b16 %v1495
        %v2687 = vunpack.c.h.b16 %v1495
        %v2688 = vunpack.c.l.b16 %v1496
        %v2689 = vunpack.c.h.b16 %v1496
        %v2690 = vunpack.c.l.b16 %v1497
        %v2691 = vunpack.c.h.b16 %v1497
        %v2692 = vunpack.c.l.b16 %v1498
        %v2693 = vunpack.c.h.b16 %v1498
        %v2694 = vunpack.c.l.b16 %v1499
        %v2695 = vunpack.c.h.b16 %v1499
        %v2696 = vunpack.c.l.b16 %v1500
        %v2697 = vunpack.c.h.b16 %v1500
        %v2698 = vunpack.c.l.b16 %v1501
        %v2699 = vunpack.c.h.b16 %v1501
        %v2700 = vunpack.c.l.b16 %v1502
        %v2701 = vunpack.c.h.b16 %v1502
        %v2702 = vunpack.c.l.b16 %v1503
        %v2703 = vunpack.c.h.b16 %v1503
        %v2704 = vunpack.c.l.b16 %v1504
        %v2705 = vunpack.c.h.b16 %v1504
        %v2706 = vunpack.c.l.b16 %v1505
        %v2707 = vunpack.c.h.b16 %v1505
        %v2708 = vunpack.c.l.b16 %v1506
        %v2709 = vunpack.c.h.b16 %v1506
        %v2710 = vunpack.c.l.b16 %v1507
        %v2711 = vunpack.c.h.b16 %v1507
        %v2712 = vunpack.c.l.b16 %v1508
        %v2713 = vunpack.c.h.b16 %v1508
        %v2714 = vunpack.c.l.b16 %v1509
        %v2715 = vunpack.c.h.b16 %v1509
        %v2716 = vunpack.c.l.b16 %v1510
        %v2717 = vunpack.c.h.b16 %v1510
        %v2718 = vunpack.c.l.b16 %v1511
        %v2719 = vunpack.c.h.b16 %v1511
        %v2720 = vunpack.c.l.b16 %v1512
        %v2721 = vunpack.c.h.b16 %v1512
        %v2722 = vunpack.c.l.b16 %v1513
        %v2723 = vunpack.c.h.b16 %v1513
        %v2724 = vunpack.c.l.b16 %v1514
        %v2725 = vunpack.c.h.b16 %v1514
        %v2726 = vunpack.c.l.b16 %v1515
        %v2727 = vunpack.c.h.b16 %v1515
        %v2728 = vunpack.c.l.b16 %v1516
        %v2729 = vunpack.c.h.b16 %v1516
        %v2730 = vunpack.c.l.b16 %v1517
        %v2731 = vunpack.c.h.b16 %v1517
        %v2732 = vunpack.c.l.b16 %v1518
        %v2733 = vunpack.c.h.b16 %v1518
        %v2734 = vunpack.c.l.b16 %v1519
        %v2735 = vunpack.c.h.b16 %v1519
        %v2736 = vunpack.c.l.b16 %v1520
        %v2737 = vunpack.c.h.b16 %v1520
        %v2738 = vunpack.c.l.b16 %v1521
        %v2739 = vunpack.c.h.b16 %v1521
        %v2740 = vunpack.c.l.b16 %v1522
        %v2741 = vunpack.c.h.b16 %v1522
        %v2742 = vunpack.c.l.b16 %v1523
        %v2743 = vunpack.c.h.b16 %v1523
        %v2744 = vunpack.c.l.b16 %v1524
        %v2745 = vunpack.c.h.b16 %v1524
        %v2746 = vunpack.c.l.b16 %v1525
        %v2747 = vunpack.c.h.b16 %v1525
        %v2748 = vunpack.c.l.b16 %v1526
        %v2749 = vunpack.c.h.b16 %v1526
        %v2750 = vunpack.c.l.b16 %v1527
        %v2751 = vunpack.c.h.b16 %v1527
        %v2752 = vunpack.c.l.b16 %v1528
        %v2753 = vunpack.c.h.b16 %v1528
        %v2754 = vunpack.c.l.b16 %v1529
        %v2755 = vunpack.c.h.b16 %v1529
        %v2756 = vunpack.c.l.b16 %v1530
        %v2757 = vunpack.c.h.b16 %v1530
        %v2758 = vunpack.c.l.b16 %v1531
        %v2759 = vunpack.c.h.b16 %v1531
        %v2760 = vunpack.c.l.b16 %v1532
        %v2761 = vunpack.c.h.b16 %v1532
        %v2762 = vunpack.c.l.b16 %v1533
        %v2763 = vunpack.c.h.b16 %v1533
        %v2764 = vunpack.c.l.b16 %v1534
        %v2765 = vunpack.c.h.b16 %v1534
        %v2766 = vunpack.c.l.b16 %v1535
        %v2767 = vunpack.c.h.b16 %v1535
        %v2768 = vunpack.c.l.b16 %v1536
        %v2769 = vunpack.c.h.b16 %v1536
        %v2770 = vunpack.c.l.b16 %v1537
        %v2771 = vunpack.c.h.b16 %v1537
        %v2772 = vunpack.c.l.b16 %v1538
        %v2773 = vunpack.c.h.b16 %v1538
        %v2774 = vunpack.c.l.b16 %v1539
        %v2775 = vunpack.c.h.b16 %v1539
        %v2776 = vunpack.c.l.b16 %v1540
        %v2777 = vunpack.c.h.b16 %v1540
        %v2778 = vunpack.c.l.b16 %v1541
        %v2779 = vunpack.c.h.b16 %v1541
        %v2780 = vunpack.c.l.b16 %v1542
        %v2781 = vunpack.c.h.b16 %v1542
        %v2782 = vunpack.c.l.b16 %v1543
        %v2783 = vunpack.c.h.b16 %v1543
        %v2784 = vunpack.c.l.b16 %v1544
        %v2785 = vunpack.c.h.b16 %v1544
        %v2786 = vunpack.c.l.b16 %v1545
        %v2787 = vunpack.c.h.b16 %v1545
        %v2788 = vunpack.c.l.b16 %v1546
        %v2789 = vunpack.c.h.b16 %v1546
        %v2790 = vunpack.c.l.b16 %v1547
        %v2791 = vunpack.c.h.b16 %v1547
        %v2792 = vunpack.c.l.b16 %v1548
        %v2793 = vunpack.c.h.b16 %v1548
        %v2794 = vunpack.c.l.b16 %v1549
        %v2795 = vunpack.c.h.b16 %v1549
        %v2796 = vunpack.c.l.b16 %v1550
        %v2797 = vunpack.c.h.b16 %v1550
        %v2798 = vunpack.c.l.b16 %v1551
        %v2799 = vunpack.c.h.b16 %v1551
        %v2800 = vunpack.c.l.b16 %v1552
        %v2801 = vunpack.c.h.b16 %v1552
        %v2802 = vunpack.c.l.b16 %v1553
        %v2803 = vunpack.c.h.b16 %v1553
        %v2804 = vunpack.c.l.b16 %v1554
        %v2805 = vunpack.c.h.b16 %v1554
        %v2806 = vunpack.c.l.b16 %v1555
        %v2807 = vunpack.c.h.b16 %v1555
        %v2808 = vunpack.c.l.b16 %v1556
        %v2809 = vunpack.c.h.b16 %v1556
        %v2810 = vunpack.c.l.b16 %v1557
        %v2811 = vunpack.c.h.b16 %v1557
        %v2812 = vunpack.c.l.b16 %v1558
        %v2813 = vunpack.c.h.b16 %v1558
        %v2814 = vunpack.c.l.b16 %v1559
        %v2815 = vunpack.c.h.b16 %v1559
        %v2816 = vunpack.c.l.b16 %v1560
        %v2817 = vunpack.c.h.b16 %v1560
        %v2818 = vunpack.c.l.b16 %v1561
        %v2819 = vunpack.c.h.b16 %v1561
        %v2820 = vunpack.c.l.b16 %v1562
        %v2821 = vunpack.c.h.b16 %v1562
        %v2822 = vunpack.c.l.b16 %v1563
        %v2823 = vunpack.c.h.b16 %v1563
        %v2824 = vunpack.c.l.b16 %v1564
        %v2825 = vunpack.c.h.b16 %v1564
        %v2826 = vunpack.c.l.b16 %v1565
        %v2827 = vunpack.c.h.b16 %v1565
        %v2828 = vunpack.c.l.b16 %v1566
        %v2829 = vunpack.c.h.b16 %v1566
        %v2830 = vunpack.c.l.b16 %v1567
        %v2831 = vunpack.c.h.b16 %v1567
        %v2832 = vunpack.c.l.b16 %v1568
        %v2833 = vunpack.c.h.b16 %v1568
        %v2834 = vunpack.c.l.b16 %v1569
        %v2835 = vunpack.c.h.b16 %v1569
        %v2836 = vunpack.c.l.b16 %v1570
        %v2837 = vunpack.c.h.b16 %v1570
        %v2838 = vunpack.c.l.b16 %v1571
        %v2839 = vunpack.c.h.b16 %v1571
        %v2840 = vunpack.c.l.b16 %v1572
        %v2841 = vunpack.c.h.b16 %v1572
        %v2842 = vunpack.c.l.b16 %v1573
        %v2843 = vunpack.c.h.b16 %v1573
        %v2844 = vunpack.c.l.b16 %v1574
        %v2845 = vunpack.c.h.b16 %v1574
        %v2846 = vunpack.c.l.b16 %v1575
        %v2847 = vunpack.c.h.b16 %v1575
        %v2848 = vunpack.c.l.b16 %v1576
        %v2849 = vunpack.c.h.b16 %v1576
        %v2850 = vunpack.c.l.b16 %v1577
        %v2851 = vunpack.c.h.b16 %v1577
        %v2852 = vunpack.c.l.b16 %v1578
        %v2853 = vunpack.c.h.b16 %v1578
        %v2854 = vunpack.c.l.b16 %v1579
        %v2855 = vunpack.c.h.b16 %v1579
        %v2856 = vunpack.c.l.b16 %v1580
        %v2857 = vunpack.c.h.b16 %v1580
        %v2858 = vunpack.c.l.b16 %v1581
        %v2859 = vunpack.c.h.b16 %v1581
        %v2860 = vunpack.c.l.b16 %v1582
        %v2861 = vunpack.c.h.b16 %v1582
        %v2862 = vunpack.c.l.b16 %v1583
        %v2863 = vunpack.c.h.b16 %v1583
        %v2864 = vunpack.c.l.b16 %v1584
        %v2865 = vunpack.c.h.b16 %v1584
        %v2866 = vunpack.c.l.b16 %v1585
        %v2867 = vunpack.c.h.b16 %v1585
        %v2868 = vunpack.c.l.b16 %v1586
        %v2869 = vunpack.c.h.b16 %v1586
        %v2870 = vunpack.c.l.b16 %v1587
        %v2871 = vunpack.c.h.b16 %v1587
        %v2872 = vunpack.c.l.b16 %v1588
        %v2873 = vunpack.c.h.b16 %v1588
        %v2874 = vunpack.c.l.b16 %v1589
        %v2875 = vunpack.c.h.b16 %v1589
        %v2876 = vunpack.c.l.b16 %v1590
        %v2877 = vunpack.c.h.b16 %v1590
        %v2878 = vunpack.c.l.b16 %v1591
        %v2879 = vunpack.c.h.b16 %v1591
        %v2880 = vunpack.c.l.b16 %v1592
        %v2881 = vunpack.c.h.b16 %v1592
        %v2882 = vunpack.c.l.b16 %v1593
        %v2883 = vunpack.c.h.b16 %v1593
        %v2884 = vunpack.c.l.b16 %v1594
        %v2885 = vunpack.c.h.b16 %v1594
        %v2886 = vunpack.c.l.b16 %v1595
        %v2887 = vunpack.c.h.b16 %v1595
        %v2888 = vunpack.c.l.b16 %v1596
        %v2889 = vunpack.c.h.b16 %v1596
        %v2890 = vunpack.c.l.b16 %v1597
        %v2891 = vunpack.c.h.b16 %v1597
        %v2892 = vunpack.c.l.b16 %v1598
        %v2893 = vunpack.c.h.b16 %v1598
        %v2894 = vunpack.c.l.b16 %v1599
        %v2895 = vunpack.c.h.b16 %v1599
        %v2896 = vunpack.c.l.b16 %v1600
        %v2897 = vunpack.c.h.b16 %v1600
        %v2898 = vunpack.c.l.b16 %v1601
        %v2899 = vunpack.c.h.b16 %v1601
        %v2900 = vunpack.c.l.b16 %v1602
        %v2901 = vunpack.c.h.b16 %v1602
        %v2902 = vunpack.c.l.b16 %v1603
        %v2903 = vunpack.c.h.b16 %v1603
        %v2904 = vunpack.c.l.b16 %v1604
        %v2905 = vunpack.c.h.b16 %v1604
        %v2906 = vunpack.c.l.b16 %v1605
        %v2907 = vunpack.c.h.b16 %v1605
        %v2908 = vunpack.c.l.b16 %v1606
        %v2909 = vunpack.c.h.b16 %v1606
        %v2910 = vunpack.c.l.b16 %v1607
        %v2911 = vunpack.c.h.b16 %v1607
        %v2912 = vunpack.c.l.b16 %v1608
        %v2913 = vunpack.c.h.b16 %v1608
        %v2914 = vunpack.c.l.b16 %v1609
        %v2915 = vunpack.c.h.b16 %v1609
        %v2916 = vunpack.c.l.b16 %v1610
        %v2917 = vunpack.c.h.b16 %v1610
        %v2918 = vunpack.c.l.b16 %v1611
        %v2919 = vunpack.c.h.b16 %v1611
        %v2920 = vunpack.c.l.b16 %v1612
        %v2921 = vunpack.c.h.b16 %v1612
        %v2922 = vpack.c.b16 %v2674, %v2666
        %v2923 = vpack.c.b16 %v2675, %v2667
        %v2924 = vpack.c.b16 %v2676, %v2668
        %v2925 = vpack.c.b16 %v2677, %v2669
        %v2926 = vpack.c.b16 %v2678, %v2670
        %v2927 = vpack.c.b16 %v2679, %v2671
        %v2928 = vpack.c.b16 %v2680, %v2672
        %v2929 = vpack.c.b16 %v2681, %v2673
        %v2930 = vpack.c.b16 %v2690, %v2682
        %v2931 = vpack.c.b16 %v2691, %v2683
        %v2932 = vpack.c.b16 %v2692, %v2684
        %v2933 = vpack.c.b16 %v2693, %v2685
        %v2934 = vpack.c.b16 %v2694, %v2686
        %v2935 = vpack.c.b16 %v2695, %v2687
        %v2936 = vpack.c.b16 %v2696, %v2688
        %v2937 = vpack.c.b16 %v2697, %v2689
        %v2938 = vpack.c.b16 %v2706, %v2698
        %v2939 = vpack.c.b16 %v2707, %v2699
        %v2940 = vpack.c.b16 %v2708, %v2700
        %v2941 = vpack.c.b16 %v2709, %v2701
        %v2942 = vpack.c.b16 %v2710, %v2702
        %v2943 = vpack.c.b16 %v2711, %v2703
        %v2944 = vpack.c.b16 %v2712, %v2704
        %v2945 = vpack.c.b16 %v2713, %v2705
        %v2946 = vpack.c.b16 %v2722, %v2714
        %v2947 = vpack.c.b16 %v2723, %v2715
        %v2948 = vpack.c.b16 %v2724, %v2716
        %v2949 = vpack.c.b16 %v2725, %v2717
        %v2950 = vpack.c.b16 %v2726, %v2718
        %v2951 = vpack.c.b16 %v2727, %v2719
        %v2952 = vpack.c.b16 %v2728, %v2720
        %v2953 = vpack.c.b16 %v2729, %v2721
        %v2954 = vpack.c.b16 %v2738, %v2730
        %v2955 = vpack.c.b16 %v2739, %v2731
        %v2956 = vpack.c.b16 %v2740, %v2732
        %v2957 = vpack.c.b16 %v2741, %v2733
        %v2958 = vpack.c.b16 %v2742, %v2734
        %v2959 = vpack.c.b16 %v2743, %v2735
        %v2960 = vpack.c.b16 %v2744, %v2736
        %v2961 = vpack.c.b16 %v2745, %v2737
        %v2962 = vpack.c.b16 %v2754, %v2746
        %v2963 = vpack.c.b16 %v2755, %v2747
        %v2964 = vpack.c.b16 %v2756, %v2748
        %v2965 = vpack.c.b16 %v2757, %v2749
        %v2966 = vpack.c.b16 %v2758, %v2750
        %v2967 = vpack.c.b16 %v2759, %v2751
        %v2968 = vpack.c.b16 %v2760, %v2752
        %v2969 = vpack.c.b16 %v2761, %v2753
        %v2970 = vpack.c.b16 %v2770, %v2762
        %v2971 = vpack.c.b16 %v2771, %v2763
        %v2972 = vpack.c.b16 %v2772, %v2764
        %v2973 = vpack.c.b16 %v2773, %v2765
        %v2974 = vpack.c.b16 %v2774, %v2766
        %v2975 = vpack.c.b16 %v2775, %v2767
        %v2976 = vpack.c.b16 %v2776, %v2768
        %v2977 = vpack.c.b16 %v2777, %v2769
        %v2978 = vpack.c.b16 %v2786, %v2778
        %v2979 = vpack.c.b16 %v2787, %v2779
        %v2980 = vpack.c.b16 %v2788, %v2780
        %v2981 = vpack.c.b16 %v2789, %v2781
        %v2982 = vpack.c.b16 %v2790, %v2782
        %v2983 = vpack.c.b16 %v2791, %v2783
        %v2984 = vpack.c.b16 %v2792, %v2784
        %v2985 = vpack.c.b16 %v2793, %v2785
        %v2986 = vpack.c.b16 %v2802, %v2794
        %v2987 = vpack.c.b16 %v2803, %v2795
        %v2988 = vpack.c.b16 %v2804, %v2796
        %v2989 = vpack.c.b16 %v2805, %v2797
        %v2990 = vpack.c.b16 %v2806, %v2798
        %v2991 = vpack.c.b16 %v2807, %v2799
        %v2992 = vpack.c.b16 %v2808, %v2800
        %v2993 = vpack.c.b16 %v2809, %v2801
        %v2994 = vpack.c.b16 %v2818, %v2810
        %v2995 = vpack.c.b16 %v2819, %v2811
        %v2996 = vpack.c.b16 %v2820, %v2812
        %v2997 = vpack.c.b16 %v2821, %v2813
        %v2998 = vpack.c.b16 %v2822, %v2814
        %v2999 = vpack.c.b16 %v2823, %v2815
        %v3000 = vpack.c.b16 %v2824, %v2816
        %v3001 = vpack.c.b16 %v2825, %v2817
        %v3002 = vpack.c.b16 %v2834, %v2826
        %v3003 = vpack.c.b16 %v2835, %v2827
        %v3004 = vpack.c.b16 %v2836, %v2828
        %v3005 = vpack.c.b16 %v2837, %v2829
        %v3006 = vpack.c.b16 %v2838, %v2830
        %v3007 = vpack.c.b16 %v2839, %v2831
        %v3008 = vpack.c.b16 %v2840, %v2832
        %v3009 = vpack.c.b16 %v2841, %v2833
        %v3010 = vpack.c.b16 %v2850, %v2842
        %v3011 = vpack.c.b16 %v2851, %v2843
        %v3012 = vpack.c.b16 %v2852, %v2844
        %v3013 = vpack.c.b16 %v2853, %v2845
        %v3014 = vpack.c.b16 %v2854, %v2846
        %v3015 = vpack.c.b16 %v2855, %v2847
        %v3016 = vpack.c.b16 %v2856, %v2848
        %v3017 = vpack.c.b16 %v2857, %v2849
        %v3018 = vpack.c.b16 %v2866, %v2858
        %v3019 = vpack.c.b16 %v2867, %v2859
        %v3020 = vpack.c.b16 %v2868, %v2860
        %v3021 = vpack.c.b16 %v2869, %v2861
        %v3022 = vpack.c.b16 %v2870, %v2862
        %v3023 = vpack.c.b16 %v2871, %v2863
        %v3024 = vpack.c.b16 %v2872, %v2864
        %v3025 = vpack.c.b16 %v2873, %v2865
        %v3026 = vpack.c.b16 %v2882, %v2874
        %v3027 = vpack.c.b16 %v2883, %v2875
        %v3028 = vpack.c.b16 %v2884, %v2876
        %v3029 = vpack.c.b16 %v2885, %v2877
        %v3030 = vpack.c.b16 %v2886, %v2878
        %v3031 = vpack.c.b16 %v2887, %v2879
        %v3032 = vpack.c.b16 %v2888, %v2880
        %v3033 = vpack.c.b16 %v2889, %v2881
        %v3034 = vpack.c.b16 %v2898, %v2890
        %v3035 = vpack.c.b16 %v2899, %v2891
        %v3036 = vpack.c.b16 %v2900, %v2892
        %v3037 = vpack.c.b16 %v2901, %v2893
        %v3038 = vpack.c.b16 %v2902, %v2894
        %v3039 = vpack.c.b16 %v2903, %v2895
        %v3040 = vpack.c.b16 %v2904, %v2896
        %v3041 = vpack.c.b16 %v2905, %v2897
        %v3042 = vpack.c.b16 %v2914, %v2906
        %v3043 = vpack.c.b16 %v2915, %v2907
        %v3044 = vpack.c.b16 %v2916, %v2908
        %v3045 = vpack.c.b16 %v2917, %v2909
        %v3046 = vpack.c.b16 %v2918, %v2910
        %v3047 = vpack.c.b16 %v2919, %v2911
        %v3048 = vpack.c.b16 %v2920, %v2912
        %v3049 = vpack.c.b16 %v2921, %v2913
        %3179 = vrot.lane.b32.xlu0 %v1720, 96
        %v3180 = vpop.permute.xlu0 %3179
        %3182 = vmatprep.subr.bf16.mxu0 0
        %3183 = vmatpush1.bf16.msra.mxu0 %v1620
        %3184 = vmatprep.subr.bf16.mxu0 0
        %3185 = vmatpush1.bf16.msra.mxu0 %v1619
        %3186 = vmatprep.subr.bf16.mxu0 0
        %3187 = vmatpush1.bf16.msra.mxu0 %v1618
        %3188 = vmatprep.subr.bf16.mxu0 0
        %3189 = vmatpush1.bf16.msra.mxu0 %v1617
        %3190 = vmatprep.subr.bf16.mxu0 0
        %3191 = vmatpush1.bf16.msra.mxu0 %v1616
        %3192 = vmatprep.subr.bf16.mxu0 0
        %3193 = vmatpush1.bf16.msra.mxu0 %v1615
        %3194 = vmatprep.subr.bf16.mxu0 0
        %3195 = vmatpush1.bf16.msra.mxu0 %v1614
        %3196 = vmatprep.subr.bf16.mxu0 0
        %3197 = vmatpush1.bf16.msra.mxu0 %v1613
        %3198 = vmatprep.subr.bf16.mxu0 0
        %3199 = vmatpush2.bf16.msra.mxu0 %v1628
        %3200 = vmatprep.subr.bf16.mxu0 0
        %3201 = vmatpush2.bf16.msra.mxu0 %v1627
        %3202 = vmatprep.subr.bf16.mxu0 0
        %3203 = vmatpush2.bf16.msra.mxu0 %v1626
        %3204 = vmatprep.subr.bf16.mxu0 0
        %3205 = vmatpush2.bf16.msra.mxu0 %v1625
        %3206 = vmatprep.subr.bf16.mxu0 0
        %3207 = vmatpush2.bf16.msra.mxu0 %v1624
        %3208 = vmatprep.subr.bf16.mxu0 0
        %3209 = vmatpush2.bf16.msra.mxu0 %v1623
        %3210 = vmatprep.subr.bf16.mxu0 0
        %3211 = vmatpush2.bf16.msra.mxu0 %v1622
        %3212 = vmatprep.subr.bf16.mxu0 0
        %3213 = vmatpush2.bf16.msra.mxu0 %v1621
        %3214 = vmatprep.mubr.bf16.mxu0 %v2923
        %3215 = vmatmul.mubr.bf16.gmra.mxu0 %v2922
        %v3216 = vpop.f32.mrf.mxu0
        %v3217 = vadd.f32 %v3180, %v3216
        %v3218 = vpop.f32.mrf.mxu0
        %v3219 = vpop.f32.mrf.mxu0
        %v3220 = vadd.f32 %v3180, %v3219
        %v3221 = vpop.f32.mrf.mxu0
        %3222 = vmatprep.mubr.bf16.mxu0 %v2931
        %3223 = vmatmul.mubr.bf16.gmra.mxu0 %v2930
        %v3224 = vpop.f32.mrf.mxu0
        %v3225 = vadd.f32 %v3180, %v3224
        %v3226 = vpop.f32.mrf.mxu0
        %v3227 = vpop.f32.mrf.mxu0
        %v3228 = vadd.f32 %v3180, %v3227
        %v3229 = vpop.f32.mrf.mxu0
        %3230 = vmatprep.mubr.bf16.mxu0 %v2939
        %3231 = vmatmul.mubr.bf16.gmra.mxu0 %v2938
        %v3232 = vpop.f32.mrf.mxu0
        %v3233 = vadd.f32 %v3180, %v3232
        %v3234 = vpop.f32.mrf.mxu0
        %v3235 = vpop.f32.mrf.mxu0
        %v3236 = vadd.f32 %v3180, %v3235
        %v3237 = vpop.f32.mrf.mxu0
        %3238 = vmatprep.mubr.bf16.mxu0 %v2947
        %3239 = vmatmul.mubr.bf16.gmra.mxu0 %v2946
        %v3240 = vpop.f32.mrf.mxu0
        %v3241 = vadd.f32 %v3180, %v3240
        %v3242 = vpop.f32.mrf.mxu0
        %v3243 = vpop.f32.mrf.mxu0
        %v3244 = vadd.f32 %v3180, %v3243
        %v3245 = vpop.f32.mrf.mxu0
        %3246 = vmatprep.mubr.bf16.mxu0 %v2955
        %3247 = vmatmul.mubr.bf16.gmra.mxu0 %v2954
        %v3248 = vpop.f32.mrf.mxu0
        %v3249 = vadd.f32 %v3180, %v3248
        %v3250 = vpop.f32.mrf.mxu0
        %v3251 = vpop.f32.mrf.mxu0
        %v3252 = vadd.f32 %v3180, %v3251
        %v3253 = vpop.f32.mrf.mxu0
        %3254 = vmatprep.mubr.bf16.mxu0 %v2963
        %3255 = vmatmul.mubr.bf16.gmra.mxu0 %v2962
        %v3256 = vpop.f32.mrf.mxu0
        %v3257 = vadd.f32 %v3180, %v3256
        %v3258 = vpop.f32.mrf.mxu0
        %v3259 = vpop.f32.mrf.mxu0
        %v3260 = vadd.f32 %v3180, %v3259
        %v3261 = vpop.f32.mrf.mxu0
        %3262 = vmatprep.mubr.bf16.mxu0 %v2971
        %3263 = vmatmul.mubr.bf16.gmra.mxu0 %v2970
        %v3264 = vpop.f32.mrf.mxu0
        %v3265 = vadd.f32 %v3180, %v3264
        %v3266 = vpop.f32.mrf.mxu0
        %v3267 = vpop.f32.mrf.mxu0
        %v3268 = vadd.f32 %v3180, %v3267
        %v3269 = vpop.f32.mrf.mxu0
        %3270 = vmatprep.mubr.bf16.mxu0 %v2979
        %3271 = vmatmul.mubr.bf16.gmra.mxu0 %v2978
        %v3272 = vpop.f32.mrf.mxu0
        %v3273 = vadd.f32 %v3180, %v3272
        %v3274 = vpop.f32.mrf.mxu0
        %v3275 = vpop.f32.mrf.mxu0
        %v3276 = vadd.f32 %v3180, %v3275
        %v3277 = vpop.f32.mrf.mxu0
        %3278 = vmatprep.mubr.bf16.mxu0 %v2987
        %3279 = vmatmul.mubr.bf16.gmra.mxu0 %v2986
        %v3280 = vpop.f32.mrf.mxu0
        %v3281 = vadd.f32 %v3180, %v3280
        %v3282 = vpop.f32.mrf.mxu0
        %v3283 = vpop.f32.mrf.mxu0
        %v3284 = vadd.f32 %v3180, %v3283
        %v3285 = vpop.f32.mrf.mxu0
        %3286 = vmatprep.mubr.bf16.mxu0 %v2995
        %3287 = vmatmul.mubr.bf16.gmra.mxu0 %v2994
        %v3288 = vpop.f32.mrf.mxu0
        %v3289 = vadd.f32 %v3180, %v3288
        %v3290 = vpop.f32.mrf.mxu0
        %v3291 = vpop.f32.mrf.mxu0
        %v3292 = vadd.f32 %v3180, %v3291
        %v3293 = vpop.f32.mrf.mxu0
        %3294 = vmatprep.mubr.bf16.mxu0 %v3003
        %3295 = vmatmul.mubr.bf16.gmra.mxu0 %v3002
        %v3296 = vpop.f32.mrf.mxu0
        %v3297 = vadd.f32 %v3180, %v3296
        %v3298 = vpop.f32.mrf.mxu0
        %v3299 = vpop.f32.mrf.mxu0
        %v3300 = vadd.f32 %v3180, %v3299
        %v3301 = vpop.f32.mrf.mxu0
        %3302 = vmatprep.mubr.bf16.mxu0 %v3011
        %3303 = vmatmul.mubr.bf16.gmra.mxu0 %v3010
        %v3304 = vpop.f32.mrf.mxu0
        %v3305 = vadd.f32 %v3180, %v3304
        %v3306 = vpop.f32.mrf.mxu0
        %v3307 = vpop.f32.mrf.mxu0
        %v3308 = vadd.f32 %v3180, %v3307
        %v3309 = vpop.f32.mrf.mxu0
        %3310 = vmatprep.mubr.bf16.mxu0 %v3019
        %3311 = vmatmul.mubr.bf16.gmra.mxu0 %v3018
        %v3312 = vpop.f32.mrf.mxu0
        %v3313 = vadd.f32 %v3180, %v3312
        %v3314 = vpop.f32.mrf.mxu0
        %v3315 = vpop.f32.mrf.mxu0
        %v3316 = vadd.f32 %v3180, %v3315
        %v3317 = vpop.f32.mrf.mxu0
        %3318 = vmatprep.mubr.bf16.mxu0 %v3027
        %3319 = vmatmul.mubr.bf16.gmra.mxu0 %v3026
        %v3320 = vpop.f32.mrf.mxu0
        %v3321 = vadd.f32 %v3180, %v3320
        %v3322 = vpop.f32.mrf.mxu0
        %v3323 = vpop.f32.mrf.mxu0
        %v3324 = vadd.f32 %v3180, %v3323
        %v3325 = vpop.f32.mrf.mxu0
        %3326 = vmatprep.mubr.bf16.mxu0 %v3035
        %3327 = vmatmul.mubr.bf16.gmra.mxu0 %v3034
        %v3328 = vpop.f32.mrf.mxu0
        %v3329 = vadd.f32 %v3180, %v3328
        %v3330 = vpop.f32.mrf.mxu0
        %v3331 = vpop.f32.mrf.mxu0
        %v3332 = vadd.f32 %v3180, %v3331
        %v3333 = vpop.f32.mrf.mxu0
        %3334 = vmatprep.mubr.bf16.mxu0 %v3043
        %3335 = vmatmul.mubr.bf16.gmra.mxu0 %v3042
        %v3336 = vpop.f32.mrf.mxu0
        %v3337 = vadd.f32 %v3180, %v3336
        %v3338 = vpop.f32.mrf.mxu0
        %v3339 = vpop.f32.mrf.mxu0
        %v3340 = vadd.f32 %v3180, %v3339
        %v3341 = vpop.f32.mrf.mxu0
        %3342 = vdwg.mxu0
        %3343 = vmatprep.subr.bf16.mxu0 0
        %3344 = vmatpush1.bf16.msra.mxu0 %v1636
        %3345 = vmatprep.subr.bf16.mxu0 0
        %3346 = vmatpush1.bf16.msra.mxu0 %v1635
        %3347 = vmatprep.subr.bf16.mxu0 0
        %3348 = vmatpush1.bf16.msra.mxu0 %v1634
        %3349 = vmatprep.subr.bf16.mxu0 0
        %3350 = vmatpush1.bf16.msra.mxu0 %v1633
        %3351 = vmatprep.subr.bf16.mxu0 0
        %3352 = vmatpush1.bf16.msra.mxu0 %v1632
        %3353 = vmatprep.subr.bf16.mxu0 0
        %3354 = vmatpush1.bf16.msra.mxu0 %v1631
        %3355 = vmatprep.subr.bf16.mxu0 0
        %3356 = vmatpush1.bf16.msra.mxu0 %v1630
        %3357 = vmatprep.subr.bf16.mxu0 0
        %3358 = vmatpush1.bf16.msra.mxu0 %v1629
        %3359 = vmatprep.subr.bf16.mxu0 0
        %3360 = vmatpush2.bf16.msra.mxu0 %v1644
        %3361 = vmatprep.subr.bf16.mxu0 0
        %3362 = vmatpush2.bf16.msra.mxu0 %v1643
        %3363 = vmatprep.subr.bf16.mxu0 0
        %3364 = vmatpush2.bf16.msra.mxu0 %v1642
        %3365 = vmatprep.subr.bf16.mxu0 0
        %3366 = vmatpush2.bf16.msra.mxu0 %v1641
        %3367 = vmatprep.subr.bf16.mxu0 0
        %3368 = vmatpush2.bf16.msra.mxu0 %v1640
        %3369 = vmatprep.subr.bf16.mxu0 0
        %3370 = vmatpush2.bf16.msra.mxu0 %v1639
        %3371 = vmatprep.subr.bf16.mxu0 0
        %3372 = vmatpush2.bf16.msra.mxu0 %v1638
        %3373 = vmatprep.subr.bf16.mxu0 0
        %3374 = vmatpush2.bf16.msra.mxu0 %v1637
        %3375 = vmatprep.mubr.bf16.mxu0 %v2925
        %3376 = vmatmul.mubr.bf16.gmra.mxu0 %v2924
        %v3377 = vpop.f32.mrf.mxu0
        %v3378 = vadd.f32 %v3217, %v3377
        %v3379 = vpop.f32.mrf.mxu0
        %v3380 = vpop.f32.mrf.mxu0
        %v3381 = vadd.f32 %v3220, %v3380
        %v3382 = vpop.f32.mrf.mxu0
        %3383 = vmatprep.mubr.bf16.mxu0 %v2933
        %3384 = vmatmul.mubr.bf16.gmra.mxu0 %v2932
        %v3385 = vpop.f32.mrf.mxu0
        %v3386 = vadd.f32 %v3225, %v3385
        %v3387 = vpop.f32.mrf.mxu0
        %v3388 = vpop.f32.mrf.mxu0
        %v3389 = vadd.f32 %v3228, %v3388
        %v3390 = vpop.f32.mrf.mxu0
        %3391 = vmatprep.mubr.bf16.mxu0 %v2941
        %3392 = vmatmul.mubr.bf16.gmra.mxu0 %v2940
        %v3393 = vpop.f32.mrf.mxu0
        %v3394 = vadd.f32 %v3233, %v3393
        %v3395 = vpop.f32.mrf.mxu0
        %v3396 = vpop.f32.mrf.mxu0
        %v3397 = vadd.f32 %v3236, %v3396
        %v3398 = vpop.f32.mrf.mxu0
        %3399 = vmatprep.mubr.bf16.mxu0 %v2949
        %3400 = vmatmul.mubr.bf16.gmra.mxu0 %v2948
        %v3401 = vpop.f32.mrf.mxu0
        %v3402 = vadd.f32 %v3241, %v3401
        %v3403 = vpop.f32.mrf.mxu0
        %v3404 = vpop.f32.mrf.mxu0
        %v3405 = vadd.f32 %v3244, %v3404
        %v3406 = vpop.f32.mrf.mxu0
        %3407 = vmatprep.mubr.bf16.mxu0 %v2957
        %3408 = vmatmul.mubr.bf16.gmra.mxu0 %v2956
        %v3409 = vpop.f32.mrf.mxu0
        %v3410 = vadd.f32 %v3249, %v3409
        %v3411 = vpop.f32.mrf.mxu0
        %v3412 = vpop.f32.mrf.mxu0
        %v3413 = vadd.f32 %v3252, %v3412
        %v3414 = vpop.f32.mrf.mxu0
        %3415 = vmatprep.mubr.bf16.mxu0 %v2965
        %3416 = vmatmul.mubr.bf16.gmra.mxu0 %v2964
        %v3417 = vpop.f32.mrf.mxu0
        %v3418 = vadd.f32 %v3257, %v3417
        %v3419 = vpop.f32.mrf.mxu0
        %v3420 = vpop.f32.mrf.mxu0
        %v3421 = vadd.f32 %v3260, %v3420
        %v3422 = vpop.f32.mrf.mxu0
        %3423 = vmatprep.mubr.bf16.mxu0 %v2973
        %3424 = vmatmul.mubr.bf16.gmra.mxu0 %v2972
        %v3425 = vpop.f32.mrf.mxu0
        %v3426 = vadd.f32 %v3265, %v3425
        %v3427 = vpop.f32.mrf.mxu0
        %v3428 = vpop.f32.mrf.mxu0
        %v3429 = vadd.f32 %v3268, %v3428
        %v3430 = vpop.f32.mrf.mxu0
        %3431 = vmatprep.mubr.bf16.mxu0 %v2981
        %3432 = vmatmul.mubr.bf16.gmra.mxu0 %v2980
        %v3433 = vpop.f32.mrf.mxu0
        %v3434 = vadd.f32 %v3273, %v3433
        %v3435 = vpop.f32.mrf.mxu0
        %v3436 = vpop.f32.mrf.mxu0
        %v3437 = vadd.f32 %v3276, %v3436
        %v3438 = vpop.f32.mrf.mxu0
        %3439 = vmatprep.mubr.bf16.mxu0 %v2989
        %3440 = vmatmul.mubr.bf16.gmra.mxu0 %v2988
        %v3441 = vpop.f32.mrf.mxu0
        %v3442 = vadd.f32 %v3281, %v3441
        %v3443 = vpop.f32.mrf.mxu0
        %v3444 = vpop.f32.mrf.mxu0
        %v3445 = vadd.f32 %v3284, %v3444
        %v3446 = vpop.f32.mrf.mxu0
        %3447 = vmatprep.mubr.bf16.mxu0 %v2997
        %3448 = vmatmul.mubr.bf16.gmra.mxu0 %v2996
        %v3449 = vpop.f32.mrf.mxu0
        %v3450 = vadd.f32 %v3289, %v3449
        %v3451 = vpop.f32.mrf.mxu0
        %v3452 = vpop.f32.mrf.mxu0
        %v3453 = vadd.f32 %v3292, %v3452
        %v3454 = vpop.f32.mrf.mxu0
        %3455 = vmatprep.mubr.bf16.mxu0 %v3005
        %3456 = vmatmul.mubr.bf16.gmra.mxu0 %v3004
        %v3457 = vpop.f32.mrf.mxu0
        %v3458 = vadd.f32 %v3297, %v3457
        %v3459 = vpop.f32.mrf.mxu0
        %v3460 = vpop.f32.mrf.mxu0
        %v3461 = vadd.f32 %v3300, %v3460
        %v3462 = vpop.f32.mrf.mxu0
        %3463 = vmatprep.mubr.bf16.mxu0 %v3013
        %3464 = vmatmul.mubr.bf16.gmra.mxu0 %v3012
        %v3465 = vpop.f32.mrf.mxu0
        %v3466 = vadd.f32 %v3305, %v3465
        %v3467 = vpop.f32.mrf.mxu0
        %v3468 = vpop.f32.mrf.mxu0
        %v3469 = vadd.f32 %v3308, %v3468
        %v3470 = vpop.f32.mrf.mxu0
        %3471 = vmatprep.mubr.bf16.mxu0 %v3021
        %3472 = vmatmul.mubr.bf16.gmra.mxu0 %v3020
        %v3473 = vpop.f32.mrf.mxu0
        %v3474 = vadd.f32 %v3313, %v3473
        %v3475 = vpop.f32.mrf.mxu0
        %v3476 = vpop.f32.mrf.mxu0
        %v3477 = vadd.f32 %v3316, %v3476
        %v3478 = vpop.f32.mrf.mxu0
        %3479 = vmatprep.mubr.bf16.mxu0 %v3029
        %3480 = vmatmul.mubr.bf16.gmra.mxu0 %v3028
        %v3481 = vpop.f32.mrf.mxu0
        %v3482 = vadd.f32 %v3321, %v3481
        %v3483 = vpop.f32.mrf.mxu0
        %v3484 = vpop.f32.mrf.mxu0
        %v3485 = vadd.f32 %v3324, %v3484
        %v3486 = vpop.f32.mrf.mxu0
        %3487 = vmatprep.mubr.bf16.mxu0 %v3037
        %3488 = vmatmul.mubr.bf16.gmra.mxu0 %v3036
        %v3489 = vpop.f32.mrf.mxu0
        %v3490 = vadd.f32 %v3329, %v3489
        %v3491 = vpop.f32.mrf.mxu0
        %v3492 = vpop.f32.mrf.mxu0
        %v3493 = vadd.f32 %v3332, %v3492
        %v3494 = vpop.f32.mrf.mxu0
        %3495 = vmatprep.mubr.bf16.mxu0 %v3045
        %3496 = vmatmul.mubr.bf16.gmra.mxu0 %v3044
        %v3497 = vpop.f32.mrf.mxu0
        %v3498 = vadd.f32 %v3337, %v3497
        %v3499 = vpop.f32.mrf.mxu0
        %v3500 = vpop.f32.mrf.mxu0
        %v3501 = vadd.f32 %v3340, %v3500
        %v3502 = vpop.f32.mrf.mxu0
        %3503 = vdwg.mxu0
        %3504 = vmatprep.subr.bf16.mxu0 0
        %3505 = vmatpush1.bf16.msra.mxu0 %v1652
        %3506 = vmatprep.subr.bf16.mxu0 0
        %3507 = vmatpush1.bf16.msra.mxu0 %v1651
        %3508 = vmatprep.subr.bf16.mxu0 0
        %3509 = vmatpush1.bf16.msra.mxu0 %v1650
        %3510 = vmatprep.subr.bf16.mxu0 0
        %3511 = vmatpush1.bf16.msra.mxu0 %v1649
        %3512 = vmatprep.subr.bf16.mxu0 0
        %3513 = vmatpush1.bf16.msra.mxu0 %v1648
        %3514 = vmatprep.subr.bf16.mxu0 0
        %3515 = vmatpush1.bf16.msra.mxu0 %v1647
        %3516 = vmatprep.subr.bf16.mxu0 0
        %3517 = vmatpush1.bf16.msra.mxu0 %v1646
        %3518 = vmatprep.subr.bf16.mxu0 0
        %3519 = vmatpush1.bf16.msra.mxu0 %v1645
        %3520 = vmatprep.subr.bf16.mxu0 0
        %3521 = vmatpush2.bf16.msra.mxu0 %v1660
        %3522 = vmatprep.subr.bf16.mxu0 0
        %3523 = vmatpush2.bf16.msra.mxu0 %v1659
        %3524 = vmatprep.subr.bf16.mxu0 0
        %3525 = vmatpush2.bf16.msra.mxu0 %v1658
        %3526 = vmatprep.subr.bf16.mxu0 0
        %3527 = vmatpush2.bf16.msra.mxu0 %v1657
        %3528 = vmatprep.subr.bf16.mxu0 0
        %3529 = vmatpush2.bf16.msra.mxu0 %v1656
        %3530 = vmatprep.subr.bf16.mxu0 0
        %3531 = vmatpush2.bf16.msra.mxu0 %v1655
        %3532 = vmatprep.subr.bf16.mxu0 0
        %3533 = vmatpush2.bf16.msra.mxu0 %v1654
        %3534 = vmatprep.subr.bf16.mxu0 0
        %3535 = vmatpush2.bf16.msra.mxu0 %v1653
        %3536 = vmatprep.mubr.bf16.mxu0 %v2927
        %3537 = vmatmul.mubr.bf16.gmra.mxu0 %v2926
        %v3538 = vpop.f32.mrf.mxu0
        %v3539 = vadd.f32 %v3378, %v3538
        %v3540 = vpop.f32.mrf.mxu0
        %v3541 = vpop.f32.mrf.mxu0
        %v3542 = vadd.f32 %v3381, %v3541
        %v3543 = vpop.f32.mrf.mxu0
        %3544 = vmatprep.mubr.bf16.mxu0 %v2935
        %3545 = vmatmul.mubr.bf16.gmra.mxu0 %v2934
        %v3546 = vpop.f32.mrf.mxu0
        %v3547 = vadd.f32 %v3386, %v3546
        %v3548 = vpop.f32.mrf.mxu0
        %v3549 = vpop.f32.mrf.mxu0
        %v3550 = vadd.f32 %v3389, %v3549
        %v3551 = vpop.f32.mrf.mxu0
        %3552 = vmatprep.mubr.bf16.mxu0 %v2943
        %3553 = vmatmul.mubr.bf16.gmra.mxu0 %v2942
        %v3554 = vpop.f32.mrf.mxu0
        %v3555 = vadd.f32 %v3394, %v3554
        %v3556 = vpop.f32.mrf.mxu0
        %v3557 = vpop.f32.mrf.mxu0
        %v3558 = vadd.f32 %v3397, %v3557
        %v3559 = vpop.f32.mrf.mxu0
        %3560 = vmatprep.mubr.bf16.mxu0 %v2951
        %3561 = vmatmul.mubr.bf16.gmra.mxu0 %v2950
        %v3562 = vpop.f32.mrf.mxu0
        %v3563 = vadd.f32 %v3402, %v3562
        %v3564 = vpop.f32.mrf.mxu0
        %v3565 = vpop.f32.mrf.mxu0
        %v3566 = vadd.f32 %v3405, %v3565
        %v3567 = vpop.f32.mrf.mxu0
        %3568 = vmatprep.mubr.bf16.mxu0 %v2959
        %3569 = vmatmul.mubr.bf16.gmra.mxu0 %v2958
        %v3570 = vpop.f32.mrf.mxu0
        %v3571 = vadd.f32 %v3410, %v3570
        %v3572 = vpop.f32.mrf.mxu0
        %v3573 = vpop.f32.mrf.mxu0
        %v3574 = vadd.f32 %v3413, %v3573
        %v3575 = vpop.f32.mrf.mxu0
        %3576 = vmatprep.mubr.bf16.mxu0 %v2967
        %3577 = vmatmul.mubr.bf16.gmra.mxu0 %v2966
        %v3578 = vpop.f32.mrf.mxu0
        %v3579 = vadd.f32 %v3418, %v3578
        %v3580 = vpop.f32.mrf.mxu0
        %v3581 = vpop.f32.mrf.mxu0
        %v3582 = vadd.f32 %v3421, %v3581
        %v3583 = vpop.f32.mrf.mxu0
        %3584 = vmatprep.mubr.bf16.mxu0 %v2975
        %3585 = vmatmul.mubr.bf16.gmra.mxu0 %v2974
        %v3586 = vpop.f32.mrf.mxu0
        %v3587 = vadd.f32 %v3426, %v3586
        %v3588 = vpop.f32.mrf.mxu0
        %v3589 = vpop.f32.mrf.mxu0
        %v3590 = vadd.f32 %v3429, %v3589
        %v3591 = vpop.f32.mrf.mxu0
        %3592 = vmatprep.mubr.bf16.mxu0 %v2983
        %3593 = vmatmul.mubr.bf16.gmra.mxu0 %v2982
        %v3594 = vpop.f32.mrf.mxu0
        %v3595 = vadd.f32 %v3434, %v3594
        %v3596 = vpop.f32.mrf.mxu0
        %v3597 = vpop.f32.mrf.mxu0
        %v3598 = vadd.f32 %v3437, %v3597
        %v3599 = vpop.f32.mrf.mxu0
        %3600 = vmatprep.mubr.bf16.mxu0 %v2991
        %3601 = vmatmul.mubr.bf16.gmra.mxu0 %v2990
        %v3602 = vpop.f32.mrf.mxu0
        %v3603 = vadd.f32 %v3442, %v3602
        %v3604 = vpop.f32.mrf.mxu0
        %v3605 = vpop.f32.mrf.mxu0
        %v3606 = vadd.f32 %v3445, %v3605
        %v3607 = vpop.f32.mrf.mxu0
        %3608 = vmatprep.mubr.bf16.mxu0 %v2999
        %3609 = vmatmul.mubr.bf16.gmra.mxu0 %v2998
        %v3610 = vpop.f32.mrf.mxu0
        %v3611 = vadd.f32 %v3450, %v3610
        %v3612 = vpop.f32.mrf.mxu0
        %v3613 = vpop.f32.mrf.mxu0
        %v3614 = vadd.f32 %v3453, %v3613
        %v3615 = vpop.f32.mrf.mxu0
        %3616 = vmatprep.mubr.bf16.mxu0 %v3007
        %3617 = vmatmul.mubr.bf16.gmra.mxu0 %v3006
        %v3618 = vpop.f32.mrf.mxu0
        %v3619 = vadd.f32 %v3458, %v3618
        %v3620 = vpop.f32.mrf.mxu0
        %v3621 = vpop.f32.mrf.mxu0
        %v3622 = vadd.f32 %v3461, %v3621
        %v3623 = vpop.f32.mrf.mxu0
        %3624 = vmatprep.mubr.bf16.mxu0 %v3015
        %3625 = vmatmul.mubr.bf16.gmra.mxu0 %v3014
        %v3626 = vpop.f32.mrf.mxu0
        %v3627 = vadd.f32 %v3466, %v3626
        %v3628 = vpop.f32.mrf.mxu0
        %v3629 = vpop.f32.mrf.mxu0
        %v3630 = vadd.f32 %v3469, %v3629
        %v3631 = vpop.f32.mrf.mxu0
        %3632 = vmatprep.mubr.bf16.mxu0 %v3023
        %3633 = vmatmul.mubr.bf16.gmra.mxu0 %v3022
        %v3634 = vpop.f32.mrf.mxu0
        %v3635 = vadd.f32 %v3474, %v3634
        %v3636 = vpop.f32.mrf.mxu0
        %v3637 = vpop.f32.mrf.mxu0
        %v3638 = vadd.f32 %v3477, %v3637
        %v3639 = vpop.f32.mrf.mxu0
        %3640 = vmatprep.mubr.bf16.mxu0 %v3031
        %3641 = vmatmul.mubr.bf16.gmra.mxu0 %v3030
        %v3642 = vpop.f32.mrf.mxu0
        %v3643 = vadd.f32 %v3482, %v3642
        %v3644 = vpop.f32.mrf.mxu0
        %v3645 = vpop.f32.mrf.mxu0
        %v3646 = vadd.f32 %v3485, %v3645
        %v3647 = vpop.f32.mrf.mxu0
        %3648 = vmatprep.mubr.bf16.mxu0 %v3039
        %3649 = vmatmul.mubr.bf16.gmra.mxu0 %v3038
        %v3650 = vpop.f32.mrf.mxu0
        %v3651 = vadd.f32 %v3490, %v3650
        %v3652 = vpop.f32.mrf.mxu0
        %v3653 = vpop.f32.mrf.mxu0
        %v3654 = vadd.f32 %v3493, %v3653
        %v3655 = vpop.f32.mrf.mxu0
        %3656 = vmatprep.mubr.bf16.mxu0 %v3047
        %3657 = vmatmul.mubr.bf16.gmra.mxu0 %v3046
        %v3658 = vpop.f32.mrf.mxu0
        %v3659 = vadd.f32 %v3498, %v3658
        %v3660 = vpop.f32.mrf.mxu0
        %v3661 = vpop.f32.mrf.mxu0
        %v3662 = vadd.f32 %v3501, %v3661
        %v3663 = vpop.f32.mrf.mxu0
        %3664 = vdwg.mxu0
        %3665 = vmatprep.subr.bf16.mxu0 0
        %3666 = vmatpush1.bf16.msra.mxu0 %v1668
        %3667 = vmatprep.subr.bf16.mxu0 0
        %3668 = vmatpush1.bf16.msra.mxu0 %v1667
        %3669 = vmatprep.subr.bf16.mxu0 0
        %3670 = vmatpush1.bf16.msra.mxu0 %v1666
        %3671 = vmatprep.subr.bf16.mxu0 0
        %3672 = vmatpush1.bf16.msra.mxu0 %v1665
        %3673 = vmatprep.subr.bf16.mxu0 0
        %3674 = vmatpush1.bf16.msra.mxu0 %v1664
        %3675 = vmatprep.subr.bf16.mxu0 0
        %3676 = vmatpush1.bf16.msra.mxu0 %v1663
        %3677 = vmatprep.subr.bf16.mxu0 0
        %3678 = vmatpush1.bf16.msra.mxu0 %v1662
        %3679 = vmatprep.subr.bf16.mxu0 0
        %3680 = vmatpush1.bf16.msra.mxu0 %v1661
        %3681 = vmatprep.subr.bf16.mxu0 0
        %3682 = vmatpush2.bf16.msra.mxu0 %v1676
        %3683 = vmatprep.subr.bf16.mxu0 0
        %3684 = vmatpush2.bf16.msra.mxu0 %v1675
        %3685 = vmatprep.subr.bf16.mxu0 0
        %3686 = vmatpush2.bf16.msra.mxu0 %v1674
        %3687 = vmatprep.subr.bf16.mxu0 0
        %3688 = vmatpush2.bf16.msra.mxu0 %v1673
        %3689 = vmatprep.subr.bf16.mxu0 0
        %3690 = vmatpush2.bf16.msra.mxu0 %v1672
        %3691 = vmatprep.subr.bf16.mxu0 0
        %3692 = vmatpush2.bf16.msra.mxu0 %v1671
        %3693 = vmatprep.subr.bf16.mxu0 0
        %3694 = vmatpush2.bf16.msra.mxu0 %v1670
        %3695 = vmatprep.subr.bf16.mxu0 0
        %3696 = vmatpush2.bf16.msra.mxu0 %v1669
        %3697 = vmatprep.mubr.bf16.mxu0 %v2929
        %3698 = vmatmul.mubr.bf16.gmra.mxu0 %v2928
        %v3699 = vpop.f32.mrf.mxu0
        %v3700 = vadd.f32 %v3539, %v3699
        %v3701 = vpop.f32.mrf.mxu0
        %v3702 = vpop.f32.mrf.mxu0
        %v3703 = vadd.f32 %v3542, %v3702
        %v3704 = vpop.f32.mrf.mxu0
        %3705 = vmatprep.mubr.bf16.mxu0 %v2937
        %3706 = vmatmul.mubr.bf16.gmra.mxu0 %v2936
        %v3707 = vpop.f32.mrf.mxu0
        %v3708 = vadd.f32 %v3547, %v3707
        %v3709 = vpop.f32.mrf.mxu0
        %v3710 = vpop.f32.mrf.mxu0
        %v3711 = vadd.f32 %v3550, %v3710
        %v3712 = vpop.f32.mrf.mxu0
        %3713 = vmatprep.mubr.bf16.mxu0 %v2945
        %3714 = vmatmul.mubr.bf16.gmra.mxu0 %v2944
        %v3715 = vpop.f32.mrf.mxu0
        %v3716 = vadd.f32 %v3555, %v3715
        %v3717 = vpop.f32.mrf.mxu0
        %v3718 = vpop.f32.mrf.mxu0
        %v3719 = vadd.f32 %v3558, %v3718
        %v3720 = vpop.f32.mrf.mxu0
        %3721 = vmatprep.mubr.bf16.mxu0 %v2953
        %3722 = vmatmul.mubr.bf16.gmra.mxu0 %v2952
        %v3723 = vpop.f32.mrf.mxu0
        %v3724 = vadd.f32 %v3563, %v3723
        %v3725 = vpop.f32.mrf.mxu0
        %v3726 = vpop.f32.mrf.mxu0
        %v3727 = vadd.f32 %v3566, %v3726
        %v3728 = vpop.f32.mrf.mxu0
        %3729 = vmatprep.mubr.bf16.mxu0 %v2961
        %3730 = vmatmul.mubr.bf16.gmra.mxu0 %v2960
        %v3731 = vpop.f32.mrf.mxu0
        %v3732 = vadd.f32 %v3571, %v3731
        %v3733 = vpop.f32.mrf.mxu0
        %v3734 = vpop.f32.mrf.mxu0
        %v3735 = vadd.f32 %v3574, %v3734
        %v3736 = vpop.f32.mrf.mxu0
        %3737 = vmatprep.mubr.bf16.mxu0 %v2969
        %3738 = vmatmul.mubr.bf16.gmra.mxu0 %v2968
        %v3739 = vpop.f32.mrf.mxu0
        %v3740 = vadd.f32 %v3579, %v3739
        %v3741 = vpop.f32.mrf.mxu0
        %v3742 = vpop.f32.mrf.mxu0
        %v3743 = vadd.f32 %v3582, %v3742
        %v3744 = vpop.f32.mrf.mxu0
        %3745 = vmatprep.mubr.bf16.mxu0 %v2977
        %3746 = vmatmul.mubr.bf16.gmra.mxu0 %v2976
        %v3747 = vpop.f32.mrf.mxu0
        %v3748 = vadd.f32 %v3587, %v3747
        %v3749 = vpop.f32.mrf.mxu0
        %v3750 = vpop.f32.mrf.mxu0
        %v3751 = vadd.f32 %v3590, %v3750
        %v3752 = vpop.f32.mrf.mxu0
        %3753 = vmatprep.mubr.bf16.mxu0 %v2985
        %3754 = vmatmul.mubr.bf16.gmra.mxu0 %v2984
        %v3755 = vpop.f32.mrf.mxu0
        %v3756 = vadd.f32 %v3595, %v3755
        %v3757 = vpop.f32.mrf.mxu0
        %v3758 = vpop.f32.mrf.mxu0
        %v3759 = vadd.f32 %v3598, %v3758
        %v3760 = vpop.f32.mrf.mxu0
        %3761 = vmatprep.mubr.bf16.mxu0 %v2993
        %3762 = vmatmul.mubr.bf16.gmra.mxu0 %v2992
        %v3763 = vpop.f32.mrf.mxu0
        %v3764 = vadd.f32 %v3603, %v3763
        %v3765 = vpop.f32.mrf.mxu0
        %v3766 = vpop.f32.mrf.mxu0
        %v3767 = vadd.f32 %v3606, %v3766
        %v3768 = vpop.f32.mrf.mxu0
        %3769 = vmatprep.mubr.bf16.mxu0 %v3001
        %3770 = vmatmul.mubr.bf16.gmra.mxu0 %v3000
        %v3771 = vpop.f32.mrf.mxu0
        %v3772 = vadd.f32 %v3611, %v3771
        %v3773 = vpop.f32.mrf.mxu0
        %v3774 = vpop.f32.mrf.mxu0
        %v3775 = vadd.f32 %v3614, %v3774
        %v3776 = vpop.f32.mrf.mxu0
        %3777 = vmatprep.mubr.bf16.mxu0 %v3009
        %3778 = vmatmul.mubr.bf16.gmra.mxu0 %v3008
        %v3779 = vpop.f32.mrf.mxu0
        %v3780 = vadd.f32 %v3619, %v3779
        %v3781 = vpop.f32.mrf.mxu0
        %v3782 = vpop.f32.mrf.mxu0
        %v3783 = vadd.f32 %v3622, %v3782
        %v3784 = vpop.f32.mrf.mxu0
        %3785 = vmatprep.mubr.bf16.mxu0 %v3017
        %3786 = vmatmul.mubr.bf16.gmra.mxu0 %v3016
        %v3787 = vpop.f32.mrf.mxu0
        %v3788 = vadd.f32 %v3627, %v3787
        %v3789 = vpop.f32.mrf.mxu0
        %v3790 = vpop.f32.mrf.mxu0
        %v3791 = vadd.f32 %v3630, %v3790
        %v3792 = vpop.f32.mrf.mxu0
        %3793 = vmatprep.mubr.bf16.mxu0 %v3025
        %3794 = vmatmul.mubr.bf16.gmra.mxu0 %v3024
        %v3795 = vpop.f32.mrf.mxu0
        %v3796 = vadd.f32 %v3635, %v3795
        %v3797 = vpop.f32.mrf.mxu0
        %v3798 = vpop.f32.mrf.mxu0
        %v3799 = vadd.f32 %v3638, %v3798
        %v3800 = vpop.f32.mrf.mxu0
        %3801 = vmatprep.mubr.bf16.mxu0 %v3033
        %3802 = vmatmul.mubr.bf16.gmra.mxu0 %v3032
        %v3803 = vpop.f32.mrf.mxu0
        %v3804 = vadd.f32 %v3643, %v3803
        %v3805 = vpop.f32.mrf.mxu0
        %v3806 = vpop.f32.mrf.mxu0
        %v3807 = vadd.f32 %v3646, %v3806
        %v3808 = vpop.f32.mrf.mxu0
        %3809 = vmatprep.mubr.bf16.mxu0 %v3041
        %3810 = vmatmul.mubr.bf16.gmra.mxu0 %v3040
        %v3811 = vpop.f32.mrf.mxu0
        %v3812 = vadd.f32 %v3651, %v3811
        %v3813 = vpop.f32.mrf.mxu0
        %v3814 = vpop.f32.mrf.mxu0
        %v3815 = vadd.f32 %v3654, %v3814
        %v3816 = vpop.f32.mrf.mxu0
        %3817 = vmatprep.mubr.bf16.mxu0 %v3049
        %3818 = vmatmul.mubr.bf16.gmra.mxu0 %v3048
        %v3819 = vpop.f32.mrf.mxu0
        %v3820 = vadd.f32 %v3659, %v3819
        %v3821 = vpop.f32.mrf.mxu0
        %v3822 = vpop.f32.mrf.mxu0
        %v3823 = vadd.f32 %v3662, %v3822
        %v3824 = vpop.f32.mrf.mxu0
        %3825 = vdwg.mxu0
        %v3826 = vmax.f32 %v3700, 0.0
        %v3827 = vmax.f32 %v3703, 0.0
        %v3828 = vmax.f32 %v3708, 0.0
        %v3829 = vmax.f32 %v3711, 0.0
        %v3830 = vmax.f32 %v3716, 0.0
        %v3831 = vmax.f32 %v3719, 0.0
        %v3832 = vmax.f32 %v3724, 0.0
        %v3833 = vmax.f32 %v3727, 0.0
        %v3834 = vmax.f32 %v3732, 0.0
        %v3835 = vmax.f32 %v3735, 0.0
        %v3836 = vmax.f32 %v3740, 0.0
        %v3837 = vmax.f32 %v3743, 0.0
        %v3838 = vmax.f32 %v3748, 0.0
        %v3839 = vmax.f32 %v3751, 0.0
        %v3840 = vmax.f32 %v3756, 0.0
        %v3841 = vmax.f32 %v3759, 0.0
        %v3842 = vmax.f32 %v3764, 0.0
        %v3843 = vmax.f32 %v3767, 0.0
        %v3844 = vmax.f32 %v3772, 0.0
        %v3845 = vmax.f32 %v3775, 0.0
        %v3846 = vmax.f32 %v3780, 0.0
        %v3847 = vmax.f32 %v3783, 0.0
        %v3848 = vmax.f32 %v3788, 0.0
        %v3849 = vmax.f32 %v3791, 0.0
        %v3850 = vmax.f32 %v3796, 0.0
        %v3851 = vmax.f32 %v3799, 0.0
        %v3852 = vmax.f32 %v3804, 0.0
        %v3853 = vmax.f32 %v3807, 0.0
        %v3854 = vmax.f32 %v3812, 0.0
        %v3855 = vmax.f32 %v3815, 0.0
        %v3856 = vmax.f32 %v3820, 0.0
        %v3857 = vmax.f32 %v3823, 0.0
        %v3858 = vsel %vm2048, %v3826, 0.0
        %3859 = vadd.xlane.f32.xlu0 %v3858
        %v3860 = vpop.xlane.xlu0 %3859
        %v3861 = vsel %vm2048, %v3827, 0.0
        %3862 = vadd.xlane.f32.xlu0 %v3861
        %v3863 = vpop.xlane.xlu0 %3862
        %v3864 = vsel %vm2048, %v3828, 0.0
        %3865 = vadd.xlane.f32.xlu0 %v3864
        %v3866 = vpop.xlane.xlu0 %3865
        %v3867 = vsel %vm2048, %v3829, 0.0
        %3868 = vadd.xlane.f32.xlu0 %v3867
        %v3869 = vpop.xlane.xlu0 %3868
        %v3870 = vsel %vm2048, %v3830, 0.0
        %3871 = vadd.xlane.f32.xlu0 %v3870
        %v3872 = vpop.xlane.xlu0 %3871
        %v3873 = vsel %vm2048, %v3831, 0.0
        %3874 = vadd.xlane.f32.xlu0 %v3873
        %v3875 = vpop.xlane.xlu0 %3874
        %v3876 = vsel %vm2048, %v3832, 0.0
        %3877 = vadd.xlane.f32.xlu0 %v3876
        %v3878 = vpop.xlane.xlu0 %3877
        %v3879 = vsel %vm2048, %v3833, 0.0
        %3880 = vadd.xlane.f32.xlu0 %v3879
        %v3881 = vpop.xlane.xlu0 %3880
        %v3882 = vsel %vm2048, %v3834, 0.0
        %3883 = vadd.xlane.f32.xlu0 %v3882
        %v3884 = vpop.xlane.xlu0 %3883
        %v3885 = vsel %vm2048, %v3835, 0.0
        %3886 = vadd.xlane.f32.xlu0 %v3885
        %v3887 = vpop.xlane.xlu0 %3886
        %v3888 = vsel %vm2048, %v3836, 0.0
        %3889 = vadd.xlane.f32.xlu0 %v3888
        %v3890 = vpop.xlane.xlu0 %3889
        %v3891 = vsel %vm2048, %v3837, 0.0
        %3892 = vadd.xlane.f32.xlu0 %v3891
        %v3893 = vpop.xlane.xlu0 %3892
        %v3894 = vsel %vm2048, %v3838, 0.0
        %3895 = vadd.xlane.f32.xlu0 %v3894
        %v3896 = vpop.xlane.xlu0 %3895
        %v3897 = vsel %vm2048, %v3839, 0.0
        %3898 = vadd.xlane.f32.xlu0 %v3897
        %v3899 = vpop.xlane.xlu0 %3898
        %v3900 = vsel %vm2048, %v3840, 0.0
        %3901 = vadd.xlane.f32.xlu0 %v3900
        %v3902 = vpop.xlane.xlu0 %3901
        %v3903 = vsel %vm2048, %v3841, 0.0
        %3904 = vadd.xlane.f32.xlu0 %v3903
        %v3905 = vpop.xlane.xlu0 %3904
        %v3906 = vsel %vm2048, %v3842, 0.0
        %3907 = vadd.xlane.f32.xlu0 %v3906
        %v3908 = vpop.xlane.xlu0 %3907
        %v3909 = vsel %vm2048, %v3843, 0.0
        %3910 = vadd.xlane.f32.xlu0 %v3909
        %v3911 = vpop.xlane.xlu0 %3910
        %v3912 = vsel %vm2048, %v3844, 0.0
        %3913 = vadd.xlane.f32.xlu0 %v3912
        %v3914 = vpop.xlane.xlu0 %3913
        %v3915 = vsel %vm2048, %v3845, 0.0
        %3916 = vadd.xlane.f32.xlu0 %v3915
        %v3917 = vpop.xlane.xlu0 %3916
        %v3918 = vsel %vm2048, %v3846, 0.0
        %3919 = vadd.xlane.f32.xlu0 %v3918
        %v3920 = vpop.xlane.xlu0 %3919
        %v3921 = vsel %vm2048, %v3847, 0.0
        %3922 = vadd.xlane.f32.xlu0 %v3921
        %v3923 = vpop.xlane.xlu0 %3922
        %v3924 = vsel %vm2048, %v3848, 0.0
        %3925 = vadd.xlane.f32.xlu0 %v3924
        %v3926 = vpop.xlane.xlu0 %3925
        %v3927 = vsel %vm2048, %v3849, 0.0
        %3928 = vadd.xlane.f32.xlu0 %v3927
        %v3929 = vpop.xlane.xlu0 %3928
        %v3930 = vsel %vm2048, %v3850, 0.0
        %3931 = vadd.xlane.f32.xlu0 %v3930
        %v3932 = vpop.xlane.xlu0 %3931
        %v3933 = vsel %vm2048, %v3851, 0.0
        %3934 = vadd.xlane.f32.xlu0 %v3933
        %v3935 = vpop.xlane.xlu0 %3934
        %v3936 = vsel %vm2048, %v3852, 0.0
        %3937 = vadd.xlane.f32.xlu0 %v3936
        %v3938 = vpop.xlane.xlu0 %3937
        %v3939 = vsel %vm2048, %v3853, 0.0
        %3940 = vadd.xlane.f32.xlu0 %v3939
        %v3941 = vpop.xlane.xlu0 %3940
        %v3942 = vsel %vm2048, %v3854, 0.0
        %3943 = vadd.xlane.f32.xlu0 %v3942
        %v3944 = vpop.xlane.xlu0 %3943
        %v3945 = vsel %vm2048, %v3855, 0.0
        %3946 = vadd.xlane.f32.xlu0 %v3945
        %v3947 = vpop.xlane.xlu0 %3946
        %v3948 = vsel %vm2048, %v3856, 0.0
        %3949 = vadd.xlane.f32.xlu0 %v3948
        %v3950 = vpop.xlane.xlu0 %3949
        %v3951 = vsel %vm2048, %v3857, 0.0
        %3952 = vadd.xlane.f32.xlu0 %v3951
        %v3953 = vpop.xlane.xlu0 %3952
        %v3954 = vmul.f32 %v3860, %v2145
        %v3955 = vmul.f32 %v3863, %v2145
        %v3956 = vmul.f32 %v3866, %v2145
        %v3957 = vmul.f32 %v3869, %v2145
        %v3958 = vmul.f32 %v3872, %v2145
        %v3959 = vmul.f32 %v3875, %v2145
        %v3960 = vmul.f32 %v3878, %v2145
        %v3961 = vmul.f32 %v3881, %v2145
        %v3962 = vmul.f32 %v3884, %v2145
        %v3963 = vmul.f32 %v3887, %v2145
        %v3964 = vmul.f32 %v3890, %v2145
        %v3965 = vmul.f32 %v3893, %v2145
        %v3966 = vmul.f32 %v3896, %v2145
        %v3967 = vmul.f32 %v3899, %v2145
        %v3968 = vmul.f32 %v3902, %v2145
        %v3969 = vmul.f32 %v3905, %v2145
        %v3970 = vmul.f32 %v3908, %v2145
        %v3971 = vmul.f32 %v3911, %v2145
        %v3972 = vmul.f32 %v3914, %v2145
        %v3973 = vmul.f32 %v3917, %v2145
        %v3974 = vmul.f32 %v3920, %v2145
        %v3975 = vmul.f32 %v3923, %v2145
        %v3976 = vmul.f32 %v3926, %v2145
        %v3977 = vmul.f32 %v3929, %v2145
        %v3978 = vmul.f32 %v3932, %v2145
        %v3979 = vmul.f32 %v3935, %v2145
        %v3980 = vmul.f32 %v3938, %v2145
        %v3981 = vmul.f32 %v3941, %v2145
        %v3982 = vmul.f32 %v3944, %v2145
        %v3983 = vmul.f32 %v3947, %v2145
        %v3984 = vmul.f32 %v3950, %v2145
        %v3985 = vmul.f32 %v3953, %v2145
        %v3986 = vsub.f32 %v3826, %v3954
        %v3987 = vsub.f32 %v3827, %v3955
        %v3988 = vsub.f32 %v3828, %v3956
        %v3989 = vsub.f32 %v3829, %v3957
        %v3990 = vsub.f32 %v3830, %v3958
        %v3991 = vsub.f32 %v3831, %v3959
        %v3992 = vsub.f32 %v3832, %v3960
        %v3993 = vsub.f32 %v3833, %v3961
        %v3994 = vsub.f32 %v3834, %v3962
        %v3995 = vsub.f32 %v3835, %v3963
        %v3996 = vsub.f32 %v3836, %v3964
        %v3997 = vsub.f32 %v3837, %v3965
        %v3998 = vsub.f32 %v3838, %v3966
        %v3999 = vsub.f32 %v3839, %v3967
        %v4000 = vsub.f32 %v3840, %v3968
        %v4001 = vsub.f32 %v3841, %v3969
        %v4002 = vsub.f32 %v3842, %v3970
        %v4003 = vsub.f32 %v3843, %v3971
        %v4004 = vsub.f32 %v3844, %v3972
        %v4005 = vsub.f32 %v3845, %v3973
        %v4006 = vsub.f32 %v3846, %v3974
        %v4007 = vsub.f32 %v3847, %v3975
        %v4008 = vsub.f32 %v3848, %v3976
        %v4009 = vsub.f32 %v3849, %v3977
        %v4010 = vsub.f32 %v3850, %v3978
        %v4011 = vsub.f32 %v3851, %v3979
        %v4012 = vsub.f32 %v3852, %v3980
        %v4013 = vsub.f32 %v3853, %v3981
        %v4014 = vsub.f32 %v3854, %v3982
        %v4015 = vsub.f32 %v3855, %v3983
        %v4016 = vsub.f32 %v3856, %v3984
        %v4017 = vsub.f32 %v3857, %v3985
        %v4018 = vmul.f32 %v3986, %v3986
        %v4019 = vmul.f32 %v3987, %v3987
        %v4020 = vmul.f32 %v3988, %v3988
        %v4021 = vmul.f32 %v3989, %v3989
        %v4022 = vmul.f32 %v3990, %v3990
        %v4023 = vmul.f32 %v3991, %v3991
        %v4024 = vmul.f32 %v3992, %v3992
        %v4025 = vmul.f32 %v3993, %v3993
        %v4026 = vmul.f32 %v3994, %v3994
        %v4027 = vmul.f32 %v3995, %v3995
        %v4028 = vmul.f32 %v3996, %v3996
        %v4029 = vmul.f32 %v3997, %v3997
        %v4030 = vmul.f32 %v3998, %v3998
        %v4031 = vmul.f32 %v3999, %v3999
        %v4032 = vmul.f32 %v4000, %v4000
        %v4033 = vmul.f32 %v4001, %v4001
        %v4034 = vmul.f32 %v4002, %v4002
        %v4035 = vmul.f32 %v4003, %v4003
        %v4036 = vmul.f32 %v4004, %v4004
        %v4037 = vmul.f32 %v4005, %v4005
        %v4038 = vmul.f32 %v4006, %v4006
        %v4039 = vmul.f32 %v4007, %v4007
        %v4040 = vmul.f32 %v4008, %v4008
        %v4041 = vmul.f32 %v4009, %v4009
        %v4042 = vmul.f32 %v4010, %v4010
        %v4043 = vmul.f32 %v4011, %v4011
        %v4044 = vmul.f32 %v4012, %v4012
        %v4045 = vmul.f32 %v4013, %v4013
        %v4046 = vmul.f32 %v4014, %v4014
        %v4047 = vmul.f32 %v4015, %v4015
        %v4048 = vmul.f32 %v4016, %v4016
        %v4049 = vmul.f32 %v4017, %v4017
        %v4050 = vsel %vm2048, %v4018, 0.0
        %4051 = vadd.xlane.f32.xlu0 %v4050
        %v4052 = vpop.xlane.xlu0 %4051
        %v4053 = vsel %vm2048, %v4019, 0.0
        %4054 = vadd.xlane.f32.xlu0 %v4053
        %v4055 = vpop.xlane.xlu0 %4054
        %v4056 = vsel %vm2048, %v4020, 0.0
        %4057 = vadd.xlane.f32.xlu0 %v4056
        %v4058 = vpop.xlane.xlu0 %4057
        %v4059 = vsel %vm2048, %v4021, 0.0
        %4060 = vadd.xlane.f32.xlu0 %v4059
        %v4061 = vpop.xlane.xlu0 %4060
        %v4062 = vsel %vm2048, %v4022, 0.0
        %4063 = vadd.xlane.f32.xlu0 %v4062
        %v4064 = vpop.xlane.xlu0 %4063
        %v4065 = vsel %vm2048, %v4023, 0.0
        %4066 = vadd.xlane.f32.xlu0 %v4065
        %v4067 = vpop.xlane.xlu0 %4066
        %v4068 = vsel %vm2048, %v4024, 0.0
        %4069 = vadd.xlane.f32.xlu0 %v4068
        %v4070 = vpop.xlane.xlu0 %4069
        %v4071 = vsel %vm2048, %v4025, 0.0
        %4072 = vadd.xlane.f32.xlu0 %v4071
        %v4073 = vpop.xlane.xlu0 %4072
        %v4074 = vsel %vm2048, %v4026, 0.0
        %4075 = vadd.xlane.f32.xlu0 %v4074
        %v4076 = vpop.xlane.xlu0 %4075
        %v4077 = vsel %vm2048, %v4027, 0.0
        %4078 = vadd.xlane.f32.xlu0 %v4077
        %v4079 = vpop.xlane.xlu0 %4078
        %v4080 = vsel %vm2048, %v4028, 0.0
        %4081 = vadd.xlane.f32.xlu0 %v4080
        %v4082 = vpop.xlane.xlu0 %4081
        %v4083 = vsel %vm2048, %v4029, 0.0
        %4084 = vadd.xlane.f32.xlu0 %v4083
        %v4085 = vpop.xlane.xlu0 %4084
        %v4086 = vsel %vm2048, %v4030, 0.0
        %4087 = vadd.xlane.f32.xlu0 %v4086
        %v4088 = vpop.xlane.xlu0 %4087
        %v4089 = vsel %vm2048, %v4031, 0.0
        %4090 = vadd.xlane.f32.xlu0 %v4089
        %v4091 = vpop.xlane.xlu0 %4090
        %v4092 = vsel %vm2048, %v4032, 0.0
        %4093 = vadd.xlane.f32.xlu0 %v4092
        %v4094 = vpop.xlane.xlu0 %4093
        %v4095 = vsel %vm2048, %v4033, 0.0
        %4096 = vadd.xlane.f32.xlu0 %v4095
        %v4097 = vpop.xlane.xlu0 %4096
        %v4098 = vsel %vm2048, %v4034, 0.0
        %4099 = vadd.xlane.f32.xlu0 %v4098
        %v4100 = vpop.xlane.xlu0 %4099
        %v4101 = vsel %vm2048, %v4035, 0.0
        %4102 = vadd.xlane.f32.xlu0 %v4101
        %v4103 = vpop.xlane.xlu0 %4102
        %v4104 = vsel %vm2048, %v4036, 0.0
        %4105 = vadd.xlane.f32.xlu0 %v4104
        %v4106 = vpop.xlane.xlu0 %4105
        %v4107 = vsel %vm2048, %v4037, 0.0
        %4108 = vadd.xlane.f32.xlu0 %v4107
        %v4109 = vpop.xlane.xlu0 %4108
        %v4110 = vsel %vm2048, %v4038, 0.0
        %4111 = vadd.xlane.f32.xlu0 %v4110
        %v4112 = vpop.xlane.xlu0 %4111
        %v4113 = vsel %vm2048, %v4039, 0.0
        %4114 = vadd.xlane.f32.xlu0 %v4113
        %v4115 = vpop.xlane.xlu0 %4114
        %v4116 = vsel %vm2048, %v4040, 0.0
        %4117 = vadd.xlane.f32.xlu0 %v4116
        %v4118 = vpop.xlane.xlu0 %4117
        %v4119 = vsel %vm2048, %v4041, 0.0
        %4120 = vadd.xlane.f32.xlu0 %v4119
        %v4121 = vpop.xlane.xlu0 %4120
        %v4122 = vsel %vm2048, %v4042, 0.0
        %4123 = vadd.xlane.f32.xlu0 %v4122
        %v4124 = vpop.xlane.xlu0 %4123
        %v4125 = vsel %vm2048, %v4043, 0.0
        %4126 = vadd.xlane.f32.xlu0 %v4125
        %v4127 = vpop.xlane.xlu0 %4126
        %v4128 = vsel %vm2048, %v4044, 0.0
        %4129 = vadd.xlane.f32.xlu0 %v4128
        %v4130 = vpop.xlane.xlu0 %4129
        %v4131 = vsel %vm2048, %v4045, 0.0
        %4132 = vadd.xlane.f32.xlu0 %v4131
        %v4133 = vpop.xlane.xlu0 %4132
        %v4134 = vsel %vm2048, %v4046, 0.0
        %4135 = vadd.xlane.f32.xlu0 %v4134
        %v4136 = vpop.xlane.xlu0 %4135
        %v4137 = vsel %vm2048, %v4047, 0.0
        %4138 = vadd.xlane.f32.xlu0 %v4137
        %v4139 = vpop.xlane.xlu0 %4138
        %v4140 = vsel %vm2048, %v4048, 0.0
        %4141 = vadd.xlane.f32.xlu0 %v4140
        %v4142 = vpop.xlane.xlu0 %4141
        %v4143 = vsel %vm2048, %v4049, 0.0
        %4144 = vadd.xlane.f32.xlu0 %v4143
        %v4145 = vpop.xlane.xlu0 %4144
        %v4146 = vmul.f32 %v4052, %v2145
        %v4147 = vmul.f32 %v4055, %v2145
        %v4148 = vmul.f32 %v4058, %v2145
        %v4149 = vmul.f32 %v4061, %v2145
        %v4150 = vmul.f32 %v4064, %v2145
        %v4151 = vmul.f32 %v4067, %v2145
        %v4152 = vmul.f32 %v4070, %v2145
        %v4153 = vmul.f32 %v4073, %v2145
        %v4154 = vmul.f32 %v4076, %v2145
        %v4155 = vmul.f32 %v4079, %v2145
        %v4156 = vmul.f32 %v4082, %v2145
        %v4157 = vmul.f32 %v4085, %v2145
        %v4158 = vmul.f32 %v4088, %v2145
        %v4159 = vmul.f32 %v4091, %v2145
        %v4160 = vmul.f32 %v4094, %v2145
        %v4161 = vmul.f32 %v4097, %v2145
        %v4162 = vmul.f32 %v4100, %v2145
        %v4163 = vmul.f32 %v4103, %v2145
        %v4164 = vmul.f32 %v4106, %v2145
        %v4165 = vmul.f32 %v4109, %v2145
        %v4166 = vmul.f32 %v4112, %v2145
        %v4167 = vmul.f32 %v4115, %v2145
        %v4168 = vmul.f32 %v4118, %v2145
        %v4169 = vmul.f32 %v4121, %v2145
        %v4170 = vmul.f32 %v4124, %v2145
        %v4171 = vmul.f32 %v4127, %v2145
        %v4172 = vmul.f32 %v4130, %v2145
        %v4173 = vmul.f32 %v4133, %v2145
        %v4174 = vmul.f32 %v4136, %v2145
        %v4175 = vmul.f32 %v4139, %v2145
        %v4176 = vmul.f32 %v4142, %v2145
        %v4177 = vmul.f32 %v4145, %v2145
        %v4178 = vadd.f32 %v4146, 1e-09
        %v4179 = vadd.f32 %v4147, 1e-09
        %v4180 = vadd.f32 %v4148, 1e-09
        %v4181 = vadd.f32 %v4149, 1e-09
        %v4182 = vadd.f32 %v4150, 1e-09
        %v4183 = vadd.f32 %v4151, 1e-09
        %v4184 = vadd.f32 %v4152, 1e-09
        %v4185 = vadd.f32 %v4153, 1e-09
        %v4186 = vadd.f32 %v4154, 1e-09
        %v4187 = vadd.f32 %v4155, 1e-09
        %v4188 = vadd.f32 %v4156, 1e-09
        %v4189 = vadd.f32 %v4157, 1e-09
        %v4190 = vadd.f32 %v4158, 1e-09
        %v4191 = vadd.f32 %v4159, 1e-09
        %v4192 = vadd.f32 %v4160, 1e-09
        %v4193 = vadd.f32 %v4161, 1e-09
        %v4194 = vadd.f32 %v4162, 1e-09
        %v4195 = vadd.f32 %v4163, 1e-09
        %v4196 = vadd.f32 %v4164, 1e-09
        %v4197 = vadd.f32 %v4165, 1e-09
        %v4198 = vadd.f32 %v4166, 1e-09
        %v4199 = vadd.f32 %v4167, 1e-09
        %v4200 = vadd.f32 %v4168, 1e-09
        %v4201 = vadd.f32 %v4169, 1e-09
        %v4202 = vadd.f32 %v4170, 1e-09
        %v4203 = vadd.f32 %v4171, 1e-09
        %v4204 = vadd.f32 %v4172, 1e-09
        %v4205 = vadd.f32 %v4173, 1e-09
        %v4206 = vadd.f32 %v4174, 1e-09
        %v4207 = vadd.f32 %v4175, 1e-09
        %v4208 = vadd.f32 %v4176, 1e-09
        %v4209 = vadd.f32 %v4177, 1e-09
        %v4210 = vrsqrt.pop %v4178
        %v4211 = vrsqrt.pop %v4179
        %v4212 = vrsqrt.pop %v4180
        %v4213 = vrsqrt.pop %v4181
        %v4214 = vrsqrt.pop %v4182
        %v4215 = vrsqrt.pop %v4183
        %v4216 = vrsqrt.pop %v4184
        %v4217 = vrsqrt.pop %v4185
        %v4218 = vrsqrt.pop %v4186
        %v4219 = vrsqrt.pop %v4187
        %v4220 = vrsqrt.pop %v4188
        %v4221 = vrsqrt.pop %v4189
        %v4222 = vrsqrt.pop %v4190
        %v4223 = vrsqrt.pop %v4191
        %v4224 = vrsqrt.pop %v4192
        %v4225 = vrsqrt.pop %v4193
        %v4226 = vrsqrt.pop %v4194
        %v4227 = vrsqrt.pop %v4195
        %v4228 = vrsqrt.pop %v4196
        %v4229 = vrsqrt.pop %v4197
        %v4230 = vrsqrt.pop %v4198
        %v4231 = vrsqrt.pop %v4199
        %v4232 = vrsqrt.pop %v4200
        %v4233 = vrsqrt.pop %v4201
        %v4234 = vrsqrt.pop %v4202
        %v4235 = vrsqrt.pop %v4203
        %v4236 = vrsqrt.pop %v4204
        %v4237 = vrsqrt.pop %v4205
        %v4238 = vrsqrt.pop %v4206
        %v4239 = vrsqrt.pop %v4207
        %v4240 = vrsqrt.pop %v4208
        %v4241 = vrsqrt.pop %v4209
        %v4242 = vmul.f32 %v2437, %v4210
        %v4243 = vmul.f32 %v2437, %v4211
        %v4244 = vmul.f32 %v2437, %v4212
        %v4245 = vmul.f32 %v2437, %v4213
        %v4246 = vmul.f32 %v2437, %v4214
        %v4247 = vmul.f32 %v2437, %v4215
        %v4248 = vmul.f32 %v2437, %v4216
        %v4249 = vmul.f32 %v2437, %v4217
        %v4250 = vmul.f32 %v2437, %v4218
        %v4251 = vmul.f32 %v2437, %v4219
        %v4252 = vmul.f32 %v2437, %v4220
        %v4253 = vmul.f32 %v2437, %v4221
        %v4254 = vmul.f32 %v2437, %v4222
        %v4255 = vmul.f32 %v2437, %v4223
        %v4256 = vmul.f32 %v2437, %v4224
        %v4257 = vmul.f32 %v2437, %v4225
        %v4258 = vmul.f32 %v2437, %v4226
        %v4259 = vmul.f32 %v2437, %v4227
        %v4260 = vmul.f32 %v2437, %v4228
        %v4261 = vmul.f32 %v2437, %v4229
        %v4262 = vmul.f32 %v2437, %v4230
        %v4263 = vmul.f32 %v2437, %v4231
        %v4264 = vmul.f32 %v2437, %v4232
        %v4265 = vmul.f32 %v2437, %v4233
        %v4266 = vmul.f32 %v2437, %v4234
        %v4267 = vmul.f32 %v2437, %v4235
        %v4268 = vmul.f32 %v2437, %v4236
        %v4269 = vmul.f32 %v2437, %v4237
        %v4270 = vmul.f32 %v2437, %v4238
        %v4271 = vmul.f32 %v2437, %v4239
        %v4272 = vmul.f32 %v2437, %v4240
        %v4273 = vmul.f32 %v2437, %v4241
        %4306 = vrot.lane.b32.xlu0 %v4242, 96
        %v4307 = vpop.permute.xlu0 %4306
        %4308 = vrot.lane.b32.xlu0 %v4243, 96
        %v4309 = vpop.permute.xlu0 %4308
        %4310 = vrot.lane.b32.xlu0 %v4244, 96
        %v4311 = vpop.permute.xlu0 %4310
        %4312 = vrot.lane.b32.xlu0 %v4245, 96
        %v4313 = vpop.permute.xlu0 %4312
        %4314 = vrot.lane.b32.xlu0 %v4246, 96
        %v4315 = vpop.permute.xlu0 %4314
        %4316 = vrot.lane.b32.xlu0 %v4247, 96
        %v4317 = vpop.permute.xlu0 %4316
        %4318 = vrot.lane.b32.xlu0 %v4248, 96
        %v4319 = vpop.permute.xlu0 %4318
        %4320 = vrot.lane.b32.xlu0 %v4249, 96
        %v4321 = vpop.permute.xlu0 %4320
        %4322 = vrot.lane.b32.xlu0 %v4250, 96
        %v4323 = vpop.permute.xlu0 %4322
        %4324 = vrot.lane.b32.xlu0 %v4251, 96
        %v4325 = vpop.permute.xlu0 %4324
        %4326 = vrot.lane.b32.xlu0 %v4252, 96
        %v4327 = vpop.permute.xlu0 %4326
        %4328 = vrot.lane.b32.xlu0 %v4253, 96
        %v4329 = vpop.permute.xlu0 %4328
        %4330 = vrot.lane.b32.xlu0 %v4254, 96
        %v4331 = vpop.permute.xlu0 %4330
        %4332 = vrot.lane.b32.xlu0 %v4255, 96
        %v4333 = vpop.permute.xlu0 %4332
        %4334 = vrot.lane.b32.xlu0 %v4256, 96
        %v4335 = vpop.permute.xlu0 %4334
        %4336 = vrot.lane.b32.xlu0 %v4257, 96
        %v4337 = vpop.permute.xlu0 %4336
        %4338 = vrot.lane.b32.xlu0 %v4258, 96
        %v4339 = vpop.permute.xlu0 %4338
        %4340 = vrot.lane.b32.xlu0 %v4259, 96
        %v4341 = vpop.permute.xlu0 %4340
        %4342 = vrot.lane.b32.xlu0 %v4260, 96
        %v4343 = vpop.permute.xlu0 %4342
        %4344 = vrot.lane.b32.xlu0 %v4261, 96
        %v4345 = vpop.permute.xlu0 %4344
        %4346 = vrot.lane.b32.xlu0 %v4262, 96
        %v4347 = vpop.permute.xlu0 %4346
        %4348 = vrot.lane.b32.xlu0 %v4263, 96
        %v4349 = vpop.permute.xlu0 %4348
        %4350 = vrot.lane.b32.xlu0 %v4264, 96
        %v4351 = vpop.permute.xlu0 %4350
        %4352 = vrot.lane.b32.xlu0 %v4265, 96
        %v4353 = vpop.permute.xlu0 %4352
        %4354 = vrot.lane.b32.xlu0 %v4266, 96
        %v4355 = vpop.permute.xlu0 %4354
        %4356 = vrot.lane.b32.xlu0 %v4267, 96
        %v4357 = vpop.permute.xlu0 %4356
        %4358 = vrot.lane.b32.xlu0 %v4268, 96
        %v4359 = vpop.permute.xlu0 %4358
        %4360 = vrot.lane.b32.xlu0 %v4269, 96
        %v4361 = vpop.permute.xlu0 %4360
        %4362 = vrot.lane.b32.xlu0 %v4270, 96
        %v4363 = vpop.permute.xlu0 %4362
        %4364 = vrot.lane.b32.xlu0 %v4271, 96
        %v4365 = vpop.permute.xlu0 %4364
        %4366 = vrot.lane.b32.xlu0 %v4272, 96
        %v4367 = vpop.permute.xlu0 %4366
        %4368 = vrot.lane.b32.xlu0 %v4273, 96
        %v4369 = vpop.permute.xlu0 %4368
        %v4402 = vmul.f32 %v3986, %v4307
        %v4403 = vmul.f32 %v3987, %v4309
        %v4404 = vmul.f32 %v3988, %v4311
        %v4405 = vmul.f32 %v3989, %v4313
        %v4406 = vmul.f32 %v3990, %v4315
        %v4407 = vmul.f32 %v3991, %v4317
        %v4408 = vmul.f32 %v3992, %v4319
        %v4409 = vmul.f32 %v3993, %v4321
        %v4410 = vmul.f32 %v3994, %v4323
        %v4411 = vmul.f32 %v3995, %v4325
        %v4412 = vmul.f32 %v3996, %v4327
        %v4413 = vmul.f32 %v3997, %v4329
        %v4414 = vmul.f32 %v3998, %v4331
        %v4415 = vmul.f32 %v3999, %v4333
        %v4416 = vmul.f32 %v4000, %v4335
        %v4417 = vmul.f32 %v4001, %v4337
        %v4418 = vmul.f32 %v4002, %v4339
        %v4419 = vmul.f32 %v4003, %v4341
        %v4420 = vmul.f32 %v4004, %v4343
        %v4421 = vmul.f32 %v4005, %v4345
        %v4422 = vmul.f32 %v4006, %v4347
        %v4423 = vmul.f32 %v4007, %v4349
        %v4424 = vmul.f32 %v4008, %v4351
        %v4425 = vmul.f32 %v4009, %v4353
        %v4426 = vmul.f32 %v4010, %v4355
        %v4427 = vmul.f32 %v4011, %v4357
        %v4428 = vmul.f32 %v4012, %v4359
        %v4429 = vmul.f32 %v4013, %v4361
        %v4430 = vmul.f32 %v4014, %v4363
        %v4431 = vmul.f32 %v4015, %v4365
        %v4432 = vmul.f32 %v4016, %v4367
        %v4433 = vmul.f32 %v4017, %v4369
        %4435 = vrot.lane.b32.xlu0 %v2505, 96
        %v4436 = vpop.permute.xlu0 %4435
        %v4438 = vadd.f32 %v4402, %v4436
        %v4439 = vadd.f32 %v4403, %v4436
        %v4440 = vadd.f32 %v4404, %v4436
        %v4441 = vadd.f32 %v4405, %v4436
        %v4442 = vadd.f32 %v4406, %v4436
        %v4443 = vadd.f32 %v4407, %v4436
        %v4444 = vadd.f32 %v4408, %v4436
        %v4445 = vadd.f32 %v4409, %v4436
        %v4446 = vadd.f32 %v4410, %v4436
        %v4447 = vadd.f32 %v4411, %v4436
        %v4448 = vadd.f32 %v4412, %v4436
        %v4449 = vadd.f32 %v4413, %v4436
        %v4450 = vadd.f32 %v4414, %v4436
        %v4451 = vadd.f32 %v4415, %v4436
        %v4452 = vadd.f32 %v4416, %v4436
        %v4453 = vadd.f32 %v4417, %v4436
        %v4454 = vadd.f32 %v4418, %v4436
        %v4455 = vadd.f32 %v4419, %v4436
        %v4456 = vadd.f32 %v4420, %v4436
        %v4457 = vadd.f32 %v4421, %v4436
        %v4458 = vadd.f32 %v4422, %v4436
        %v4459 = vadd.f32 %v4423, %v4436
        %v4460 = vadd.f32 %v4424, %v4436
        %v4461 = vadd.f32 %v4425, %v4436
        %v4462 = vadd.f32 %v4426, %v4436
        %v4463 = vadd.f32 %v4427, %v4436
        %v4464 = vadd.f32 %v4428, %v4436
        %v4465 = vadd.f32 %v4429, %v4436
        %v4466 = vadd.f32 %v4430, %v4436
        %v4467 = vadd.f32 %v4431, %v4436
        %v4468 = vadd.f32 %v4432, %v4436
        %v4469 = vadd.f32 %v4433, %v4436
        %4502 = vrot.lane.b32.xlu0 %v4438, 32
        %v4503 = vpop.permute.xlu0 %4502
        %4504 = vrot.lane.b32.xlu0 %v4439, 32
        %v4505 = vpop.permute.xlu0 %4504
        %4506 = vrot.lane.b32.xlu0 %v4440, 32
        %v4507 = vpop.permute.xlu0 %4506
        %4508 = vrot.lane.b32.xlu0 %v4441, 32
        %v4509 = vpop.permute.xlu0 %4508
        %4510 = vrot.lane.b32.xlu0 %v4442, 32
        %v4511 = vpop.permute.xlu0 %4510
        %4512 = vrot.lane.b32.xlu0 %v4443, 32
        %v4513 = vpop.permute.xlu0 %4512
        %4514 = vrot.lane.b32.xlu0 %v4444, 32
        %v4515 = vpop.permute.xlu0 %4514
        %4516 = vrot.lane.b32.xlu0 %v4445, 32
        %v4517 = vpop.permute.xlu0 %4516
        %4518 = vrot.lane.b32.xlu0 %v4446, 32
        %v4519 = vpop.permute.xlu0 %4518
        %4520 = vrot.lane.b32.xlu0 %v4447, 32
        %v4521 = vpop.permute.xlu0 %4520
        %4522 = vrot.lane.b32.xlu0 %v4448, 32
        %v4523 = vpop.permute.xlu0 %4522
        %4524 = vrot.lane.b32.xlu0 %v4449, 32
        %v4525 = vpop.permute.xlu0 %4524
        %4526 = vrot.lane.b32.xlu0 %v4450, 32
        %v4527 = vpop.permute.xlu0 %4526
        %4528 = vrot.lane.b32.xlu0 %v4451, 32
        %v4529 = vpop.permute.xlu0 %4528
        %4530 = vrot.lane.b32.xlu0 %v4452, 32
        %v4531 = vpop.permute.xlu0 %4530
        %4532 = vrot.lane.b32.xlu0 %v4453, 32
        %v4533 = vpop.permute.xlu0 %4532
        %4534 = vrot.lane.b32.xlu0 %v4454, 32
        %v4535 = vpop.permute.xlu0 %4534
        %4536 = vrot.lane.b32.xlu0 %v4455, 32
        %v4537 = vpop.permute.xlu0 %4536
        %4538 = vrot.lane.b32.xlu0 %v4456, 32
        %v4539 = vpop.permute.xlu0 %4538
        %4540 = vrot.lane.b32.xlu0 %v4457, 32
        %v4541 = vpop.permute.xlu0 %4540
        %4542 = vrot.lane.b32.xlu0 %v4458, 32
        %v4543 = vpop.permute.xlu0 %4542
        %4544 = vrot.lane.b32.xlu0 %v4459, 32
        %v4545 = vpop.permute.xlu0 %4544
        %4546 = vrot.lane.b32.xlu0 %v4460, 32
        %v4547 = vpop.permute.xlu0 %4546
        %4548 = vrot.lane.b32.xlu0 %v4461, 32
        %v4549 = vpop.permute.xlu0 %4548
        %4550 = vrot.lane.b32.xlu0 %v4462, 32
        %v4551 = vpop.permute.xlu0 %4550
        %4552 = vrot.lane.b32.xlu0 %v4463, 32
        %v4553 = vpop.permute.xlu0 %4552
        %4554 = vrot.lane.b32.xlu0 %v4464, 32
        %v4555 = vpop.permute.xlu0 %4554
        %4556 = vrot.lane.b32.xlu0 %v4465, 32
        %v4557 = vpop.permute.xlu0 %4556
        %4558 = vrot.lane.b32.xlu0 %v4466, 32
        %v4559 = vpop.permute.xlu0 %4558
        %4560 = vrot.lane.b32.xlu0 %v4467, 32
        %v4561 = vpop.permute.xlu0 %4560
        %4562 = vrot.lane.b32.xlu0 %v4468, 32
        %v4563 = vpop.permute.xlu0 %4562
        %4564 = vrot.lane.b32.xlu0 %v4469, 32
        %v4565 = vpop.permute.xlu0 %4564
        %v4598 = vsel %vm2048, %v2506, %v4503
        %v4599 = vsel %vm2048, %v2507, %v4505
        %v4600 = vsel %vm2048, %v2508, %v4507
        %v4601 = vsel %vm2048, %v2509, %v4509
        %v4602 = vsel %vm2048, %v2510, %v4511
        %v4603 = vsel %vm2048, %v2511, %v4513
        %v4604 = vsel %vm2048, %v2512, %v4515
        %v4605 = vsel %vm2048, %v2513, %v4517
        %v4606 = vsel %vm2048, %v2514, %v4519
        %v4607 = vsel %vm2048, %v2515, %v4521
        %v4608 = vsel %vm2048, %v2516, %v4523
        %v4609 = vsel %vm2048, %v2517, %v4525
        %v4610 = vsel %vm2048, %v2518, %v4527
        %v4611 = vsel %vm2048, %v2519, %v4529
        %v4612 = vsel %vm2048, %v2520, %v4531
        %v4613 = vsel %vm2048, %v2521, %v4533
        %v4614 = vsel %vm2048, %v2522, %v4535
        %v4615 = vsel %vm2048, %v2523, %v4537
        %v4616 = vsel %vm2048, %v2524, %v4539
        %v4617 = vsel %vm2048, %v2525, %v4541
        %v4618 = vsel %vm2048, %v2526, %v4543
        %v4619 = vsel %vm2048, %v2527, %v4545
        %v4620 = vsel %vm2048, %v2528, %v4547
        %v4621 = vsel %vm2048, %v2529, %v4549
        %v4622 = vsel %vm2048, %v2530, %v4551
        %v4623 = vsel %vm2048, %v2531, %v4553
        %v4624 = vsel %vm2048, %v2532, %v4555
        %v4625 = vsel %vm2048, %v2533, %v4557
        %v4626 = vsel %vm2048, %v2534, %v4559
        %v4627 = vsel %vm2048, %v2535, %v4561
        %v4628 = vsel %vm2048, %v2536, %v4563
        %v4629 = vsel %vm2048, %v2537, %v4565
        %v4630 = vpack.c.bf16 %v4599, %v4598
        %v4631 = vpack.c.bf16 %v4601, %v4600
        %v4632 = vpack.c.bf16 %v4603, %v4602
        %v4633 = vpack.c.bf16 %v4605, %v4604
        %v4634 = vpack.c.bf16 %v4607, %v4606
        %v4635 = vpack.c.bf16 %v4609, %v4608
        %v4636 = vpack.c.bf16 %v4611, %v4610
        %v4637 = vpack.c.bf16 %v4613, %v4612
        %v4638 = vpack.c.bf16 %v4615, %v4614
        %v4639 = vpack.c.bf16 %v4617, %v4616
        %v4640 = vpack.c.bf16 %v4619, %v4618
        %v4641 = vpack.c.bf16 %v4621, %v4620
        %v4642 = vpack.c.bf16 %v4623, %v4622
        %v4643 = vpack.c.bf16 %v4625, %v4624
        %v4644 = vpack.c.bf16 %v4627, %v4626
        %v4645 = vpack.c.bf16 %v4629, %v4628
        %v4662 = vunpack.c.l.b16 %v4630
        %v4663 = vunpack.c.h.b16 %v4630
        %v4664 = vunpack.c.l.b16 %v4631
        %v4665 = vunpack.c.h.b16 %v4631
        %v4666 = vunpack.c.l.b16 %v4632
        %v4667 = vunpack.c.h.b16 %v4632
        %v4668 = vunpack.c.l.b16 %v4633
        %v4669 = vunpack.c.h.b16 %v4633
        %v4670 = vunpack.c.l.b16 %v4634
        %v4671 = vunpack.c.h.b16 %v4634
        %v4672 = vunpack.c.l.b16 %v4635
        %v4673 = vunpack.c.h.b16 %v4635
        %v4674 = vunpack.c.l.b16 %v4636
        %v4675 = vunpack.c.h.b16 %v4636
        %v4676 = vunpack.c.l.b16 %v4637
        %v4677 = vunpack.c.h.b16 %v4637
        %v4678 = vunpack.c.l.b16 %v4638
        %v4679 = vunpack.c.h.b16 %v4638
        %v4680 = vunpack.c.l.b16 %v4639
        %v4681 = vunpack.c.h.b16 %v4639
        %v4682 = vunpack.c.l.b16 %v4640
        %v4683 = vunpack.c.h.b16 %v4640
        %v4684 = vunpack.c.l.b16 %v4641
        %v4685 = vunpack.c.h.b16 %v4641
        %v4686 = vunpack.c.l.b16 %v4642
        %v4687 = vunpack.c.h.b16 %v4642
        %v4688 = vunpack.c.l.b16 %v4643
        %v4689 = vunpack.c.h.b16 %v4643
        %v4690 = vunpack.c.l.b16 %v4644
        %v4691 = vunpack.c.h.b16 %v4644
        %v4692 = vunpack.c.l.b16 %v4645
        %v4693 = vunpack.c.h.b16 %v4645
        %v4694 = vpack.c.b16 %v4662, %v4662
        %v4695 = vpack.c.b16 %v4663, %v4663
        %v4696 = vpack.c.b16 %v4664, %v4664
        %v4697 = vpack.c.b16 %v4665, %v4665
        %v4698 = vpack.c.b16 %v4666, %v4666
        %v4699 = vpack.c.b16 %v4667, %v4667
        %v4700 = vpack.c.b16 %v4668, %v4668
        %v4701 = vpack.c.b16 %v4669, %v4669
        %v4702 = vpack.c.b16 %v4670, %v4670
        %v4703 = vpack.c.b16 %v4671, %v4671
        %v4704 = vpack.c.b16 %v4672, %v4672
        %v4705 = vpack.c.b16 %v4673, %v4673
        %v4706 = vpack.c.b16 %v4674, %v4674
        %v4707 = vpack.c.b16 %v4675, %v4675
        %v4708 = vpack.c.b16 %v4676, %v4676
        %v4709 = vpack.c.b16 %v4677, %v4677
        %v4710 = vpack.c.b16 %v4678, %v4678
        %v4711 = vpack.c.b16 %v4679, %v4679
        %v4712 = vpack.c.b16 %v4680, %v4680
        %v4713 = vpack.c.b16 %v4681, %v4681
        %v4714 = vpack.c.b16 %v4682, %v4682
        %v4715 = vpack.c.b16 %v4683, %v4683
        %v4716 = vpack.c.b16 %v4684, %v4684
        %v4717 = vpack.c.b16 %v4685, %v4685
        %v4718 = vpack.c.b16 %v4686, %v4686
        %v4719 = vpack.c.b16 %v4687, %v4687
        %v4720 = vpack.c.b16 %v4688, %v4688
        %v4721 = vpack.c.b16 %v4689, %v4689
        %v4722 = vpack.c.b16 %v4690, %v4690
        %v4723 = vpack.c.b16 %v4691, %v4691
        %v4724 = vpack.c.b16 %v4692, %v4692
        %v4725 = vpack.c.b16 %v4693, %v4693
        %vm4758 = vcmask 519168
        %4759 = vst.msk [vmem:[%s288] sm:$0xf] %vm4758, %v4694
        %4760 = vst.msk [vmem:[%s288 + $0x4] sm:$0xf] %vm4758, %v4695
        %4761 = vst.msk [vmem:[%s288 + $0x8] sm:$0xf] %vm4758, %v4696
        %4762 = vst.msk [vmem:[%s288 + $0xc] sm:$0xf] %vm4758, %v4697
        %4763 = vst.msk [vmem:[%s288 + $0x10] sm:$0xf] %vm4758, %v4698
        %4764 = vst.msk [vmem:[%s288 + $0x14] sm:$0xf] %vm4758, %v4699
        %4765 = vst.msk [vmem:[%s288 + $0x18] sm:$0xf] %vm4758, %v4700
        %4766 = vst.msk [vmem:[%s288 + $0x1c] sm:$0xf] %vm4758, %v4701
        %4767 = vst.msk [vmem:[%s288 + $0x20] sm:$0xf] %vm4758, %v4702
        %4768 = vst.msk [vmem:[%s288 + $0x24] sm:$0xf] %vm4758, %v4703
        %4769 = vst.msk [vmem:[%s288 + $0x28] sm:$0xf] %vm4758, %v4704
        %4770 = vst.msk [vmem:[%s288 + $0x2c] sm:$0xf] %vm4758, %v4705
        %4771 = vst.msk [vmem:[%s288 + $0x30] sm:$0xf] %vm4758, %v4706
        %4772 = vst.msk [vmem:[%s288 + $0x34] sm:$0xf] %vm4758, %v4707
        %4773 = vst.msk [vmem:[%s288 + $0x38] sm:$0xf] %vm4758, %v4708
        %4774 = vst.msk [vmem:[%s288 + $0x3c] sm:$0xf] %vm4758, %v4709
        %4775 = vst.msk [vmem:[%s288 + $0x40] sm:$0xf] %vm4758, %v4710
        %4776 = vst.msk [vmem:[%s288 + $0x44] sm:$0xf] %vm4758, %v4711
        %4777 = vst.msk [vmem:[%s288 + $0x48] sm:$0xf] %vm4758, %v4712
        %4778 = vst.msk [vmem:[%s288 + $0x4c] sm:$0xf] %vm4758, %v4713
        %4779 = vst.msk [vmem:[%s288 + $0x50] sm:$0xf] %vm4758, %v4714
        %4780 = vst.msk [vmem:[%s288 + $0x54] sm:$0xf] %vm4758, %v4715
        %4781 = vst.msk [vmem:[%s288 + $0x58] sm:$0xf] %vm4758, %v4716
        %4782 = vst.msk [vmem:[%s288 + $0x5c] sm:$0xf] %vm4758, %v4717
        %4783 = vst.msk [vmem:[%s288 + $0x60] sm:$0xf] %vm4758, %v4718
        %4784 = vst.msk [vmem:[%s288 + $0x64] sm:$0xf] %vm4758, %v4719
        %4785 = vst.msk [vmem:[%s288 + $0x68] sm:$0xf] %vm4758, %v4720
        %4786 = vst.msk [vmem:[%s288 + $0x6c] sm:$0xf] %vm4758, %v4721
        %4787 = vst.msk [vmem:[%s288 + $0x70] sm:$0xf] %vm4758, %v4722
        %4788 = vst.msk [vmem:[%s288 + $0x74] sm:$0xf] %vm4758, %v4723
        %4789 = vst.msk [vmem:[%s288 + $0x78] sm:$0xf] %vm4758, %v4724
        %4790 = vst.msk [vmem:[%s288 + $0x7c] sm:$0xf] %vm4758, %v4725
        %s4791 = smul.u32 32, %s21
        %p4792 = scmp.lt.s32.totalorder %s4791, 127
        %s4793 = scalar_select %p4792, %s4791, 127
        %s4794 = smul.addr %s4793, 4
        %s4795 = scalar_lea.vmem %s5, %s4794
        // Predicated region
        $region57: #{graphsaint_forward.2} parent=39 // pred_check
          %p4796 = pneg %p149
        $region58: #{graphsaint_forward.2} parent=39 // pred_check_branch
          %4798 = sbr.rel (%p4796) target = $region60
        $region59: #{graphsaint_forward.2} parent=39 // pred_region
          %s4799 = smul.u32 32, %s21
        $region60: #{graphsaint_forward.2} parent=39 // pred_fallthru
          _
      $region40: #{graphsaint_forward.2} parent=5 // pred_fallthru
        _
      %p4800 = scmp.le.s32.totalorder 2, %s16
      // Predicated region
      $region61: #{graphsaint_forward.2} parent=5 // pred_check
        %p4801 = pneg %p4800
      $region62: #{graphsaint_forward.2} parent=5 // pred_check_branch
        %4803 = sbr.rel (%p4801) target = $region64
      $region63: #{graphsaint_forward.2} parent=5 // pred_region
        %s4804 = ssub.s32 %s16, 2
        // Predicated region
        $region65: #{graphsaint_forward.2} parent=63 // pred_check
          %p4805 = pneg %p155
        $region66: #{graphsaint_forward.2} parent=63 // pred_check_branch
          %4807 = sbr.rel (%p4805) target = $region68
        $region67: #{graphsaint_forward.2} parent=63 // pred_region
          %s4808 = smul.u32 32, %s22
          %p4809 = scmp.lt.s32.totalorder %s4808, 127
          %s4810 = scalar_select %p4809, %s4808, 127
          %s4811 = smul.addr %s4810, 4
          %s4812 = scalar_lea.vmem %s5, %s4811
        $region68: #{graphsaint_forward.2} parent=63 // pred_fallthru
          _
      $region64: #{graphsaint_forward.2} parent=5 // pred_fallthru
        _
    $region6: #{graphsaint_forward.2} parent=1 // loop_footer
      %s20 = sadd.s32 1, %s16
    $region7: #{graphsaint_forward.2} parent=1 // loop_footer_branch
      %15 = sbr.rel target = $region3
    $region8: #{graphsaint_forward.2} parent=1 // loop_exit
      _
    %4813 = vsyncpa [#allocation3], 1
    %s4814 = scalar_lea.sflag [#allocation3], 1
    %4815 = vsyncpa %s4814, 1
    %4816 = vsyncpa [#allocation5], 1
    %4817 = vsyncpa [#allocation8], 1

// kernel: graphsaint_forward.3
$region0: #{graphsaint_forward.3}
  #allocation0 [shape = 'u32[]', space=smem, size = 0x4, offset = 0x4, fixed_abs, tag = 'smem constant byte address 0x4 - core index']
  #allocation1 [shape = 'u32[144,128]{1,0:T(1,128)}', space=vmem, size = 0x12000, scoped, tag = 'internal scratch']
  %s0 = inlined_call_operand.vmem [shape: bf16[1024,64], index: 0, kind: input, shape index: {}]
  %s1 = inlined_call_operand.vmem [shape: bf16[1024,1024], index: 1, kind: input, shape index: {}]
  %s2 = inlined_call_operand.vmem [shape: bf16[64,32], index: 2, kind: input, shape index: {}]
  %s3 = inlined_call_operand.vmem [shape: bf16[64,32], index: 3, kind: input, shape index: {}]
  %s4 = inlined_call_operand.vmem [shape: f32[3,64], index: 4, kind: input, shape index: {}]
  %s5 = inlined_call_operand.vmem [shape: bf16[64,128], index: 5, kind: input, shape index: {}]
  %s6 = inlined_call_operand.vmem [shape: f32[1,128], index: 6, kind: input, shape index: {}]
  %s7 = inlined_call_operand.hbm [shape: f32[1024,128], index: 7, kind: output, shape index: {}]
  %s8 = sld [smem:[#allocation0]]
  $region61: #{graphsaint_forward.3} parent=0
    _
  %s10 = ssub.s32 1, %s8
  %s11 = scalar_select 0, %s10, %s8
  $region1: #{graphsaint_forward.3} parent=0
    #allocation2 [shape = 'u8[262144]{0}', space=vmem, size = 0x40000, scoped, tag = 'output window, operand 0']
    #allocation3 [shape = 's32[2]{0}', space=sflag, size = 0x8, scoped, tag = 'scoped memory for graphsaint_forward.3']
    %12 = vsyncpa [#allocation3], 0
    %s13 = scalar_lea.sflag [#allocation3], 1
    %14 = vsyncpa %s13, 0
    loop: start=0, step=1, limit=6
    $region2: #{graphsaint_forward.3} parent=1 // loop_pre_header
      _
    $region3: #{graphsaint_forward.3} parent=1 // loop_header
      %s16 = sphi 0, %s20
      %p17 = scmp.ge.s32.totalorder %s16, 6
      %s24 = sphi 0, %s24
      %s26 = sphi 0, %s24
      %s27 = sphi 0, %s26
      %s41 = sphi 0, %s27
      %s47 = sphi 0, %s49
      %s50 = sphi 0, %s47
      %s51 = sphi 0, %s50
      %s67 = sphi 0, %s51
      %s71 = sphi 0, %s71
      %s73 = sphi 0, %s71
      %s74 = sphi 0, %s73
      %s88 = sphi 0, %s74
      %s92 = sphi 0, %s92
      %s94 = sphi 0, %s92
      %s95 = sphi 0, %s94
      %s109 = sphi 0, %s95
      %s113 = sphi 0, %s113
      %s115 = sphi 0, %s113
      %s116 = sphi 0, %s115
      %s130 = sphi 0, %s116
      %s134 = sphi 0, %s134
      %s136 = sphi 0, %s134
      %s137 = sphi 0, %s136
      %s151 = sphi 0, %s137
      %s155 = sphi 0, %s155
      %s157 = sphi 0, %s155
      %s158 = sphi 0, %s157
      %s172 = sphi 0, %s158
      %s178 = sphi 0, %s180
      %s181 = sphi 0, %s178
      %s182 = sphi 0, %s181
      %s198 = sphi 0, %s182
    $region4: #{graphsaint_forward.3} parent=1 // loop_header_branch
      %19 = sbr.rel (%p17) target = $region8
    $region5: #{graphsaint_forward.3} parent=1 // loop_body
      %s21 = ssub.s32 %s16, 1
      %s22 = ssub.s32 %s16, 2
      %s23 = sadd.s32 %s16, 1
      %s25 = sadd.s32 %s24, 1
      %p28 = scmp.eq.s32.totalorder %s16, 3
      %p29 = scmp.ne.s32.totalorder %s24, %s26
      %p30 = scmp.eq.s32.totalorder %s16, 0
      %p31 = por %p29, %p30
      %p32 = scmp.ne.s32.totalorder %s24, %s26
      %p33 = scmp.eq.s32.totalorder %s21, 3
      %p34 = por %p32, %p33
      %p35 = scmp.ne.s32.totalorder %s26, %s27
      %p36 = scmp.eq.s32.totalorder %s21, 0
      %p37 = por %p35, %p36
      %p38 = scmp.ne.s32.totalorder %s26, %s27
      %p39 = scmp.eq.s32.totalorder %s22, 3
      %p40 = por %p38, %p39
      %p42 = scmp.ne.s32.totalorder %s27, %s41
      %p43 = scmp.eq.s32.totalorder %s22, 0
      %p44 = por %p42, %p43
      %s45 = ssub.s32 %s16, %s23
      %p46 = scmp.eq.s32.totalorder %s45, 0
      %s48 = sadd.s32 %s47, 1
      %s49 = scalar_select %p46, %s47, %s48
      %p52 = pneg %p46
      %p53 = scmp.eq.s32.totalorder %s16, 3
      %p54 = por %p52, %p53
      %p55 = scmp.ne.s32.totalorder %s47, %s50
      %p56 = scmp.eq.s32.totalorder %s16, 0
      %p57 = por %p55, %p56
      %p58 = scmp.ne.s32.totalorder %s47, %s50
      %p59 = scmp.eq.s32.totalorder %s21, 3
      %p60 = por %p58, %p59
      %p61 = scmp.ne.s32.totalorder %s50, %s51
      %p62 = scmp.eq.s32.totalorder %s21, 0
      %p63 = por %p61, %p62
      %p64 = scmp.ne.s32.totalorder %s50, %s51
      %p65 = scmp.eq.s32.totalorder %s22, 3
      %p66 = por %p64, %p65
      %p68 = scmp.ne.s32.totalorder %s51, %s67
      %p69 = scmp.eq.s32.totalorder %s22, 0
      %p70 = por %p68, %p69
      %s72 = sadd.s32 %s71, 1
      %p75 = scmp.eq.s32.totalorder %s16, 3
      %p76 = scmp.ne.s32.totalorder %s71, %s73
      %p77 = scmp.eq.s32.totalorder %s16, 0
      %p78 = por %p76, %p77
      %p79 = scmp.ne.s32.totalorder %s71, %s73
      %p80 = scmp.eq.s32.totalorder %s21, 3
      %p81 = por %p79, %p80
      %p82 = scmp.ne.s32.totalorder %s73, %s74
      %p83 = scmp.eq.s32.totalorder %s21, 0
      %p84 = por %p82, %p83
      %p85 = scmp.ne.s32.totalorder %s73, %s74
      %p86 = scmp.eq.s32.totalorder %s22, 3
      %p87 = por %p85, %p86
      %p89 = scmp.ne.s32.totalorder %s74, %s88
      %p90 = scmp.eq.s32.totalorder %s22, 0
      %p91 = por %p89, %p90
      %s93 = sadd.s32 %s92, 1
      %p96 = scmp.eq.s32.totalorder %s16, 3
      %p97 = scmp.ne.s32.totalorder %s92, %s94
      %p98 = scmp.eq.s32.totalorder %s16, 0
      %p99 = por %p97, %p98
      %p100 = scmp.ne.s32.totalorder %s92, %s94
      %p101 = scmp.eq.s32.totalorder %s21, 3
      %p102 = por %p100, %p101
      %p103 = scmp.ne.s32.totalorder %s94, %s95
      %p104 = scmp.eq.s32.totalorder %s21, 0
      %p105 = por %p103, %p104
      %p106 = scmp.ne.s32.totalorder %s94, %s95
      %p107 = scmp.eq.s32.totalorder %s22, 3
      %p108 = por %p106, %p107
      %p110 = scmp.ne.s32.totalorder %s95, %s109
      %p111 = scmp.eq.s32.totalorder %s22, 0
      %p112 = por %p110, %p111
      %s114 = sadd.s32 %s113, 1
      %p117 = scmp.eq.s32.totalorder %s16, 3
      %p118 = scmp.ne.s32.totalorder %s113, %s115
      %p119 = scmp.eq.s32.totalorder %s16, 0
      %p120 = por %p118, %p119
      %p121 = scmp.ne.s32.totalorder %s113, %s115
      %p122 = scmp.eq.s32.totalorder %s21, 3
      %p123 = por %p121, %p122
      %p124 = scmp.ne.s32.totalorder %s115, %s116
      %p125 = scmp.eq.s32.totalorder %s21, 0
      %p126 = por %p124, %p125
      %p127 = scmp.ne.s32.totalorder %s115, %s116
      %p128 = scmp.eq.s32.totalorder %s22, 3
      %p129 = por %p127, %p128
      %p131 = scmp.ne.s32.totalorder %s116, %s130
      %p132 = scmp.eq.s32.totalorder %s22, 0
      %p133 = por %p131, %p132
      %s135 = sadd.s32 %s134, 1
      %p138 = scmp.eq.s32.totalorder %s16, 3
      %p139 = scmp.ne.s32.totalorder %s134, %s136
      %p140 = scmp.eq.s32.totalorder %s16, 0
      %p141 = por %p139, %p140
      %p142 = scmp.ne.s32.totalorder %s134, %s136
      %p143 = scmp.eq.s32.totalorder %s21, 3
      %p144 = por %p142, %p143
      %p145 = scmp.ne.s32.totalorder %s136, %s137
      %p146 = scmp.eq.s32.totalorder %s21, 0
      %p147 = por %p145, %p146
      %p148 = scmp.ne.s32.totalorder %s136, %s137
      %p149 = scmp.eq.s32.totalorder %s22, 3
      %p150 = por %p148, %p149
      %p152 = scmp.ne.s32.totalorder %s137, %s151
      %p153 = scmp.eq.s32.totalorder %s22, 0
      %p154 = por %p152, %p153
      %s156 = sadd.s32 %s155, 1
      %p159 = scmp.eq.s32.totalorder %s16, 3
      %p160 = scmp.ne.s32.totalorder %s155, %s157
      %p161 = scmp.eq.s32.totalorder %s16, 0
      %p162 = por %p160, %p161
      %p163 = scmp.ne.s32.totalorder %s155, %s157
      %p164 = scmp.eq.s32.totalorder %s21, 3
      %p165 = por %p163, %p164
      %p166 = scmp.ne.s32.totalorder %s157, %s158
      %p167 = scmp.eq.s32.totalorder %s21, 0
      %p168 = por %p166, %p167
      %p169 = scmp.ne.s32.totalorder %s157, %s158
      %p170 = scmp.eq.s32.totalorder %s22, 3
      %p171 = por %p169, %p170
      %p173 = scmp.ne.s32.totalorder %s158, %s172
      %p174 = scmp.eq.s32.totalorder %s22, 0
      %p175 = por %p173, %p174
      %s176 = ssub.s32 %s16, %s23
      %p177 = scmp.eq.s32.totalorder %s176, 0
      %s179 = sadd.s32 %s178, 1
      %s180 = scalar_select %p177, %s178, %s179
      %p183 = pneg %p177
      %p184 = scmp.eq.s32.totalorder %s16, 3
      %p185 = por %p183, %p184
      %p186 = scmp.ne.s32.totalorder %s178, %s181
      %p187 = scmp.eq.s32.totalorder %s16, 0
      %p188 = por %p186, %p187
      %p189 = scmp.ne.s32.totalorder %s178, %s181
      %p190 = scmp.eq.s32.totalorder %s21, 3
      %p191 = por %p189, %p190
      %p192 = scmp.ne.s32.totalorder %s181, %s182
      %p193 = scmp.eq.s32.totalorder %s21, 0
      %p194 = por %p192, %p193
      %p195 = scmp.ne.s32.totalorder %s181, %s182
      %p196 = scmp.eq.s32.totalorder %s22, 3
      %p197 = por %p195, %p196
      %p199 = scmp.ne.s32.totalorder %s182, %s198
      %p200 = scmp.eq.s32.totalorder %s22, 0
      %p201 = por %p199, %p200
      %p202 = scmp.le.s32.totalorder 1, %s16
      %p203 = scmp.lt.s32.totalorder %s16, 5
      %p204 = pnand %p202, %p203
      %p205 = pneg %p204
      // Predicated region
      $region9: #{graphsaint_forward.3} parent=5 // pred_check
        _
      $region10: #{graphsaint_forward.3} parent=5 // pred_check_branch
        %207 = sbr.rel (%p204) target = $region12
      $region11: #{graphsaint_forward.3} parent=5 // pred_region
        %s208 = ssub.s32 %s16, 1
        // Predicated region
        $region13: #{graphsaint_forward.3} parent=11 // pred_check
          %p209 = pneg %p37
        $region14: #{graphsaint_forward.3} parent=11 // pred_check_branch
          %211 = sbr.rel (%p209) target = $region16
        $region15: #{graphsaint_forward.3} parent=11 // pred_region
          _
        $region16: #{graphsaint_forward.3} parent=11 // pred_fallthru
          _
        // Predicated region
        $region17: #{graphsaint_forward.3} parent=11 // pred_check
          %p212 = pneg %p84
        $region18: #{graphsaint_forward.3} parent=11 // pred_check_branch
          %214 = sbr.rel (%p212) target = $region20
        $region19: #{graphsaint_forward.3} parent=11 // pred_region
          _
        $region20: #{graphsaint_forward.3} parent=11 // pred_fallthru
          _
        // Predicated region
        $region21: #{graphsaint_forward.3} parent=11 // pred_check
          %p215 = pneg %p105
        $region22: #{graphsaint_forward.3} parent=11 // pred_check_branch
          %217 = sbr.rel (%p215) target = $region24
        $region23: #{graphsaint_forward.3} parent=11 // pred_region
          _
        $region24: #{graphsaint_forward.3} parent=11 // pred_fallthru
          _
        // Predicated region
        $region25: #{graphsaint_forward.3} parent=11 // pred_check
          %p218 = pneg %p126
        $region26: #{graphsaint_forward.3} parent=11 // pred_check_branch
          %220 = sbr.rel (%p218) target = $region28
        $region27: #{graphsaint_forward.3} parent=11 // pred_region
          _
        $region28: #{graphsaint_forward.3} parent=11 // pred_fallthru
          _
        // Predicated region
        $region29: #{graphsaint_forward.3} parent=11 // pred_check
          %p221 = pneg %p147
        $region30: #{graphsaint_forward.3} parent=11 // pred_check_branch
          %223 = sbr.rel (%p221) target = $region32
        $region31: #{graphsaint_forward.3} parent=11 // pred_region
          _
        $region32: #{graphsaint_forward.3} parent=11 // pred_fallthru
          _
        // Predicated region
        $region33: #{graphsaint_forward.3} parent=11 // pred_check
          %p224 = pneg %p168
        $region34: #{graphsaint_forward.3} parent=11 // pred_check_branch
          %226 = sbr.rel (%p224) target = $region36
        $region35: #{graphsaint_forward.3} parent=11 // pred_region
          _
        $region36: #{graphsaint_forward.3} parent=11 // pred_fallthru
          _
      $region12: #{graphsaint_forward.3} parent=5 // pred_fallthru
        _
      %p227 = scmp.lt.s32.totalorder %s16, 4
      // Predicated region
      $region37: #{graphsaint_forward.3} parent=5 // pred_check
        %p228 = pneg %p227
      $region38: #{graphsaint_forward.3} parent=5 // pred_check_branch
        %230 = sbr.rel (%p228) target = $region40
      $region39: #{graphsaint_forward.3} parent=5 // pred_region
        // Predicated region
        $region41: #{graphsaint_forward.3} parent=39 // pred_check
          %p231 = pneg %p57
        $region42: #{graphsaint_forward.3} parent=39 // pred_check_branch
          %233 = sbr.rel (%p231) target = $region44
        $region43: #{graphsaint_forward.3} parent=39 // pred_region
          %s234 = smul.u32 32, %s16
          %p235 = scmp.lt.s32.totalorder %s234, 127
          %s236 = scalar_select %p235, %s234, 127
          %s237 = smul.addr %s236, 8
          %s238 = smul.addr %s237, 4
          %s239 = scalar_lea.vmem %s1, %s238
          %s240 = smul.u32 32, %s16
        $region44: #{graphsaint_forward.3} parent=39 // pred_fallthru
          _
      $region40: #{graphsaint_forward.3} parent=5 // pred_fallthru
        _
      %p241 = scmp.le.s32.totalorder 1, %s16
      %p242 = scmp.lt.s32.totalorder %s16, 5
      %p243 = pnand %p241, %p242
      %p244 = pneg %p243
      // Predicated region
      $region45: #{graphsaint_forward.3} parent=5 // pred_check
        _
      $region46: #{graphsaint_forward.3} parent=5 // pred_check_branch
        %246 = sbr.rel (%p243) target = $region48
      $region47: #{graphsaint_forward.3} parent=5 // pred_region
        %s247 = ssub.s32 %s16, 1
        %p248 = pneg %p37
        %p249 = pneg %p34
        %s250 = smul.u32 32, %s21
        %p251 = scmp.lt.s32.totalorder %s250, 127
        %s252 = scalar_select %p251, %s250, 127
        %s253 = smul.addr %s252, 8
        %s254 = smul.addr %s253, 4
        %s255 = scalar_lea.vmem %s1, %s254
        %p256 = pneg %p63
        %p257 = pneg %p60
        %p258 = pneg %p84
        %p259 = pneg %p81
        %p260 = pneg %p105
        %p261 = pneg %p102
        %p262 = pneg %p126
        %p263 = pneg %p123
        %p264 = pneg %p147
        %p265 = pneg %p144
        %p266 = pneg %p168
        %p267 = pneg %p165
        %p268 = pneg %p194
        %p269 = pneg %p191
        %s270 = sand.u32 %s181, 1
        %s271 = scalar_lea.sflag [#allocation3], %s270
        %s272 = sand.u32 %s181, 1
        %s273 = smul.addr %s272, 256
        %s274 = scalar_lea.vmem [#allocation2], %s273
        %s275 = smul.u32 32, %s21
        %p276 = scmp.lt.s32.totalorder %s275, 127
        %s277 = scalar_select %p276, %s275, 127
        %s278 = smul.addr %s277, 8
        %s279 = smul.addr %s278, 4
        %s280 = scalar_lea.vmem %s1, %s279
        %s281 = smul.u32 32, %s21
        %s282 = smul.u32 32, %s21
        %v284 = vld [vmem:[%s0] sm:$0xf]
        %v285 = vld [vmem:[%s0 + $0x4] sm:$0xf]
        %v286 = vld [vmem:[%s0 + $0x8] sm:$0xf]
        %v287 = vld [vmem:[%s0 + $0xc] sm:$0xf]
        %v288 = vld [vmem:[%s0 + $0x10] sm:$0xf]
        %v289 = vld [vmem:[%s0 + $0x14] sm:$0xf]
        %v290 = vld [vmem:[%s0 + $0x18] sm:$0xf]
        %v291 = vld [vmem:[%s0 + $0x1c] sm:$0xf]
        %v292 = vld [vmem:[%s0 + $0x20] sm:$0xf]
        %v293 = vld [vmem:[%s0 + $0x24] sm:$0xf]
        %v294 = vld [vmem:[%s0 + $0x28] sm:$0xf]
        %v295 = vld [vmem:[%s0 + $0x2c] sm:$0xf]
        %v296 = vld [vmem:[%s0 + $0x30] sm:$0xf]
        %v297 = vld [vmem:[%s0 + $0x34] sm:$0xf]
        %v298 = vld [vmem:[%s0 + $0x38] sm:$0xf]
        %v299 = vld [vmem:[%s0 + $0x3c] sm:$0xf]
        %v300 = vld [vmem:[%s0 + $0x40] sm:$0xf]
        %v301 = vld [vmem:[%s0 + $0x44] sm:$0xf]
        %v302 = vld [vmem:[%s0 + $0x48] sm:$0xf]
        %v303 = vld [vmem:[%s0 + $0x4c] sm:$0xf]
        %v304 = vld [vmem:[%s0 + $0x50] sm:$0xf]
        %v305 = vld [vmem:[%s0 + $0x54] sm:$0xf]
        %v306 = vld [vmem:[%s0 + $0x58] sm:$0xf]
        %v307 = vld [vmem:[%s0 + $0x5c] sm:$0xf]
        %v308 = vld [vmem:[%s0 + $0x60] sm:$0xf]
        %v309 = vld [vmem:[%s0 + $0x64] sm:$0xf]
        %v310 = vld [vmem:[%s0 + $0x68] sm:$0xf]
        %v311 = vld [vmem:[%s0 + $0x6c] sm:$0xf]
        %v312 = vld [vmem:[%s0 + $0x70] sm:$0xf]
        %v313 = vld [vmem:[%s0 + $0x74] sm:$0xf]
        %v314 = vld [vmem:[%s0 + $0x78] sm:$0xf]
        %v315 = vld [vmem:[%s0 + $0x7c] sm:$0xf]
        %v316 = vld [vmem:[%s0 + $0x80] sm:$0xf]
        %v317 = vld [vmem:[%s0 + $0x84] sm:$0xf]
        %v318 = vld [vmem:[%s0 + $0x88] sm:$0xf]
        %v319 = vld [vmem:[%s0 + $0x8c] sm:$0xf]
        %v320 = vld [vmem:[%s0 + $0x90] sm:$0xf]
        %v321 = vld [vmem:[%s0 + $0x94] sm:$0xf]
        %v322 = vld [vmem:[%s0 + $0x98] sm:$0xf]
        %v323 = vld [vmem:[%s0 + $0x9c] sm:$0xf]
        %v324 = vld [vmem:[%s0 + $0xa0] sm:$0xf]
        %v325 = vld [vmem:[%s0 + $0xa4] sm:$0xf]
        %v326 = vld [vmem:[%s0 + $0xa8] sm:$0xf]
        %v327 = vld [vmem:[%s0 + $0xac] sm:$0xf]
        %v328 = vld [vmem:[%s0 + $0xb0] sm:$0xf]
        %v329 = vld [vmem:[%s0 + $0xb4] sm:$0xf]
        %v330 = vld [vmem:[%s0 + $0xb8] sm:$0xf]
        %v331 = vld [vmem:[%s0 + $0xbc] sm:$0xf]
        %v332 = vld [vmem:[%s0 + $0xc0] sm:$0xf]
        %v333 = vld [vmem:[%s0 + $0xc4] sm:$0xf]
        %v334 = vld [vmem:[%s0 + $0xc8] sm:$0xf]
        %v335 = vld [vmem:[%s0 + $0xcc] sm:$0xf]
        %v336 = vld [vmem:[%s0 + $0xd0] sm:$0xf]
        %v337 = vld [vmem:[%s0 + $0xd4] sm:$0xf]
        %v338 = vld [vmem:[%s0 + $0xd8] sm:$0xf]
        %v339 = vld [vmem:[%s0 + $0xdc] sm:$0xf]
        %v340 = vld [vmem:[%s0 + $0xe0] sm:$0xf]
        %v341 = vld [vmem:[%s0 + $0xe4] sm:$0xf]
        %v342 = vld [vmem:[%s0 + $0xe8] sm:$0xf]
        %v343 = vld [vmem:[%s0 + $0xec] sm:$0xf]
        %v344 = vld [vmem:[%s0 + $0xf0] sm:$0xf]
        %v345 = vld [vmem:[%s0 + $0xf4] sm:$0xf]
        %v346 = vld [vmem:[%s0 + $0xf8] sm:$0xf]
        %v347 = vld [vmem:[%s0 + $0xfc] sm:$0xf]
        %v348 = vld [vmem:[%s0 + $0x100] sm:$0xf]
        %v349 = vld [vmem:[%s0 + $0x104] sm:$0xf]
        %v350 = vld [vmem:[%s0 + $0x108] sm:$0xf]
        %v351 = vld [vmem:[%s0 + $0x10c] sm:$0xf]
        %v352 = vld [vmem:[%s0 + $0x110] sm:$0xf]
        %v353 = vld [vmem:[%s0 + $0x114] sm:$0xf]
        %v354 = vld [vmem:[%s0 + $0x118] sm:$0xf]
        %v355 = vld [vmem:[%s0 + $0x11c] sm:$0xf]
        %v356 = vld [vmem:[%s0 + $0x120] sm:$0xf]
        %v357 = vld [vmem:[%s0 + $0x124] sm:$0xf]
        %v358 = vld [vmem:[%s0 + $0x128] sm:$0xf]
        %v359 = vld [vmem:[%s0 + $0x12c] sm:$0xf]
        %v360 = vld [vmem:[%s0 + $0x130] sm:$0xf]
        %v361 = vld [vmem:[%s0 + $0x134] sm:$0xf]
        %v362 = vld [vmem:[%s0 + $0x138] sm:$0xf]
        %v363 = vld [vmem:[%s0 + $0x13c] sm:$0xf]
        %v364 = vld [vmem:[%s0 + $0x140] sm:$0xf]
        %v365 = vld [vmem:[%s0 + $0x144] sm:$0xf]
        %v366 = vld [vmem:[%s0 + $0x148] sm:$0xf]
        %v367 = vld [vmem:[%s0 + $0x14c] sm:$0xf]
        %v368 = vld [vmem:[%s0 + $0x150] sm:$0xf]
        %v369 = vld [vmem:[%s0 + $0x154] sm:$0xf]
        %v370 = vld [vmem:[%s0 + $0x158] sm:$0xf]
        %v371 = vld [vmem:[%s0 + $0x15c] sm:$0xf]
        %v372 = vld [vmem:[%s0 + $0x160] sm:$0xf]
        %v373 = vld [vmem:[%s0 + $0x164] sm:$0xf]
        %v374 = vld [vmem:[%s0 + $0x168] sm:$0xf]
        %v375 = vld [vmem:[%s0 + $0x16c] sm:$0xf]
        %v376 = vld [vmem:[%s0 + $0x170] sm:$0xf]
        %v377 = vld [vmem:[%s0 + $0x174] sm:$0xf]
        %v378 = vld [vmem:[%s0 + $0x178] sm:$0xf]
        %v379 = vld [vmem:[%s0 + $0x17c] sm:$0xf]
        %v380 = vld [vmem:[%s0 + $0x180] sm:$0xf]
        %v381 = vld [vmem:[%s0 + $0x184] sm:$0xf]
        %v382 = vld [vmem:[%s0 + $0x188] sm:$0xf]
        %v383 = vld [vmem:[%s0 + $0x18c] sm:$0xf]
        %v384 = vld [vmem:[%s0 + $0x190] sm:$0xf]
        %v385 = vld [vmem:[%s0 + $0x194] sm:$0xf]
        %v386 = vld [vmem:[%s0 + $0x198] sm:$0xf]
        %v387 = vld [vmem:[%s0 + $0x19c] sm:$0xf]
        %v388 = vld [vmem:[%s0 + $0x1a0] sm:$0xf]
        %v389 = vld [vmem:[%s0 + $0x1a4] sm:$0xf]
        %v390 = vld [vmem:[%s0 + $0x1a8] sm:$0xf]
        %v391 = vld [vmem:[%s0 + $0x1ac] sm:$0xf]
        %v392 = vld [vmem:[%s0 + $0x1b0] sm:$0xf]
        %v393 = vld [vmem:[%s0 + $0x1b4] sm:$0xf]
        %v394 = vld [vmem:[%s0 + $0x1b8] sm:$0xf]
        %v395 = vld [vmem:[%s0 + $0x1bc] sm:$0xf]
        %v396 = vld [vmem:[%s0 + $0x1c0] sm:$0xf]
        %v397 = vld [vmem:[%s0 + $0x1c4] sm:$0xf]
        %v398 = vld [vmem:[%s0 + $0x1c8] sm:$0xf]
        %v399 = vld [vmem:[%s0 + $0x1cc] sm:$0xf]
        %v400 = vld [vmem:[%s0 + $0x1d0] sm:$0xf]
        %v401 = vld [vmem:[%s0 + $0x1d4] sm:$0xf]
        %v402 = vld [vmem:[%s0 + $0x1d8] sm:$0xf]
        %v403 = vld [vmem:[%s0 + $0x1dc] sm:$0xf]
        %v404 = vld [vmem:[%s0 + $0x1e0] sm:$0xf]
        %v405 = vld [vmem:[%s0 + $0x1e4] sm:$0xf]
        %v406 = vld [vmem:[%s0 + $0x1e8] sm:$0xf]
        %v407 = vld [vmem:[%s0 + $0x1ec] sm:$0xf]
        %v408 = vld [vmem:[%s0 + $0x1f0] sm:$0xf]
        %v409 = vld [vmem:[%s0 + $0x1f4] sm:$0xf]
        %v410 = vld [vmem:[%s0 + $0x1f8] sm:$0xf]
        %v411 = vld [vmem:[%s0 + $0x1fc] sm:$0xf]
        %v412 = vld [vmem:[%s3] sm:$0xf]
        %v413 = vld [vmem:[%s3 + $0x4] sm:$0xf]
        %v414 = vld [vmem:[%s3 + $0x8] sm:$0xf]
        %v415 = vld [vmem:[%s3 + $0xc] sm:$0xf]
        %v416 = vld [vmem:[%s3 + $0x10] sm:$0xf]
        %v417 = vld [vmem:[%s3 + $0x14] sm:$0xf]
        %v418 = vld [vmem:[%s3 + $0x18] sm:$0xf]
        %v419 = vld [vmem:[%s3 + $0x1c] sm:$0xf]
        %v548 = vunpack.c.l.b16 %v284
        %v549 = vunpack.c.l.b16 %v285
        %v550 = vunpack.c.l.b16 %v286
        %v551 = vunpack.c.l.b16 %v287
        %v552 = vunpack.c.l.b16 %v288
        %v553 = vunpack.c.l.b16 %v289
        %v554 = vunpack.c.l.b16 %v290
        %v555 = vunpack.c.l.b16 %v291
        %v556 = vunpack.c.l.b16 %v292
        %v557 = vunpack.c.l.b16 %v293
        %v558 = vunpack.c.l.b16 %v294
        %v559 = vunpack.c.l.b16 %v295
        %v560 = vunpack.c.l.b16 %v296
        %v561 = vunpack.c.l.b16 %v297
        %v562 = vunpack.c.l.b16 %v298
        %v563 = vunpack.c.l.b16 %v299
        %v564 = vunpack.c.l.b16 %v300
        %v565 = vunpack.c.l.b16 %v301
        %v566 = vunpack.c.l.b16 %v302
        %v567 = vunpack.c.l.b16 %v303
        %v568 = vunpack.c.l.b16 %v304
        %v569 = vunpack.c.l.b16 %v305
        %v570 = vunpack.c.l.b16 %v306
        %v571 = vunpack.c.l.b16 %v307
        %v572 = vunpack.c.l.b16 %v308
        %v573 = vunpack.c.l.b16 %v309
        %v574 = vunpack.c.l.b16 %v310
        %v575 = vunpack.c.l.b16 %v311
        %v576 = vunpack.c.l.b16 %v312
        %v577 = vunpack.c.l.b16 %v313
        %v578 = vunpack.c.l.b16 %v314
        %v579 = vunpack.c.l.b16 %v315
        %v580 = vunpack.c.l.b16 %v316
        %v581 = vunpack.c.l.b16 %v317
        %v582 = vunpack.c.l.b16 %v318
        %v583 = vunpack.c.l.b16 %v319
        %v584 = vunpack.c.l.b16 %v320
        %v585 = vunpack.c.l.b16 %v321
        %v586 = vunpack.c.l.b16 %v322
        %v587 = vunpack.c.l.b16 %v323
        %v588 = vunpack.c.l.b16 %v324
        %v589 = vunpack.c.l.b16 %v325
        %v590 = vunpack.c.l.b16 %v326
        %v591 = vunpack.c.l.b16 %v327
        %v592 = vunpack.c.l.b16 %v328
        %v593 = vunpack.c.l.b16 %v329
        %v594 = vunpack.c.l.b16 %v330
        %v595 = vunpack.c.l.b16 %v331
        %v596 = vunpack.c.l.b16 %v332
        %v597 = vunpack.c.l.b16 %v333
        %v598 = vunpack.c.l.b16 %v334
        %v599 = vunpack.c.l.b16 %v335
        %v600 = vunpack.c.l.b16 %v336
        %v601 = vunpack.c.l.b16 %v337
        %v602 = vunpack.c.l.b16 %v338
        %v603 = vunpack.c.l.b16 %v339
        %v604 = vunpack.c.l.b16 %v340
        %v605 = vunpack.c.l.b16 %v341
        %v606 = vunpack.c.l.b16 %v342
        %v607 = vunpack.c.l.b16 %v343
        %v608 = vunpack.c.l.b16 %v344
        %v609 = vunpack.c.l.b16 %v345
        %v610 = vunpack.c.l.b16 %v346
        %v611 = vunpack.c.l.b16 %v347
        %v612 = vunpack.c.l.b16 %v348
        %v613 = vunpack.c.l.b16 %v349
        %v614 = vunpack.c.l.b16 %v350
        %v615 = vunpack.c.l.b16 %v351
        %v616 = vunpack.c.l.b16 %v352
        %v617 = vunpack.c.l.b16 %v353
        %v618 = vunpack.c.l.b16 %v354
        %v619 = vunpack.c.l.b16 %v355
        %v620 = vunpack.c.l.b16 %v356
        %v621 = vunpack.c.l.b16 %v357
        %v622 = vunpack.c.l.b16 %v358
        %v623 = vunpack.c.l.b16 %v359
        %v624 = vunpack.c.l.b16 %v360
        %v625 = vunpack.c.l.b16 %v361
        %v626 = vunpack.c.l.b16 %v362
        %v627 = vunpack.c.l.b16 %v363
        %v628 = vunpack.c.l.b16 %v364
        %v629 = vunpack.c.l.b16 %v365
        %v630 = vunpack.c.l.b16 %v366
        %v631 = vunpack.c.l.b16 %v367
        %v632 = vunpack.c.l.b16 %v368
        %v633 = vunpack.c.l.b16 %v369
        %v634 = vunpack.c.l.b16 %v370
        %v635 = vunpack.c.l.b16 %v371
        %v636 = vunpack.c.l.b16 %v372
        %v637 = vunpack.c.l.b16 %v373
        %v638 = vunpack.c.l.b16 %v374
        %v639 = vunpack.c.l.b16 %v375
        %v640 = vunpack.c.l.b16 %v376
        %v641 = vunpack.c.l.b16 %v377
        %v642 = vunpack.c.l.b16 %v378
        %v643 = vunpack.c.l.b16 %v379
        %v644 = vunpack.c.l.b16 %v380
        %v645 = vunpack.c.l.b16 %v381
        %v646 = vunpack.c.l.b16 %v382
        %v647 = vunpack.c.l.b16 %v383
        %v648 = vunpack.c.l.b16 %v384
        %v649 = vunpack.c.l.b16 %v385
        %v650 = vunpack.c.l.b16 %v386
        %v651 = vunpack.c.l.b16 %v387
        %v652 = vunpack.c.l.b16 %v388
        %v653 = vunpack.c.l.b16 %v389
        %v654 = vunpack.c.l.b16 %v390
        %v655 = vunpack.c.l.b16 %v391
        %v656 = vunpack.c.l.b16 %v392
        %v657 = vunpack.c.l.b16 %v393
        %v658 = vunpack.c.l.b16 %v394
        %v659 = vunpack.c.l.b16 %v395
        %v660 = vunpack.c.l.b16 %v396
        %v661 = vunpack.c.l.b16 %v397
        %v662 = vunpack.c.l.b16 %v398
        %v663 = vunpack.c.l.b16 %v399
        %v664 = vunpack.c.l.b16 %v400
        %v665 = vunpack.c.l.b16 %v401
        %v666 = vunpack.c.l.b16 %v402
        %v667 = vunpack.c.l.b16 %v403
        %v668 = vunpack.c.l.b16 %v404
        %v669 = vunpack.c.l.b16 %v405
        %v670 = vunpack.c.l.b16 %v406
        %v671 = vunpack.c.l.b16 %v407
        %v672 = vunpack.c.l.b16 %v408
        %v673 = vunpack.c.l.b16 %v409
        %v674 = vunpack.c.l.b16 %v410
        %v675 = vunpack.c.l.b16 %v411
        %v676 = vpack.c.b16 %v549, %v548
        %v677 = vpack.c.b16 %v551, %v550
        %v678 = vpack.c.b16 %v553, %v552
        %v679 = vpack.c.b16 %v555, %v554
        %v680 = vpack.c.b16 %v557, %v556
        %v681 = vpack.c.b16 %v559, %v558
        %v682 = vpack.c.b16 %v561, %v560
        %v683 = vpack.c.b16 %v563, %v562
        %v684 = vpack.c.b16 %v565, %v564
        %v685 = vpack.c.b16 %v567, %v566
        %v686 = vpack.c.b16 %v569, %v568
        %v687 = vpack.c.b16 %v571, %v570
        %v688 = vpack.c.b16 %v573, %v572
        %v689 = vpack.c.b16 %v575, %v574
        %v690 = vpack.c.b16 %v577, %v576
        %v691 = vpack.c.b16 %v579, %v578
        %v692 = vpack.c.b16 %v581, %v580
        %v693 = vpack.c.b16 %v583, %v582
        %v694 = vpack.c.b16 %v585, %v584
        %v695 = vpack.c.b16 %v587, %v586
        %v696 = vpack.c.b16 %v589, %v588
        %v697 = vpack.c.b16 %v591, %v590
        %v698 = vpack.c.b16 %v593, %v592
        %v699 = vpack.c.b16 %v595, %v594
        %v700 = vpack.c.b16 %v597, %v596
        %v701 = vpack.c.b16 %v599, %v598
        %v702 = vpack.c.b16 %v601, %v600
        %v703 = vpack.c.b16 %v603, %v602
        %v704 = vpack.c.b16 %v605, %v604
        %v705 = vpack.c.b16 %v607, %v606
        %v706 = vpack.c.b16 %v609, %v608
        %v707 = vpack.c.b16 %v611, %v610
        %v708 = vpack.c.b16 %v613, %v612
        %v709 = vpack.c.b16 %v615, %v614
        %v710 = vpack.c.b16 %v617, %v616
        %v711 = vpack.c.b16 %v619, %v618
        %v712 = vpack.c.b16 %v621, %v620
        %v713 = vpack.c.b16 %v623, %v622
        %v714 = vpack.c.b16 %v625, %v624
        %v715 = vpack.c.b16 %v627, %v626
        %v716 = vpack.c.b16 %v629, %v628
        %v717 = vpack.c.b16 %v631, %v630
        %v718 = vpack.c.b16 %v633, %v632
        %v719 = vpack.c.b16 %v635, %v634
        %v720 = vpack.c.b16 %v637, %v636
        %v721 = vpack.c.b16 %v639, %v638
        %v722 = vpack.c.b16 %v641, %v640
        %v723 = vpack.c.b16 %v643, %v642
        %v724 = vpack.c.b16 %v645, %v644
        %v725 = vpack.c.b16 %v647, %v646
        %v726 = vpack.c.b16 %v649, %v648
        %v727 = vpack.c.b16 %v651, %v650
        %v728 = vpack.c.b16 %v653, %v652
        %v729 = vpack.c.b16 %v655, %v654
        %v730 = vpack.c.b16 %v657, %v656
        %v731 = vpack.c.b16 %v659, %v658
        %v732 = vpack.c.b16 %v661, %v660
        %v733 = vpack.c.b16 %v663, %v662
        %v734 = vpack.c.b16 %v665, %v664
        %v735 = vpack.c.b16 %v667, %v666
        %v736 = vpack.c.b16 %v669, %v668
        %v737 = vpack.c.b16 %v671, %v670
        %v738 = vpack.c.b16 %v673, %v672
        %v739 = vpack.c.b16 %v675, %v674
        %v748 = vunpack.c.l.b16 %v412
        %v749 = vunpack.c.l.b16 %v413
        %v750 = vunpack.c.l.b16 %v414
        %v751 = vunpack.c.l.b16 %v415
        %v752 = vunpack.c.l.b16 %v416
        %v753 = vunpack.c.l.b16 %v417
        %v754 = vunpack.c.l.b16 %v418
        %v755 = vunpack.c.l.b16 %v419
        %v756 = vpack.c.b16 %v749, %v748
        %v757 = vpack.c.b16 %v751, %v750
        %v758 = vpack.c.b16 %v753, %v752
        %v759 = vpack.c.b16 %v755, %v754
        %vm764 = vcmask 523264
        %v766 = vsel %vm764, %v676, 0
        %v769 = vsel %vm764, %v677, 0
        %v772 = vsel %vm764, %v678, 0
        %v775 = vsel %vm764, %v679, 0
        %v778 = vsel %vm764, %v680, 0
        %v781 = vsel %vm764, %v681, 0
        %v784 = vsel %vm764, %v682, 0
        %v787 = vsel %vm764, %v683, 0
        %v790 = vsel %vm764, %v684, 0
        %v793 = vsel %vm764, %v685, 0
        %v796 = vsel %vm764, %v686, 0
        %v799 = vsel %vm764, %v687, 0
        %v802 = vsel %vm764, %v688, 0
        %v805 = vsel %vm764, %v689, 0
        %v808 = vsel %vm764, %v690, 0
        %v811 = vsel %vm764, %v691, 0
        %v814 = vsel %vm764, %v692, 0
        %v817 = vsel %vm764, %v693, 0
        %v820 = vsel %vm764, %v694, 0
        %v823 = vsel %vm764, %v695, 0
        %v826 = vsel %vm764, %v696, 0
        %v829 = vsel %vm764, %v697, 0
        %v832 = vsel %vm764, %v698, 0
        %v835 = vsel %vm764, %v699, 0
        %v838 = vsel %vm764, %v700, 0
        %v841 = vsel %vm764, %v701, 0
        %v844 = vsel %vm764, %v702, 0
        %v847 = vsel %vm764, %v703, 0
        %v850 = vsel %vm764, %v704, 0
        %v853 = vsel %vm764, %v705, 0
        %v856 = vsel %vm764, %v706, 0
        %v859 = vsel %vm764, %v707, 0
        %v862 = vsel %vm764, %v708, 0
        %v865 = vsel %vm764, %v709, 0
        %v868 = vsel %vm764, %v710, 0
        %v871 = vsel %vm764, %v711, 0
        %v874 = vsel %vm764, %v712, 0
        %v877 = vsel %vm764, %v713, 0
        %v880 = vsel %vm764, %v714, 0
        %v883 = vsel %vm764, %v715, 0
        %v886 = vsel %vm764, %v716, 0
        %v889 = vsel %vm764, %v717, 0
        %v892 = vsel %vm764, %v718, 0
        %v895 = vsel %vm764, %v719, 0
        %v898 = vsel %vm764, %v720, 0
        %v901 = vsel %vm764, %v721, 0
        %v904 = vsel %vm764, %v722, 0
        %v907 = vsel %vm764, %v723, 0
        %v910 = vsel %vm764, %v724, 0
        %v913 = vsel %vm764, %v725, 0
        %v916 = vsel %vm764, %v726, 0
        %v919 = vsel %vm764, %v727, 0
        %v922 = vsel %vm764, %v728, 0
        %v925 = vsel %vm764, %v729, 0
        %v928 = vsel %vm764, %v730, 0
        %v931 = vsel %vm764, %v731, 0
        %v934 = vsel %vm764, %v732, 0
        %v937 = vsel %vm764, %v733, 0
        %v940 = vsel %vm764, %v734, 0
        %v943 = vsel %vm764, %v735, 0
        %v946 = vsel %vm764, %v736, 0
        %v949 = vsel %vm764, %v737, 0
        %v952 = vsel %vm764, %v738, 0
        %v955 = vsel %vm764, %v739, 0
        %957 = vmatprep.subr.bf16.mxu0 0
        %958 = vmatpush1.bf16.msra.mxu0 0
        %959 = vmatprep.subr.bf16.mxu0 0
        %960 = vmatpush1.bf16.msra.mxu0 0
        %961 = vmatprep.subr.bf16.mxu0 0
        %962 = vmatpush1.bf16.msra.mxu0 0
        %963 = vmatprep.subr.bf16.mxu0 0
        %964 = vmatpush1.bf16.msra.mxu0 0
        %965 = vmatprep.subr.bf16.mxu0 0
        %966 = vmatpush1.bf16.msra.mxu0 %v759
        %967 = vmatprep.subr.bf16.mxu0 0
        %968 = vmatpush1.bf16.msra.mxu0 %v758
        %969 = vmatprep.subr.bf16.mxu0 0
        %970 = vmatpush1.bf16.msra.mxu0 %v757
        %971 = vmatprep.subr.bf16.mxu0 0
        %972 = vmatpush1.bf16.msra.mxu0 %v756
        %973 = vmatprep.subr.bf16.mxu0 0
        %974 = vmatpush2.bf16.msra.mxu0 0
        %975 = vmatprep.subr.bf16.mxu0 0
        %976 = vmatpush2.bf16.msra.mxu0 0
        %977 = vmatprep.subr.bf16.mxu0 0
        %978 = vmatpush2.bf16.msra.mxu0 0
        %979 = vmatprep.subr.bf16.mxu0 0
        %980 = vmatpush2.bf16.msra.mxu0 0
        %981 = vmatprep.subr.bf16.mxu0 0
        %982 = vmatpush2.bf16.msra.mxu0 0
        %983 = vmatprep.subr.bf16.mxu0 0
        %984 = vmatpush2.bf16.msra.mxu0 0
        %985 = vmatprep.subr.bf16.mxu0 0
        %986 = vmatpush2.bf16.msra.mxu0 0
        %987 = vmatprep.subr.bf16.mxu0 0
        %988 = vmatpush2.bf16.msra.mxu0 0
        %989 = vmatprep.mubr.bf16.mxu0 0
        %990 = vmatmul.mubr.bf16.gmra.mxu0 %v766
        %v991 = vpop.f32.mrf.mxu0
        %v992 = vadd.f32 0.0, %v991
        %v993 = vpop.f32.mrf.mxu0
        %v994 = vpop.f32.mrf.mxu0
        %v995 = vadd.f32 0.0, %v994
        %v996 = vpop.f32.mrf.mxu0
        %997 = vmatprep.mubr.bf16.mxu0 0
        %998 = vmatmul.mubr.bf16.gmra.mxu0 %v769
        %v999 = vpop.f32.mrf.mxu0
        %v1000 = vadd.f32 0.0, %v999
        %v1001 = vpop.f32.mrf.mxu0
        %v1002 = vpop.f32.mrf.mxu0
        %v1003 = vadd.f32 0.0, %v1002
        %v1004 = vpop.f32.mrf.mxu0
        %1005 = vmatprep.mubr.bf16.mxu0 0
        %1006 = vmatmul.mubr.bf16.gmra.mxu0 %v772
        %v1007 = vpop.f32.mrf.mxu0
        %v1008 = vadd.f32 0.0, %v1007
        %v1009 = vpop.f32.mrf.mxu0
        %v1010 = vpop.f32.mrf.mxu0
        %v1011 = vadd.f32 0.0, %v1010
        %v1012 = vpop.f32.mrf.mxu0
        %1013 = vmatprep.mubr.bf16.mxu0 0
        %1014 = vmatmul.mubr.bf16.gmra.mxu0 %v775
        %v1015 = vpop.f32.mrf.mxu0
        %v1016 = vadd.f32 0.0, %v1015
        %v1017 = vpop.f32.mrf.mxu0
        %v1018 = vpop.f32.mrf.mxu0
        %v1019 = vadd.f32 0.0, %v1018
        %v1020 = vpop.f32.mrf.mxu0
        %1021 = vmatprep.mubr.bf16.mxu0 0
        %1022 = vmatmul.mubr.bf16.gmra.mxu0 %v778
        %v1023 = vpop.f32.mrf.mxu0
        %v1024 = vadd.f32 0.0, %v1023
        %v1025 = vpop.f32.mrf.mxu0
        %v1026 = vpop.f32.mrf.mxu0
        %v1027 = vadd.f32 0.0, %v1026
        %v1028 = vpop.f32.mrf.mxu0
        %1029 = vmatprep.mubr.bf16.mxu0 0
        %1030 = vmatmul.mubr.bf16.gmra.mxu0 %v781
        %v1031 = vpop.f32.mrf.mxu0
        %v1032 = vadd.f32 0.0, %v1031
        %v1033 = vpop.f32.mrf.mxu0
        %v1034 = vpop.f32.mrf.mxu0
        %v1035 = vadd.f32 0.0, %v1034
        %v1036 = vpop.f32.mrf.mxu0
        %1037 = vmatprep.mubr.bf16.mxu0 0
        %1038 = vmatmul.mubr.bf16.gmra.mxu0 %v784
        %v1039 = vpop.f32.mrf.mxu0
        %v1040 = vadd.f32 0.0, %v1039
        %v1041 = vpop.f32.mrf.mxu0
        %v1042 = vpop.f32.mrf.mxu0
        %v1043 = vadd.f32 0.0, %v1042
        %v1044 = vpop.f32.mrf.mxu0
        %1045 = vmatprep.mubr.bf16.mxu0 0
        %1046 = vmatmul.mubr.bf16.gmra.mxu0 %v787
        %v1047 = vpop.f32.mrf.mxu0
        %v1048 = vadd.f32 0.0, %v1047
        %v1049 = vpop.f32.mrf.mxu0
        %v1050 = vpop.f32.mrf.mxu0
        %v1051 = vadd.f32 0.0, %v1050
        %v1052 = vpop.f32.mrf.mxu0
        %1053 = vmatprep.mubr.bf16.mxu0 0
        %1054 = vmatmul.mubr.bf16.gmra.mxu0 %v790
        %v1055 = vpop.f32.mrf.mxu0
        %v1056 = vadd.f32 0.0, %v1055
        %v1057 = vpop.f32.mrf.mxu0
        %v1058 = vpop.f32.mrf.mxu0
        %v1059 = vadd.f32 0.0, %v1058
        %v1060 = vpop.f32.mrf.mxu0
        %1061 = vmatprep.mubr.bf16.mxu0 0
        %1062 = vmatmul.mubr.bf16.gmra.mxu0 %v793
        %v1063 = vpop.f32.mrf.mxu0
        %v1064 = vadd.f32 0.0, %v1063
        %v1065 = vpop.f32.mrf.mxu0
        %v1066 = vpop.f32.mrf.mxu0
        %v1067 = vadd.f32 0.0, %v1066
        %v1068 = vpop.f32.mrf.mxu0
        %1069 = vmatprep.mubr.bf16.mxu0 0
        %1070 = vmatmul.mubr.bf16.gmra.mxu0 %v796
        %v1071 = vpop.f32.mrf.mxu0
        %v1072 = vadd.f32 0.0, %v1071
        %v1073 = vpop.f32.mrf.mxu0
        %v1074 = vpop.f32.mrf.mxu0
        %v1075 = vadd.f32 0.0, %v1074
        %v1076 = vpop.f32.mrf.mxu0
        %1077 = vmatprep.mubr.bf16.mxu0 0
        %1078 = vmatmul.mubr.bf16.gmra.mxu0 %v799
        %v1079 = vpop.f32.mrf.mxu0
        %v1080 = vadd.f32 0.0, %v1079
        %v1081 = vpop.f32.mrf.mxu0
        %v1082 = vpop.f32.mrf.mxu0
        %v1083 = vadd.f32 0.0, %v1082
        %v1084 = vpop.f32.mrf.mxu0
        %1085 = vmatprep.mubr.bf16.mxu0 0
        %1086 = vmatmul.mubr.bf16.gmra.mxu0 %v802
        %v1087 = vpop.f32.mrf.mxu0
        %v1088 = vadd.f32 0.0, %v1087
        %v1089 = vpop.f32.mrf.mxu0
        %v1090 = vpop.f32.mrf.mxu0
        %v1091 = vadd.f32 0.0, %v1090
        %v1092 = vpop.f32.mrf.mxu0
        %1093 = vmatprep.mubr.bf16.mxu0 0
        %1094 = vmatmul.mubr.bf16.gmra.mxu0 %v805
        %v1095 = vpop.f32.mrf.mxu0
        %v1096 = vadd.f32 0.0, %v1095
        %v1097 = vpop.f32.mrf.mxu0
        %v1098 = vpop.f32.mrf.mxu0
        %v1099 = vadd.f32 0.0, %v1098
        %v1100 = vpop.f32.mrf.mxu0
        %1101 = vmatprep.mubr.bf16.mxu0 0
        %1102 = vmatmul.mubr.bf16.gmra.mxu0 %v808
        %v1103 = vpop.f32.mrf.mxu0
        %v1104 = vadd.f32 0.0, %v1103
        %v1105 = vpop.f32.mrf.mxu0
        %v1106 = vpop.f32.mrf.mxu0
        %v1107 = vadd.f32 0.0, %v1106
        %v1108 = vpop.f32.mrf.mxu0
        %1109 = vmatprep.mubr.bf16.mxu0 0
        %1110 = vmatmul.mubr.bf16.gmra.mxu0 %v811
        %v1111 = vpop.f32.mrf.mxu0
        %v1112 = vadd.f32 0.0, %v1111
        %v1113 = vpop.f32.mrf.mxu0
        %v1114 = vpop.f32.mrf.mxu0
        %v1115 = vadd.f32 0.0, %v1114
        %v1116 = vpop.f32.mrf.mxu0
        %1117 = vmatprep.mubr.bf16.mxu0 0
        %1118 = vmatmul.mubr.bf16.gmra.mxu0 %v814
        %v1119 = vpop.f32.mrf.mxu0
        %v1120 = vadd.f32 0.0, %v1119
        %v1121 = vpop.f32.mrf.mxu0
        %v1122 = vpop.f32.mrf.mxu0
        %v1123 = vadd.f32 0.0, %v1122
        %v1124 = vpop.f32.mrf.mxu0
        %1125 = vmatprep.mubr.bf16.mxu0 0
        %1126 = vmatmul.mubr.bf16.gmra.mxu0 %v817
        %v1127 = vpop.f32.mrf.mxu0
        %v1128 = vadd.f32 0.0, %v1127
        %v1129 = vpop.f32.mrf.mxu0
        %v1130 = vpop.f32.mrf.mxu0
        %v1131 = vadd.f32 0.0, %v1130
        %v1132 = vpop.f32.mrf.mxu0
        %1133 = vmatprep.mubr.bf16.mxu0 0
        %1134 = vmatmul.mubr.bf16.gmra.mxu0 %v820
        %v1135 = vpop.f32.mrf.mxu0
        %v1136 = vadd.f32 0.0, %v1135
        %v1137 = vpop.f32.mrf.mxu0
        %v1138 = vpop.f32.mrf.mxu0
        %v1139 = vadd.f32 0.0, %v1138
        %v1140 = vpop.f32.mrf.mxu0
        %1141 = vmatprep.mubr.bf16.mxu0 0
        %1142 = vmatmul.mubr.bf16.gmra.mxu0 %v823
        %v1143 = vpop.f32.mrf.mxu0
        %v1144 = vadd.f32 0.0, %v1143
        %v1145 = vpop.f32.mrf.mxu0
        %v1146 = vpop.f32.mrf.mxu0
        %v1147 = vadd.f32 0.0, %v1146
        %v1148 = vpop.f32.mrf.mxu0
        %1149 = vmatprep.mubr.bf16.mxu0 0
        %1150 = vmatmul.mubr.bf16.gmra.mxu0 %v826
        %v1151 = vpop.f32.mrf.mxu0
        %v1152 = vadd.f32 0.0, %v1151
        %v1153 = vpop.f32.mrf.mxu0
        %v1154 = vpop.f32.mrf.mxu0
        %v1155 = vadd.f32 0.0, %v1154
        %v1156 = vpop.f32.mrf.mxu0
        %1157 = vmatprep.mubr.bf16.mxu0 0
        %1158 = vmatmul.mubr.bf16.gmra.mxu0 %v829
        %v1159 = vpop.f32.mrf.mxu0
        %v1160 = vadd.f32 0.0, %v1159
        %v1161 = vpop.f32.mrf.mxu0
        %v1162 = vpop.f32.mrf.mxu0
        %v1163 = vadd.f32 0.0, %v1162
        %v1164 = vpop.f32.mrf.mxu0
        %1165 = vmatprep.mubr.bf16.mxu0 0
        %1166 = vmatmul.mubr.bf16.gmra.mxu0 %v832
        %v1167 = vpop.f32.mrf.mxu0
        %v1168 = vadd.f32 0.0, %v1167
        %v1169 = vpop.f32.mrf.mxu0
        %v1170 = vpop.f32.mrf.mxu0
        %v1171 = vadd.f32 0.0, %v1170
        %v1172 = vpop.f32.mrf.mxu0
        %1173 = vmatprep.mubr.bf16.mxu0 0
        %1174 = vmatmul.mubr.bf16.gmra.mxu0 %v835
        %v1175 = vpop.f32.mrf.mxu0
        %v1176 = vadd.f32 0.0, %v1175
        %v1177 = vpop.f32.mrf.mxu0
        %v1178 = vpop.f32.mrf.mxu0
        %v1179 = vadd.f32 0.0, %v1178
        %v1180 = vpop.f32.mrf.mxu0
        %1181 = vmatprep.mubr.bf16.mxu0 0
        %1182 = vmatmul.mubr.bf16.gmra.mxu0 %v838
        %v1183 = vpop.f32.mrf.mxu0
        %v1184 = vadd.f32 0.0, %v1183
        %v1185 = vpop.f32.mrf.mxu0
        %v1186 = vpop.f32.mrf.mxu0
        %v1187 = vadd.f32 0.0, %v1186
        %v1188 = vpop.f32.mrf.mxu0
        %1189 = vmatprep.mubr.bf16.mxu0 0
        %1190 = vmatmul.mubr.bf16.gmra.mxu0 %v841
        %v1191 = vpop.f32.mrf.mxu0
        %v1192 = vadd.f32 0.0, %v1191
        %v1193 = vpop.f32.mrf.mxu0
        %v1194 = vpop.f32.mrf.mxu0
        %v1195 = vadd.f32 0.0, %v1194
        %v1196 = vpop.f32.mrf.mxu0
        %1197 = vmatprep.mubr.bf16.mxu0 0
        %1198 = vmatmul.mubr.bf16.gmra.mxu0 %v844
        %v1199 = vpop.f32.mrf.mxu0
        %v1200 = vadd.f32 0.0, %v1199
        %v1201 = vpop.f32.mrf.mxu0
        %v1202 = vpop.f32.mrf.mxu0
        %v1203 = vadd.f32 0.0, %v1202
        %v1204 = vpop.f32.mrf.mxu0
        %1205 = vmatprep.mubr.bf16.mxu0 0
        %1206 = vmatmul.mubr.bf16.gmra.mxu0 %v847
        %v1207 = vpop.f32.mrf.mxu0
        %v1208 = vadd.f32 0.0, %v1207
        %v1209 = vpop.f32.mrf.mxu0
        %v1210 = vpop.f32.mrf.mxu0
        %v1211 = vadd.f32 0.0, %v1210
        %v1212 = vpop.f32.mrf.mxu0
        %1213 = vmatprep.mubr.bf16.mxu0 0
        %1214 = vmatmul.mubr.bf16.gmra.mxu0 %v850
        %v1215 = vpop.f32.mrf.mxu0
        %v1216 = vadd.f32 0.0, %v1215
        %v1217 = vpop.f32.mrf.mxu0
        %v1218 = vpop.f32.mrf.mxu0
        %v1219 = vadd.f32 0.0, %v1218
        %v1220 = vpop.f32.mrf.mxu0
        %1221 = vmatprep.mubr.bf16.mxu0 0
        %1222 = vmatmul.mubr.bf16.gmra.mxu0 %v853
        %v1223 = vpop.f32.mrf.mxu0
        %v1224 = vadd.f32 0.0, %v1223
        %v1225 = vpop.f32.mrf.mxu0
        %v1226 = vpop.f32.mrf.mxu0
        %v1227 = vadd.f32 0.0, %v1226
        %v1228 = vpop.f32.mrf.mxu0
        %1229 = vmatprep.mubr.bf16.mxu0 0
        %1230 = vmatmul.mubr.bf16.gmra.mxu0 %v856
        %v1231 = vpop.f32.mrf.mxu0
        %v1232 = vadd.f32 0.0, %v1231
        %v1233 = vpop.f32.mrf.mxu0
        %v1234 = vpop.f32.mrf.mxu0
        %v1235 = vadd.f32 0.0, %v1234
        %v1236 = vpop.f32.mrf.mxu0
        %1237 = vmatprep.mubr.bf16.mxu0 0
        %1238 = vmatmul.mubr.bf16.gmra.mxu0 %v859
        %v1239 = vpop.f32.mrf.mxu0
        %v1240 = vadd.f32 0.0, %v1239
        %v1241 = vpop.f32.mrf.mxu0
        %v1242 = vpop.f32.mrf.mxu0
        %v1243 = vadd.f32 0.0, %v1242
        %v1244 = vpop.f32.mrf.mxu0
        %1245 = vmatprep.mubr.bf16.mxu0 0
        %1246 = vmatmul.mubr.bf16.gmra.mxu0 %v862
        %v1247 = vpop.f32.mrf.mxu0
        %v1248 = vadd.f32 0.0, %v1247
        %v1249 = vpop.f32.mrf.mxu0
        %v1250 = vpop.f32.mrf.mxu0
        %v1251 = vadd.f32 0.0, %v1250
        %v1252 = vpop.f32.mrf.mxu0
        %1253 = vmatprep.mubr.bf16.mxu0 0
        %1254 = vmatmul.mubr.bf16.gmra.mxu0 %v865
        %v1255 = vpop.f32.mrf.mxu0
        %v1256 = vadd.f32 0.0, %v1255
        %v1257 = vpop.f32.mrf.mxu0
        %v1258 = vpop.f32.mrf.mxu0
        %v1259 = vadd.f32 0.0, %v1258
        %v1260 = vpop.f32.mrf.mxu0
        %1261 = vmatprep.mubr.bf16.mxu0 0
        %1262 = vmatmul.mubr.bf16.gmra.mxu0 %v868
        %v1263 = vpop.f32.mrf.mxu0
        %v1264 = vadd.f32 0.0, %v1263
        %v1265 = vpop.f32.mrf.mxu0
        %v1266 = vpop.f32.mrf.mxu0
        %v1267 = vadd.f32 0.0, %v1266
        %v1268 = vpop.f32.mrf.mxu0
        %1269 = vmatprep.mubr.bf16.mxu0 0
        %1270 = vmatmul.mubr.bf16.gmra.mxu0 %v871
        %v1271 = vpop.f32.mrf.mxu0
        %v1272 = vadd.f32 0.0, %v1271
        %v1273 = vpop.f32.mrf.mxu0
        %v1274 = vpop.f32.mrf.mxu0
        %v1275 = vadd.f32 0.0, %v1274
        %v1276 = vpop.f32.mrf.mxu0
        %1277 = vmatprep.mubr.bf16.mxu0 0
        %1278 = vmatmul.mubr.bf16.gmra.mxu0 %v874
        %v1279 = vpop.f32.mrf.mxu0
        %v1280 = vadd.f32 0.0, %v1279
        %v1281 = vpop.f32.mrf.mxu0
        %v1282 = vpop.f32.mrf.mxu0
        %v1283 = vadd.f32 0.0, %v1282
        %v1284 = vpop.f32.mrf.mxu0
        %1285 = vmatprep.mubr.bf16.mxu0 0
        %1286 = vmatmul.mubr.bf16.gmra.mxu0 %v877
        %v1287 = vpop.f32.mrf.mxu0
        %v1288 = vadd.f32 0.0, %v1287
        %v1289 = vpop.f32.mrf.mxu0
        %v1290 = vpop.f32.mrf.mxu0
        %v1291 = vadd.f32 0.0, %v1290
        %v1292 = vpop.f32.mrf.mxu0
        %1293 = vmatprep.mubr.bf16.mxu0 0
        %1294 = vmatmul.mubr.bf16.gmra.mxu0 %v880
        %v1295 = vpop.f32.mrf.mxu0
        %v1296 = vadd.f32 0.0, %v1295
        %v1297 = vpop.f32.mrf.mxu0
        %v1298 = vpop.f32.mrf.mxu0
        %v1299 = vadd.f32 0.0, %v1298
        %v1300 = vpop.f32.mrf.mxu0
        %1301 = vmatprep.mubr.bf16.mxu0 0
        %1302 = vmatmul.mubr.bf16.gmra.mxu0 %v883
        %v1303 = vpop.f32.mrf.mxu0
        %v1304 = vadd.f32 0.0, %v1303
        %v1305 = vpop.f32.mrf.mxu0
        %v1306 = vpop.f32.mrf.mxu0
        %v1307 = vadd.f32 0.0, %v1306
        %v1308 = vpop.f32.mrf.mxu0
        %1309 = vmatprep.mubr.bf16.mxu0 0
        %1310 = vmatmul.mubr.bf16.gmra.mxu0 %v886
        %v1311 = vpop.f32.mrf.mxu0
        %v1312 = vadd.f32 0.0, %v1311
        %v1313 = vpop.f32.mrf.mxu0
        %v1314 = vpop.f32.mrf.mxu0
        %v1315 = vadd.f32 0.0, %v1314
        %v1316 = vpop.f32.mrf.mxu0
        %1317 = vmatprep.mubr.bf16.mxu0 0
        %1318 = vmatmul.mubr.bf16.gmra.mxu0 %v889
        %v1319 = vpop.f32.mrf.mxu0
        %v1320 = vadd.f32 0.0, %v1319
        %v1321 = vpop.f32.mrf.mxu0
        %v1322 = vpop.f32.mrf.mxu0
        %v1323 = vadd.f32 0.0, %v1322
        %v1324 = vpop.f32.mrf.mxu0
        %1325 = vmatprep.mubr.bf16.mxu0 0
        %1326 = vmatmul.mubr.bf16.gmra.mxu0 %v892
        %v1327 = vpop.f32.mrf.mxu0
        %v1328 = vadd.f32 0.0, %v1327
        %v1329 = vpop.f32.mrf.mxu0
        %v1330 = vpop.f32.mrf.mxu0
        %v1331 = vadd.f32 0.0, %v1330
        %v1332 = vpop.f32.mrf.mxu0
        %1333 = vmatprep.mubr.bf16.mxu0 0
        %1334 = vmatmul.mubr.bf16.gmra.mxu0 %v895
        %v1335 = vpop.f32.mrf.mxu0
        %v1336 = vadd.f32 0.0, %v1335
        %v1337 = vpop.f32.mrf.mxu0
        %v1338 = vpop.f32.mrf.mxu0
        %v1339 = vadd.f32 0.0, %v1338
        %v1340 = vpop.f32.mrf.mxu0
        %1341 = vmatprep.mubr.bf16.mxu0 0
        %1342 = vmatmul.mubr.bf16.gmra.mxu0 %v898
        %v1343 = vpop.f32.mrf.mxu0
        %v1344 = vadd.f32 0.0, %v1343
        %v1345 = vpop.f32.mrf.mxu0
        %v1346 = vpop.f32.mrf.mxu0
        %v1347 = vadd.f32 0.0, %v1346
        %v1348 = vpop.f32.mrf.mxu0
        %1349 = vmatprep.mubr.bf16.mxu0 0
        %1350 = vmatmul.mubr.bf16.gmra.mxu0 %v901
        %v1351 = vpop.f32.mrf.mxu0
        %v1352 = vadd.f32 0.0, %v1351
        %v1353 = vpop.f32.mrf.mxu0
        %v1354 = vpop.f32.mrf.mxu0
        %v1355 = vadd.f32 0.0, %v1354
        %v1356 = vpop.f32.mrf.mxu0
        %1357 = vmatprep.mubr.bf16.mxu0 0
        %1358 = vmatmul.mubr.bf16.gmra.mxu0 %v904
        %v1359 = vpop.f32.mrf.mxu0
        %v1360 = vadd.f32 0.0, %v1359
        %v1361 = vpop.f32.mrf.mxu0
        %v1362 = vpop.f32.mrf.mxu0
        %v1363 = vadd.f32 0.0, %v1362
        %v1364 = vpop.f32.mrf.mxu0
        %1365 = vmatprep.mubr.bf16.mxu0 0
        %1366 = vmatmul.mubr.bf16.gmra.mxu0 %v907
        %v1367 = vpop.f32.mrf.mxu0
        %v1368 = vadd.f32 0.0, %v1367
        %v1369 = vpop.f32.mrf.mxu0
        %v1370 = vpop.f32.mrf.mxu0
        %v1371 = vadd.f32 0.0, %v1370
        %v1372 = vpop.f32.mrf.mxu0
        %1373 = vmatprep.mubr.bf16.mxu0 0
        %1374 = vmatmul.mubr.bf16.gmra.mxu0 %v910
        %v1375 = vpop.f32.mrf.mxu0
        %v1376 = vadd.f32 0.0, %v1375
        %v1377 = vpop.f32.mrf.mxu0
        %v1378 = vpop.f32.mrf.mxu0
        %v1379 = vadd.f32 0.0, %v1378
        %v1380 = vpop.f32.mrf.mxu0
        %1381 = vmatprep.mubr.bf16.mxu0 0
        %1382 = vmatmul.mubr.bf16.gmra.mxu0 %v913
        %v1383 = vpop.f32.mrf.mxu0
        %v1384 = vadd.f32 0.0, %v1383
        %v1385 = vpop.f32.mrf.mxu0
        %v1386 = vpop.f32.mrf.mxu0
        %v1387 = vadd.f32 0.0, %v1386
        %v1388 = vpop.f32.mrf.mxu0
        %1389 = vmatprep.mubr.bf16.mxu0 0
        %1390 = vmatmul.mubr.bf16.gmra.mxu0 %v916
        %v1391 = vpop.f32.mrf.mxu0
        %v1392 = vadd.f32 0.0, %v1391
        %v1393 = vpop.f32.mrf.mxu0
        %v1394 = vpop.f32.mrf.mxu0
        %v1395 = vadd.f32 0.0, %v1394
        %v1396 = vpop.f32.mrf.mxu0
        %1397 = vmatprep.mubr.bf16.mxu0 0
        %1398 = vmatmul.mubr.bf16.gmra.mxu0 %v919
        %v1399 = vpop.f32.mrf.mxu0
        %v1400 = vadd.f32 0.0, %v1399
        %v1401 = vpop.f32.mrf.mxu0
        %v1402 = vpop.f32.mrf.mxu0
        %v1403 = vadd.f32 0.0, %v1402
        %v1404 = vpop.f32.mrf.mxu0
        %1405 = vmatprep.mubr.bf16.mxu0 0
        %1406 = vmatmul.mubr.bf16.gmra.mxu0 %v922
        %v1407 = vpop.f32.mrf.mxu0
        %v1408 = vadd.f32 0.0, %v1407
        %v1409 = vpop.f32.mrf.mxu0
        %v1410 = vpop.f32.mrf.mxu0
        %v1411 = vadd.f32 0.0, %v1410
        %v1412 = vpop.f32.mrf.mxu0
        %1413 = vmatprep.mubr.bf16.mxu0 0
        %1414 = vmatmul.mubr.bf16.gmra.mxu0 %v925
        %v1415 = vpop.f32.mrf.mxu0
        %v1416 = vadd.f32 0.0, %v1415
        %v1417 = vpop.f32.mrf.mxu0
        %v1418 = vpop.f32.mrf.mxu0
        %v1419 = vadd.f32 0.0, %v1418
        %v1420 = vpop.f32.mrf.mxu0
        %1421 = vmatprep.mubr.bf16.mxu0 0
        %1422 = vmatmul.mubr.bf16.gmra.mxu0 %v928
        %v1423 = vpop.f32.mrf.mxu0
        %v1424 = vadd.f32 0.0, %v1423
        %v1425 = vpop.f32.mrf.mxu0
        %v1426 = vpop.f32.mrf.mxu0
        %v1427 = vadd.f32 0.0, %v1426
        %v1428 = vpop.f32.mrf.mxu0
        %1429 = vmatprep.mubr.bf16.mxu0 0
        %1430 = vmatmul.mubr.bf16.gmra.mxu0 %v931
        %v1431 = vpop.f32.mrf.mxu0
        %v1432 = vadd.f32 0.0, %v1431
        %v1433 = vpop.f32.mrf.mxu0
        %v1434 = vpop.f32.mrf.mxu0
        %v1435 = vadd.f32 0.0, %v1434
        %v1436 = vpop.f32.mrf.mxu0
        %1437 = vmatprep.mubr.bf16.mxu0 0
        %1438 = vmatmul.mubr.bf16.gmra.mxu0 %v934
        %v1439 = vpop.f32.mrf.mxu0
        %v1440 = vadd.f32 0.0, %v1439
        %v1441 = vpop.f32.mrf.mxu0
        %v1442 = vpop.f32.mrf.mxu0
        %v1443 = vadd.f32 0.0, %v1442
        %v1444 = vpop.f32.mrf.mxu0
        %1445 = vmatprep.mubr.bf16.mxu0 0
        %1446 = vmatmul.mubr.bf16.gmra.mxu0 %v937
        %v1447 = vpop.f32.mrf.mxu0
        %v1448 = vadd.f32 0.0, %v1447
        %v1449 = vpop.f32.mrf.mxu0
        %v1450 = vpop.f32.mrf.mxu0
        %v1451 = vadd.f32 0.0, %v1450
        %v1452 = vpop.f32.mrf.mxu0
        %1453 = vmatprep.mubr.bf16.mxu0 0
        %1454 = vmatmul.mubr.bf16.gmra.mxu0 %v940
        %v1455 = vpop.f32.mrf.mxu0
        %v1456 = vadd.f32 0.0, %v1455
        %v1457 = vpop.f32.mrf.mxu0
        %v1458 = vpop.f32.mrf.mxu0
        %v1459 = vadd.f32 0.0, %v1458
        %v1460 = vpop.f32.mrf.mxu0
        %1461 = vmatprep.mubr.bf16.mxu0 0
        %1462 = vmatmul.mubr.bf16.gmra.mxu0 %v943
        %v1463 = vpop.f32.mrf.mxu0
        %v1464 = vadd.f32 0.0, %v1463
        %v1465 = vpop.f32.mrf.mxu0
        %v1466 = vpop.f32.mrf.mxu0
        %v1467 = vadd.f32 0.0, %v1466
        %v1468 = vpop.f32.mrf.mxu0
        %1469 = vmatprep.mubr.bf16.mxu0 0
        %1470 = vmatmul.mubr.bf16.gmra.mxu0 %v946
        %v1471 = vpop.f32.mrf.mxu0
        %v1472 = vadd.f32 0.0, %v1471
        %v1473 = vpop.f32.mrf.mxu0
        %v1474 = vpop.f32.mrf.mxu0
        %v1475 = vadd.f32 0.0, %v1474
        %v1476 = vpop.f32.mrf.mxu0
        %1477 = vmatprep.mubr.bf16.mxu0 0
        %1478 = vmatmul.mubr.bf16.gmra.mxu0 %v949
        %v1479 = vpop.f32.mrf.mxu0
        %v1480 = vadd.f32 0.0, %v1479
        %v1481 = vpop.f32.mrf.mxu0
        %v1482 = vpop.f32.mrf.mxu0
        %v1483 = vadd.f32 0.0, %v1482
        %v1484 = vpop.f32.mrf.mxu0
        %1485 = vmatprep.mubr.bf16.mxu0 0
        %1486 = vmatmul.mubr.bf16.gmra.mxu0 %v952
        %v1487 = vpop.f32.mrf.mxu0
        %v1488 = vadd.f32 0.0, %v1487
        %v1489 = vpop.f32.mrf.mxu0
        %v1490 = vpop.f32.mrf.mxu0
        %v1491 = vadd.f32 0.0, %v1490
        %v1492 = vpop.f32.mrf.mxu0
        %1493 = vmatprep.mubr.bf16.mxu0 0
        %1494 = vmatmul.mubr.bf16.gmra.mxu0 %v955
        %v1495 = vpop.f32.mrf.mxu0
        %v1496 = vadd.f32 0.0, %v1495
        %v1497 = vpop.f32.mrf.mxu0
        %v1498 = vpop.f32.mrf.mxu0
        %v1499 = vadd.f32 0.0, %v1498
        %v1500 = vpop.f32.mrf.mxu0
        %1501 = vdwg.mxu0
        %v1502 = vld [vmem:[%s280] sm:$0xff]
        %v1503 = vld [vmem:[%s280 + $0x8] sm:$0xff]
        %v1504 = vld [vmem:[%s280 + $0x10] sm:$0xff]
        %v1505 = vld [vmem:[%s280 + $0x18] sm:$0xff]
        %v1506 = vld [vmem:[%s280 + $0x20] sm:$0xff]
        %v1507 = vld [vmem:[%s280 + $0x28] sm:$0xff]
        %v1508 = vld [vmem:[%s280 + $0x30] sm:$0xff]
        %v1509 = vld [vmem:[%s280 + $0x38] sm:$0xff]
        %v1510 = vld [vmem:[%s280 + $0x40] sm:$0xff]
        %v1511 = vld [vmem:[%s280 + $0x48] sm:$0xff]
        %v1512 = vld [vmem:[%s280 + $0x50] sm:$0xff]
        %v1513 = vld [vmem:[%s280 + $0x58] sm:$0xff]
        %v1514 = vld [vmem:[%s280 + $0x60] sm:$0xff]
        %v1515 = vld [vmem:[%s280 + $0x68] sm:$0xff]
        %v1516 = vld [vmem:[%s280 + $0x70] sm:$0xff]
        %v1517 = vld [vmem:[%s280 + $0x78] sm:$0xff]
        %v1518 = vld [vmem:[%s280 + $0x80] sm:$0xff]
        %v1519 = vld [vmem:[%s280 + $0x88] sm:$0xff]
        %v1520 = vld [vmem:[%s280 + $0x90] sm:$0xff]
        %v1521 = vld [vmem:[%s280 + $0x98] sm:$0xff]
        %v1522 = vld [vmem:[%s280 + $0xa0] sm:$0xff]
        %v1523 = vld [vmem:[%s280 + $0xa8] sm:$0xff]
        %v1524 = vld [vmem:[%s280 + $0xb0] sm:$0xff]
        %v1525 = vld [vmem:[%s280 + $0xb8] sm:$0xff]
        %v1526 = vld [vmem:[%s280 + $0xc0] sm:$0xff]
        %v1527 = vld [vmem:[%s280 + $0xc8] sm:$0xff]
        %v1528 = vld [vmem:[%s280 + $0xd0] sm:$0xff]
        %v1529 = vld [vmem:[%s280 + $0xd8] sm:$0xff]
        %v1530 = vld [vmem:[%s280 + $0xe0] sm:$0xff]
        %v1531 = vld [vmem:[%s280 + $0xe8] sm:$0xff]
        %v1532 = vld [vmem:[%s280 + $0xf0] sm:$0xff]
        %v1533 = vld [vmem:[%s280 + $0xf8] sm:$0xff]
        %v1534 = vld [vmem:[%s280 + $0x100] sm:$0xff]
        %v1535 = vld [vmem:[%s280 + $0x108] sm:$0xff]
        %v1536 = vld [vmem:[%s280 + $0x110] sm:$0xff]
        %v1537 = vld [vmem:[%s280 + $0x118] sm:$0xff]
        %v1538 = vld [vmem:[%s280 + $0x120] sm:$0xff]
        %v1539 = vld [vmem:[%s280 + $0x128] sm:$0xff]
        %v1540 = vld [vmem:[%s280 + $0x130] sm:$0xff]
        %v1541 = vld [vmem:[%s280 + $0x138] sm:$0xff]
        %v1542 = vld [vmem:[%s280 + $0x140] sm:$0xff]
        %v1543 = vld [vmem:[%s280 + $0x148] sm:$0xff]
        %v1544 = vld [vmem:[%s280 + $0x150] sm:$0xff]
        %v1545 = vld [vmem:[%s280 + $0x158] sm:$0xff]
        %v1546 = vld [vmem:[%s280 + $0x160] sm:$0xff]
        %v1547 = vld [vmem:[%s280 + $0x168] sm:$0xff]
        %v1548 = vld [vmem:[%s280 + $0x170] sm:$0xff]
        %v1549 = vld [vmem:[%s280 + $0x178] sm:$0xff]
        %v1550 = vld [vmem:[%s280 + $0x180] sm:$0xff]
        %v1551 = vld [vmem:[%s280 + $0x188] sm:$0xff]
        %v1552 = vld [vmem:[%s280 + $0x190] sm:$0xff]
        %v1553 = vld [vmem:[%s280 + $0x198] sm:$0xff]
        %v1554 = vld [vmem:[%s280 + $0x1a0] sm:$0xff]
        %v1555 = vld [vmem:[%s280 + $0x1a8] sm:$0xff]
        %v1556 = vld [vmem:[%s280 + $0x1b0] sm:$0xff]
        %v1557 = vld [vmem:[%s280 + $0x1b8] sm:$0xff]
        %v1558 = vld [vmem:[%s280 + $0x1c0] sm:$0xff]
        %v1559 = vld [vmem:[%s280 + $0x1c8] sm:$0xff]
        %v1560 = vld [vmem:[%s280 + $0x1d0] sm:$0xff]
        %v1561 = vld [vmem:[%s280 + $0x1d8] sm:$0xff]
        %v1562 = vld [vmem:[%s280 + $0x1e0] sm:$0xff]
        %v1563 = vld [vmem:[%s280 + $0x1e8] sm:$0xff]
        %v1564 = vld [vmem:[%s280 + $0x1f0] sm:$0xff]
        %v1565 = vld [vmem:[%s280 + $0x1f8] sm:$0xff]
        %v1566 = vld [vmem:[%s280 + $0x200] sm:$0xff]
        %v1567 = vld [vmem:[%s280 + $0x208] sm:$0xff]
        %v1568 = vld [vmem:[%s280 + $0x210] sm:$0xff]
        %v1569 = vld [vmem:[%s280 + $0x218] sm:$0xff]
        %v1570 = vld [vmem:[%s280 + $0x220] sm:$0xff]
        %v1571 = vld [vmem:[%s280 + $0x228] sm:$0xff]
        %v1572 = vld [vmem:[%s280 + $0x230] sm:$0xff]
        %v1573 = vld [vmem:[%s280 + $0x238] sm:$0xff]
        %v1574 = vld [vmem:[%s280 + $0x240] sm:$0xff]
        %v1575 = vld [vmem:[%s280 + $0x248] sm:$0xff]
        %v1576 = vld [vmem:[%s280 + $0x250] sm:$0xff]
        %v1577 = vld [vmem:[%s280 + $0x258] sm:$0xff]
        %v1578 = vld [vmem:[%s280 + $0x260] sm:$0xff]
        %v1579 = vld [vmem:[%s280 + $0x268] sm:$0xff]
        %v1580 = vld [vmem:[%s280 + $0x270] sm:$0xff]
        %v1581 = vld [vmem:[%s280 + $0x278] sm:$0xff]
        %v1582 = vld [vmem:[%s280 + $0x280] sm:$0xff]
        %v1583 = vld [vmem:[%s280 + $0x288] sm:$0xff]
        %v1584 = vld [vmem:[%s280 + $0x290] sm:$0xff]
        %v1585 = vld [vmem:[%s280 + $0x298] sm:$0xff]
        %v1586 = vld [vmem:[%s280 + $0x2a0] sm:$0xff]
        %v1587 = vld [vmem:[%s280 + $0x2a8] sm:$0xff]
        %v1588 = vld [vmem:[%s280 + $0x2b0] sm:$0xff]
        %v1589 = vld [vmem:[%s280 + $0x2b8] sm:$0xff]
        %v1590 = vld [vmem:[%s280 + $0x2c0] sm:$0xff]
        %v1591 = vld [vmem:[%s280 + $0x2c8] sm:$0xff]
        %v1592 = vld [vmem:[%s280 + $0x2d0] sm:$0xff]
        %v1593 = vld [vmem:[%s280 + $0x2d8] sm:$0xff]
        %v1594 = vld [vmem:[%s280 + $0x2e0] sm:$0xff]
        %v1595 = vld [vmem:[%s280 + $0x2e8] sm:$0xff]
        %v1596 = vld [vmem:[%s280 + $0x2f0] sm:$0xff]
        %v1597 = vld [vmem:[%s280 + $0x2f8] sm:$0xff]
        %v1598 = vld [vmem:[%s280 + $0x300] sm:$0xff]
        %v1599 = vld [vmem:[%s280 + $0x308] sm:$0xff]
        %v1600 = vld [vmem:[%s280 + $0x310] sm:$0xff]
        %v1601 = vld [vmem:[%s280 + $0x318] sm:$0xff]
        %v1602 = vld [vmem:[%s280 + $0x320] sm:$0xff]
        %v1603 = vld [vmem:[%s280 + $0x328] sm:$0xff]
        %v1604 = vld [vmem:[%s280 + $0x330] sm:$0xff]
        %v1605 = vld [vmem:[%s280 + $0x338] sm:$0xff]
        %v1606 = vld [vmem:[%s280 + $0x340] sm:$0xff]
        %v1607 = vld [vmem:[%s280 + $0x348] sm:$0xff]
        %v1608 = vld [vmem:[%s280 + $0x350] sm:$0xff]
        %v1609 = vld [vmem:[%s280 + $0x358] sm:$0xff]
        %v1610 = vld [vmem:[%s280 + $0x360] sm:$0xff]
        %v1611 = vld [vmem:[%s280 + $0x368] sm:$0xff]
        %v1612 = vld [vmem:[%s280 + $0x370] sm:$0xff]
        %v1613 = vld [vmem:[%s280 + $0x378] sm:$0xff]
        %v1614 = vld [vmem:[%s280 + $0x380] sm:$0xff]
        %v1615 = vld [vmem:[%s280 + $0x388] sm:$0xff]
        %v1616 = vld [vmem:[%s280 + $0x390] sm:$0xff]
        %v1617 = vld [vmem:[%s280 + $0x398] sm:$0xff]
        %v1618 = vld [vmem:[%s280 + $0x3a0] sm:$0xff]
        %v1619 = vld [vmem:[%s280 + $0x3a8] sm:$0xff]
        %v1620 = vld [vmem:[%s280 + $0x3b0] sm:$0xff]
        %v1621 = vld [vmem:[%s280 + $0x3b8] sm:$0xff]
        %v1622 = vld [vmem:[%s280 + $0x3c0] sm:$0xff]
        %v1623 = vld [vmem:[%s280 + $0x3c8] sm:$0xff]
        %v1624 = vld [vmem:[%s280 + $0x3d0] sm:$0xff]
        %v1625 = vld [vmem:[%s280 + $0x3d8] sm:$0xff]
        %v1626 = vld [vmem:[%s280 + $0x3e0] sm:$0xff]
        %v1627 = vld [vmem:[%s280 + $0x3e8] sm:$0xff]
        %v1628 = vld [vmem:[%s280 + $0x3f0] sm:$0xff]
        %v1629 = vld [vmem:[%s280 + $0x3f8] sm:$0xff]
        %v1630 = vpack.c.bf16 %v995, %v992
        %v1631 = vpack.c.bf16 %v1003, %v1000
        %v1632 = vpack.c.bf16 %v1011, %v1008
        %v1633 = vpack.c.bf16 %v1019, %v1016
        %v1634 = vpack.c.bf16 %v1027, %v1024
        %v1635 = vpack.c.bf16 %v1035, %v1032
        %v1636 = vpack.c.bf16 %v1043, %v1040
        %v1637 = vpack.c.bf16 %v1051, %v1048
        %v1638 = vpack.c.bf16 %v1059, %v1056
        %v1639 = vpack.c.bf16 %v1067, %v1064
        %v1640 = vpack.c.bf16 %v1075, %v1072
        %v1641 = vpack.c.bf16 %v1083, %v1080
        %v1642 = vpack.c.bf16 %v1091, %v1088
        %v1643 = vpack.c.bf16 %v1099, %v1096
        %v1644 = vpack.c.bf16 %v1107, %v1104
        %v1645 = vpack.c.bf16 %v1115, %v1112
        %v1646 = vpack.c.bf16 %v1123, %v1120
        %v1647 = vpack.c.bf16 %v1131, %v1128
        %v1648 = vpack.c.bf16 %v1139, %v1136
        %v1649 = vpack.c.bf16 %v1147, %v1144
        %v1650 = vpack.c.bf16 %v1155, %v1152
        %v1651 = vpack.c.bf16 %v1163, %v1160
        %v1652 = vpack.c.bf16 %v1171, %v1168
        %v1653 = vpack.c.bf16 %v1179, %v1176
        %v1654 = vpack.c.bf16 %v1187, %v1184
        %v1655 = vpack.c.bf16 %v1195, %v1192
        %v1656 = vpack.c.bf16 %v1203, %v1200
        %v1657 = vpack.c.bf16 %v1211, %v1208
        %v1658 = vpack.c.bf16 %v1219, %v1216
        %v1659 = vpack.c.bf16 %v1227, %v1224
        %v1660 = vpack.c.bf16 %v1235, %v1232
        %v1661 = vpack.c.bf16 %v1243, %v1240
        %v1662 = vpack.c.bf16 %v1251, %v1248
        %v1663 = vpack.c.bf16 %v1259, %v1256
        %v1664 = vpack.c.bf16 %v1267, %v1264
        %v1665 = vpack.c.bf16 %v1275, %v1272
        %v1666 = vpack.c.bf16 %v1283, %v1280
        %v1667 = vpack.c.bf16 %v1291, %v1288
        %v1668 = vpack.c.bf16 %v1299, %v1296
        %v1669 = vpack.c.bf16 %v1307, %v1304
        %v1670 = vpack.c.bf16 %v1315, %v1312
        %v1671 = vpack.c.bf16 %v1323, %v1320
        %v1672 = vpack.c.bf16 %v1331, %v1328
        %v1673 = vpack.c.bf16 %v1339, %v1336
        %v1674 = vpack.c.bf16 %v1347, %v1344
        %v1675 = vpack.c.bf16 %v1355, %v1352
        %v1676 = vpack.c.bf16 %v1363, %v1360
        %v1677 = vpack.c.bf16 %v1371, %v1368
        %v1678 = vpack.c.bf16 %v1379, %v1376
        %v1679 = vpack.c.bf16 %v1387, %v1384
        %v1680 = vpack.c.bf16 %v1395, %v1392
        %v1681 = vpack.c.bf16 %v1403, %v1400
        %v1682 = vpack.c.bf16 %v1411, %v1408
        %v1683 = vpack.c.bf16 %v1419, %v1416
        %v1684 = vpack.c.bf16 %v1427, %v1424
        %v1685 = vpack.c.bf16 %v1435, %v1432
        %v1686 = vpack.c.bf16 %v1443, %v1440
        %v1687 = vpack.c.bf16 %v1451, %v1448
        %v1688 = vpack.c.bf16 %v1459, %v1456
        %v1689 = vpack.c.bf16 %v1467, %v1464
        %v1690 = vpack.c.bf16 %v1475, %v1472
        %v1691 = vpack.c.bf16 %v1483, %v1480
        %v1692 = vpack.c.bf16 %v1491, %v1488
        %v1693 = vpack.c.bf16 %v1499, %v1496
        %s1694 = smul.u32 %s21, 256
        %s1695 = sshra.s32 %s1694, 3
        %s1696 = sand.u32 %s1694, 7
        %s1697 = smul.addr %s1695, 4
        %s1698 = scalar_lea.vmem %s0, %s1697
        %v1699 = vld [vmem:[%s1698] sm:$0xf]
        %v1700 = vld [vmem:[%s1698 + $0x4] sm:$0xf]
        %v1701 = vld [vmem:[%s1698 + $0x8] sm:$0xf]
        %v1702 = vld [vmem:[%s1698 + $0xc] sm:$0xf]
        %v1703 = vld [vmem:[%s1698 + $0x10] sm:$0xf]
        %v1704 = vld [vmem:[%s1698 + $0x14] sm:$0xf]
        %v1705 = vld [vmem:[%s1698 + $0x18] sm:$0xf]
        %v1706 = vld [vmem:[%s1698 + $0x1c] sm:$0xf]
        %v1707 = vld [vmem:[%s1698 + $0x20] sm:$0xf]
        %v1708 = vld [vmem:[%s1698 + $0x24] sm:$0xf]
        %v1709 = vld [vmem:[%s1698 + $0x28] sm:$0xf]
        %v1710 = vld [vmem:[%s1698 + $0x2c] sm:$0xf]
        %v1711 = vld [vmem:[%s1698 + $0x30] sm:$0xf]
        %v1712 = vld [vmem:[%s1698 + $0x34] sm:$0xf]
        %v1713 = vld [vmem:[%s1698 + $0x38] sm:$0xf]
        %v1714 = vld [vmem:[%s1698 + $0x3c] sm:$0xf]
        %v1715 = vld [vmem:[%s1698 + $0x40] sm:$0xf]
        %v1716 = vld [vmem:[%s1698 + $0x44] sm:$0xf]
        %v1717 = vld [vmem:[%s1698 + $0x48] sm:$0xf]
        %v1718 = vld [vmem:[%s1698 + $0x4c] sm:$0xf]
        %v1719 = vld [vmem:[%s1698 + $0x50] sm:$0xf]
        %v1720 = vld [vmem:[%s1698 + $0x54] sm:$0xf]
        %v1721 = vld [vmem:[%s1698 + $0x58] sm:$0xf]
        %v1722 = vld [vmem:[%s1698 + $0x5c] sm:$0xf]
        %v1723 = vld [vmem:[%s1698 + $0x60] sm:$0xf]
        %v1724 = vld [vmem:[%s1698 + $0x64] sm:$0xf]
        %v1725 = vld [vmem:[%s1698 + $0x68] sm:$0xf]
        %v1726 = vld [vmem:[%s1698 + $0x6c] sm:$0xf]
        %v1727 = vld [vmem:[%s1698 + $0x70] sm:$0xf]
        %v1728 = vld [vmem:[%s1698 + $0x74] sm:$0xf]
        %v1729 = vld [vmem:[%s1698 + $0x78] sm:$0xf]
        %v1730 = vld [vmem:[%s1698 + $0x7c] sm:$0xf]
        %v1731 = vld [vmem:[%s2] sm:$0xf]
        %v1732 = vld [vmem:[%s2 + $0x4] sm:$0xf]
        %v1733 = vld [vmem:[%s2 + $0x8] sm:$0xf]
        %v1734 = vld [vmem:[%s2 + $0xc] sm:$0xf]
        %v1735 = vld [vmem:[%s2 + $0x10] sm:$0xf]
        %v1736 = vld [vmem:[%s2 + $0x14] sm:$0xf]
        %v1737 = vld [vmem:[%s2 + $0x18] sm:$0xf]
        %v1738 = vld [vmem:[%s2 + $0x1c] sm:$0xf]
        %v1739 = vld [vmem:[%s4] sm:$0x7]
        %v1740 = vlaneseq
        %v1741 = vshrl.u32 %v1740, 7
        %v1742 = vsub.s32 0, %v1741
        %v1743 = vrot.slane %v1739, %v1742
        %v1776 = vunpack.c.l.b16 %v1699
        %v1777 = vunpack.c.l.b16 %v1700
        %v1778 = vunpack.c.l.b16 %v1701
        %v1779 = vunpack.c.l.b16 %v1702
        %v1780 = vunpack.c.l.b16 %v1703
        %v1781 = vunpack.c.l.b16 %v1704
        %v1782 = vunpack.c.l.b16 %v1705
        %v1783 = vunpack.c.l.b16 %v1706
        %v1784 = vunpack.c.l.b16 %v1707
        %v1785 = vunpack.c.l.b16 %v1708
        %v1786 = vunpack.c.l.b16 %v1709
        %v1787 = vunpack.c.l.b16 %v1710
        %v1788 = vunpack.c.l.b16 %v1711
        %v1789 = vunpack.c.l.b16 %v1712
        %v1790 = vunpack.c.l.b16 %v1713
        %v1791 = vunpack.c.l.b16 %v1714
        %v1792 = vunpack.c.l.b16 %v1715
        %v1793 = vunpack.c.l.b16 %v1716
        %v1794 = vunpack.c.l.b16 %v1717
        %v1795 = vunpack.c.l.b16 %v1718
        %v1796 = vunpack.c.l.b16 %v1719
        %v1797 = vunpack.c.l.b16 %v1720
        %v1798 = vunpack.c.l.b16 %v1721
        %v1799 = vunpack.c.l.b16 %v1722
        %v1800 = vunpack.c.l.b16 %v1723
        %v1801 = vunpack.c.l.b16 %v1724
        %v1802 = vunpack.c.l.b16 %v1725
        %v1803 = vunpack.c.l.b16 %v1726
        %v1804 = vunpack.c.l.b16 %v1727
        %v1805 = vunpack.c.l.b16 %v1728
        %v1806 = vunpack.c.l.b16 %v1729
        %v1807 = vunpack.c.l.b16 %v1730
        %v1808 = vpack.c.b16 %v1777, %v1776
        %v1809 = vpack.c.b16 %v1779, %v1778
        %v1810 = vpack.c.b16 %v1781, %v1780
        %v1811 = vpack.c.b16 %v1783, %v1782
        %v1812 = vpack.c.b16 %v1785, %v1784
        %v1813 = vpack.c.b16 %v1787, %v1786
        %v1814 = vpack.c.b16 %v1789, %v1788
        %v1815 = vpack.c.b16 %v1791, %v1790
        %v1816 = vpack.c.b16 %v1793, %v1792
        %v1817 = vpack.c.b16 %v1795, %v1794
        %v1818 = vpack.c.b16 %v1797, %v1796
        %v1819 = vpack.c.b16 %v1799, %v1798
        %v1820 = vpack.c.b16 %v1801, %v1800
        %v1821 = vpack.c.b16 %v1803, %v1802
        %v1822 = vpack.c.b16 %v1805, %v1804
        %v1823 = vpack.c.b16 %v1807, %v1806
        %v1832 = vunpack.c.l.b16 %v1731
        %v1833 = vunpack.c.l.b16 %v1732
        %v1834 = vunpack.c.l.b16 %v1733
        %v1835 = vunpack.c.l.b16 %v1734
        %v1836 = vunpack.c.l.b16 %v1735
        %v1837 = vunpack.c.l.b16 %v1736
        %v1838 = vunpack.c.l.b16 %v1737
        %v1839 = vunpack.c.l.b16 %v1738
        %v1840 = vpack.c.b16 %v1833, %v1832
        %v1841 = vpack.c.b16 %v1835, %v1834
        %v1842 = vpack.c.b16 %v1837, %v1836
        %v1843 = vpack.c.b16 %v1839, %v1838
        %v1849 = vsel %vm764, %v1808, 0
        %v1852 = vsel %vm764, %v1809, 0
        %v1855 = vsel %vm764, %v1810, 0
        %v1858 = vsel %vm764, %v1811, 0
        %v1861 = vsel %vm764, %v1812, 0
        %v1864 = vsel %vm764, %v1813, 0
        %v1867 = vsel %vm764, %v1814, 0
        %v1870 = vsel %vm764, %v1815, 0
        %v1873 = vsel %vm764, %v1816, 0
        %v1876 = vsel %vm764, %v1817, 0
        %v1879 = vsel %vm764, %v1818, 0
        %v1882 = vsel %vm764, %v1819, 0
        %v1885 = vsel %vm764, %v1820, 0
        %v1888 = vsel %vm764, %v1821, 0
        %v1891 = vsel %vm764, %v1822, 0
        %v1894 = vsel %vm764, %v1823, 0
        %1896 = vmatprep.subr.bf16.mxu0 0
        %1897 = vmatpush1.bf16.msra.mxu0 0
        %1898 = vmatprep.subr.bf16.mxu0 0
        %1899 = vmatpush1.bf16.msra.mxu0 0
        %1900 = vmatprep.subr.bf16.mxu0 0
        %1901 = vmatpush1.bf16.msra.mxu0 0
        %1902 = vmatprep.subr.bf16.mxu0 0
        %1903 = vmatpush1.bf16.msra.mxu0 0
        %1904 = vmatprep.subr.bf16.mxu0 0
        %1905 = vmatpush1.bf16.msra.mxu0 %v1843
        %1906 = vmatprep.subr.bf16.mxu0 0
        %1907 = vmatpush1.bf16.msra.mxu0 %v1842
        %1908 = vmatprep.subr.bf16.mxu0 0
        %1909 = vmatpush1.bf16.msra.mxu0 %v1841
        %1910 = vmatprep.subr.bf16.mxu0 0
        %1911 = vmatpush1.bf16.msra.mxu0 %v1840
        %1912 = vmatprep.subr.bf16.mxu0 0
        %1913 = vmatpush2.bf16.msra.mxu0 0
        %1914 = vmatprep.subr.bf16.mxu0 0
        %1915 = vmatpush2.bf16.msra.mxu0 0
        %1916 = vmatprep.subr.bf16.mxu0 0
        %1917 = vmatpush2.bf16.msra.mxu0 0
        %1918 = vmatprep.subr.bf16.mxu0 0
        %1919 = vmatpush2.bf16.msra.mxu0 0
        %1920 = vmatprep.subr.bf16.mxu0 0
        %1921 = vmatpush2.bf16.msra.mxu0 0
        %1922 = vmatprep.subr.bf16.mxu0 0
        %1923 = vmatpush2.bf16.msra.mxu0 0
        %1924 = vmatprep.subr.bf16.mxu0 0
        %1925 = vmatpush2.bf16.msra.mxu0 0
        %1926 = vmatprep.subr.bf16.mxu0 0
        %1927 = vmatpush2.bf16.msra.mxu0 0
        %1928 = vmatprep.mubr.bf16.mxu0 0
        %1929 = vmatmul.mubr.bf16.gmra.mxu0 %v1849
        %v1930 = vpop.f32.mrf.mxu0
        %v1931 = vadd.f32 %v1743, %v1930
        %v1932 = vpop.f32.mrf.mxu0
        %v1933 = vpop.f32.mrf.mxu0
        %v1934 = vadd.f32 %v1743, %v1933
        %v1935 = vpop.f32.mrf.mxu0
        %1936 = vmatprep.mubr.bf16.mxu0 0
        %1937 = vmatmul.mubr.bf16.gmra.mxu0 %v1852
        %v1938 = vpop.f32.mrf.mxu0
        %v1939 = vadd.f32 %v1743, %v1938
        %v1940 = vpop.f32.mrf.mxu0
        %v1941 = vpop.f32.mrf.mxu0
        %v1942 = vadd.f32 %v1743, %v1941
        %v1943 = vpop.f32.mrf.mxu0
        %1944 = vmatprep.mubr.bf16.mxu0 0
        %1945 = vmatmul.mubr.bf16.gmra.mxu0 %v1855
        %v1946 = vpop.f32.mrf.mxu0
        %v1947 = vadd.f32 %v1743, %v1946
        %v1948 = vpop.f32.mrf.mxu0
        %v1949 = vpop.f32.mrf.mxu0
        %v1950 = vadd.f32 %v1743, %v1949
        %v1951 = vpop.f32.mrf.mxu0
        %1952 = vmatprep.mubr.bf16.mxu0 0
        %1953 = vmatmul.mubr.bf16.gmra.mxu0 %v1858
        %v1954 = vpop.f32.mrf.mxu0
        %v1955 = vadd.f32 %v1743, %v1954
        %v1956 = vpop.f32.mrf.mxu0
        %v1957 = vpop.f32.mrf.mxu0
        %v1958 = vadd.f32 %v1743, %v1957
        %v1959 = vpop.f32.mrf.mxu0
        %1960 = vmatprep.mubr.bf16.mxu0 0
        %1961 = vmatmul.mubr.bf16.gmra.mxu0 %v1861
        %v1962 = vpop.f32.mrf.mxu0
        %v1963 = vadd.f32 %v1743, %v1962
        %v1964 = vpop.f32.mrf.mxu0
        %v1965 = vpop.f32.mrf.mxu0
        %v1966 = vadd.f32 %v1743, %v1965
        %v1967 = vpop.f32.mrf.mxu0
        %1968 = vmatprep.mubr.bf16.mxu0 0
        %1969 = vmatmul.mubr.bf16.gmra.mxu0 %v1864
        %v1970 = vpop.f32.mrf.mxu0
        %v1971 = vadd.f32 %v1743, %v1970
        %v1972 = vpop.f32.mrf.mxu0
        %v1973 = vpop.f32.mrf.mxu0
        %v1974 = vadd.f32 %v1743, %v1973
        %v1975 = vpop.f32.mrf.mxu0
        %1976 = vmatprep.mubr.bf16.mxu0 0
        %1977 = vmatmul.mubr.bf16.gmra.mxu0 %v1867
        %v1978 = vpop.f32.mrf.mxu0
        %v1979 = vadd.f32 %v1743, %v1978
        %v1980 = vpop.f32.mrf.mxu0
        %v1981 = vpop.f32.mrf.mxu0
        %v1982 = vadd.f32 %v1743, %v1981
        %v1983 = vpop.f32.mrf.mxu0
        %1984 = vmatprep.mubr.bf16.mxu0 0
        %1985 = vmatmul.mubr.bf16.gmra.mxu0 %v1870
        %v1986 = vpop.f32.mrf.mxu0
        %v1987 = vadd.f32 %v1743, %v1986
        %v1988 = vpop.f32.mrf.mxu0
        %v1989 = vpop.f32.mrf.mxu0
        %v1990 = vadd.f32 %v1743, %v1989
        %v1991 = vpop.f32.mrf.mxu0
        %1992 = vmatprep.mubr.bf16.mxu0 0
        %1993 = vmatmul.mubr.bf16.gmra.mxu0 %v1873
        %v1994 = vpop.f32.mrf.mxu0
        %v1995 = vadd.f32 %v1743, %v1994
        %v1996 = vpop.f32.mrf.mxu0
        %v1997 = vpop.f32.mrf.mxu0
        %v1998 = vadd.f32 %v1743, %v1997
        %v1999 = vpop.f32.mrf.mxu0
        %2000 = vmatprep.mubr.bf16.mxu0 0
        %2001 = vmatmul.mubr.bf16.gmra.mxu0 %v1876
        %v2002 = vpop.f32.mrf.mxu0
        %v2003 = vadd.f32 %v1743, %v2002
        %v2004 = vpop.f32.mrf.mxu0
        %v2005 = vpop.f32.mrf.mxu0
        %v2006 = vadd.f32 %v1743, %v2005
        %v2007 = vpop.f32.mrf.mxu0
        %2008 = vmatprep.mubr.bf16.mxu0 0
        %2009 = vmatmul.mubr.bf16.gmra.mxu0 %v1879
        %v2010 = vpop.f32.mrf.mxu0
        %v2011 = vadd.f32 %v1743, %v2010
        %v2012 = vpop.f32.mrf.mxu0
        %v2013 = vpop.f32.mrf.mxu0
        %v2014 = vadd.f32 %v1743, %v2013
        %v2015 = vpop.f32.mrf.mxu0
        %2016 = vmatprep.mubr.bf16.mxu0 0
        %2017 = vmatmul.mubr.bf16.gmra.mxu0 %v1882
        %v2018 = vpop.f32.mrf.mxu0
        %v2019 = vadd.f32 %v1743, %v2018
        %v2020 = vpop.f32.mrf.mxu0
        %v2021 = vpop.f32.mrf.mxu0
        %v2022 = vadd.f32 %v1743, %v2021
        %v2023 = vpop.f32.mrf.mxu0
        %2024 = vmatprep.mubr.bf16.mxu0 0
        %2025 = vmatmul.mubr.bf16.gmra.mxu0 %v1885
        %v2026 = vpop.f32.mrf.mxu0
        %v2027 = vadd.f32 %v1743, %v2026
        %v2028 = vpop.f32.mrf.mxu0
        %v2029 = vpop.f32.mrf.mxu0
        %v2030 = vadd.f32 %v1743, %v2029
        %v2031 = vpop.f32.mrf.mxu0
        %2032 = vmatprep.mubr.bf16.mxu0 0
        %2033 = vmatmul.mubr.bf16.gmra.mxu0 %v1888
        %v2034 = vpop.f32.mrf.mxu0
        %v2035 = vadd.f32 %v1743, %v2034
        %v2036 = vpop.f32.mrf.mxu0
        %v2037 = vpop.f32.mrf.mxu0
        %v2038 = vadd.f32 %v1743, %v2037
        %v2039 = vpop.f32.mrf.mxu0
        %2040 = vmatprep.mubr.bf16.mxu0 0
        %2041 = vmatmul.mubr.bf16.gmra.mxu0 %v1891
        %v2042 = vpop.f32.mrf.mxu0
        %v2043 = vadd.f32 %v1743, %v2042
        %v2044 = vpop.f32.mrf.mxu0
        %v2045 = vpop.f32.mrf.mxu0
        %v2046 = vadd.f32 %v1743, %v2045
        %v2047 = vpop.f32.mrf.mxu0
        %2048 = vmatprep.mubr.bf16.mxu0 0
        %2049 = vmatmul.mubr.bf16.gmra.mxu0 %v1894
        %v2050 = vpop.f32.mrf.mxu0
        %v2051 = vadd.f32 %v1743, %v2050
        %v2052 = vpop.f32.mrf.mxu0
        %v2053 = vpop.f32.mrf.mxu0
        %v2054 = vadd.f32 %v1743, %v2053
        %v2055 = vpop.f32.mrf.mxu0
        %2056 = vdwg.mxu0
        %v2057 = vmax.f32 %v1931, 0.0
        %v2058 = vmax.f32 %v1934, 0.0
        %v2059 = vmax.f32 %v1939, 0.0
        %v2060 = vmax.f32 %v1942, 0.0
        %v2061 = vmax.f32 %v1947, 0.0
        %v2062 = vmax.f32 %v1950, 0.0
        %v2063 = vmax.f32 %v1955, 0.0
        %v2064 = vmax.f32 %v1958, 0.0
        %v2065 = vmax.f32 %v1963, 0.0
        %v2066 = vmax.f32 %v1966, 0.0
        %v2067 = vmax.f32 %v1971, 0.0
        %v2068 = vmax.f32 %v1974, 0.0
        %v2069 = vmax.f32 %v1979, 0.0
        %v2070 = vmax.f32 %v1982, 0.0
        %v2071 = vmax.f32 %v1987, 0.0
        %v2072 = vmax.f32 %v1990, 0.0
        %v2073 = vmax.f32 %v1995, 0.0
        %v2074 = vmax.f32 %v1998, 0.0
        %v2075 = vmax.f32 %v2003, 0.0
        %v2076 = vmax.f32 %v2006, 0.0
        %v2077 = vmax.f32 %v2011, 0.0
        %v2078 = vmax.f32 %v2014, 0.0
        %v2079 = vmax.f32 %v2019, 0.0
        %v2080 = vmax.f32 %v2022, 0.0
        %v2081 = vmax.f32 %v2027, 0.0
        %v2082 = vmax.f32 %v2030, 0.0
        %v2083 = vmax.f32 %v2035, 0.0
        %v2084 = vmax.f32 %v2038, 0.0
        %v2085 = vmax.f32 %v2043, 0.0
        %v2086 = vmax.f32 %v2046, 0.0
        %v2087 = vmax.f32 %v2051, 0.0
        %v2088 = vmax.f32 %v2054, 0.0
        %vm2089 = vcmask 261120
        %v2090 = vsel %vm2089, %v2057, 0.0
        %2091 = vadd.xlane.f32.xlu0 %v2090
        %v2092 = vpop.xlane.xlu0 %2091
        %v2093 = vsel %vm2089, %v2058, 0.0
        %2094 = vadd.xlane.f32.xlu0 %v2093
        %v2095 = vpop.xlane.xlu0 %2094
        %v2096 = vsel %vm2089, %v2059, 0.0
        %2097 = vadd.xlane.f32.xlu0 %v2096
        %v2098 = vpop.xlane.xlu0 %2097
        %v2099 = vsel %vm2089, %v2060, 0.0
        %2100 = vadd.xlane.f32.xlu0 %v2099
        %v2101 = vpop.xlane.xlu0 %2100
        %v2102 = vsel %vm2089, %v2061, 0.0
        %2103 = vadd.xlane.f32.xlu0 %v2102
        %v2104 = vpop.xlane.xlu0 %2103
        %v2105 = vsel %vm2089, %v2062, 0.0
        %2106 = vadd.xlane.f32.xlu0 %v2105
        %v2107 = vpop.xlane.xlu0 %2106
        %v2108 = vsel %vm2089, %v2063, 0.0
        %2109 = vadd.xlane.f32.xlu0 %v2108
        %v2110 = vpop.xlane.xlu0 %2109
        %v2111 = vsel %vm2089, %v2064, 0.0
        %2112 = vadd.xlane.f32.xlu0 %v2111
        %v2113 = vpop.xlane.xlu0 %2112
        %v2114 = vsel %vm2089, %v2065, 0.0
        %2115 = vadd.xlane.f32.xlu0 %v2114
        %v2116 = vpop.xlane.xlu0 %2115
        %v2117 = vsel %vm2089, %v2066, 0.0
        %2118 = vadd.xlane.f32.xlu0 %v2117
        %v2119 = vpop.xlane.xlu0 %2118
        %v2120 = vsel %vm2089, %v2067, 0.0
        %2121 = vadd.xlane.f32.xlu0 %v2120
        %v2122 = vpop.xlane.xlu0 %2121
        %v2123 = vsel %vm2089, %v2068, 0.0
        %2124 = vadd.xlane.f32.xlu0 %v2123
        %v2125 = vpop.xlane.xlu0 %2124
        %v2126 = vsel %vm2089, %v2069, 0.0
        %2127 = vadd.xlane.f32.xlu0 %v2126
        %v2128 = vpop.xlane.xlu0 %2127
        %v2129 = vsel %vm2089, %v2070, 0.0
        %2130 = vadd.xlane.f32.xlu0 %v2129
        %v2131 = vpop.xlane.xlu0 %2130
        %v2132 = vsel %vm2089, %v2071, 0.0
        %2133 = vadd.xlane.f32.xlu0 %v2132
        %v2134 = vpop.xlane.xlu0 %2133
        %v2135 = vsel %vm2089, %v2072, 0.0
        %2136 = vadd.xlane.f32.xlu0 %v2135
        %v2137 = vpop.xlane.xlu0 %2136
        %v2138 = vsel %vm2089, %v2073, 0.0
        %2139 = vadd.xlane.f32.xlu0 %v2138
        %v2140 = vpop.xlane.xlu0 %2139
        %v2141 = vsel %vm2089, %v2074, 0.0
        %2142 = vadd.xlane.f32.xlu0 %v2141
        %v2143 = vpop.xlane.xlu0 %2142
        %v2144 = vsel %vm2089, %v2075, 0.0
        %2145 = vadd.xlane.f32.xlu0 %v2144
        %v2146 = vpop.xlane.xlu0 %2145
        %v2147 = vsel %vm2089, %v2076, 0.0
        %2148 = vadd.xlane.f32.xlu0 %v2147
        %v2149 = vpop.xlane.xlu0 %2148
        %v2150 = vsel %vm2089, %v2077, 0.0
        %2151 = vadd.xlane.f32.xlu0 %v2150
        %v2152 = vpop.xlane.xlu0 %2151
        %v2153 = vsel %vm2089, %v2078, 0.0
        %2154 = vadd.xlane.f32.xlu0 %v2153
        %v2155 = vpop.xlane.xlu0 %2154
        %v2156 = vsel %vm2089, %v2079, 0.0
        %2157 = vadd.xlane.f32.xlu0 %v2156
        %v2158 = vpop.xlane.xlu0 %2157
        %v2159 = vsel %vm2089, %v2080, 0.0
        %2160 = vadd.xlane.f32.xlu0 %v2159
        %v2161 = vpop.xlane.xlu0 %2160
        %v2162 = vsel %vm2089, %v2081, 0.0
        %2163 = vadd.xlane.f32.xlu0 %v2162
        %v2164 = vpop.xlane.xlu0 %2163
        %v2165 = vsel %vm2089, %v2082, 0.0
        %2166 = vadd.xlane.f32.xlu0 %v2165
        %v2167 = vpop.xlane.xlu0 %2166
        %v2168 = vsel %vm2089, %v2083, 0.0
        %2169 = vadd.xlane.f32.xlu0 %v2168
        %v2170 = vpop.xlane.xlu0 %2169
        %v2171 = vsel %vm2089, %v2084, 0.0
        %2172 = vadd.xlane.f32.xlu0 %v2171
        %v2173 = vpop.xlane.xlu0 %2172
        %v2174 = vsel %vm2089, %v2085, 0.0
        %2175 = vadd.xlane.f32.xlu0 %v2174
        %v2176 = vpop.xlane.xlu0 %2175
        %v2177 = vsel %vm2089, %v2086, 0.0
        %2178 = vadd.xlane.f32.xlu0 %v2177
        %v2179 = vpop.xlane.xlu0 %2178
        %v2180 = vsel %vm2089, %v2087, 0.0
        %2181 = vadd.xlane.f32.xlu0 %v2180
        %v2182 = vpop.xlane.xlu0 %2181
        %v2183 = vsel %vm2089, %v2088, 0.0
        %2184 = vadd.xlane.f32.xlu0 %v2183
        %v2185 = vpop.xlane.xlu0 %2184
        %v2186 = vrcp.pop 32.0
        %v2187 = vmul.f32 %v2092, %v2186
        %v2188 = vmul.f32 %v2095, %v2186
        %v2189 = vmul.f32 %v2098, %v2186
        %v2190 = vmul.f32 %v2101, %v2186
        %v2191 = vmul.f32 %v2104, %v2186
        %v2192 = vmul.f32 %v2107, %v2186
        %v2193 = vmul.f32 %v2110, %v2186
        %v2194 = vmul.f32 %v2113, %v2186
        %v2195 = vmul.f32 %v2116, %v2186
        %v2196 = vmul.f32 %v2119, %v2186
        %v2197 = vmul.f32 %v2122, %v2186
        %v2198 = vmul.f32 %v2125, %v2186
        %v2199 = vmul.f32 %v2128, %v2186
        %v2200 = vmul.f32 %v2131, %v2186
        %v2201 = vmul.f32 %v2134, %v2186
        %v2202 = vmul.f32 %v2137, %v2186
        %v2203 = vmul.f32 %v2140, %v2186
        %v2204 = vmul.f32 %v2143, %v2186
        %v2205 = vmul.f32 %v2146, %v2186
        %v2206 = vmul.f32 %v2149, %v2186
        %v2207 = vmul.f32 %v2152, %v2186
        %v2208 = vmul.f32 %v2155, %v2186
        %v2209 = vmul.f32 %v2158, %v2186
        %v2210 = vmul.f32 %v2161, %v2186
        %v2211 = vmul.f32 %v2164, %v2186
        %v2212 = vmul.f32 %v2167, %v2186
        %v2213 = vmul.f32 %v2170, %v2186
        %v2214 = vmul.f32 %v2173, %v2186
        %v2215 = vmul.f32 %v2176, %v2186
        %v2216 = vmul.f32 %v2179, %v2186
        %v2217 = vmul.f32 %v2182, %v2186
        %v2218 = vmul.f32 %v2185, %v2186
        %v2219 = vsub.f32 %v2057, %v2187
        %v2220 = vsub.f32 %v2058, %v2188
        %v2221 = vsub.f32 %v2059, %v2189
        %v2222 = vsub.f32 %v2060, %v2190
        %v2223 = vsub.f32 %v2061, %v2191
        %v2224 = vsub.f32 %v2062, %v2192
        %v2225 = vsub.f32 %v2063, %v2193
        %v2226 = vsub.f32 %v2064, %v2194
        %v2227 = vsub.f32 %v2065, %v2195
        %v2228 = vsub.f32 %v2066, %v2196
        %v2229 = vsub.f32 %v2067, %v2197
        %v2230 = vsub.f32 %v2068, %v2198
        %v2231 = vsub.f32 %v2069, %v2199
        %v2232 = vsub.f32 %v2070, %v2200
        %v2233 = vsub.f32 %v2071, %v2201
        %v2234 = vsub.f32 %v2072, %v2202
        %v2235 = vsub.f32 %v2073, %v2203
        %v2236 = vsub.f32 %v2074, %v2204
        %v2237 = vsub.f32 %v2075, %v2205
        %v2238 = vsub.f32 %v2076, %v2206
        %v2239 = vsub.f32 %v2077, %v2207
        %v2240 = vsub.f32 %v2078, %v2208
        %v2241 = vsub.f32 %v2079, %v2209
        %v2242 = vsub.f32 %v2080, %v2210
        %v2243 = vsub.f32 %v2081, %v2211
        %v2244 = vsub.f32 %v2082, %v2212
        %v2245 = vsub.f32 %v2083, %v2213
        %v2246 = vsub.f32 %v2084, %v2214
        %v2247 = vsub.f32 %v2085, %v2215
        %v2248 = vsub.f32 %v2086, %v2216
        %v2249 = vsub.f32 %v2087, %v2217
        %v2250 = vsub.f32 %v2088, %v2218
        %v2251 = vmul.f32 %v2219, %v2219
        %v2252 = vmul.f32 %v2220, %v2220
        %v2253 = vmul.f32 %v2221, %v2221
        %v2254 = vmul.f32 %v2222, %v2222
        %v2255 = vmul.f32 %v2223, %v2223
        %v2256 = vmul.f32 %v2224, %v2224
        %v2257 = vmul.f32 %v2225, %v2225
        %v2258 = vmul.f32 %v2226, %v2226
        %v2259 = vmul.f32 %v2227, %v2227
        %v2260 = vmul.f32 %v2228, %v2228
        %v2261 = vmul.f32 %v2229, %v2229
        %v2262 = vmul.f32 %v2230, %v2230
        %v2263 = vmul.f32 %v2231, %v2231
        %v2264 = vmul.f32 %v2232, %v2232
        %v2265 = vmul.f32 %v2233, %v2233
        %v2266 = vmul.f32 %v2234, %v2234
        %v2267 = vmul.f32 %v2235, %v2235
        %v2268 = vmul.f32 %v2236, %v2236
        %v2269 = vmul.f32 %v2237, %v2237
        %v2270 = vmul.f32 %v2238, %v2238
        %v2271 = vmul.f32 %v2239, %v2239
        %v2272 = vmul.f32 %v2240, %v2240
        %v2273 = vmul.f32 %v2241, %v2241
        %v2274 = vmul.f32 %v2242, %v2242
        %v2275 = vmul.f32 %v2243, %v2243
        %v2276 = vmul.f32 %v2244, %v2244
        %v2277 = vmul.f32 %v2245, %v2245
        %v2278 = vmul.f32 %v2246, %v2246
        %v2279 = vmul.f32 %v2247, %v2247
        %v2280 = vmul.f32 %v2248, %v2248
        %v2281 = vmul.f32 %v2249, %v2249
        %v2282 = vmul.f32 %v2250, %v2250
        %v2283 = vsel %vm2089, %v2251, 0.0
        %2284 = vadd.xlane.f32.xlu0 %v2283
        %v2285 = vpop.xlane.xlu0 %2284
        %v2286 = vsel %vm2089, %v2252, 0.0
        %2287 = vadd.xlane.f32.xlu0 %v2286
        %v2288 = vpop.xlane.xlu0 %2287
        %v2289 = vsel %vm2089, %v2253, 0.0
        %2290 = vadd.xlane.f32.xlu0 %v2289
        %v2291 = vpop.xlane.xlu0 %2290
        %v2292 = vsel %vm2089, %v2254, 0.0
        %2293 = vadd.xlane.f32.xlu0 %v2292
        %v2294 = vpop.xlane.xlu0 %2293
        %v2295 = vsel %vm2089, %v2255, 0.0
        %2296 = vadd.xlane.f32.xlu0 %v2295
        %v2297 = vpop.xlane.xlu0 %2296
        %v2298 = vsel %vm2089, %v2256, 0.0
        %2299 = vadd.xlane.f32.xlu0 %v2298
        %v2300 = vpop.xlane.xlu0 %2299
        %v2301 = vsel %vm2089, %v2257, 0.0
        %2302 = vadd.xlane.f32.xlu0 %v2301
        %v2303 = vpop.xlane.xlu0 %2302
        %v2304 = vsel %vm2089, %v2258, 0.0
        %2305 = vadd.xlane.f32.xlu0 %v2304
        %v2306 = vpop.xlane.xlu0 %2305
        %v2307 = vsel %vm2089, %v2259, 0.0
        %2308 = vadd.xlane.f32.xlu0 %v2307
        %v2309 = vpop.xlane.xlu0 %2308
        %v2310 = vsel %vm2089, %v2260, 0.0
        %2311 = vadd.xlane.f32.xlu0 %v2310
        %v2312 = vpop.xlane.xlu0 %2311
        %v2313 = vsel %vm2089, %v2261, 0.0
        %2314 = vadd.xlane.f32.xlu0 %v2313
        %v2315 = vpop.xlane.xlu0 %2314
        %v2316 = vsel %vm2089, %v2262, 0.0
        %2317 = vadd.xlane.f32.xlu0 %v2316
        %v2318 = vpop.xlane.xlu0 %2317
        %v2319 = vsel %vm2089, %v2263, 0.0
        %2320 = vadd.xlane.f32.xlu0 %v2319
        %v2321 = vpop.xlane.xlu0 %2320
        %v2322 = vsel %vm2089, %v2264, 0.0
        %2323 = vadd.xlane.f32.xlu0 %v2322
        %v2324 = vpop.xlane.xlu0 %2323
        %v2325 = vsel %vm2089, %v2265, 0.0
        %2326 = vadd.xlane.f32.xlu0 %v2325
        %v2327 = vpop.xlane.xlu0 %2326
        %v2328 = vsel %vm2089, %v2266, 0.0
        %2329 = vadd.xlane.f32.xlu0 %v2328
        %v2330 = vpop.xlane.xlu0 %2329
        %v2331 = vsel %vm2089, %v2267, 0.0
        %2332 = vadd.xlane.f32.xlu0 %v2331
        %v2333 = vpop.xlane.xlu0 %2332
        %v2334 = vsel %vm2089, %v2268, 0.0
        %2335 = vadd.xlane.f32.xlu0 %v2334
        %v2336 = vpop.xlane.xlu0 %2335
        %v2337 = vsel %vm2089, %v2269, 0.0
        %2338 = vadd.xlane.f32.xlu0 %v2337
        %v2339 = vpop.xlane.xlu0 %2338
        %v2340 = vsel %vm2089, %v2270, 0.0
        %2341 = vadd.xlane.f32.xlu0 %v2340
        %v2342 = vpop.xlane.xlu0 %2341
        %v2343 = vsel %vm2089, %v2271, 0.0
        %2344 = vadd.xlane.f32.xlu0 %v2343
        %v2345 = vpop.xlane.xlu0 %2344
        %v2346 = vsel %vm2089, %v2272, 0.0
        %2347 = vadd.xlane.f32.xlu0 %v2346
        %v2348 = vpop.xlane.xlu0 %2347
        %v2349 = vsel %vm2089, %v2273, 0.0
        %2350 = vadd.xlane.f32.xlu0 %v2349
        %v2351 = vpop.xlane.xlu0 %2350
        %v2352 = vsel %vm2089, %v2274, 0.0
        %2353 = vadd.xlane.f32.xlu0 %v2352
        %v2354 = vpop.xlane.xlu0 %2353
        %v2355 = vsel %vm2089, %v2275, 0.0
        %2356 = vadd.xlane.f32.xlu0 %v2355
        %v2357 = vpop.xlane.xlu0 %2356
        %v2358 = vsel %vm2089, %v2276, 0.0
        %2359 = vadd.xlane.f32.xlu0 %v2358
        %v2360 = vpop.xlane.xlu0 %2359
        %v2361 = vsel %vm2089, %v2277, 0.0
        %2362 = vadd.xlane.f32.xlu0 %v2361
        %v2363 = vpop.xlane.xlu0 %2362
        %v2364 = vsel %vm2089, %v2278, 0.0
        %2365 = vadd.xlane.f32.xlu0 %v2364
        %v2366 = vpop.xlane.xlu0 %2365
        %v2367 = vsel %vm2089, %v2279, 0.0
        %2368 = vadd.xlane.f32.xlu0 %v2367
        %v2369 = vpop.xlane.xlu0 %2368
        %v2370 = vsel %vm2089, %v2280, 0.0
        %2371 = vadd.xlane.f32.xlu0 %v2370
        %v2372 = vpop.xlane.xlu0 %2371
        %v2373 = vsel %vm2089, %v2281, 0.0
        %2374 = vadd.xlane.f32.xlu0 %v2373
        %v2375 = vpop.xlane.xlu0 %2374
        %v2376 = vsel %vm2089, %v2282, 0.0
        %2377 = vadd.xlane.f32.xlu0 %v2376
        %v2378 = vpop.xlane.xlu0 %2377
        %v2379 = vmul.f32 %v2285, %v2186
        %v2380 = vmul.f32 %v2288, %v2186
        %v2381 = vmul.f32 %v2291, %v2186
        %v2382 = vmul.f32 %v2294, %v2186
        %v2383 = vmul.f32 %v2297, %v2186
        %v2384 = vmul.f32 %v2300, %v2186
        %v2385 = vmul.f32 %v2303, %v2186
        %v2386 = vmul.f32 %v2306, %v2186
        %v2387 = vmul.f32 %v2309, %v2186
        %v2388 = vmul.f32 %v2312, %v2186
        %v2389 = vmul.f32 %v2315, %v2186
        %v2390 = vmul.f32 %v2318, %v2186
        %v2391 = vmul.f32 %v2321, %v2186
        %v2392 = vmul.f32 %v2324, %v2186
        %v2393 = vmul.f32 %v2327, %v2186
        %v2394 = vmul.f32 %v2330, %v2186
        %v2395 = vmul.f32 %v2333, %v2186
        %v2396 = vmul.f32 %v2336, %v2186
        %v2397 = vmul.f32 %v2339, %v2186
        %v2398 = vmul.f32 %v2342, %v2186
        %v2399 = vmul.f32 %v2345, %v2186
        %v2400 = vmul.f32 %v2348, %v2186
        %v2401 = vmul.f32 %v2351, %v2186
        %v2402 = vmul.f32 %v2354, %v2186
        %v2403 = vmul.f32 %v2357, %v2186
        %v2404 = vmul.f32 %v2360, %v2186
        %v2405 = vmul.f32 %v2363, %v2186
        %v2406 = vmul.f32 %v2366, %v2186
        %v2407 = vmul.f32 %v2369, %v2186
        %v2408 = vmul.f32 %v2372, %v2186
        %v2409 = vmul.f32 %v2375, %v2186
        %v2410 = vmul.f32 %v2378, %v2186
        %v2411 = vadd.f32 %v2379, 1e-09
        %v2412 = vadd.f32 %v2380, 1e-09
        %v2413 = vadd.f32 %v2381, 1e-09
        %v2414 = vadd.f32 %v2382, 1e-09
        %v2415 = vadd.f32 %v2383, 1e-09
        %v2416 = vadd.f32 %v2384, 1e-09
        %v2417 = vadd.f32 %v2385, 1e-09
        %v2418 = vadd.f32 %v2386, 1e-09
        %v2419 = vadd.f32 %v2387, 1e-09
        %v2420 = vadd.f32 %v2388, 1e-09
        %v2421 = vadd.f32 %v2389, 1e-09
        %v2422 = vadd.f32 %v2390, 1e-09
        %v2423 = vadd.f32 %v2391, 1e-09
        %v2424 = vadd.f32 %v2392, 1e-09
        %v2425 = vadd.f32 %v2393, 1e-09
        %v2426 = vadd.f32 %v2394, 1e-09
        %v2427 = vadd.f32 %v2395, 1e-09
        %v2428 = vadd.f32 %v2396, 1e-09
        %v2429 = vadd.f32 %v2397, 1e-09
        %v2430 = vadd.f32 %v2398, 1e-09
        %v2431 = vadd.f32 %v2399, 1e-09
        %v2432 = vadd.f32 %v2400, 1e-09
        %v2433 = vadd.f32 %v2401, 1e-09
        %v2434 = vadd.f32 %v2402, 1e-09
        %v2435 = vadd.f32 %v2403, 1e-09
        %v2436 = vadd.f32 %v2404, 1e-09
        %v2437 = vadd.f32 %v2405, 1e-09
        %v2438 = vadd.f32 %v2406, 1e-09
        %v2439 = vadd.f32 %v2407, 1e-09
        %v2440 = vadd.f32 %v2408, 1e-09
        %v2441 = vadd.f32 %v2409, 1e-09
        %v2442 = vadd.f32 %v2410, 1e-09
        %v2443 = vrsqrt.pop %v2411
        %v2444 = vrsqrt.pop %v2412
        %v2445 = vrsqrt.pop %v2413
        %v2446 = vrsqrt.pop %v2414
        %v2447 = vrsqrt.pop %v2415
        %v2448 = vrsqrt.pop %v2416
        %v2449 = vrsqrt.pop %v2417
        %v2450 = vrsqrt.pop %v2418
        %v2451 = vrsqrt.pop %v2419
        %v2452 = vrsqrt.pop %v2420
        %v2453 = vrsqrt.pop %v2421
        %v2454 = vrsqrt.pop %v2422
        %v2455 = vrsqrt.pop %v2423
        %v2456 = vrsqrt.pop %v2424
        %v2457 = vrsqrt.pop %v2425
        %v2458 = vrsqrt.pop %v2426
        %v2459 = vrsqrt.pop %v2427
        %v2460 = vrsqrt.pop %v2428
        %v2461 = vrsqrt.pop %v2429
        %v2462 = vrsqrt.pop %v2430
        %v2463 = vrsqrt.pop %v2431
        %v2464 = vrsqrt.pop %v2432
        %v2465 = vrsqrt.pop %v2433
        %v2466 = vrsqrt.pop %v2434
        %v2467 = vrsqrt.pop %v2435
        %v2468 = vrsqrt.pop %v2436
        %v2469 = vrsqrt.pop %v2437
        %v2470 = vrsqrt.pop %v2438
        %v2471 = vrsqrt.pop %v2439
        %v2472 = vrsqrt.pop %v2440
        %v2473 = vrsqrt.pop %v2441
        %v2474 = vrsqrt.pop %v2442
        %v2475 = vlaneseq
        %v2476 = vshrl.u32 %v2475, 7
        %v2477 = vsub.s32 1, %v2476
        %v2478 = vrot.slane %v1739, %v2477
        %v2479 = vmul.f32 %v2478, %v2443
        %v2480 = vmul.f32 %v2478, %v2444
        %v2481 = vmul.f32 %v2478, %v2445
        %v2482 = vmul.f32 %v2478, %v2446
        %v2483 = vmul.f32 %v2478, %v2447
        %v2484 = vmul.f32 %v2478, %v2448
        %v2485 = vmul.f32 %v2478, %v2449
        %v2486 = vmul.f32 %v2478, %v2450
        %v2487 = vmul.f32 %v2478, %v2451
        %v2488 = vmul.f32 %v2478, %v2452
        %v2489 = vmul.f32 %v2478, %v2453
        %v2490 = vmul.f32 %v2478, %v2454
        %v2491 = vmul.f32 %v2478, %v2455
        %v2492 = vmul.f32 %v2478, %v2456
        %v2493 = vmul.f32 %v2478, %v2457
        %v2494 = vmul.f32 %v2478, %v2458
        %v2495 = vmul.f32 %v2478, %v2459
        %v2496 = vmul.f32 %v2478, %v2460
        %v2497 = vmul.f32 %v2478, %v2461
        %v2498 = vmul.f32 %v2478, %v2462
        %v2499 = vmul.f32 %v2478, %v2463
        %v2500 = vmul.f32 %v2478, %v2464
        %v2501 = vmul.f32 %v2478, %v2465
        %v2502 = vmul.f32 %v2478, %v2466
        %v2503 = vmul.f32 %v2478, %v2467
        %v2504 = vmul.f32 %v2478, %v2468
        %v2505 = vmul.f32 %v2478, %v2469
        %v2506 = vmul.f32 %v2478, %v2470
        %v2507 = vmul.f32 %v2478, %v2471
        %v2508 = vmul.f32 %v2478, %v2472
        %v2509 = vmul.f32 %v2478, %v2473
        %v2510 = vmul.f32 %v2478, %v2474
        %v2511 = vmul.f32 %v2219, %v2479
        %v2512 = vmul.f32 %v2220, %v2480
        %v2513 = vmul.f32 %v2221, %v2481
        %v2514 = vmul.f32 %v2222, %v2482
        %v2515 = vmul.f32 %v2223, %v2483
        %v2516 = vmul.f32 %v2224, %v2484
        %v2517 = vmul.f32 %v2225, %v2485
        %v2518 = vmul.f32 %v2226, %v2486
        %v2519 = vmul.f32 %v2227, %v2487
        %v2520 = vmul.f32 %v2228, %v2488
        %v2521 = vmul.f32 %v2229, %v2489
        %v2522 = vmul.f32 %v2230, %v2490
        %v2523 = vmul.f32 %v2231, %v2491
        %v2524 = vmul.f32 %v2232, %v2492
        %v2525 = vmul.f32 %v2233, %v2493
        %v2526 = vmul.f32 %v2234, %v2494
        %v2527 = vmul.f32 %v2235, %v2495
        %v2528 = vmul.f32 %v2236, %v2496
        %v2529 = vmul.f32 %v2237, %v2497
        %v2530 = vmul.f32 %v2238, %v2498
        %v2531 = vmul.f32 %v2239, %v2499
        %v2532 = vmul.f32 %v2240, %v2500
        %v2533 = vmul.f32 %v2241, %v2501
        %v2534 = vmul.f32 %v2242, %v2502
        %v2535 = vmul.f32 %v2243, %v2503
        %v2536 = vmul.f32 %v2244, %v2504
        %v2537 = vmul.f32 %v2245, %v2505
        %v2538 = vmul.f32 %v2246, %v2506
        %v2539 = vmul.f32 %v2247, %v2507
        %v2540 = vmul.f32 %v2248, %v2508
        %v2541 = vmul.f32 %v2249, %v2509
        %v2542 = vmul.f32 %v2250, %v2510
        %v2543 = vlaneseq
        %v2544 = vshrl.u32 %v2543, 7
        %v2545 = vsub.s32 2, %v2544
        %v2546 = vrot.slane %v1739, %v2545
        %v2547 = vadd.f32 %v2511, %v2546
        %v2548 = vadd.f32 %v2512, %v2546
        %v2549 = vadd.f32 %v2513, %v2546
        %v2550 = vadd.f32 %v2514, %v2546
        %v2551 = vadd.f32 %v2515, %v2546
        %v2552 = vadd.f32 %v2516, %v2546
        %v2553 = vadd.f32 %v2517, %v2546
        %v2554 = vadd.f32 %v2518, %v2546
        %v2555 = vadd.f32 %v2519, %v2546
        %v2556 = vadd.f32 %v2520, %v2546
        %v2557 = vadd.f32 %v2521, %v2546
        %v2558 = vadd.f32 %v2522, %v2546
        %v2559 = vadd.f32 %v2523, %v2546
        %v2560 = vadd.f32 %v2524, %v2546
        %v2561 = vadd.f32 %v2525, %v2546
        %v2562 = vadd.f32 %v2526, %v2546
        %v2563 = vadd.f32 %v2527, %v2546
        %v2564 = vadd.f32 %v2528, %v2546
        %v2565 = vadd.f32 %v2529, %v2546
        %v2566 = vadd.f32 %v2530, %v2546
        %v2567 = vadd.f32 %v2531, %v2546
        %v2568 = vadd.f32 %v2532, %v2546
        %v2569 = vadd.f32 %v2533, %v2546
        %v2570 = vadd.f32 %v2534, %v2546
        %v2571 = vadd.f32 %v2535, %v2546
        %v2572 = vadd.f32 %v2536, %v2546
        %v2573 = vadd.f32 %v2537, %v2546
        %v2574 = vadd.f32 %v2538, %v2546
        %v2575 = vadd.f32 %v2539, %v2546
        %v2576 = vadd.f32 %v2540, %v2546
        %v2577 = vadd.f32 %v2541, %v2546
        %v2578 = vadd.f32 %v2542, %v2546
        %v2707 = vunpack.c.l.b16 %v1502
        %v2708 = vunpack.c.h.b16 %v1502
        %v2709 = vunpack.c.l.b16 %v1503
        %v2710 = vunpack.c.h.b16 %v1503
        %v2711 = vunpack.c.l.b16 %v1504
        %v2712 = vunpack.c.h.b16 %v1504
        %v2713 = vunpack.c.l.b16 %v1505
        %v2714 = vunpack.c.h.b16 %v1505
        %v2715 = vunpack.c.l.b16 %v1506
        %v2716 = vunpack.c.h.b16 %v1506
        %v2717 = vunpack.c.l.b16 %v1507
        %v2718 = vunpack.c.h.b16 %v1507
        %v2719 = vunpack.c.l.b16 %v1508
        %v2720 = vunpack.c.h.b16 %v1508
        %v2721 = vunpack.c.l.b16 %v1509
        %v2722 = vunpack.c.h.b16 %v1509
        %v2723 = vunpack.c.l.b16 %v1510
        %v2724 = vunpack.c.h.b16 %v1510
        %v2725 = vunpack.c.l.b16 %v1511
        %v2726 = vunpack.c.h.b16 %v1511
        %v2727 = vunpack.c.l.b16 %v1512
        %v2728 = vunpack.c.h.b16 %v1512
        %v2729 = vunpack.c.l.b16 %v1513
        %v2730 = vunpack.c.h.b16 %v1513
        %v2731 = vunpack.c.l.b16 %v1514
        %v2732 = vunpack.c.h.b16 %v1514
        %v2733 = vunpack.c.l.b16 %v1515
        %v2734 = vunpack.c.h.b16 %v1515
        %v2735 = vunpack.c.l.b16 %v1516
        %v2736 = vunpack.c.h.b16 %v1516
        %v2737 = vunpack.c.l.b16 %v1517
        %v2738 = vunpack.c.h.b16 %v1517
        %v2739 = vunpack.c.l.b16 %v1518
        %v2740 = vunpack.c.h.b16 %v1518
        %v2741 = vunpack.c.l.b16 %v1519
        %v2742 = vunpack.c.h.b16 %v1519
        %v2743 = vunpack.c.l.b16 %v1520
        %v2744 = vunpack.c.h.b16 %v1520
        %v2745 = vunpack.c.l.b16 %v1521
        %v2746 = vunpack.c.h.b16 %v1521
        %v2747 = vunpack.c.l.b16 %v1522
        %v2748 = vunpack.c.h.b16 %v1522
        %v2749 = vunpack.c.l.b16 %v1523
        %v2750 = vunpack.c.h.b16 %v1523
        %v2751 = vunpack.c.l.b16 %v1524
        %v2752 = vunpack.c.h.b16 %v1524
        %v2753 = vunpack.c.l.b16 %v1525
        %v2754 = vunpack.c.h.b16 %v1525
        %v2755 = vunpack.c.l.b16 %v1526
        %v2756 = vunpack.c.h.b16 %v1526
        %v2757 = vunpack.c.l.b16 %v1527
        %v2758 = vunpack.c.h.b16 %v1527
        %v2759 = vunpack.c.l.b16 %v1528
        %v2760 = vunpack.c.h.b16 %v1528
        %v2761 = vunpack.c.l.b16 %v1529
        %v2762 = vunpack.c.h.b16 %v1529
        %v2763 = vunpack.c.l.b16 %v1530
        %v2764 = vunpack.c.h.b16 %v1530
        %v2765 = vunpack.c.l.b16 %v1531
        %v2766 = vunpack.c.h.b16 %v1531
        %v2767 = vunpack.c.l.b16 %v1532
        %v2768 = vunpack.c.h.b16 %v1532
        %v2769 = vunpack.c.l.b16 %v1533
        %v2770 = vunpack.c.h.b16 %v1533
        %v2771 = vunpack.c.l.b16 %v1534
        %v2772 = vunpack.c.h.b16 %v1534
        %v2773 = vunpack.c.l.b16 %v1535
        %v2774 = vunpack.c.h.b16 %v1535
        %v2775 = vunpack.c.l.b16 %v1536
        %v2776 = vunpack.c.h.b16 %v1536
        %v2777 = vunpack.c.l.b16 %v1537
        %v2778 = vunpack.c.h.b16 %v1537
        %v2779 = vunpack.c.l.b16 %v1538
        %v2780 = vunpack.c.h.b16 %v1538
        %v2781 = vunpack.c.l.b16 %v1539
        %v2782 = vunpack.c.h.b16 %v1539
        %v2783 = vunpack.c.l.b16 %v1540
        %v2784 = vunpack.c.h.b16 %v1540
        %v2785 = vunpack.c.l.b16 %v1541
        %v2786 = vunpack.c.h.b16 %v1541
        %v2787 = vunpack.c.l.b16 %v1542
        %v2788 = vunpack.c.h.b16 %v1542
        %v2789 = vunpack.c.l.b16 %v1543
        %v2790 = vunpack.c.h.b16 %v1543
        %v2791 = vunpack.c.l.b16 %v1544
        %v2792 = vunpack.c.h.b16 %v1544
        %v2793 = vunpack.c.l.b16 %v1545
        %v2794 = vunpack.c.h.b16 %v1545
        %v2795 = vunpack.c.l.b16 %v1546
        %v2796 = vunpack.c.h.b16 %v1546
        %v2797 = vunpack.c.l.b16 %v1547
        %v2798 = vunpack.c.h.b16 %v1547
        %v2799 = vunpack.c.l.b16 %v1548
        %v2800 = vunpack.c.h.b16 %v1548
        %v2801 = vunpack.c.l.b16 %v1549
        %v2802 = vunpack.c.h.b16 %v1549
        %v2803 = vunpack.c.l.b16 %v1550
        %v2804 = vunpack.c.h.b16 %v1550
        %v2805 = vunpack.c.l.b16 %v1551
        %v2806 = vunpack.c.h.b16 %v1551
        %v2807 = vunpack.c.l.b16 %v1552
        %v2808 = vunpack.c.h.b16 %v1552
        %v2809 = vunpack.c.l.b16 %v1553
        %v2810 = vunpack.c.h.b16 %v1553
        %v2811 = vunpack.c.l.b16 %v1554
        %v2812 = vunpack.c.h.b16 %v1554
        %v2813 = vunpack.c.l.b16 %v1555
        %v2814 = vunpack.c.h.b16 %v1555
        %v2815 = vunpack.c.l.b16 %v1556
        %v2816 = vunpack.c.h.b16 %v1556
        %v2817 = vunpack.c.l.b16 %v1557
        %v2818 = vunpack.c.h.b16 %v1557
        %v2819 = vunpack.c.l.b16 %v1558
        %v2820 = vunpack.c.h.b16 %v1558
        %v2821 = vunpack.c.l.b16 %v1559
        %v2822 = vunpack.c.h.b16 %v1559
        %v2823 = vunpack.c.l.b16 %v1560
        %v2824 = vunpack.c.h.b16 %v1560
        %v2825 = vunpack.c.l.b16 %v1561
        %v2826 = vunpack.c.h.b16 %v1561
        %v2827 = vunpack.c.l.b16 %v1562
        %v2828 = vunpack.c.h.b16 %v1562
        %v2829 = vunpack.c.l.b16 %v1563
        %v2830 = vunpack.c.h.b16 %v1563
        %v2831 = vunpack.c.l.b16 %v1564
        %v2832 = vunpack.c.h.b16 %v1564
        %v2833 = vunpack.c.l.b16 %v1565
        %v2834 = vunpack.c.h.b16 %v1565
        %v2835 = vunpack.c.l.b16 %v1566
        %v2836 = vunpack.c.h.b16 %v1566
        %v2837 = vunpack.c.l.b16 %v1567
        %v2838 = vunpack.c.h.b16 %v1567
        %v2839 = vunpack.c.l.b16 %v1568
        %v2840 = vunpack.c.h.b16 %v1568
        %v2841 = vunpack.c.l.b16 %v1569
        %v2842 = vunpack.c.h.b16 %v1569
        %v2843 = vunpack.c.l.b16 %v1570
        %v2844 = vunpack.c.h.b16 %v1570
        %v2845 = vunpack.c.l.b16 %v1571
        %v2846 = vunpack.c.h.b16 %v1571
        %v2847 = vunpack.c.l.b16 %v1572
        %v2848 = vunpack.c.h.b16 %v1572
        %v2849 = vunpack.c.l.b16 %v1573
        %v2850 = vunpack.c.h.b16 %v1573
        %v2851 = vunpack.c.l.b16 %v1574
        %v2852 = vunpack.c.h.b16 %v1574
        %v2853 = vunpack.c.l.b16 %v1575
        %v2854 = vunpack.c.h.b16 %v1575
        %v2855 = vunpack.c.l.b16 %v1576
        %v2856 = vunpack.c.h.b16 %v1576
        %v2857 = vunpack.c.l.b16 %v1577
        %v2858 = vunpack.c.h.b16 %v1577
        %v2859 = vunpack.c.l.b16 %v1578
        %v2860 = vunpack.c.h.b16 %v1578
        %v2861 = vunpack.c.l.b16 %v1579
        %v2862 = vunpack.c.h.b16 %v1579
        %v2863 = vunpack.c.l.b16 %v1580
        %v2864 = vunpack.c.h.b16 %v1580
        %v2865 = vunpack.c.l.b16 %v1581
        %v2866 = vunpack.c.h.b16 %v1581
        %v2867 = vunpack.c.l.b16 %v1582
        %v2868 = vunpack.c.h.b16 %v1582
        %v2869 = vunpack.c.l.b16 %v1583
        %v2870 = vunpack.c.h.b16 %v1583
        %v2871 = vunpack.c.l.b16 %v1584
        %v2872 = vunpack.c.h.b16 %v1584
        %v2873 = vunpack.c.l.b16 %v1585
        %v2874 = vunpack.c.h.b16 %v1585
        %v2875 = vunpack.c.l.b16 %v1586
        %v2876 = vunpack.c.h.b16 %v1586
        %v2877 = vunpack.c.l.b16 %v1587
        %v2878 = vunpack.c.h.b16 %v1587
        %v2879 = vunpack.c.l.b16 %v1588
        %v2880 = vunpack.c.h.b16 %v1588
        %v2881 = vunpack.c.l.b16 %v1589
        %v2882 = vunpack.c.h.b16 %v1589
        %v2883 = vunpack.c.l.b16 %v1590
        %v2884 = vunpack.c.h.b16 %v1590
        %v2885 = vunpack.c.l.b16 %v1591
        %v2886 = vunpack.c.h.b16 %v1591
        %v2887 = vunpack.c.l.b16 %v1592
        %v2888 = vunpack.c.h.b16 %v1592
        %v2889 = vunpack.c.l.b16 %v1593
        %v2890 = vunpack.c.h.b16 %v1593
        %v2891 = vunpack.c.l.b16 %v1594
        %v2892 = vunpack.c.h.b16 %v1594
        %v2893 = vunpack.c.l.b16 %v1595
        %v2894 = vunpack.c.h.b16 %v1595
        %v2895 = vunpack.c.l.b16 %v1596
        %v2896 = vunpack.c.h.b16 %v1596
        %v2897 = vunpack.c.l.b16 %v1597
        %v2898 = vunpack.c.h.b16 %v1597
        %v2899 = vunpack.c.l.b16 %v1598
        %v2900 = vunpack.c.h.b16 %v1598
        %v2901 = vunpack.c.l.b16 %v1599
        %v2902 = vunpack.c.h.b16 %v1599
        %v2903 = vunpack.c.l.b16 %v1600
        %v2904 = vunpack.c.h.b16 %v1600
        %v2905 = vunpack.c.l.b16 %v1601
        %v2906 = vunpack.c.h.b16 %v1601
        %v2907 = vunpack.c.l.b16 %v1602
        %v2908 = vunpack.c.h.b16 %v1602
        %v2909 = vunpack.c.l.b16 %v1603
        %v2910 = vunpack.c.h.b16 %v1603
        %v2911 = vunpack.c.l.b16 %v1604
        %v2912 = vunpack.c.h.b16 %v1604
        %v2913 = vunpack.c.l.b16 %v1605
        %v2914 = vunpack.c.h.b16 %v1605
        %v2915 = vunpack.c.l.b16 %v1606
        %v2916 = vunpack.c.h.b16 %v1606
        %v2917 = vunpack.c.l.b16 %v1607
        %v2918 = vunpack.c.h.b16 %v1607
        %v2919 = vunpack.c.l.b16 %v1608
        %v2920 = vunpack.c.h.b16 %v1608
        %v2921 = vunpack.c.l.b16 %v1609
        %v2922 = vunpack.c.h.b16 %v1609
        %v2923 = vunpack.c.l.b16 %v1610
        %v2924 = vunpack.c.h.b16 %v1610
        %v2925 = vunpack.c.l.b16 %v1611
        %v2926 = vunpack.c.h.b16 %v1611
        %v2927 = vunpack.c.l.b16 %v1612
        %v2928 = vunpack.c.h.b16 %v1612
        %v2929 = vunpack.c.l.b16 %v1613
        %v2930 = vunpack.c.h.b16 %v1613
        %v2931 = vunpack.c.l.b16 %v1614
        %v2932 = vunpack.c.h.b16 %v1614
        %v2933 = vunpack.c.l.b16 %v1615
        %v2934 = vunpack.c.h.b16 %v1615
        %v2935 = vunpack.c.l.b16 %v1616
        %v2936 = vunpack.c.h.b16 %v1616
        %v2937 = vunpack.c.l.b16 %v1617
        %v2938 = vunpack.c.h.b16 %v1617
        %v2939 = vunpack.c.l.b16 %v1618
        %v2940 = vunpack.c.h.b16 %v1618
        %v2941 = vunpack.c.l.b16 %v1619
        %v2942 = vunpack.c.h.b16 %v1619
        %v2943 = vunpack.c.l.b16 %v1620
        %v2944 = vunpack.c.h.b16 %v1620
        %v2945 = vunpack.c.l.b16 %v1621
        %v2946 = vunpack.c.h.b16 %v1621
        %v2947 = vunpack.c.l.b16 %v1622
        %v2948 = vunpack.c.h.b16 %v1622
        %v2949 = vunpack.c.l.b16 %v1623
        %v2950 = vunpack.c.h.b16 %v1623
        %v2951 = vunpack.c.l.b16 %v1624
        %v2952 = vunpack.c.h.b16 %v1624
        %v2953 = vunpack.c.l.b16 %v1625
        %v2954 = vunpack.c.h.b16 %v1625
        %v2955 = vunpack.c.l.b16 %v1626
        %v2956 = vunpack.c.h.b16 %v1626
        %v2957 = vunpack.c.l.b16 %v1627
        %v2958 = vunpack.c.h.b16 %v1627
        %v2959 = vunpack.c.l.b16 %v1628
        %v2960 = vunpack.c.h.b16 %v1628
        %v2961 = vunpack.c.l.b16 %v1629
        %v2962 = vunpack.c.h.b16 %v1629
        %v2963 = vpack.c.b16 %v2715, %v2707
        %v2964 = vpack.c.b16 %v2716, %v2708
        %v2965 = vpack.c.b16 %v2717, %v2709
        %v2966 = vpack.c.b16 %v2718, %v2710
        %v2967 = vpack.c.b16 %v2719, %v2711
        %v2968 = vpack.c.b16 %v2720, %v2712
        %v2969 = vpack.c.b16 %v2721, %v2713
        %v2970 = vpack.c.b16 %v2722, %v2714
        %v2971 = vpack.c.b16 %v2731, %v2723
        %v2972 = vpack.c.b16 %v2732, %v2724
        %v2973 = vpack.c.b16 %v2733, %v2725
        %v2974 = vpack.c.b16 %v2734, %v2726
        %v2975 = vpack.c.b16 %v2735, %v2727
        %v2976 = vpack.c.b16 %v2736, %v2728
        %v2977 = vpack.c.b16 %v2737, %v2729
        %v2978 = vpack.c.b16 %v2738, %v2730
        %v2979 = vpack.c.b16 %v2747, %v2739
        %v2980 = vpack.c.b16 %v2748, %v2740
        %v2981 = vpack.c.b16 %v2749, %v2741
        %v2982 = vpack.c.b16 %v2750, %v2742
        %v2983 = vpack.c.b16 %v2751, %v2743
        %v2984 = vpack.c.b16 %v2752, %v2744
        %v2985 = vpack.c.b16 %v2753, %v2745
        %v2986 = vpack.c.b16 %v2754, %v2746
        %v2987 = vpack.c.b16 %v2763, %v2755
        %v2988 = vpack.c.b16 %v2764, %v2756
        %v2989 = vpack.c.b16 %v2765, %v2757
        %v2990 = vpack.c.b16 %v2766, %v2758
        %v2991 = vpack.c.b16 %v2767, %v2759
        %v2992 = vpack.c.b16 %v2768, %v2760
        %v2993 = vpack.c.b16 %v2769, %v2761
        %v2994 = vpack.c.b16 %v2770, %v2762
        %v2995 = vpack.c.b16 %v2779, %v2771
        %v2996 = vpack.c.b16 %v2780, %v2772
        %v2997 = vpack.c.b16 %v2781, %v2773
        %v2998 = vpack.c.b16 %v2782, %v2774
        %v2999 = vpack.c.b16 %v2783, %v2775
        %v3000 = vpack.c.b16 %v2784, %v2776
        %v3001 = vpack.c.b16 %v2785, %v2777
        %v3002 = vpack.c.b16 %v2786, %v2778
        %v3003 = vpack.c.b16 %v2795, %v2787
        %v3004 = vpack.c.b16 %v2796, %v2788
        %v3005 = vpack.c.b16 %v2797, %v2789
        %v3006 = vpack.c.b16 %v2798, %v2790
        %v3007 = vpack.c.b16 %v2799, %v2791
        %v3008 = vpack.c.b16 %v2800, %v2792
        %v3009 = vpack.c.b16 %v2801, %v2793
        %v3010 = vpack.c.b16 %v2802, %v2794
        %v3011 = vpack.c.b16 %v2811, %v2803
        %v3012 = vpack.c.b16 %v2812, %v2804
        %v3013 = vpack.c.b16 %v2813, %v2805
        %v3014 = vpack.c.b16 %v2814, %v2806
        %v3015 = vpack.c.b16 %v2815, %v2807
        %v3016 = vpack.c.b16 %v2816, %v2808
        %v3017 = vpack.c.b16 %v2817, %v2809
        %v3018 = vpack.c.b16 %v2818, %v2810
        %v3019 = vpack.c.b16 %v2827, %v2819
        %v3020 = vpack.c.b16 %v2828, %v2820
        %v3021 = vpack.c.b16 %v2829, %v2821
        %v3022 = vpack.c.b16 %v2830, %v2822
        %v3023 = vpack.c.b16 %v2831, %v2823
        %v3024 = vpack.c.b16 %v2832, %v2824
        %v3025 = vpack.c.b16 %v2833, %v2825
        %v3026 = vpack.c.b16 %v2834, %v2826
        %v3027 = vpack.c.b16 %v2843, %v2835
        %v3028 = vpack.c.b16 %v2844, %v2836
        %v3029 = vpack.c.b16 %v2845, %v2837
        %v3030 = vpack.c.b16 %v2846, %v2838
        %v3031 = vpack.c.b16 %v2847, %v2839
        %v3032 = vpack.c.b16 %v2848, %v2840
        %v3033 = vpack.c.b16 %v2849, %v2841
        %v3034 = vpack.c.b16 %v2850, %v2842
        %v3035 = vpack.c.b16 %v2859, %v2851
        %v3036 = vpack.c.b16 %v2860, %v2852
        %v3037 = vpack.c.b16 %v2861, %v2853
        %v3038 = vpack.c.b16 %v2862, %v2854
        %v3039 = vpack.c.b16 %v2863, %v2855
        %v3040 = vpack.c.b16 %v2864, %v2856
        %v3041 = vpack.c.b16 %v2865, %v2857
        %v3042 = vpack.c.b16 %v2866, %v2858
        %v3043 = vpack.c.b16 %v2875, %v2867
        %v3044 = vpack.c.b16 %v2876, %v2868
        %v3045 = vpack.c.b16 %v2877, %v2869
        %v3046 = vpack.c.b16 %v2878, %v2870
        %v3047 = vpack.c.b16 %v2879, %v2871
        %v3048 = vpack.c.b16 %v2880, %v2872
        %v3049 = vpack.c.b16 %v2881, %v2873
        %v3050 = vpack.c.b16 %v2882, %v2874
        %v3051 = vpack.c.b16 %v2891, %v2883
        %v3052 = vpack.c.b16 %v2892, %v2884
        %v3053 = vpack.c.b16 %v2893, %v2885
        %v3054 = vpack.c.b16 %v2894, %v2886
        %v3055 = vpack.c.b16 %v2895, %v2887
        %v3056 = vpack.c.b16 %v2896, %v2888
        %v3057 = vpack.c.b16 %v2897, %v2889
        %v3058 = vpack.c.b16 %v2898, %v2890
        %v3059 = vpack.c.b16 %v2907, %v2899
        %v3060 = vpack.c.b16 %v2908, %v2900
        %v3061 = vpack.c.b16 %v2909, %v2901
        %v3062 = vpack.c.b16 %v2910, %v2902
        %v3063 = vpack.c.b16 %v2911, %v2903
        %v3064 = vpack.c.b16 %v2912, %v2904
        %v3065 = vpack.c.b16 %v2913, %v2905
        %v3066 = vpack.c.b16 %v2914, %v2906
        %v3067 = vpack.c.b16 %v2923, %v2915
        %v3068 = vpack.c.b16 %v2924, %v2916
        %v3069 = vpack.c.b16 %v2925, %v2917
        %v3070 = vpack.c.b16 %v2926, %v2918
        %v3071 = vpack.c.b16 %v2927, %v2919
        %v3072 = vpack.c.b16 %v2928, %v2920
        %v3073 = vpack.c.b16 %v2929, %v2921
        %v3074 = vpack.c.b16 %v2930, %v2922
        %v3075 = vpack.c.b16 %v2939, %v2931
        %v3076 = vpack.c.b16 %v2940, %v2932
        %v3077 = vpack.c.b16 %v2941, %v2933
        %v3078 = vpack.c.b16 %v2942, %v2934
        %v3079 = vpack.c.b16 %v2943, %v2935
        %v3080 = vpack.c.b16 %v2944, %v2936
        %v3081 = vpack.c.b16 %v2945, %v2937
        %v3082 = vpack.c.b16 %v2946, %v2938
        %v3083 = vpack.c.b16 %v2955, %v2947
        %v3084 = vpack.c.b16 %v2956, %v2948
        %v3085 = vpack.c.b16 %v2957, %v2949
        %v3086 = vpack.c.b16 %v2958, %v2950
        %v3087 = vpack.c.b16 %v2959, %v2951
        %v3088 = vpack.c.b16 %v2960, %v2952
        %v3089 = vpack.c.b16 %v2961, %v2953
        %v3090 = vpack.c.b16 %v2962, %v2954
        %3220 = vrot.lane.b32.xlu0 %v1743, 96
        %v3221 = vpop.permute.xlu0 %3220
        %3223 = vmatprep.subr.bf16.mxu0 0
        %3224 = vmatpush1.bf16.msra.mxu0 %v1637
        %3225 = vmatprep.subr.bf16.mxu0 0
        %3226 = vmatpush1.bf16.msra.mxu0 %v1636
        %3227 = vmatprep.subr.bf16.mxu0 0
        %3228 = vmatpush1.bf16.msra.mxu0 %v1635
        %3229 = vmatprep.subr.bf16.mxu0 0
        %3230 = vmatpush1.bf16.msra.mxu0 %v1634
        %3231 = vmatprep.subr.bf16.mxu0 0
        %3232 = vmatpush1.bf16.msra.mxu0 %v1633
        %3233 = vmatprep.subr.bf16.mxu0 0
        %3234 = vmatpush1.bf16.msra.mxu0 %v1632
        %3235 = vmatprep.subr.bf16.mxu0 0
        %3236 = vmatpush1.bf16.msra.mxu0 %v1631
        %3237 = vmatprep.subr.bf16.mxu0 0
        %3238 = vmatpush1.bf16.msra.mxu0 %v1630
        %3239 = vmatprep.subr.bf16.mxu0 0
        %3240 = vmatpush2.bf16.msra.mxu0 %v1645
        %3241 = vmatprep.subr.bf16.mxu0 0
        %3242 = vmatpush2.bf16.msra.mxu0 %v1644
        %3243 = vmatprep.subr.bf16.mxu0 0
        %3244 = vmatpush2.bf16.msra.mxu0 %v1643
        %3245 = vmatprep.subr.bf16.mxu0 0
        %3246 = vmatpush2.bf16.msra.mxu0 %v1642
        %3247 = vmatprep.subr.bf16.mxu0 0
        %3248 = vmatpush2.bf16.msra.mxu0 %v1641
        %3249 = vmatprep.subr.bf16.mxu0 0
        %3250 = vmatpush2.bf16.msra.mxu0 %v1640
        %3251 = vmatprep.subr.bf16.mxu0 0
        %3252 = vmatpush2.bf16.msra.mxu0 %v1639
        %3253 = vmatprep.subr.bf16.mxu0 0
        %3254 = vmatpush2.bf16.msra.mxu0 %v1638
        %3255 = vmatprep.mubr.bf16.mxu0 %v2964
        %3256 = vmatmul.mubr.bf16.gmra.mxu0 %v2963
        %v3257 = vpop.f32.mrf.mxu0
        %v3258 = vadd.f32 %v3221, %v3257
        %v3259 = vpop.f32.mrf.mxu0
        %v3260 = vpop.f32.mrf.mxu0
        %v3261 = vadd.f32 %v3221, %v3260
        %v3262 = vpop.f32.mrf.mxu0
        %3263 = vmatprep.mubr.bf16.mxu0 %v2972
        %3264 = vmatmul.mubr.bf16.gmra.mxu0 %v2971
        %v3265 = vpop.f32.mrf.mxu0
        %v3266 = vadd.f32 %v3221, %v3265
        %v3267 = vpop.f32.mrf.mxu0
        %v3268 = vpop.f32.mrf.mxu0
        %v3269 = vadd.f32 %v3221, %v3268
        %v3270 = vpop.f32.mrf.mxu0
        %3271 = vmatprep.mubr.bf16.mxu0 %v2980
        %3272 = vmatmul.mubr.bf16.gmra.mxu0 %v2979
        %v3273 = vpop.f32.mrf.mxu0
        %v3274 = vadd.f32 %v3221, %v3273
        %v3275 = vpop.f32.mrf.mxu0
        %v3276 = vpop.f32.mrf.mxu0
        %v3277 = vadd.f32 %v3221, %v3276
        %v3278 = vpop.f32.mrf.mxu0
        %3279 = vmatprep.mubr.bf16.mxu0 %v2988
        %3280 = vmatmul.mubr.bf16.gmra.mxu0 %v2987
        %v3281 = vpop.f32.mrf.mxu0
        %v3282 = vadd.f32 %v3221, %v3281
        %v3283 = vpop.f32.mrf.mxu0
        %v3284 = vpop.f32.mrf.mxu0
        %v3285 = vadd.f32 %v3221, %v3284
        %v3286 = vpop.f32.mrf.mxu0
        %3287 = vmatprep.mubr.bf16.mxu0 %v2996
        %3288 = vmatmul.mubr.bf16.gmra.mxu0 %v2995
        %v3289 = vpop.f32.mrf.mxu0
        %v3290 = vadd.f32 %v3221, %v3289
        %v3291 = vpop.f32.mrf.mxu0
        %v3292 = vpop.f32.mrf.mxu0
        %v3293 = vadd.f32 %v3221, %v3292
        %v3294 = vpop.f32.mrf.mxu0
        %3295 = vmatprep.mubr.bf16.mxu0 %v3004
        %3296 = vmatmul.mubr.bf16.gmra.mxu0 %v3003
        %v3297 = vpop.f32.mrf.mxu0
        %v3298 = vadd.f32 %v3221, %v3297
        %v3299 = vpop.f32.mrf.mxu0
        %v3300 = vpop.f32.mrf.mxu0
        %v3301 = vadd.f32 %v3221, %v3300
        %v3302 = vpop.f32.mrf.mxu0
        %3303 = vmatprep.mubr.bf16.mxu0 %v3012
        %3304 = vmatmul.mubr.bf16.gmra.mxu0 %v3011
        %v3305 = vpop.f32.mrf.mxu0
        %v3306 = vadd.f32 %v3221, %v3305
        %v3307 = vpop.f32.mrf.mxu0
        %v3308 = vpop.f32.mrf.mxu0
        %v3309 = vadd.f32 %v3221, %v3308
        %v3310 = vpop.f32.mrf.mxu0
        %3311 = vmatprep.mubr.bf16.mxu0 %v3020
        %3312 = vmatmul.mubr.bf16.gmra.mxu0 %v3019
        %v3313 = vpop.f32.mrf.mxu0
        %v3314 = vadd.f32 %v3221, %v3313
        %v3315 = vpop.f32.mrf.mxu0
        %v3316 = vpop.f32.mrf.mxu0
        %v3317 = vadd.f32 %v3221, %v3316
        %v3318 = vpop.f32.mrf.mxu0
        %3319 = vmatprep.mubr.bf16.mxu0 %v3028
        %3320 = vmatmul.mubr.bf16.gmra.mxu0 %v3027
        %v3321 = vpop.f32.mrf.mxu0
        %v3322 = vadd.f32 %v3221, %v3321
        %v3323 = vpop.f32.mrf.mxu0
        %v3324 = vpop.f32.mrf.mxu0
        %v3325 = vadd.f32 %v3221, %v3324
        %v3326 = vpop.f32.mrf.mxu0
        %3327 = vmatprep.mubr.bf16.mxu0 %v3036
        %3328 = vmatmul.mubr.bf16.gmra.mxu0 %v3035
        %v3329 = vpop.f32.mrf.mxu0
        %v3330 = vadd.f32 %v3221, %v3329
        %v3331 = vpop.f32.mrf.mxu0
        %v3332 = vpop.f32.mrf.mxu0
        %v3333 = vadd.f32 %v3221, %v3332
        %v3334 = vpop.f32.mrf.mxu0
        %3335 = vmatprep.mubr.bf16.mxu0 %v3044
        %3336 = vmatmul.mubr.bf16.gmra.mxu0 %v3043
        %v3337 = vpop.f32.mrf.mxu0
        %v3338 = vadd.f32 %v3221, %v3337
        %v3339 = vpop.f32.mrf.mxu0
        %v3340 = vpop.f32.mrf.mxu0
        %v3341 = vadd.f32 %v3221, %v3340
        %v3342 = vpop.f32.mrf.mxu0
        %3343 = vmatprep.mubr.bf16.mxu0 %v3052
        %3344 = vmatmul.mubr.bf16.gmra.mxu0 %v3051
        %v3345 = vpop.f32.mrf.mxu0
        %v3346 = vadd.f32 %v3221, %v3345
        %v3347 = vpop.f32.mrf.mxu0
        %v3348 = vpop.f32.mrf.mxu0
        %v3349 = vadd.f32 %v3221, %v3348
        %v3350 = vpop.f32.mrf.mxu0
        %3351 = vmatprep.mubr.bf16.mxu0 %v3060
        %3352 = vmatmul.mubr.bf16.gmra.mxu0 %v3059
        %v3353 = vpop.f32.mrf.mxu0
        %v3354 = vadd.f32 %v3221, %v3353
        %v3355 = vpop.f32.mrf.mxu0
        %v3356 = vpop.f32.mrf.mxu0
        %v3357 = vadd.f32 %v3221, %v3356
        %v3358 = vpop.f32.mrf.mxu0
        %3359 = vmatprep.mubr.bf16.mxu0 %v3068
        %3360 = vmatmul.mubr.bf16.gmra.mxu0 %v3067
        %v3361 = vpop.f32.mrf.mxu0
        %v3362 = vadd.f32 %v3221, %v3361
        %v3363 = vpop.f32.mrf.mxu0
        %v3364 = vpop.f32.mrf.mxu0
        %v3365 = vadd.f32 %v3221, %v3364
        %v3366 = vpop.f32.mrf.mxu0
        %3367 = vmatprep.mubr.bf16.mxu0 %v3076
        %3368 = vmatmul.mubr.bf16.gmra.mxu0 %v3075
        %v3369 = vpop.f32.mrf.mxu0
        %v3370 = vadd.f32 %v3221, %v3369
        %v3371 = vpop.f32.mrf.mxu0
        %v3372 = vpop.f32.mrf.mxu0
        %v3373 = vadd.f32 %v3221, %v3372
        %v3374 = vpop.f32.mrf.mxu0
        %3375 = vmatprep.mubr.bf16.mxu0 %v3084
        %3376 = vmatmul.mubr.bf16.gmra.mxu0 %v3083
        %v3377 = vpop.f32.mrf.mxu0
        %v3378 = vadd.f32 %v3221, %v3377
        %v3379 = vpop.f32.mrf.mxu0
        %v3380 = vpop.f32.mrf.mxu0
        %v3381 = vadd.f32 %v3221, %v3380
        %v3382 = vpop.f32.mrf.mxu0
        %3383 = vdwg.mxu0
        %3384 = vmatprep.subr.bf16.mxu0 0
        %3385 = vmatpush1.bf16.msra.mxu0 %v1653
        %3386 = vmatprep.subr.bf16.mxu0 0
        %3387 = vmatpush1.bf16.msra.mxu0 %v1652
        %3388 = vmatprep.subr.bf16.mxu0 0
        %3389 = vmatpush1.bf16.msra.mxu0 %v1651
        %3390 = vmatprep.subr.bf16.mxu0 0
        %3391 = vmatpush1.bf16.msra.mxu0 %v1650
        %3392 = vmatprep.subr.bf16.mxu0 0
        %3393 = vmatpush1.bf16.msra.mxu0 %v1649
        %3394 = vmatprep.subr.bf16.mxu0 0
        %3395 = vmatpush1.bf16.msra.mxu0 %v1648
        %3396 = vmatprep.subr.bf16.mxu0 0
        %3397 = vmatpush1.bf16.msra.mxu0 %v1647
        %3398 = vmatprep.subr.bf16.mxu0 0
        %3399 = vmatpush1.bf16.msra.mxu0 %v1646
        %3400 = vmatprep.subr.bf16.mxu0 0
        %3401 = vmatpush2.bf16.msra.mxu0 %v1661
        %3402 = vmatprep.subr.bf16.mxu0 0
        %3403 = vmatpush2.bf16.msra.mxu0 %v1660
        %3404 = vmatprep.subr.bf16.mxu0 0
        %3405 = vmatpush2.bf16.msra.mxu0 %v1659
        %3406 = vmatprep.subr.bf16.mxu0 0
        %3407 = vmatpush2.bf16.msra.mxu0 %v1658
        %3408 = vmatprep.subr.bf16.mxu0 0
        %3409 = vmatpush2.bf16.msra.mxu0 %v1657
        %3410 = vmatprep.subr.bf16.mxu0 0
        %3411 = vmatpush2.bf16.msra.mxu0 %v1656
        %3412 = vmatprep.subr.bf16.mxu0 0
        %3413 = vmatpush2.bf16.msra.mxu0 %v1655
        %3414 = vmatprep.subr.bf16.mxu0 0
        %3415 = vmatpush2.bf16.msra.mxu0 %v1654
        %3416 = vmatprep.mubr.bf16.mxu0 %v2966
        %3417 = vmatmul.mubr.bf16.gmra.mxu0 %v2965
        %v3418 = vpop.f32.mrf.mxu0
        %v3419 = vadd.f32 %v3258, %v3418
        %v3420 = vpop.f32.mrf.mxu0
        %v3421 = vpop.f32.mrf.mxu0
        %v3422 = vadd.f32 %v3261, %v3421
        %v3423 = vpop.f32.mrf.mxu0
        %3424 = vmatprep.mubr.bf16.mxu0 %v2974
        %3425 = vmatmul.mubr.bf16.gmra.mxu0 %v2973
        %v3426 = vpop.f32.mrf.mxu0
        %v3427 = vadd.f32 %v3266, %v3426
        %v3428 = vpop.f32.mrf.mxu0
        %v3429 = vpop.f32.mrf.mxu0
        %v3430 = vadd.f32 %v3269, %v3429
        %v3431 = vpop.f32.mrf.mxu0
        %3432 = vmatprep.mubr.bf16.mxu0 %v2982
        %3433 = vmatmul.mubr.bf16.gmra.mxu0 %v2981
        %v3434 = vpop.f32.mrf.mxu0
        %v3435 = vadd.f32 %v3274, %v3434
        %v3436 = vpop.f32.mrf.mxu0
        %v3437 = vpop.f32.mrf.mxu0
        %v3438 = vadd.f32 %v3277, %v3437
        %v3439 = vpop.f32.mrf.mxu0
        %3440 = vmatprep.mubr.bf16.mxu0 %v2990
        %3441 = vmatmul.mubr.bf16.gmra.mxu0 %v2989
        %v3442 = vpop.f32.mrf.mxu0
        %v3443 = vadd.f32 %v3282, %v3442
        %v3444 = vpop.f32.mrf.mxu0
        %v3445 = vpop.f32.mrf.mxu0
        %v3446 = vadd.f32 %v3285, %v3445
        %v3447 = vpop.f32.mrf.mxu0
        %3448 = vmatprep.mubr.bf16.mxu0 %v2998
        %3449 = vmatmul.mubr.bf16.gmra.mxu0 %v2997
        %v3450 = vpop.f32.mrf.mxu0
        %v3451 = vadd.f32 %v3290, %v3450
        %v3452 = vpop.f32.mrf.mxu0
        %v3453 = vpop.f32.mrf.mxu0
        %v3454 = vadd.f32 %v3293, %v3453
        %v3455 = vpop.f32.mrf.mxu0
        %3456 = vmatprep.mubr.bf16.mxu0 %v3006
        %3457 = vmatmul.mubr.bf16.gmra.mxu0 %v3005
        %v3458 = vpop.f32.mrf.mxu0
        %v3459 = vadd.f32 %v3298, %v3458
        %v3460 = vpop.f32.mrf.mxu0
        %v3461 = vpop.f32.mrf.mxu0
        %v3462 = vadd.f32 %v3301, %v3461
        %v3463 = vpop.f32.mrf.mxu0
        %3464 = vmatprep.mubr.bf16.mxu0 %v3014
        %3465 = vmatmul.mubr.bf16.gmra.mxu0 %v3013
        %v3466 = vpop.f32.mrf.mxu0
        %v3467 = vadd.f32 %v3306, %v3466
        %v3468 = vpop.f32.mrf.mxu0
        %v3469 = vpop.f32.mrf.mxu0
        %v3470 = vadd.f32 %v3309, %v3469
        %v3471 = vpop.f32.mrf.mxu0
        %3472 = vmatprep.mubr.bf16.mxu0 %v3022
        %3473 = vmatmul.mubr.bf16.gmra.mxu0 %v3021
        %v3474 = vpop.f32.mrf.mxu0
        %v3475 = vadd.f32 %v3314, %v3474
        %v3476 = vpop.f32.mrf.mxu0
        %v3477 = vpop.f32.mrf.mxu0
        %v3478 = vadd.f32 %v3317, %v3477
        %v3479 = vpop.f32.mrf.mxu0
        %3480 = vmatprep.mubr.bf16.mxu0 %v3030
        %3481 = vmatmul.mubr.bf16.gmra.mxu0 %v3029
        %v3482 = vpop.f32.mrf.mxu0
        %v3483 = vadd.f32 %v3322, %v3482
        %v3484 = vpop.f32.mrf.mxu0
        %v3485 = vpop.f32.mrf.mxu0
        %v3486 = vadd.f32 %v3325, %v3485
        %v3487 = vpop.f32.mrf.mxu0
        %3488 = vmatprep.mubr.bf16.mxu0 %v3038
        %3489 = vmatmul.mubr.bf16.gmra.mxu0 %v3037
        %v3490 = vpop.f32.mrf.mxu0
        %v3491 = vadd.f32 %v3330, %v3490
        %v3492 = vpop.f32.mrf.mxu0
        %v3493 = vpop.f32.mrf.mxu0
        %v3494 = vadd.f32 %v3333, %v3493
        %v3495 = vpop.f32.mrf.mxu0
        %3496 = vmatprep.mubr.bf16.mxu0 %v3046
        %3497 = vmatmul.mubr.bf16.gmra.mxu0 %v3045
        %v3498 = vpop.f32.mrf.mxu0
        %v3499 = vadd.f32 %v3338, %v3498
        %v3500 = vpop.f32.mrf.mxu0
        %v3501 = vpop.f32.mrf.mxu0
        %v3502 = vadd.f32 %v3341, %v3501
        %v3503 = vpop.f32.mrf.mxu0
        %3504 = vmatprep.mubr.bf16.mxu0 %v3054
        %3505 = vmatmul.mubr.bf16.gmra.mxu0 %v3053
        %v3506 = vpop.f32.mrf.mxu0
        %v3507 = vadd.f32 %v3346, %v3506
        %v3508 = vpop.f32.mrf.mxu0
        %v3509 = vpop.f32.mrf.mxu0
        %v3510 = vadd.f32 %v3349, %v3509
        %v3511 = vpop.f32.mrf.mxu0
        %3512 = vmatprep.mubr.bf16.mxu0 %v3062
        %3513 = vmatmul.mubr.bf16.gmra.mxu0 %v3061
        %v3514 = vpop.f32.mrf.mxu0
        %v3515 = vadd.f32 %v3354, %v3514
        %v3516 = vpop.f32.mrf.mxu0
        %v3517 = vpop.f32.mrf.mxu0
        %v3518 = vadd.f32 %v3357, %v3517
        %v3519 = vpop.f32.mrf.mxu0
        %3520 = vmatprep.mubr.bf16.mxu0 %v3070
        %3521 = vmatmul.mubr.bf16.gmra.mxu0 %v3069
        %v3522 = vpop.f32.mrf.mxu0
        %v3523 = vadd.f32 %v3362, %v3522
        %v3524 = vpop.f32.mrf.mxu0
        %v3525 = vpop.f32.mrf.mxu0
        %v3526 = vadd.f32 %v3365, %v3525
        %v3527 = vpop.f32.mrf.mxu0
        %3528 = vmatprep.mubr.bf16.mxu0 %v3078
        %3529 = vmatmul.mubr.bf16.gmra.mxu0 %v3077
        %v3530 = vpop.f32.mrf.mxu0
        %v3531 = vadd.f32 %v3370, %v3530
        %v3532 = vpop.f32.mrf.mxu0
        %v3533 = vpop.f32.mrf.mxu0
        %v3534 = vadd.f32 %v3373, %v3533
        %v3535 = vpop.f32.mrf.mxu0
        %3536 = vmatprep.mubr.bf16.mxu0 %v3086
        %3537 = vmatmul.mubr.bf16.gmra.mxu0 %v3085
        %v3538 = vpop.f32.mrf.mxu0
        %v3539 = vadd.f32 %v3378, %v3538
        %v3540 = vpop.f32.mrf.mxu0
        %v3541 = vpop.f32.mrf.mxu0
        %v3542 = vadd.f32 %v3381, %v3541
        %v3543 = vpop.f32.mrf.mxu0
        %3544 = vdwg.mxu0
        %3545 = vmatprep.subr.bf16.mxu0 0
        %3546 = vmatpush1.bf16.msra.mxu0 %v1669
        %3547 = vmatprep.subr.bf16.mxu0 0
        %3548 = vmatpush1.bf16.msra.mxu0 %v1668
        %3549 = vmatprep.subr.bf16.mxu0 0
        %3550 = vmatpush1.bf16.msra.mxu0 %v1667
        %3551 = vmatprep.subr.bf16.mxu0 0
        %3552 = vmatpush1.bf16.msra.mxu0 %v1666
        %3553 = vmatprep.subr.bf16.mxu0 0
        %3554 = vmatpush1.bf16.msra.mxu0 %v1665
        %3555 = vmatprep.subr.bf16.mxu0 0
        %3556 = vmatpush1.bf16.msra.mxu0 %v1664
        %3557 = vmatprep.subr.bf16.mxu0 0
        %3558 = vmatpush1.bf16.msra.mxu0 %v1663
        %3559 = vmatprep.subr.bf16.mxu0 0
        %3560 = vmatpush1.bf16.msra.mxu0 %v1662
        %3561 = vmatprep.subr.bf16.mxu0 0
        %3562 = vmatpush2.bf16.msra.mxu0 %v1677
        %3563 = vmatprep.subr.bf16.mxu0 0
        %3564 = vmatpush2.bf16.msra.mxu0 %v1676
        %3565 = vmatprep.subr.bf16.mxu0 0
        %3566 = vmatpush2.bf16.msra.mxu0 %v1675
        %3567 = vmatprep.subr.bf16.mxu0 0
        %3568 = vmatpush2.bf16.msra.mxu0 %v1674
        %3569 = vmatprep.subr.bf16.mxu0 0
        %3570 = vmatpush2.bf16.msra.mxu0 %v1673
        %3571 = vmatprep.subr.bf16.mxu0 0
        %3572 = vmatpush2.bf16.msra.mxu0 %v1672
        %3573 = vmatprep.subr.bf16.mxu0 0
        %3574 = vmatpush2.bf16.msra.mxu0 %v1671
        %3575 = vmatprep.subr.bf16.mxu0 0
        %3576 = vmatpush2.bf16.msra.mxu0 %v1670
        %3577 = vmatprep.mubr.bf16.mxu0 %v2968
        %3578 = vmatmul.mubr.bf16.gmra.mxu0 %v2967
        %v3579 = vpop.f32.mrf.mxu0
        %v3580 = vadd.f32 %v3419, %v3579
        %v3581 = vpop.f32.mrf.mxu0
        %v3582 = vpop.f32.mrf.mxu0
        %v3583 = vadd.f32 %v3422, %v3582
        %v3584 = vpop.f32.mrf.mxu0
        %3585 = vmatprep.mubr.bf16.mxu0 %v2976
        %3586 = vmatmul.mubr.bf16.gmra.mxu0 %v2975
        %v3587 = vpop.f32.mrf.mxu0
        %v3588 = vadd.f32 %v3427, %v3587
        %v3589 = vpop.f32.mrf.mxu0
        %v3590 = vpop.f32.mrf.mxu0
        %v3591 = vadd.f32 %v3430, %v3590
        %v3592 = vpop.f32.mrf.mxu0
        %3593 = vmatprep.mubr.bf16.mxu0 %v2984
        %3594 = vmatmul.mubr.bf16.gmra.mxu0 %v2983
        %v3595 = vpop.f32.mrf.mxu0
        %v3596 = vadd.f32 %v3435, %v3595
        %v3597 = vpop.f32.mrf.mxu0
        %v3598 = vpop.f32.mrf.mxu0
        %v3599 = vadd.f32 %v3438, %v3598
        %v3600 = vpop.f32.mrf.mxu0
        %3601 = vmatprep.mubr.bf16.mxu0 %v2992
        %3602 = vmatmul.mubr.bf16.gmra.mxu0 %v2991
        %v3603 = vpop.f32.mrf.mxu0
        %v3604 = vadd.f32 %v3443, %v3603
        %v3605 = vpop.f32.mrf.mxu0
        %v3606 = vpop.f32.mrf.mxu0
        %v3607 = vadd.f32 %v3446, %v3606
        %v3608 = vpop.f32.mrf.mxu0
        %3609 = vmatprep.mubr.bf16.mxu0 %v3000
        %3610 = vmatmul.mubr.bf16.gmra.mxu0 %v2999
        %v3611 = vpop.f32.mrf.mxu0
        %v3612 = vadd.f32 %v3451, %v3611
        %v3613 = vpop.f32.mrf.mxu0
        %v3614 = vpop.f32.mrf.mxu0
        %v3615 = vadd.f32 %v3454, %v3614
        %v3616 = vpop.f32.mrf.mxu0
        %3617 = vmatprep.mubr.bf16.mxu0 %v3008
        %3618 = vmatmul.mubr.bf16.gmra.mxu0 %v3007
        %v3619 = vpop.f32.mrf.mxu0
        %v3620 = vadd.f32 %v3459, %v3619
        %v3621 = vpop.f32.mrf.mxu0
        %v3622 = vpop.f32.mrf.mxu0
        %v3623 = vadd.f32 %v3462, %v3622
        %v3624 = vpop.f32.mrf.mxu0
        %3625 = vmatprep.mubr.bf16.mxu0 %v3016
        %3626 = vmatmul.mubr.bf16.gmra.mxu0 %v3015
        %v3627 = vpop.f32.mrf.mxu0
        %v3628 = vadd.f32 %v3467, %v3627
        %v3629 = vpop.f32.mrf.mxu0
        %v3630 = vpop.f32.mrf.mxu0
        %v3631 = vadd.f32 %v3470, %v3630
        %v3632 = vpop.f32.mrf.mxu0
        %3633 = vmatprep.mubr.bf16.mxu0 %v3024
        %3634 = vmatmul.mubr.bf16.gmra.mxu0 %v3023
        %v3635 = vpop.f32.mrf.mxu0
        %v3636 = vadd.f32 %v3475, %v3635
        %v3637 = vpop.f32.mrf.mxu0
        %v3638 = vpop.f32.mrf.mxu0
        %v3639 = vadd.f32 %v3478, %v3638
        %v3640 = vpop.f32.mrf.mxu0
        %3641 = vmatprep.mubr.bf16.mxu0 %v3032
        %3642 = vmatmul.mubr.bf16.gmra.mxu0 %v3031
        %v3643 = vpop.f32.mrf.mxu0
        %v3644 = vadd.f32 %v3483, %v3643
        %v3645 = vpop.f32.mrf.mxu0
        %v3646 = vpop.f32.mrf.mxu0
        %v3647 = vadd.f32 %v3486, %v3646
        %v3648 = vpop.f32.mrf.mxu0
        %3649 = vmatprep.mubr.bf16.mxu0 %v3040
        %3650 = vmatmul.mubr.bf16.gmra.mxu0 %v3039
        %v3651 = vpop.f32.mrf.mxu0
        %v3652 = vadd.f32 %v3491, %v3651
        %v3653 = vpop.f32.mrf.mxu0
        %v3654 = vpop.f32.mrf.mxu0
        %v3655 = vadd.f32 %v3494, %v3654
        %v3656 = vpop.f32.mrf.mxu0
        %3657 = vmatprep.mubr.bf16.mxu0 %v3048
        %3658 = vmatmul.mubr.bf16.gmra.mxu0 %v3047
        %v3659 = vpop.f32.mrf.mxu0
        %v3660 = vadd.f32 %v3499, %v3659
        %v3661 = vpop.f32.mrf.mxu0
        %v3662 = vpop.f32.mrf.mxu0
        %v3663 = vadd.f32 %v3502, %v3662
        %v3664 = vpop.f32.mrf.mxu0
        %3665 = vmatprep.mubr.bf16.mxu0 %v3056
        %3666 = vmatmul.mubr.bf16.gmra.mxu0 %v3055
        %v3667 = vpop.f32.mrf.mxu0
        %v3668 = vadd.f32 %v3507, %v3667
        %v3669 = vpop.f32.mrf.mxu0
        %v3670 = vpop.f32.mrf.mxu0
        %v3671 = vadd.f32 %v3510, %v3670
        %v3672 = vpop.f32.mrf.mxu0
        %3673 = vmatprep.mubr.bf16.mxu0 %v3064
        %3674 = vmatmul.mubr.bf16.gmra.mxu0 %v3063
        %v3675 = vpop.f32.mrf.mxu0
        %v3676 = vadd.f32 %v3515, %v3675
        %v3677 = vpop.f32.mrf.mxu0
        %v3678 = vpop.f32.mrf.mxu0
        %v3679 = vadd.f32 %v3518, %v3678
        %v3680 = vpop.f32.mrf.mxu0
        %3681 = vmatprep.mubr.bf16.mxu0 %v3072
        %3682 = vmatmul.mubr.bf16.gmra.mxu0 %v3071
        %v3683 = vpop.f32.mrf.mxu0
        %v3684 = vadd.f32 %v3523, %v3683
        %v3685 = vpop.f32.mrf.mxu0
        %v3686 = vpop.f32.mrf.mxu0
        %v3687 = vadd.f32 %v3526, %v3686
        %v3688 = vpop.f32.mrf.mxu0
        %3689 = vmatprep.mubr.bf16.mxu0 %v3080
        %3690 = vmatmul.mubr.bf16.gmra.mxu0 %v3079
        %v3691 = vpop.f32.mrf.mxu0
        %v3692 = vadd.f32 %v3531, %v3691
        %v3693 = vpop.f32.mrf.mxu0
        %v3694 = vpop.f32.mrf.mxu0
        %v3695 = vadd.f32 %v3534, %v3694
        %v3696 = vpop.f32.mrf.mxu0
        %3697 = vmatprep.mubr.bf16.mxu0 %v3088
        %3698 = vmatmul.mubr.bf16.gmra.mxu0 %v3087
        %v3699 = vpop.f32.mrf.mxu0
        %v3700 = vadd.f32 %v3539, %v3699
        %v3701 = vpop.f32.mrf.mxu0
        %v3702 = vpop.f32.mrf.mxu0
        %v3703 = vadd.f32 %v3542, %v3702
        %v3704 = vpop.f32.mrf.mxu0
        %3705 = vdwg.mxu0
        %3706 = vmatprep.subr.bf16.mxu0 0
        %3707 = vmatpush1.bf16.msra.mxu0 %v1685
        %3708 = vmatprep.subr.bf16.mxu0 0
        %3709 = vmatpush1.bf16.msra.mxu0 %v1684
        %3710 = vmatprep.subr.bf16.mxu0 0
        %3711 = vmatpush1.bf16.msra.mxu0 %v1683
        %3712 = vmatprep.subr.bf16.mxu0 0
        %3713 = vmatpush1.bf16.msra.mxu0 %v1682
        %3714 = vmatprep.subr.bf16.mxu0 0
        %3715 = vmatpush1.bf16.msra.mxu0 %v1681
        %3716 = vmatprep.subr.bf16.mxu0 0
        %3717 = vmatpush1.bf16.msra.mxu0 %v1680
        %3718 = vmatprep.subr.bf16.mxu0 0
        %3719 = vmatpush1.bf16.msra.mxu0 %v1679
        %3720 = vmatprep.subr.bf16.mxu0 0
        %3721 = vmatpush1.bf16.msra.mxu0 %v1678
        %3722 = vmatprep.subr.bf16.mxu0 0
        %3723 = vmatpush2.bf16.msra.mxu0 %v1693
        %3724 = vmatprep.subr.bf16.mxu0 0
        %3725 = vmatpush2.bf16.msra.mxu0 %v1692
        %3726 = vmatprep.subr.bf16.mxu0 0
        %3727 = vmatpush2.bf16.msra.mxu0 %v1691
        %3728 = vmatprep.subr.bf16.mxu0 0
        %3729 = vmatpush2.bf16.msra.mxu0 %v1690
        %3730 = vmatprep.subr.bf16.mxu0 0
        %3731 = vmatpush2.bf16.msra.mxu0 %v1689
        %3732 = vmatprep.subr.bf16.mxu0 0
        %3733 = vmatpush2.bf16.msra.mxu0 %v1688
        %3734 = vmatprep.subr.bf16.mxu0 0
        %3735 = vmatpush2.bf16.msra.mxu0 %v1687
        %3736 = vmatprep.subr.bf16.mxu0 0
        %3737 = vmatpush2.bf16.msra.mxu0 %v1686
        %3738 = vmatprep.mubr.bf16.mxu0 %v2970
        %3739 = vmatmul.mubr.bf16.gmra.mxu0 %v2969
        %v3740 = vpop.f32.mrf.mxu0
        %v3741 = vadd.f32 %v3580, %v3740
        %v3742 = vpop.f32.mrf.mxu0
        %v3743 = vpop.f32.mrf.mxu0
        %v3744 = vadd.f32 %v3583, %v3743
        %v3745 = vpop.f32.mrf.mxu0
        %3746 = vmatprep.mubr.bf16.mxu0 %v2978
        %3747 = vmatmul.mubr.bf16.gmra.mxu0 %v2977
        %v3748 = vpop.f32.mrf.mxu0
        %v3749 = vadd.f32 %v3588, %v3748
        %v3750 = vpop.f32.mrf.mxu0
        %v3751 = vpop.f32.mrf.mxu0
        %v3752 = vadd.f32 %v3591, %v3751
        %v3753 = vpop.f32.mrf.mxu0
        %3754 = vmatprep.mubr.bf16.mxu0 %v2986
        %3755 = vmatmul.mubr.bf16.gmra.mxu0 %v2985
        %v3756 = vpop.f32.mrf.mxu0
        %v3757 = vadd.f32 %v3596, %v3756
        %v3758 = vpop.f32.mrf.mxu0
        %v3759 = vpop.f32.mrf.mxu0
        %v3760 = vadd.f32 %v3599, %v3759
        %v3761 = vpop.f32.mrf.mxu0
        %3762 = vmatprep.mubr.bf16.mxu0 %v2994
        %3763 = vmatmul.mubr.bf16.gmra.mxu0 %v2993
        %v3764 = vpop.f32.mrf.mxu0
        %v3765 = vadd.f32 %v3604, %v3764
        %v3766 = vpop.f32.mrf.mxu0
        %v3767 = vpop.f32.mrf.mxu0
        %v3768 = vadd.f32 %v3607, %v3767
        %v3769 = vpop.f32.mrf.mxu0
        %3770 = vmatprep.mubr.bf16.mxu0 %v3002
        %3771 = vmatmul.mubr.bf16.gmra.mxu0 %v3001
        %v3772 = vpop.f32.mrf.mxu0
        %v3773 = vadd.f32 %v3612, %v3772
        %v3774 = vpop.f32.mrf.mxu0
        %v3775 = vpop.f32.mrf.mxu0
        %v3776 = vadd.f32 %v3615, %v3775
        %v3777 = vpop.f32.mrf.mxu0
        %3778 = vmatprep.mubr.bf16.mxu0 %v3010
        %3779 = vmatmul.mubr.bf16.gmra.mxu0 %v3009
        %v3780 = vpop.f32.mrf.mxu0
        %v3781 = vadd.f32 %v3620, %v3780
        %v3782 = vpop.f32.mrf.mxu0
        %v3783 = vpop.f32.mrf.mxu0
        %v3784 = vadd.f32 %v3623, %v3783
        %v3785 = vpop.f32.mrf.mxu0
        %3786 = vmatprep.mubr.bf16.mxu0 %v3018
        %3787 = vmatmul.mubr.bf16.gmra.mxu0 %v3017
        %v3788 = vpop.f32.mrf.mxu0
        %v3789 = vadd.f32 %v3628, %v3788
        %v3790 = vpop.f32.mrf.mxu0
        %v3791 = vpop.f32.mrf.mxu0
        %v3792 = vadd.f32 %v3631, %v3791
        %v3793 = vpop.f32.mrf.mxu0
        %3794 = vmatprep.mubr.bf16.mxu0 %v3026
        %3795 = vmatmul.mubr.bf16.gmra.mxu0 %v3025
        %v3796 = vpop.f32.mrf.mxu0
        %v3797 = vadd.f32 %v3636, %v3796
        %v3798 = vpop.f32.mrf.mxu0
        %v3799 = vpop.f32.mrf.mxu0
        %v3800 = vadd.f32 %v3639, %v3799
        %v3801 = vpop.f32.mrf.mxu0
        %3802 = vmatprep.mubr.bf16.mxu0 %v3034
        %3803 = vmatmul.mubr.bf16.gmra.mxu0 %v3033
        %v3804 = vpop.f32.mrf.mxu0
        %v3805 = vadd.f32 %v3644, %v3804
        %v3806 = vpop.f32.mrf.mxu0
        %v3807 = vpop.f32.mrf.mxu0
        %v3808 = vadd.f32 %v3647, %v3807
        %v3809 = vpop.f32.mrf.mxu0
        %3810 = vmatprep.mubr.bf16.mxu0 %v3042
        %3811 = vmatmul.mubr.bf16.gmra.mxu0 %v3041
        %v3812 = vpop.f32.mrf.mxu0
        %v3813 = vadd.f32 %v3652, %v3812
        %v3814 = vpop.f32.mrf.mxu0
        %v3815 = vpop.f32.mrf.mxu0
        %v3816 = vadd.f32 %v3655, %v3815
        %v3817 = vpop.f32.mrf.mxu0
        %3818 = vmatprep.mubr.bf16.mxu0 %v3050
        %3819 = vmatmul.mubr.bf16.gmra.mxu0 %v3049
        %v3820 = vpop.f32.mrf.mxu0
        %v3821 = vadd.f32 %v3660, %v3820
        %v3822 = vpop.f32.mrf.mxu0
        %v3823 = vpop.f32.mrf.mxu0
        %v3824 = vadd.f32 %v3663, %v3823
        %v3825 = vpop.f32.mrf.mxu0
        %3826 = vmatprep.mubr.bf16.mxu0 %v3058
        %3827 = vmatmul.mubr.bf16.gmra.mxu0 %v3057
        %v3828 = vpop.f32.mrf.mxu0
        %v3829 = vadd.f32 %v3668, %v3828
        %v3830 = vpop.f32.mrf.mxu0
        %v3831 = vpop.f32.mrf.mxu0
        %v3832 = vadd.f32 %v3671, %v3831
        %v3833 = vpop.f32.mrf.mxu0
        %3834 = vmatprep.mubr.bf16.mxu0 %v3066
        %3835 = vmatmul.mubr.bf16.gmra.mxu0 %v3065
        %v3836 = vpop.f32.mrf.mxu0
        %v3837 = vadd.f32 %v3676, %v3836
        %v3838 = vpop.f32.mrf.mxu0
        %v3839 = vpop.f32.mrf.mxu0
        %v3840 = vadd.f32 %v3679, %v3839
        %v3841 = vpop.f32.mrf.mxu0
        %3842 = vmatprep.mubr.bf16.mxu0 %v3074
        %3843 = vmatmul.mubr.bf16.gmra.mxu0 %v3073
        %v3844 = vpop.f32.mrf.mxu0
        %v3845 = vadd.f32 %v3684, %v3844
        %v3846 = vpop.f32.mrf.mxu0
        %v3847 = vpop.f32.mrf.mxu0
        %v3848 = vadd.f32 %v3687, %v3847
        %v3849 = vpop.f32.mrf.mxu0
        %3850 = vmatprep.mubr.bf16.mxu0 %v3082
        %3851 = vmatmul.mubr.bf16.gmra.mxu0 %v3081
        %v3852 = vpop.f32.mrf.mxu0
        %v3853 = vadd.f32 %v3692, %v3852
        %v3854 = vpop.f32.mrf.mxu0
        %v3855 = vpop.f32.mrf.mxu0
        %v3856 = vadd.f32 %v3695, %v3855
        %v3857 = vpop.f32.mrf.mxu0
        %3858 = vmatprep.mubr.bf16.mxu0 %v3090
        %3859 = vmatmul.mubr.bf16.gmra.mxu0 %v3089
        %v3860 = vpop.f32.mrf.mxu0
        %v3861 = vadd.f32 %v3700, %v3860
        %v3862 = vpop.f32.mrf.mxu0
        %v3863 = vpop.f32.mrf.mxu0
        %v3864 = vadd.f32 %v3703, %v3863
        %v3865 = vpop.f32.mrf.mxu0
        %3866 = vdwg.mxu0
        %v3867 = vmax.f32 %v3741, 0.0
        %v3868 = vmax.f32 %v3744, 0.0
        %v3869 = vmax.f32 %v3749, 0.0
        %v3870 = vmax.f32 %v3752, 0.0
        %v3871 = vmax.f32 %v3757, 0.0
        %v3872 = vmax.f32 %v3760, 0.0
        %v3873 = vmax.f32 %v3765, 0.0
        %v3874 = vmax.f32 %v3768, 0.0
        %v3875 = vmax.f32 %v3773, 0.0
        %v3876 = vmax.f32 %v3776, 0.0
        %v3877 = vmax.f32 %v3781, 0.0
        %v3878 = vmax.f32 %v3784, 0.0
        %v3879 = vmax.f32 %v3789, 0.0
        %v3880 = vmax.f32 %v3792, 0.0
        %v3881 = vmax.f32 %v3797, 0.0
        %v3882 = vmax.f32 %v3800, 0.0
        %v3883 = vmax.f32 %v3805, 0.0
        %v3884 = vmax.f32 %v3808, 0.0
        %v3885 = vmax.f32 %v3813, 0.0
        %v3886 = vmax.f32 %v3816, 0.0
        %v3887 = vmax.f32 %v3821, 0.0
        %v3888 = vmax.f32 %v3824, 0.0
        %v3889 = vmax.f32 %v3829, 0.0
        %v3890 = vmax.f32 %v3832, 0.0
        %v3891 = vmax.f32 %v3837, 0.0
        %v3892 = vmax.f32 %v3840, 0.0
        %v3893 = vmax.f32 %v3845, 0.0
        %v3894 = vmax.f32 %v3848, 0.0
        %v3895 = vmax.f32 %v3853, 0.0
        %v3896 = vmax.f32 %v3856, 0.0
        %v3897 = vmax.f32 %v3861, 0.0
        %v3898 = vmax.f32 %v3864, 0.0
        %v3899 = vsel %vm2089, %v3867, 0.0
        %3900 = vadd.xlane.f32.xlu0 %v3899
        %v3901 = vpop.xlane.xlu0 %3900
        %v3902 = vsel %vm2089, %v3868, 0.0
        %3903 = vadd.xlane.f32.xlu0 %v3902
        %v3904 = vpop.xlane.xlu0 %3903
        %v3905 = vsel %vm2089, %v3869, 0.0
        %3906 = vadd.xlane.f32.xlu0 %v3905
        %v3907 = vpop.xlane.xlu0 %3906
        %v3908 = vsel %vm2089, %v3870, 0.0
        %3909 = vadd.xlane.f32.xlu0 %v3908
        %v3910 = vpop.xlane.xlu0 %3909
        %v3911 = vsel %vm2089, %v3871, 0.0
        %3912 = vadd.xlane.f32.xlu0 %v3911
        %v3913 = vpop.xlane.xlu0 %3912
        %v3914 = vsel %vm2089, %v3872, 0.0
        %3915 = vadd.xlane.f32.xlu0 %v3914
        %v3916 = vpop.xlane.xlu0 %3915
        %v3917 = vsel %vm2089, %v3873, 0.0
        %3918 = vadd.xlane.f32.xlu0 %v3917
        %v3919 = vpop.xlane.xlu0 %3918
        %v3920 = vsel %vm2089, %v3874, 0.0
        %3921 = vadd.xlane.f32.xlu0 %v3920
        %v3922 = vpop.xlane.xlu0 %3921
        %v3923 = vsel %vm2089, %v3875, 0.0
        %3924 = vadd.xlane.f32.xlu0 %v3923
        %v3925 = vpop.xlane.xlu0 %3924
        %v3926 = vsel %vm2089, %v3876, 0.0
        %3927 = vadd.xlane.f32.xlu0 %v3926
        %v3928 = vpop.xlane.xlu0 %3927
        %v3929 = vsel %vm2089, %v3877, 0.0
        %3930 = vadd.xlane.f32.xlu0 %v3929
        %v3931 = vpop.xlane.xlu0 %3930
        %v3932 = vsel %vm2089, %v3878, 0.0
        %3933 = vadd.xlane.f32.xlu0 %v3932
        %v3934 = vpop.xlane.xlu0 %3933
        %v3935 = vsel %vm2089, %v3879, 0.0
        %3936 = vadd.xlane.f32.xlu0 %v3935
        %v3937 = vpop.xlane.xlu0 %3936
        %v3938 = vsel %vm2089, %v3880, 0.0
        %3939 = vadd.xlane.f32.xlu0 %v3938
        %v3940 = vpop.xlane.xlu0 %3939
        %v3941 = vsel %vm2089, %v3881, 0.0
        %3942 = vadd.xlane.f32.xlu0 %v3941
        %v3943 = vpop.xlane.xlu0 %3942
        %v3944 = vsel %vm2089, %v3882, 0.0
        %3945 = vadd.xlane.f32.xlu0 %v3944
        %v3946 = vpop.xlane.xlu0 %3945
        %v3947 = vsel %vm2089, %v3883, 0.0
        %3948 = vadd.xlane.f32.xlu0 %v3947
        %v3949 = vpop.xlane.xlu0 %3948
        %v3950 = vsel %vm2089, %v3884, 0.0
        %3951 = vadd.xlane.f32.xlu0 %v3950
        %v3952 = vpop.xlane.xlu0 %3951
        %v3953 = vsel %vm2089, %v3885, 0.0
        %3954 = vadd.xlane.f32.xlu0 %v3953
        %v3955 = vpop.xlane.xlu0 %3954
        %v3956 = vsel %vm2089, %v3886, 0.0
        %3957 = vadd.xlane.f32.xlu0 %v3956
        %v3958 = vpop.xlane.xlu0 %3957
        %v3959 = vsel %vm2089, %v3887, 0.0
        %3960 = vadd.xlane.f32.xlu0 %v3959
        %v3961 = vpop.xlane.xlu0 %3960
        %v3962 = vsel %vm2089, %v3888, 0.0
        %3963 = vadd.xlane.f32.xlu0 %v3962
        %v3964 = vpop.xlane.xlu0 %3963
        %v3965 = vsel %vm2089, %v3889, 0.0
        %3966 = vadd.xlane.f32.xlu0 %v3965
        %v3967 = vpop.xlane.xlu0 %3966
        %v3968 = vsel %vm2089, %v3890, 0.0
        %3969 = vadd.xlane.f32.xlu0 %v3968
        %v3970 = vpop.xlane.xlu0 %3969
        %v3971 = vsel %vm2089, %v3891, 0.0
        %3972 = vadd.xlane.f32.xlu0 %v3971
        %v3973 = vpop.xlane.xlu0 %3972
        %v3974 = vsel %vm2089, %v3892, 0.0
        %3975 = vadd.xlane.f32.xlu0 %v3974
        %v3976 = vpop.xlane.xlu0 %3975
        %v3977 = vsel %vm2089, %v3893, 0.0
        %3978 = vadd.xlane.f32.xlu0 %v3977
        %v3979 = vpop.xlane.xlu0 %3978
        %v3980 = vsel %vm2089, %v3894, 0.0
        %3981 = vadd.xlane.f32.xlu0 %v3980
        %v3982 = vpop.xlane.xlu0 %3981
        %v3983 = vsel %vm2089, %v3895, 0.0
        %3984 = vadd.xlane.f32.xlu0 %v3983
        %v3985 = vpop.xlane.xlu0 %3984
        %v3986 = vsel %vm2089, %v3896, 0.0
        %3987 = vadd.xlane.f32.xlu0 %v3986
        %v3988 = vpop.xlane.xlu0 %3987
        %v3989 = vsel %vm2089, %v3897, 0.0
        %3990 = vadd.xlane.f32.xlu0 %v3989
        %v3991 = vpop.xlane.xlu0 %3990
        %v3992 = vsel %vm2089, %v3898, 0.0
        %3993 = vadd.xlane.f32.xlu0 %v3992
        %v3994 = vpop.xlane.xlu0 %3993
        %v3995 = vmul.f32 %v3901, %v2186
        %v3996 = vmul.f32 %v3904, %v2186
        %v3997 = vmul.f32 %v3907, %v2186
        %v3998 = vmul.f32 %v3910, %v2186
        %v3999 = vmul.f32 %v3913, %v2186
        %v4000 = vmul.f32 %v3916, %v2186
        %v4001 = vmul.f32 %v3919, %v2186
        %v4002 = vmul.f32 %v3922, %v2186
        %v4003 = vmul.f32 %v3925, %v2186
        %v4004 = vmul.f32 %v3928, %v2186
        %v4005 = vmul.f32 %v3931, %v2186
        %v4006 = vmul.f32 %v3934, %v2186
        %v4007 = vmul.f32 %v3937, %v2186
        %v4008 = vmul.f32 %v3940, %v2186
        %v4009 = vmul.f32 %v3943, %v2186
        %v4010 = vmul.f32 %v3946, %v2186
        %v4011 = vmul.f32 %v3949, %v2186
        %v4012 = vmul.f32 %v3952, %v2186
        %v4013 = vmul.f32 %v3955, %v2186
        %v4014 = vmul.f32 %v3958, %v2186
        %v4015 = vmul.f32 %v3961, %v2186
        %v4016 = vmul.f32 %v3964, %v2186
        %v4017 = vmul.f32 %v3967, %v2186
        %v4018 = vmul.f32 %v3970, %v2186
        %v4019 = vmul.f32 %v3973, %v2186
        %v4020 = vmul.f32 %v3976, %v2186
        %v4021 = vmul.f32 %v3979, %v2186
        %v4022 = vmul.f32 %v3982, %v2186
        %v4023 = vmul.f32 %v3985, %v2186
        %v4024 = vmul.f32 %v3988, %v2186
        %v4025 = vmul.f32 %v3991, %v2186
        %v4026 = vmul.f32 %v3994, %v2186
        %v4027 = vsub.f32 %v3867, %v3995
        %v4028 = vsub.f32 %v3868, %v3996
        %v4029 = vsub.f32 %v3869, %v3997
        %v4030 = vsub.f32 %v3870, %v3998
        %v4031 = vsub.f32 %v3871, %v3999
        %v4032 = vsub.f32 %v3872, %v4000
        %v4033 = vsub.f32 %v3873, %v4001
        %v4034 = vsub.f32 %v3874, %v4002
        %v4035 = vsub.f32 %v3875, %v4003
        %v4036 = vsub.f32 %v3876, %v4004
        %v4037 = vsub.f32 %v3877, %v4005
        %v4038 = vsub.f32 %v3878, %v4006
        %v4039 = vsub.f32 %v3879, %v4007
        %v4040 = vsub.f32 %v3880, %v4008
        %v4041 = vsub.f32 %v3881, %v4009
        %v4042 = vsub.f32 %v3882, %v4010
        %v4043 = vsub.f32 %v3883, %v4011
        %v4044 = vsub.f32 %v3884, %v4012
        %v4045 = vsub.f32 %v3885, %v4013
        %v4046 = vsub.f32 %v3886, %v4014
        %v4047 = vsub.f32 %v3887, %v4015
        %v4048 = vsub.f32 %v3888, %v4016
        %v4049 = vsub.f32 %v3889, %v4017
        %v4050 = vsub.f32 %v3890, %v4018
        %v4051 = vsub.f32 %v3891, %v4019
        %v4052 = vsub.f32 %v3892, %v4020
        %v4053 = vsub.f32 %v3893, %v4021
        %v4054 = vsub.f32 %v3894, %v4022
        %v4055 = vsub.f32 %v3895, %v4023
        %v4056 = vsub.f32 %v3896, %v4024
        %v4057 = vsub.f32 %v3897, %v4025
        %v4058 = vsub.f32 %v3898, %v4026
        %v4059 = vmul.f32 %v4027, %v4027
        %v4060 = vmul.f32 %v4028, %v4028
        %v4061 = vmul.f32 %v4029, %v4029
        %v4062 = vmul.f32 %v4030, %v4030
        %v4063 = vmul.f32 %v4031, %v4031
        %v4064 = vmul.f32 %v4032, %v4032
        %v4065 = vmul.f32 %v4033, %v4033
        %v4066 = vmul.f32 %v4034, %v4034
        %v4067 = vmul.f32 %v4035, %v4035
        %v4068 = vmul.f32 %v4036, %v4036
        %v4069 = vmul.f32 %v4037, %v4037
        %v4070 = vmul.f32 %v4038, %v4038
        %v4071 = vmul.f32 %v4039, %v4039
        %v4072 = vmul.f32 %v4040, %v4040
        %v4073 = vmul.f32 %v4041, %v4041
        %v4074 = vmul.f32 %v4042, %v4042
        %v4075 = vmul.f32 %v4043, %v4043
        %v4076 = vmul.f32 %v4044, %v4044
        %v4077 = vmul.f32 %v4045, %v4045
        %v4078 = vmul.f32 %v4046, %v4046
        %v4079 = vmul.f32 %v4047, %v4047
        %v4080 = vmul.f32 %v4048, %v4048
        %v4081 = vmul.f32 %v4049, %v4049
        %v4082 = vmul.f32 %v4050, %v4050
        %v4083 = vmul.f32 %v4051, %v4051
        %v4084 = vmul.f32 %v4052, %v4052
        %v4085 = vmul.f32 %v4053, %v4053
        %v4086 = vmul.f32 %v4054, %v4054
        %v4087 = vmul.f32 %v4055, %v4055
        %v4088 = vmul.f32 %v4056, %v4056
        %v4089 = vmul.f32 %v4057, %v4057
        %v4090 = vmul.f32 %v4058, %v4058
        %v4091 = vsel %vm2089, %v4059, 0.0
        %4092 = vadd.xlane.f32.xlu0 %v4091
        %v4093 = vpop.xlane.xlu0 %4092
        %v4094 = vsel %vm2089, %v4060, 0.0
        %4095 = vadd.xlane.f32.xlu0 %v4094
        %v4096 = vpop.xlane.xlu0 %4095
        %v4097 = vsel %vm2089, %v4061, 0.0
        %4098 = vadd.xlane.f32.xlu0 %v4097
        %v4099 = vpop.xlane.xlu0 %4098
        %v4100 = vsel %vm2089, %v4062, 0.0
        %4101 = vadd.xlane.f32.xlu0 %v4100
        %v4102 = vpop.xlane.xlu0 %4101
        %v4103 = vsel %vm2089, %v4063, 0.0
        %4104 = vadd.xlane.f32.xlu0 %v4103
        %v4105 = vpop.xlane.xlu0 %4104
        %v4106 = vsel %vm2089, %v4064, 0.0
        %4107 = vadd.xlane.f32.xlu0 %v4106
        %v4108 = vpop.xlane.xlu0 %4107
        %v4109 = vsel %vm2089, %v4065, 0.0
        %4110 = vadd.xlane.f32.xlu0 %v4109
        %v4111 = vpop.xlane.xlu0 %4110
        %v4112 = vsel %vm2089, %v4066, 0.0
        %4113 = vadd.xlane.f32.xlu0 %v4112
        %v4114 = vpop.xlane.xlu0 %4113
        %v4115 = vsel %vm2089, %v4067, 0.0
        %4116 = vadd.xlane.f32.xlu0 %v4115
        %v4117 = vpop.xlane.xlu0 %4116
        %v4118 = vsel %vm2089, %v4068, 0.0
        %4119 = vadd.xlane.f32.xlu0 %v4118
        %v4120 = vpop.xlane.xlu0 %4119
        %v4121 = vsel %vm2089, %v4069, 0.0
        %4122 = vadd.xlane.f32.xlu0 %v4121
        %v4123 = vpop.xlane.xlu0 %4122
        %v4124 = vsel %vm2089, %v4070, 0.0
        %4125 = vadd.xlane.f32.xlu0 %v4124
        %v4126 = vpop.xlane.xlu0 %4125
        %v4127 = vsel %vm2089, %v4071, 0.0
        %4128 = vadd.xlane.f32.xlu0 %v4127
        %v4129 = vpop.xlane.xlu0 %4128
        %v4130 = vsel %vm2089, %v4072, 0.0
        %4131 = vadd.xlane.f32.xlu0 %v4130
        %v4132 = vpop.xlane.xlu0 %4131
        %v4133 = vsel %vm2089, %v4073, 0.0
        %4134 = vadd.xlane.f32.xlu0 %v4133
        %v4135 = vpop.xlane.xlu0 %4134
        %v4136 = vsel %vm2089, %v4074, 0.0
        %4137 = vadd.xlane.f32.xlu0 %v4136
        %v4138 = vpop.xlane.xlu0 %4137
        %v4139 = vsel %vm2089, %v4075, 0.0
        %4140 = vadd.xlane.f32.xlu0 %v4139
        %v4141 = vpop.xlane.xlu0 %4140
        %v4142 = vsel %vm2089, %v4076, 0.0
        %4143 = vadd.xlane.f32.xlu0 %v4142
        %v4144 = vpop.xlane.xlu0 %4143
        %v4145 = vsel %vm2089, %v4077, 0.0
        %4146 = vadd.xlane.f32.xlu0 %v4145
        %v4147 = vpop.xlane.xlu0 %4146
        %v4148 = vsel %vm2089, %v4078, 0.0
        %4149 = vadd.xlane.f32.xlu0 %v4148
        %v4150 = vpop.xlane.xlu0 %4149
        %v4151 = vsel %vm2089, %v4079, 0.0
        %4152 = vadd.xlane.f32.xlu0 %v4151
        %v4153 = vpop.xlane.xlu0 %4152
        %v4154 = vsel %vm2089, %v4080, 0.0
        %4155 = vadd.xlane.f32.xlu0 %v4154
        %v4156 = vpop.xlane.xlu0 %4155
        %v4157 = vsel %vm2089, %v4081, 0.0
        %4158 = vadd.xlane.f32.xlu0 %v4157
        %v4159 = vpop.xlane.xlu0 %4158
        %v4160 = vsel %vm2089, %v4082, 0.0
        %4161 = vadd.xlane.f32.xlu0 %v4160
        %v4162 = vpop.xlane.xlu0 %4161
        %v4163 = vsel %vm2089, %v4083, 0.0
        %4164 = vadd.xlane.f32.xlu0 %v4163
        %v4165 = vpop.xlane.xlu0 %4164
        %v4166 = vsel %vm2089, %v4084, 0.0
        %4167 = vadd.xlane.f32.xlu0 %v4166
        %v4168 = vpop.xlane.xlu0 %4167
        %v4169 = vsel %vm2089, %v4085, 0.0
        %4170 = vadd.xlane.f32.xlu0 %v4169
        %v4171 = vpop.xlane.xlu0 %4170
        %v4172 = vsel %vm2089, %v4086, 0.0
        %4173 = vadd.xlane.f32.xlu0 %v4172
        %v4174 = vpop.xlane.xlu0 %4173
        %v4175 = vsel %vm2089, %v4087, 0.0
        %4176 = vadd.xlane.f32.xlu0 %v4175
        %v4177 = vpop.xlane.xlu0 %4176
        %v4178 = vsel %vm2089, %v4088, 0.0
        %4179 = vadd.xlane.f32.xlu0 %v4178
        %v4180 = vpop.xlane.xlu0 %4179
        %v4181 = vsel %vm2089, %v4089, 0.0
        %4182 = vadd.xlane.f32.xlu0 %v4181
        %v4183 = vpop.xlane.xlu0 %4182
        %v4184 = vsel %vm2089, %v4090, 0.0
        %4185 = vadd.xlane.f32.xlu0 %v4184
        %v4186 = vpop.xlane.xlu0 %4185
        %v4187 = vmul.f32 %v4093, %v2186
        %v4188 = vmul.f32 %v4096, %v2186
        %v4189 = vmul.f32 %v4099, %v2186
        %v4190 = vmul.f32 %v4102, %v2186
        %v4191 = vmul.f32 %v4105, %v2186
        %v4192 = vmul.f32 %v4108, %v2186
        %v4193 = vmul.f32 %v4111, %v2186
        %v4194 = vmul.f32 %v4114, %v2186
        %v4195 = vmul.f32 %v4117, %v2186
        %v4196 = vmul.f32 %v4120, %v2186
        %v4197 = vmul.f32 %v4123, %v2186
        %v4198 = vmul.f32 %v4126, %v2186
        %v4199 = vmul.f32 %v4129, %v2186
        %v4200 = vmul.f32 %v4132, %v2186
        %v4201 = vmul.f32 %v4135, %v2186
        %v4202 = vmul.f32 %v4138, %v2186
        %v4203 = vmul.f32 %v4141, %v2186
        %v4204 = vmul.f32 %v4144, %v2186
        %v4205 = vmul.f32 %v4147, %v2186
        %v4206 = vmul.f32 %v4150, %v2186
        %v4207 = vmul.f32 %v4153, %v2186
        %v4208 = vmul.f32 %v4156, %v2186
        %v4209 = vmul.f32 %v4159, %v2186
        %v4210 = vmul.f32 %v4162, %v2186
        %v4211 = vmul.f32 %v4165, %v2186
        %v4212 = vmul.f32 %v4168, %v2186
        %v4213 = vmul.f32 %v4171, %v2186
        %v4214 = vmul.f32 %v4174, %v2186
        %v4215 = vmul.f32 %v4177, %v2186
        %v4216 = vmul.f32 %v4180, %v2186
        %v4217 = vmul.f32 %v4183, %v2186
        %v4218 = vmul.f32 %v4186, %v2186
        %v4219 = vadd.f32 %v4187, 1e-09
        %v4220 = vadd.f32 %v4188, 1e-09
        %v4221 = vadd.f32 %v4189, 1e-09
        %v4222 = vadd.f32 %v4190, 1e-09
        %v4223 = vadd.f32 %v4191, 1e-09
        %v4224 = vadd.f32 %v4192, 1e-09
        %v4225 = vadd.f32 %v4193, 1e-09
        %v4226 = vadd.f32 %v4194, 1e-09
        %v4227 = vadd.f32 %v4195, 1e-09
        %v4228 = vadd.f32 %v4196, 1e-09
        %v4229 = vadd.f32 %v4197, 1e-09
        %v4230 = vadd.f32 %v4198, 1e-09
        %v4231 = vadd.f32 %v4199, 1e-09
        %v4232 = vadd.f32 %v4200, 1e-09
        %v4233 = vadd.f32 %v4201, 1e-09
        %v4234 = vadd.f32 %v4202, 1e-09
        %v4235 = vadd.f32 %v4203, 1e-09
        %v4236 = vadd.f32 %v4204, 1e-09
        %v4237 = vadd.f32 %v4205, 1e-09
        %v4238 = vadd.f32 %v4206, 1e-09
        %v4239 = vadd.f32 %v4207, 1e-09
        %v4240 = vadd.f32 %v4208, 1e-09
        %v4241 = vadd.f32 %v4209, 1e-09
        %v4242 = vadd.f32 %v4210, 1e-09
        %v4243 = vadd.f32 %v4211, 1e-09
        %v4244 = vadd.f32 %v4212, 1e-09
        %v4245 = vadd.f32 %v4213, 1e-09
        %v4246 = vadd.f32 %v4214, 1e-09
        %v4247 = vadd.f32 %v4215, 1e-09
        %v4248 = vadd.f32 %v4216, 1e-09
        %v4249 = vadd.f32 %v4217, 1e-09
        %v4250 = vadd.f32 %v4218, 1e-09
        %v4251 = vrsqrt.pop %v4219
        %v4252 = vrsqrt.pop %v4220
        %v4253 = vrsqrt.pop %v4221
        %v4254 = vrsqrt.pop %v4222
        %v4255 = vrsqrt.pop %v4223
        %v4256 = vrsqrt.pop %v4224
        %v4257 = vrsqrt.pop %v4225
        %v4258 = vrsqrt.pop %v4226
        %v4259 = vrsqrt.pop %v4227
        %v4260 = vrsqrt.pop %v4228
        %v4261 = vrsqrt.pop %v4229
        %v4262 = vrsqrt.pop %v4230
        %v4263 = vrsqrt.pop %v4231
        %v4264 = vrsqrt.pop %v4232
        %v4265 = vrsqrt.pop %v4233
        %v4266 = vrsqrt.pop %v4234
        %v4267 = vrsqrt.pop %v4235
        %v4268 = vrsqrt.pop %v4236
        %v4269 = vrsqrt.pop %v4237
        %v4270 = vrsqrt.pop %v4238
        %v4271 = vrsqrt.pop %v4239
        %v4272 = vrsqrt.pop %v4240
        %v4273 = vrsqrt.pop %v4241
        %v4274 = vrsqrt.pop %v4242
        %v4275 = vrsqrt.pop %v4243
        %v4276 = vrsqrt.pop %v4244
        %v4277 = vrsqrt.pop %v4245
        %v4278 = vrsqrt.pop %v4246
        %v4279 = vrsqrt.pop %v4247
        %v4280 = vrsqrt.pop %v4248
        %v4281 = vrsqrt.pop %v4249
        %v4282 = vrsqrt.pop %v4250
        %v4283 = vmul.f32 %v2478, %v4251
        %v4284 = vmul.f32 %v2478, %v4252
        %v4285 = vmul.f32 %v2478, %v4253
        %v4286 = vmul.f32 %v2478, %v4254
        %v4287 = vmul.f32 %v2478, %v4255
        %v4288 = vmul.f32 %v2478, %v4256
        %v4289 = vmul.f32 %v2478, %v4257
        %v4290 = vmul.f32 %v2478, %v4258
        %v4291 = vmul.f32 %v2478, %v4259
        %v4292 = vmul.f32 %v2478, %v4260
        %v4293 = vmul.f32 %v2478, %v4261
        %v4294 = vmul.f32 %v2478, %v4262
        %v4295 = vmul.f32 %v2478, %v4263
        %v4296 = vmul.f32 %v2478, %v4264
        %v4297 = vmul.f32 %v2478, %v4265
        %v4298 = vmul.f32 %v2478, %v4266
        %v4299 = vmul.f32 %v2478, %v4267
        %v4300 = vmul.f32 %v2478, %v4268
        %v4301 = vmul.f32 %v2478, %v4269
        %v4302 = vmul.f32 %v2478, %v4270
        %v4303 = vmul.f32 %v2478, %v4271
        %v4304 = vmul.f32 %v2478, %v4272
        %v4305 = vmul.f32 %v2478, %v4273
        %v4306 = vmul.f32 %v2478, %v4274
        %v4307 = vmul.f32 %v2478, %v4275
        %v4308 = vmul.f32 %v2478, %v4276
        %v4309 = vmul.f32 %v2478, %v4277
        %v4310 = vmul.f32 %v2478, %v4278
        %v4311 = vmul.f32 %v2478, %v4279
        %v4312 = vmul.f32 %v2478, %v4280
        %v4313 = vmul.f32 %v2478, %v4281
        %v4314 = vmul.f32 %v2478, %v4282
        %4347 = vrot.lane.b32.xlu0 %v4283, 96
        %v4348 = vpop.permute.xlu0 %4347
        %4349 = vrot.lane.b32.xlu0 %v4284, 96
        %v4350 = vpop.permute.xlu0 %4349
        %4351 = vrot.lane.b32.xlu0 %v4285, 96
        %v4352 = vpop.permute.xlu0 %4351
        %4353 = vrot.lane.b32.xlu0 %v4286, 96
        %v4354 = vpop.permute.xlu0 %4353
        %4355 = vrot.lane.b32.xlu0 %v4287, 96
        %v4356 = vpop.permute.xlu0 %4355
        %4357 = vrot.lane.b32.xlu0 %v4288, 96
        %v4358 = vpop.permute.xlu0 %4357
        %4359 = vrot.lane.b32.xlu0 %v4289, 96
        %v4360 = vpop.permute.xlu0 %4359
        %4361 = vrot.lane.b32.xlu0 %v4290, 96
        %v4362 = vpop.permute.xlu0 %4361
        %4363 = vrot.lane.b32.xlu0 %v4291, 96
        %v4364 = vpop.permute.xlu0 %4363
        %4365 = vrot.lane.b32.xlu0 %v4292, 96
        %v4366 = vpop.permute.xlu0 %4365
        %4367 = vrot.lane.b32.xlu0 %v4293, 96
        %v4368 = vpop.permute.xlu0 %4367
        %4369 = vrot.lane.b32.xlu0 %v4294, 96
        %v4370 = vpop.permute.xlu0 %4369
        %4371 = vrot.lane.b32.xlu0 %v4295, 96
        %v4372 = vpop.permute.xlu0 %4371
        %4373 = vrot.lane.b32.xlu0 %v4296, 96
        %v4374 = vpop.permute.xlu0 %4373
        %4375 = vrot.lane.b32.xlu0 %v4297, 96
        %v4376 = vpop.permute.xlu0 %4375
        %4377 = vrot.lane.b32.xlu0 %v4298, 96
        %v4378 = vpop.permute.xlu0 %4377
        %4379 = vrot.lane.b32.xlu0 %v4299, 96
        %v4380 = vpop.permute.xlu0 %4379
        %4381 = vrot.lane.b32.xlu0 %v4300, 96
        %v4382 = vpop.permute.xlu0 %4381
        %4383 = vrot.lane.b32.xlu0 %v4301, 96
        %v4384 = vpop.permute.xlu0 %4383
        %4385 = vrot.lane.b32.xlu0 %v4302, 96
        %v4386 = vpop.permute.xlu0 %4385
        %4387 = vrot.lane.b32.xlu0 %v4303, 96
        %v4388 = vpop.permute.xlu0 %4387
        %4389 = vrot.lane.b32.xlu0 %v4304, 96
        %v4390 = vpop.permute.xlu0 %4389
        %4391 = vrot.lane.b32.xlu0 %v4305, 96
        %v4392 = vpop.permute.xlu0 %4391
        %4393 = vrot.lane.b32.xlu0 %v4306, 96
        %v4394 = vpop.permute.xlu0 %4393
        %4395 = vrot.lane.b32.xlu0 %v4307, 96
        %v4396 = vpop.permute.xlu0 %4395
        %4397 = vrot.lane.b32.xlu0 %v4308, 96
        %v4398 = vpop.permute.xlu0 %4397
        %4399 = vrot.lane.b32.xlu0 %v4309, 96
        %v4400 = vpop.permute.xlu0 %4399
        %4401 = vrot.lane.b32.xlu0 %v4310, 96
        %v4402 = vpop.permute.xlu0 %4401
        %4403 = vrot.lane.b32.xlu0 %v4311, 96
        %v4404 = vpop.permute.xlu0 %4403
        %4405 = vrot.lane.b32.xlu0 %v4312, 96
        %v4406 = vpop.permute.xlu0 %4405
        %4407 = vrot.lane.b32.xlu0 %v4313, 96
        %v4408 = vpop.permute.xlu0 %4407
        %4409 = vrot.lane.b32.xlu0 %v4314, 96
        %v4410 = vpop.permute.xlu0 %4409
        %v4443 = vmul.f32 %v4027, %v4348
        %v4444 = vmul.f32 %v4028, %v4350
        %v4445 = vmul.f32 %v4029, %v4352
        %v4446 = vmul.f32 %v4030, %v4354
        %v4447 = vmul.f32 %v4031, %v4356
        %v4448 = vmul.f32 %v4032, %v4358
        %v4449 = vmul.f32 %v4033, %v4360
        %v4450 = vmul.f32 %v4034, %v4362
        %v4451 = vmul.f32 %v4035, %v4364
        %v4452 = vmul.f32 %v4036, %v4366
        %v4453 = vmul.f32 %v4037, %v4368
        %v4454 = vmul.f32 %v4038, %v4370
        %v4455 = vmul.f32 %v4039, %v4372
        %v4456 = vmul.f32 %v4040, %v4374
        %v4457 = vmul.f32 %v4041, %v4376
        %v4458 = vmul.f32 %v4042, %v4378
        %v4459 = vmul.f32 %v4043, %v4380
        %v4460 = vmul.f32 %v4044, %v4382
        %v4461 = vmul.f32 %v4045, %v4384
        %v4462 = vmul.f32 %v4046, %v4386
        %v4463 = vmul.f32 %v4047, %v4388
        %v4464 = vmul.f32 %v4048, %v4390
        %v4465 = vmul.f32 %v4049, %v4392
        %v4466 = vmul.f32 %v4050, %v4394
        %v4467 = vmul.f32 %v4051, %v4396
        %v4468 = vmul.f32 %v4052, %v4398
        %v4469 = vmul.f32 %v4053, %v4400
        %v4470 = vmul.f32 %v4054, %v4402
        %v4471 = vmul.f32 %v4055, %v4404
        %v4472 = vmul.f32 %v4056, %v4406
        %v4473 = vmul.f32 %v4057, %v4408
        %v4474 = vmul.f32 %v4058, %v4410
        %4476 = vrot.lane.b32.xlu0 %v2546, 96
        %v4477 = vpop.permute.xlu0 %4476
        %v4479 = vadd.f32 %v4443, %v4477
        %v4480 = vadd.f32 %v4444, %v4477
        %v4481 = vadd.f32 %v4445, %v4477
        %v4482 = vadd.f32 %v4446, %v4477
        %v4483 = vadd.f32 %v4447, %v4477
        %v4484 = vadd.f32 %v4448, %v4477
        %v4485 = vadd.f32 %v4449, %v4477
        %v4486 = vadd.f32 %v4450, %v4477
        %v4487 = vadd.f32 %v4451, %v4477
        %v4488 = vadd.f32 %v4452, %v4477
        %v4489 = vadd.f32 %v4453, %v4477
        %v4490 = vadd.f32 %v4454, %v4477
        %v4491 = vadd.f32 %v4455, %v4477
        %v4492 = vadd.f32 %v4456, %v4477
        %v4493 = vadd.f32 %v4457, %v4477
        %v4494 = vadd.f32 %v4458, %v4477
        %v4495 = vadd.f32 %v4459, %v4477
        %v4496 = vadd.f32 %v4460, %v4477
        %v4497 = vadd.f32 %v4461, %v4477
        %v4498 = vadd.f32 %v4462, %v4477
        %v4499 = vadd.f32 %v4463, %v4477
        %v4500 = vadd.f32 %v4464, %v4477
        %v4501 = vadd.f32 %v4465, %v4477
        %v4502 = vadd.f32 %v4466, %v4477
        %v4503 = vadd.f32 %v4467, %v4477
        %v4504 = vadd.f32 %v4468, %v4477
        %v4505 = vadd.f32 %v4469, %v4477
        %v4506 = vadd.f32 %v4470, %v4477
        %v4507 = vadd.f32 %v4471, %v4477
        %v4508 = vadd.f32 %v4472, %v4477
        %v4509 = vadd.f32 %v4473, %v4477
        %v4510 = vadd.f32 %v4474, %v4477
        %v4511 = vmul.f32 %v2547, %v2547
        %v4512 = vmul.f32 %v2548, %v2548
        %v4513 = vmul.f32 %v2549, %v2549
        %v4514 = vmul.f32 %v2550, %v2550
        %v4515 = vmul.f32 %v2551, %v2551
        %v4516 = vmul.f32 %v2552, %v2552
        %v4517 = vmul.f32 %v2553, %v2553
        %v4518 = vmul.f32 %v2554, %v2554
        %v4519 = vmul.f32 %v2555, %v2555
        %v4520 = vmul.f32 %v2556, %v2556
        %v4521 = vmul.f32 %v2557, %v2557
        %v4522 = vmul.f32 %v2558, %v2558
        %v4523 = vmul.f32 %v2559, %v2559
        %v4524 = vmul.f32 %v2560, %v2560
        %v4525 = vmul.f32 %v2561, %v2561
        %v4526 = vmul.f32 %v2562, %v2562
        %v4527 = vmul.f32 %v2563, %v2563
        %v4528 = vmul.f32 %v2564, %v2564
        %v4529 = vmul.f32 %v2565, %v2565
        %v4530 = vmul.f32 %v2566, %v2566
        %v4531 = vmul.f32 %v2567, %v2567
        %v4532 = vmul.f32 %v2568, %v2568
        %v4533 = vmul.f32 %v2569, %v2569
        %v4534 = vmul.f32 %v2570, %v2570
        %v4535 = vmul.f32 %v2571, %v2571
        %v4536 = vmul.f32 %v2572, %v2572
        %v4537 = vmul.f32 %v2573, %v2573
        %v4538 = vmul.f32 %v2574, %v2574
        %v4539 = vmul.f32 %v2575, %v2575
        %v4540 = vmul.f32 %v2576, %v2576
        %v4541 = vmul.f32 %v2577, %v2577
        %v4542 = vmul.f32 %v2578, %v2578
        %v4543 = vsel %vm2089, %v4511, 0.0
        %4544 = vadd.xlane.f32.xlu0 %v4543
        %v4545 = vpop.xlane.xlu0 %4544
        %v4546 = vsel %vm2089, %v4512, 0.0
        %4547 = vadd.xlane.f32.xlu0 %v4546
        %v4548 = vpop.xlane.xlu0 %4547
        %v4549 = vsel %vm2089, %v4513, 0.0
        %4550 = vadd.xlane.f32.xlu0 %v4549
        %v4551 = vpop.xlane.xlu0 %4550
        %v4552 = vsel %vm2089, %v4514, 0.0
        %4553 = vadd.xlane.f32.xlu0 %v4552
        %v4554 = vpop.xlane.xlu0 %4553
        %v4555 = vsel %vm2089, %v4515, 0.0
        %4556 = vadd.xlane.f32.xlu0 %v4555
        %v4557 = vpop.xlane.xlu0 %4556
        %v4558 = vsel %vm2089, %v4516, 0.0
        %4559 = vadd.xlane.f32.xlu0 %v4558
        %v4560 = vpop.xlane.xlu0 %4559
        %v4561 = vsel %vm2089, %v4517, 0.0
        %4562 = vadd.xlane.f32.xlu0 %v4561
        %v4563 = vpop.xlane.xlu0 %4562
        %v4564 = vsel %vm2089, %v4518, 0.0
        %4565 = vadd.xlane.f32.xlu0 %v4564
        %v4566 = vpop.xlane.xlu0 %4565
        %v4567 = vsel %vm2089, %v4519, 0.0
        %4568 = vadd.xlane.f32.xlu0 %v4567
        %v4569 = vpop.xlane.xlu0 %4568
        %v4570 = vsel %vm2089, %v4520, 0.0
        %4571 = vadd.xlane.f32.xlu0 %v4570
        %v4572 = vpop.xlane.xlu0 %4571
        %v4573 = vsel %vm2089, %v4521, 0.0
        %4574 = vadd.xlane.f32.xlu0 %v4573
        %v4575 = vpop.xlane.xlu0 %4574
        %v4576 = vsel %vm2089, %v4522, 0.0
        %4577 = vadd.xlane.f32.xlu0 %v4576
        %v4578 = vpop.xlane.xlu0 %4577
        %v4579 = vsel %vm2089, %v4523, 0.0
        %4580 = vadd.xlane.f32.xlu0 %v4579
        %v4581 = vpop.xlane.xlu0 %4580
        %v4582 = vsel %vm2089, %v4524, 0.0
        %4583 = vadd.xlane.f32.xlu0 %v4582
        %v4584 = vpop.xlane.xlu0 %4583
        %v4585 = vsel %vm2089, %v4525, 0.0
        %4586 = vadd.xlane.f32.xlu0 %v4585
        %v4587 = vpop.xlane.xlu0 %4586
        %v4588 = vsel %vm2089, %v4526, 0.0
        %4589 = vadd.xlane.f32.xlu0 %v4588
        %v4590 = vpop.xlane.xlu0 %4589
        %v4591 = vsel %vm2089, %v4527, 0.0
        %4592 = vadd.xlane.f32.xlu0 %v4591
        %v4593 = vpop.xlane.xlu0 %4592
        %v4594 = vsel %vm2089, %v4528, 0.0
        %4595 = vadd.xlane.f32.xlu0 %v4594
        %v4596 = vpop.xlane.xlu0 %4595
        %v4597 = vsel %vm2089, %v4529, 0.0
        %4598 = vadd.xlane.f32.xlu0 %v4597
        %v4599 = vpop.xlane.xlu0 %4598
        %v4600 = vsel %vm2089, %v4530, 0.0
        %4601 = vadd.xlane.f32.xlu0 %v4600
        %v4602 = vpop.xlane.xlu0 %4601
        %v4603 = vsel %vm2089, %v4531, 0.0
        %4604 = vadd.xlane.f32.xlu0 %v4603
        %v4605 = vpop.xlane.xlu0 %4604
        %v4606 = vsel %vm2089, %v4532, 0.0
        %4607 = vadd.xlane.f32.xlu0 %v4606
        %v4608 = vpop.xlane.xlu0 %4607
        %v4609 = vsel %vm2089, %v4533, 0.0
        %4610 = vadd.xlane.f32.xlu0 %v4609
        %v4611 = vpop.xlane.xlu0 %4610
        %v4612 = vsel %vm2089, %v4534, 0.0
        %4613 = vadd.xlane.f32.xlu0 %v4612
        %v4614 = vpop.xlane.xlu0 %4613
        %v4615 = vsel %vm2089, %v4535, 0.0
        %4616 = vadd.xlane.f32.xlu0 %v4615
        %v4617 = vpop.xlane.xlu0 %4616
        %v4618 = vsel %vm2089, %v4536, 0.0
        %4619 = vadd.xlane.f32.xlu0 %v4618
        %v4620 = vpop.xlane.xlu0 %4619
        %v4621 = vsel %vm2089, %v4537, 0.0
        %4622 = vadd.xlane.f32.xlu0 %v4621
        %v4623 = vpop.xlane.xlu0 %4622
        %v4624 = vsel %vm2089, %v4538, 0.0
        %4625 = vadd.xlane.f32.xlu0 %v4624
        %v4626 = vpop.xlane.xlu0 %4625
        %v4627 = vsel %vm2089, %v4539, 0.0
        %4628 = vadd.xlane.f32.xlu0 %v4627
        %v4629 = vpop.xlane.xlu0 %4628
        %v4630 = vsel %vm2089, %v4540, 0.0
        %4631 = vadd.xlane.f32.xlu0 %v4630
        %v4632 = vpop.xlane.xlu0 %4631
        %v4633 = vsel %vm2089, %v4541, 0.0
        %4634 = vadd.xlane.f32.xlu0 %v4633
        %v4635 = vpop.xlane.xlu0 %4634
        %v4636 = vsel %vm2089, %v4542, 0.0
        %4637 = vadd.xlane.f32.xlu0 %v4636
        %v4638 = vpop.xlane.xlu0 %4637
        %v4639 = vmul.f32 %v4479, %v4479
        %v4640 = vmul.f32 %v4480, %v4480
        %v4641 = vmul.f32 %v4481, %v4481
        %v4642 = vmul.f32 %v4482, %v4482
        %v4643 = vmul.f32 %v4483, %v4483
        %v4644 = vmul.f32 %v4484, %v4484
        %v4645 = vmul.f32 %v4485, %v4485
        %v4646 = vmul.f32 %v4486, %v4486
        %v4647 = vmul.f32 %v4487, %v4487
        %v4648 = vmul.f32 %v4488, %v4488
        %v4649 = vmul.f32 %v4489, %v4489
        %v4650 = vmul.f32 %v4490, %v4490
        %v4651 = vmul.f32 %v4491, %v4491
        %v4652 = vmul.f32 %v4492, %v4492
        %v4653 = vmul.f32 %v4493, %v4493
        %v4654 = vmul.f32 %v4494, %v4494
        %v4655 = vmul.f32 %v4495, %v4495
        %v4656 = vmul.f32 %v4496, %v4496
        %v4657 = vmul.f32 %v4497, %v4497
        %v4658 = vmul.f32 %v4498, %v4498
        %v4659 = vmul.f32 %v4499, %v4499
        %v4660 = vmul.f32 %v4500, %v4500
        %v4661 = vmul.f32 %v4501, %v4501
        %v4662 = vmul.f32 %v4502, %v4502
        %v4663 = vmul.f32 %v4503, %v4503
        %v4664 = vmul.f32 %v4504, %v4504
        %v4665 = vmul.f32 %v4505, %v4505
        %v4666 = vmul.f32 %v4506, %v4506
        %v4667 = vmul.f32 %v4507, %v4507
        %v4668 = vmul.f32 %v4508, %v4508
        %v4669 = vmul.f32 %v4509, %v4509
        %v4670 = vmul.f32 %v4510, %v4510
        %v4671 = vsel %vm2089, %v4639, 0.0
        %4672 = vadd.xlane.f32.xlu0 %v4671
        %v4673 = vpop.xlane.xlu0 %4672
        %v4674 = vsel %vm2089, %v4640, 0.0
        %4675 = vadd.xlane.f32.xlu0 %v4674
        %v4676 = vpop.xlane.xlu0 %4675
        %v4677 = vsel %vm2089, %v4641, 0.0
        %4678 = vadd.xlane.f32.xlu0 %v4677
        %v4679 = vpop.xlane.xlu0 %4678
        %v4680 = vsel %vm2089, %v4642, 0.0
        %4681 = vadd.xlane.f32.xlu0 %v4680
        %v4682 = vpop.xlane.xlu0 %4681
        %v4683 = vsel %vm2089, %v4643, 0.0
        %4684 = vadd.xlane.f32.xlu0 %v4683
        %v4685 = vpop.xlane.xlu0 %4684
        %v4686 = vsel %vm2089, %v4644, 0.0
        %4687 = vadd.xlane.f32.xlu0 %v4686
        %v4688 = vpop.xlane.xlu0 %4687
        %v4689 = vsel %vm2089, %v4645, 0.0
        %4690 = vadd.xlane.f32.xlu0 %v4689
        %v4691 = vpop.xlane.xlu0 %4690
        %v4692 = vsel %vm2089, %v4646, 0.0
        %4693 = vadd.xlane.f32.xlu0 %v4692
        %v4694 = vpop.xlane.xlu0 %4693
        %v4695 = vsel %vm2089, %v4647, 0.0
        %4696 = vadd.xlane.f32.xlu0 %v4695
        %v4697 = vpop.xlane.xlu0 %4696
        %v4698 = vsel %vm2089, %v4648, 0.0
        %4699 = vadd.xlane.f32.xlu0 %v4698
        %v4700 = vpop.xlane.xlu0 %4699
        %v4701 = vsel %vm2089, %v4649, 0.0
        %4702 = vadd.xlane.f32.xlu0 %v4701
        %v4703 = vpop.xlane.xlu0 %4702
        %v4704 = vsel %vm2089, %v4650, 0.0
        %4705 = vadd.xlane.f32.xlu0 %v4704
        %v4706 = vpop.xlane.xlu0 %4705
        %v4707 = vsel %vm2089, %v4651, 0.0
        %4708 = vadd.xlane.f32.xlu0 %v4707
        %v4709 = vpop.xlane.xlu0 %4708
        %v4710 = vsel %vm2089, %v4652, 0.0
        %4711 = vadd.xlane.f32.xlu0 %v4710
        %v4712 = vpop.xlane.xlu0 %4711
        %v4713 = vsel %vm2089, %v4653, 0.0
        %4714 = vadd.xlane.f32.xlu0 %v4713
        %v4715 = vpop.xlane.xlu0 %4714
        %v4716 = vsel %vm2089, %v4654, 0.0
        %4717 = vadd.xlane.f32.xlu0 %v4716
        %v4718 = vpop.xlane.xlu0 %4717
        %v4719 = vsel %vm2089, %v4655, 0.0
        %4720 = vadd.xlane.f32.xlu0 %v4719
        %v4721 = vpop.xlane.xlu0 %4720
        %v4722 = vsel %vm2089, %v4656, 0.0
        %4723 = vadd.xlane.f32.xlu0 %v4722
        %v4724 = vpop.xlane.xlu0 %4723
        %v4725 = vsel %vm2089, %v4657, 0.0
        %4726 = vadd.xlane.f32.xlu0 %v4725
        %v4727 = vpop.xlane.xlu0 %4726
        %v4728 = vsel %vm2089, %v4658, 0.0
        %4729 = vadd.xlane.f32.xlu0 %v4728
        %v4730 = vpop.xlane.xlu0 %4729
        %v4731 = vsel %vm2089, %v4659, 0.0
        %4732 = vadd.xlane.f32.xlu0 %v4731
        %v4733 = vpop.xlane.xlu0 %4732
        %v4734 = vsel %vm2089, %v4660, 0.0
        %4735 = vadd.xlane.f32.xlu0 %v4734
        %v4736 = vpop.xlane.xlu0 %4735
        %v4737 = vsel %vm2089, %v4661, 0.0
        %4738 = vadd.xlane.f32.xlu0 %v4737
        %v4739 = vpop.xlane.xlu0 %4738
        %v4740 = vsel %vm2089, %v4662, 0.0
        %4741 = vadd.xlane.f32.xlu0 %v4740
        %v4742 = vpop.xlane.xlu0 %4741
        %v4743 = vsel %vm2089, %v4663, 0.0
        %4744 = vadd.xlane.f32.xlu0 %v4743
        %v4745 = vpop.xlane.xlu0 %4744
        %v4746 = vsel %vm2089, %v4664, 0.0
        %4747 = vadd.xlane.f32.xlu0 %v4746
        %v4748 = vpop.xlane.xlu0 %4747
        %v4749 = vsel %vm2089, %v4665, 0.0
        %4750 = vadd.xlane.f32.xlu0 %v4749
        %v4751 = vpop.xlane.xlu0 %4750
        %v4752 = vsel %vm2089, %v4666, 0.0
        %4753 = vadd.xlane.f32.xlu0 %v4752
        %v4754 = vpop.xlane.xlu0 %4753
        %v4755 = vsel %vm2089, %v4667, 0.0
        %4756 = vadd.xlane.f32.xlu0 %v4755
        %v4757 = vpop.xlane.xlu0 %4756
        %v4758 = vsel %vm2089, %v4668, 0.0
        %4759 = vadd.xlane.f32.xlu0 %v4758
        %v4760 = vpop.xlane.xlu0 %4759
        %v4761 = vsel %vm2089, %v4669, 0.0
        %4762 = vadd.xlane.f32.xlu0 %v4761
        %v4763 = vpop.xlane.xlu0 %4762
        %v4764 = vsel %vm2089, %v4670, 0.0
        %4765 = vadd.xlane.f32.xlu0 %v4764
        %v4766 = vpop.xlane.xlu0 %4765
        %v4767 = vadd.f32 %v4545, %v4673
        %v4768 = vadd.f32 %v4548, %v4676
        %v4769 = vadd.f32 %v4551, %v4679
        %v4770 = vadd.f32 %v4554, %v4682
        %v4771 = vadd.f32 %v4557, %v4685
        %v4772 = vadd.f32 %v4560, %v4688
        %v4773 = vadd.f32 %v4563, %v4691
        %v4774 = vadd.f32 %v4566, %v4694
        %v4775 = vadd.f32 %v4569, %v4697
        %v4776 = vadd.f32 %v4572, %v4700
        %v4777 = vadd.f32 %v4575, %v4703
        %v4778 = vadd.f32 %v4578, %v4706
        %v4779 = vadd.f32 %v4581, %v4709
        %v4780 = vadd.f32 %v4584, %v4712
        %v4781 = vadd.f32 %v4587, %v4715
        %v4782 = vadd.f32 %v4590, %v4718
        %v4783 = vadd.f32 %v4593, %v4721
        %v4784 = vadd.f32 %v4596, %v4724
        %v4785 = vadd.f32 %v4599, %v4727
        %v4786 = vadd.f32 %v4602, %v4730
        %v4787 = vadd.f32 %v4605, %v4733
        %v4788 = vadd.f32 %v4608, %v4736
        %v4789 = vadd.f32 %v4611, %v4739
        %v4790 = vadd.f32 %v4614, %v4742
        %v4791 = vadd.f32 %v4617, %v4745
        %v4792 = vadd.f32 %v4620, %v4748
        %v4793 = vadd.f32 %v4623, %v4751
        %v4794 = vadd.f32 %v4626, %v4754
        %v4795 = vadd.f32 %v4629, %v4757
        %v4796 = vadd.f32 %v4632, %v4760
        %v4797 = vadd.f32 %v4635, %v4763
        %v4798 = vadd.f32 %v4638, %v4766
        %v4799 = vmax.f32 %v4767, 1e-24
        %v4800 = vmax.f32 %v4768, 1e-24
        %v4801 = vmax.f32 %v4769, 1e-24
        %v4802 = vmax.f32 %v4770, 1e-24
        %v4803 = vmax.f32 %v4771, 1e-24
        %v4804 = vmax.f32 %v4772, 1e-24
        %v4805 = vmax.f32 %v4773, 1e-24
        %v4806 = vmax.f32 %v4774, 1e-24
        %v4807 = vmax.f32 %v4775, 1e-24
        %v4808 = vmax.f32 %v4776, 1e-24
        %v4809 = vmax.f32 %v4777, 1e-24
        %v4810 = vmax.f32 %v4778, 1e-24
        %v4811 = vmax.f32 %v4779, 1e-24
        %v4812 = vmax.f32 %v4780, 1e-24
        %v4813 = vmax.f32 %v4781, 1e-24
        %v4814 = vmax.f32 %v4782, 1e-24
        %v4815 = vmax.f32 %v4783, 1e-24
        %v4816 = vmax.f32 %v4784, 1e-24
        %v4817 = vmax.f32 %v4785, 1e-24
        %v4818 = vmax.f32 %v4786, 1e-24
        %v4819 = vmax.f32 %v4787, 1e-24
        %v4820 = vmax.f32 %v4788, 1e-24
        %v4821 = vmax.f32 %v4789, 1e-24
        %v4822 = vmax.f32 %v4790, 1e-24
        %v4823 = vmax.f32 %v4791, 1e-24
        %v4824 = vmax.f32 %v4792, 1e-24
        %v4825 = vmax.f32 %v4793, 1e-24
        %v4826 = vmax.f32 %v4794, 1e-24
        %v4827 = vmax.f32 %v4795, 1e-24
        %v4828 = vmax.f32 %v4796, 1e-24
        %v4829 = vmax.f32 %v4797, 1e-24
        %v4830 = vmax.f32 %v4798, 1e-24
        %v4831 = vrsqrt.pop %v4799
        %v4832 = vrsqrt.pop %v4800
        %v4833 = vrsqrt.pop %v4801
        %v4834 = vrsqrt.pop %v4802
        %v4835 = vrsqrt.pop %v4803
        %v4836 = vrsqrt.pop %v4804
        %v4837 = vrsqrt.pop %v4805
        %v4838 = vrsqrt.pop %v4806
        %v4839 = vrsqrt.pop %v4807
        %v4840 = vrsqrt.pop %v4808
        %v4841 = vrsqrt.pop %v4809
        %v4842 = vrsqrt.pop %v4810
        %v4843 = vrsqrt.pop %v4811
        %v4844 = vrsqrt.pop %v4812
        %v4845 = vrsqrt.pop %v4813
        %v4846 = vrsqrt.pop %v4814
        %v4847 = vrsqrt.pop %v4815
        %v4848 = vrsqrt.pop %v4816
        %v4849 = vrsqrt.pop %v4817
        %v4850 = vrsqrt.pop %v4818
        %v4851 = vrsqrt.pop %v4819
        %v4852 = vrsqrt.pop %v4820
        %v4853 = vrsqrt.pop %v4821
        %v4854 = vrsqrt.pop %v4822
        %v4855 = vrsqrt.pop %v4823
        %v4856 = vrsqrt.pop %v4824
        %v4857 = vrsqrt.pop %v4825
        %v4858 = vrsqrt.pop %v4826
        %v4859 = vrsqrt.pop %v4827
        %v4860 = vrsqrt.pop %v4828
        %v4861 = vrsqrt.pop %v4829
        %v4862 = vrsqrt.pop %v4830
        %v4863 = vmul.f32 %v2547, %v4831
        %v4864 = vmul.f32 %v2548, %v4832
        %v4865 = vmul.f32 %v2549, %v4833
        %v4866 = vmul.f32 %v2550, %v4834
        %v4867 = vmul.f32 %v2551, %v4835
        %v4868 = vmul.f32 %v2552, %v4836
        %v4869 = vmul.f32 %v2553, %v4837
        %v4870 = vmul.f32 %v2554, %v4838
        %v4871 = vmul.f32 %v2555, %v4839
        %v4872 = vmul.f32 %v2556, %v4840
        %v4873 = vmul.f32 %v2557, %v4841
        %v4874 = vmul.f32 %v2558, %v4842
        %v4875 = vmul.f32 %v2559, %v4843
        %v4876 = vmul.f32 %v2560, %v4844
        %v4877 = vmul.f32 %v2561, %v4845
        %v4878 = vmul.f32 %v2562, %v4846
        %v4879 = vmul.f32 %v2563, %v4847
        %v4880 = vmul.f32 %v2564, %v4848
        %v4881 = vmul.f32 %v2565, %v4849
        %v4882 = vmul.f32 %v2566, %v4850
        %v4883 = vmul.f32 %v2567, %v4851
        %v4884 = vmul.f32 %v2568, %v4852
        %v4885 = vmul.f32 %v2569, %v4853
        %v4886 = vmul.f32 %v2570, %v4854
        %v4887 = vmul.f32 %v2571, %v4855
        %v4888 = vmul.f32 %v2572, %v4856
        %v4889 = vmul.f32 %v2573, %v4857
        %v4890 = vmul.f32 %v2574, %v4858
        %v4891 = vmul.f32 %v2575, %v4859
        %v4892 = vmul.f32 %v2576, %v4860
        %v4893 = vmul.f32 %v2577, %v4861
        %v4894 = vmul.f32 %v2578, %v4862
        %v4895 = vmul.f32 %v4479, %v4831
        %v4896 = vmul.f32 %v4480, %v4832
        %v4897 = vmul.f32 %v4481, %v4833
        %v4898 = vmul.f32 %v4482, %v4834
        %v4899 = vmul.f32 %v4483, %v4835
        %v4900 = vmul.f32 %v4484, %v4836
        %v4901 = vmul.f32 %v4485, %v4837
        %v4902 = vmul.f32 %v4486, %v4838
        %v4903 = vmul.f32 %v4487, %v4839
        %v4904 = vmul.f32 %v4488, %v4840
        %v4905 = vmul.f32 %v4489, %v4841
        %v4906 = vmul.f32 %v4490, %v4842
        %v4907 = vmul.f32 %v4491, %v4843
        %v4908 = vmul.f32 %v4492, %v4844
        %v4909 = vmul.f32 %v4493, %v4845
        %v4910 = vmul.f32 %v4494, %v4846
        %v4911 = vmul.f32 %v4495, %v4847
        %v4912 = vmul.f32 %v4496, %v4848
        %v4913 = vmul.f32 %v4497, %v4849
        %v4914 = vmul.f32 %v4498, %v4850
        %v4915 = vmul.f32 %v4499, %v4851
        %v4916 = vmul.f32 %v4500, %v4852
        %v4917 = vmul.f32 %v4501, %v4853
        %v4918 = vmul.f32 %v4502, %v4854
        %v4919 = vmul.f32 %v4503, %v4855
        %v4920 = vmul.f32 %v4504, %v4856
        %v4921 = vmul.f32 %v4505, %v4857
        %v4922 = vmul.f32 %v4506, %v4858
        %v4923 = vmul.f32 %v4507, %v4859
        %v4924 = vmul.f32 %v4508, %v4860
        %v4925 = vmul.f32 %v4509, %v4861
        %v4926 = vmul.f32 %v4510, %v4862
        %4959 = vrot.lane.b32.xlu0 %v4895, 32
        %v4960 = vpop.permute.xlu0 %4959
        %4961 = vrot.lane.b32.xlu0 %v4896, 32
        %v4962 = vpop.permute.xlu0 %4961
        %4963 = vrot.lane.b32.xlu0 %v4897, 32
        %v4964 = vpop.permute.xlu0 %4963
        %4965 = vrot.lane.b32.xlu0 %v4898, 32
        %v4966 = vpop.permute.xlu0 %4965
        %4967 = vrot.lane.b32.xlu0 %v4899, 32
        %v4968 = vpop.permute.xlu0 %4967
        %4969 = vrot.lane.b32.xlu0 %v4900, 32
        %v4970 = vpop.permute.xlu0 %4969
        %4971 = vrot.lane.b32.xlu0 %v4901, 32
        %v4972 = vpop.permute.xlu0 %4971
        %4973 = vrot.lane.b32.xlu0 %v4902, 32
        %v4974 = vpop.permute.xlu0 %4973
        %4975 = vrot.lane.b32.xlu0 %v4903, 32
        %v4976 = vpop.permute.xlu0 %4975
        %4977 = vrot.lane.b32.xlu0 %v4904, 32
        %v4978 = vpop.permute.xlu0 %4977
        %4979 = vrot.lane.b32.xlu0 %v4905, 32
        %v4980 = vpop.permute.xlu0 %4979
        %4981 = vrot.lane.b32.xlu0 %v4906, 32
        %v4982 = vpop.permute.xlu0 %4981
        %4983 = vrot.lane.b32.xlu0 %v4907, 32
        %v4984 = vpop.permute.xlu0 %4983
        %4985 = vrot.lane.b32.xlu0 %v4908, 32
        %v4986 = vpop.permute.xlu0 %4985
        %4987 = vrot.lane.b32.xlu0 %v4909, 32
        %v4988 = vpop.permute.xlu0 %4987
        %4989 = vrot.lane.b32.xlu0 %v4910, 32
        %v4990 = vpop.permute.xlu0 %4989
        %4991 = vrot.lane.b32.xlu0 %v4911, 32
        %v4992 = vpop.permute.xlu0 %4991
        %4993 = vrot.lane.b32.xlu0 %v4912, 32
        %v4994 = vpop.permute.xlu0 %4993
        %4995 = vrot.lane.b32.xlu0 %v4913, 32
        %v4996 = vpop.permute.xlu0 %4995
        %4997 = vrot.lane.b32.xlu0 %v4914, 32
        %v4998 = vpop.permute.xlu0 %4997
        %4999 = vrot.lane.b32.xlu0 %v4915, 32
        %v5000 = vpop.permute.xlu0 %4999
        %5001 = vrot.lane.b32.xlu0 %v4916, 32
        %v5002 = vpop.permute.xlu0 %5001
        %5003 = vrot.lane.b32.xlu0 %v4917, 32
        %v5004 = vpop.permute.xlu0 %5003
        %5005 = vrot.lane.b32.xlu0 %v4918, 32
        %v5006 = vpop.permute.xlu0 %5005
        %5007 = vrot.lane.b32.xlu0 %v4919, 32
        %v5008 = vpop.permute.xlu0 %5007
        %5009 = vrot.lane.b32.xlu0 %v4920, 32
        %v5010 = vpop.permute.xlu0 %5009
        %5011 = vrot.lane.b32.xlu0 %v4921, 32
        %v5012 = vpop.permute.xlu0 %5011
        %5013 = vrot.lane.b32.xlu0 %v4922, 32
        %v5014 = vpop.permute.xlu0 %5013
        %5015 = vrot.lane.b32.xlu0 %v4923, 32
        %v5016 = vpop.permute.xlu0 %5015
        %5017 = vrot.lane.b32.xlu0 %v4924, 32
        %v5018 = vpop.permute.xlu0 %5017
        %5019 = vrot.lane.b32.xlu0 %v4925, 32
        %v5020 = vpop.permute.xlu0 %5019
        %5021 = vrot.lane.b32.xlu0 %v4926, 32
        %v5022 = vpop.permute.xlu0 %5021
        %v5055 = vsel %vm2089, %v4863, %v4960
        %v5056 = vsel %vm2089, %v4864, %v4962
        %v5057 = vsel %vm2089, %v4865, %v4964
        %v5058 = vsel %vm2089, %v4866, %v4966
        %v5059 = vsel %vm2089, %v4867, %v4968
        %v5060 = vsel %vm2089, %v4868, %v4970
        %v5061 = vsel %vm2089, %v4869, %v4972
        %v5062 = vsel %vm2089, %v4870, %v4974
        %v5063 = vsel %vm2089, %v4871, %v4976
        %v5064 = vsel %vm2089, %v4872, %v4978
        %v5065 = vsel %vm2089, %v4873, %v4980
        %v5066 = vsel %vm2089, %v4874, %v4982
        %v5067 = vsel %vm2089, %v4875, %v4984
        %v5068 = vsel %vm2089, %v4876, %v4986
        %v5069 = vsel %vm2089, %v4877, %v4988
        %v5070 = vsel %vm2089, %v4878, %v4990
        %v5071 = vsel %vm2089, %v4879, %v4992
        %v5072 = vsel %vm2089, %v4880, %v4994
        %v5073 = vsel %vm2089, %v4881, %v4996
        %v5074 = vsel %vm2089, %v4882, %v4998
        %v5075 = vsel %vm2089, %v4883, %v5000
        %v5076 = vsel %vm2089, %v4884, %v5002
        %v5077 = vsel %vm2089, %v4885, %v5004
        %v5078 = vsel %vm2089, %v4886, %v5006
        %v5079 = vsel %vm2089, %v4887, %v5008
        %v5080 = vsel %vm2089, %v4888, %v5010
        %v5081 = vsel %vm2089, %v4889, %v5012
        %v5082 = vsel %vm2089, %v4890, %v5014
        %v5083 = vsel %vm2089, %v4891, %v5016
        %v5084 = vsel %vm2089, %v4892, %v5018
        %v5085 = vsel %vm2089, %v4893, %v5020
        %v5086 = vsel %vm2089, %v4894, %v5022
        %v5087 = vpack.c.bf16 %v5056, %v5055
        %v5088 = vpack.c.bf16 %v5058, %v5057
        %v5089 = vpack.c.bf16 %v5060, %v5059
        %v5090 = vpack.c.bf16 %v5062, %v5061
        %v5091 = vpack.c.bf16 %v5064, %v5063
        %v5092 = vpack.c.bf16 %v5066, %v5065
        %v5093 = vpack.c.bf16 %v5068, %v5067
        %v5094 = vpack.c.bf16 %v5070, %v5069
        %v5095 = vpack.c.bf16 %v5072, %v5071
        %v5096 = vpack.c.bf16 %v5074, %v5073
        %v5097 = vpack.c.bf16 %v5076, %v5075
        %v5098 = vpack.c.bf16 %v5078, %v5077
        %v5099 = vpack.c.bf16 %v5080, %v5079
        %v5100 = vpack.c.bf16 %v5082, %v5081
        %v5101 = vpack.c.bf16 %v5084, %v5083
        %v5102 = vpack.c.bf16 %v5086, %v5085
        %v5103 = vld [vmem:[%s5] sm:$0xf]
        %v5104 = vld [vmem:[%s5 + $0x4] sm:$0xf]
        %v5105 = vld [vmem:[%s5 + $0x8] sm:$0xf]
        %v5106 = vld [vmem:[%s5 + $0xc] sm:$0xf]
        %v5107 = vld [vmem:[%s5 + $0x10] sm:$0xf]
        %v5108 = vld [vmem:[%s5 + $0x14] sm:$0xf]
        %v5109 = vld [vmem:[%s5 + $0x18] sm:$0xf]
        %v5110 = vld [vmem:[%s5 + $0x1c] sm:$0xf]
        %v5111 = vld [vmem:[%s6] sm:$0x1]
        %v5113 = vlaneseq
        %v5114 = vshrl.u32 %v5113, 7
        %v5115 = vsub.s32 0, %v5114
        %v5116 = vrot.slane %v5111, %v5115
        %v5126 = vunpack.c.l.b16 %v5103
        %v5127 = vunpack.c.l.b16 %v5104
        %v5128 = vunpack.c.l.b16 %v5105
        %v5129 = vunpack.c.l.b16 %v5106
        %v5130 = vunpack.c.l.b16 %v5107
        %v5131 = vunpack.c.l.b16 %v5108
        %v5132 = vunpack.c.l.b16 %v5109
        %v5133 = vunpack.c.l.b16 %v5110
        %v5134 = vpack.c.b16 %v5127, %v5126
        %v5135 = vpack.c.b16 %v5129, %v5128
        %v5136 = vpack.c.b16 %v5131, %v5130
        %v5137 = vpack.c.b16 %v5133, %v5132
        %v5143 = vsel %vm764, %v5087, 0
        %v5146 = vsel %vm764, %v5088, 0
        %v5149 = vsel %vm764, %v5089, 0
        %v5152 = vsel %vm764, %v5090, 0
        %v5155 = vsel %vm764, %v5091, 0
        %v5158 = vsel %vm764, %v5092, 0
        %v5161 = vsel %vm764, %v5093, 0
        %v5164 = vsel %vm764, %v5094, 0
        %v5167 = vsel %vm764, %v5095, 0
        %v5170 = vsel %vm764, %v5096, 0
        %v5173 = vsel %vm764, %v5097, 0
        %v5176 = vsel %vm764, %v5098, 0
        %v5179 = vsel %vm764, %v5099, 0
        %v5182 = vsel %vm764, %v5100, 0
        %v5185 = vsel %vm764, %v5101, 0
        %v5188 = vsel %vm764, %v5102, 0
        %5190 = vmatprep.subr.bf16.mxu0 0
        %5191 = vmatpush1.bf16.msra.mxu0 0
        %5192 = vmatprep.subr.bf16.mxu0 0
        %5193 = vmatpush1.bf16.msra.mxu0 0
        %5194 = vmatprep.subr.bf16.mxu0 0
        %5195 = vmatpush1.bf16.msra.mxu0 0
        %5196 = vmatprep.subr.bf16.mxu0 0
        %5197 = vmatpush1.bf16.msra.mxu0 0
        %5198 = vmatprep.subr.bf16.mxu0 0
        %5199 = vmatpush1.bf16.msra.mxu0 %v5137
        %5200 = vmatprep.subr.bf16.mxu0 0
        %5201 = vmatpush1.bf16.msra.mxu0 %v5136
        %5202 = vmatprep.subr.bf16.mxu0 0
        %5203 = vmatpush1.bf16.msra.mxu0 %v5135
        %5204 = vmatprep.subr.bf16.mxu0 0
        %5205 = vmatpush1.bf16.msra.mxu0 %v5134
        %5206 = vmatprep.subr.bf16.mxu0 0
        %5207 = vmatpush2.bf16.msra.mxu0 0
        %5208 = vmatprep.subr.bf16.mxu0 0
        %5209 = vmatpush2.bf16.msra.mxu0 0
        %5210 = vmatprep.subr.bf16.mxu0 0
        %5211 = vmatpush2.bf16.msra.mxu0 0
        %5212 = vmatprep.subr.bf16.mxu0 0
        %5213 = vmatpush2.bf16.msra.mxu0 0
        %5214 = vmatprep.subr.bf16.mxu0 0
        %5215 = vmatpush2.bf16.msra.mxu0 0
        %5216 = vmatprep.subr.bf16.mxu0 0
        %5217 = vmatpush2.bf16.msra.mxu0 0
        %5218 = vmatprep.subr.bf16.mxu0 0
        %5219 = vmatpush2.bf16.msra.mxu0 0
        %5220 = vmatprep.subr.bf16.mxu0 0
        %5221 = vmatpush2.bf16.msra.mxu0 0
        %5222 = vmatprep.mubr.bf16.mxu0 0
        %5223 = vmatmul.mubr.bf16.gmra.mxu0 %v5143
        %v5224 = vpop.f32.mrf.mxu0
        %v5225 = vadd.f32 %v5116, %v5224
        %v5226 = vpop.f32.mrf.mxu0
        %v5227 = vpop.f32.mrf.mxu0
        %v5228 = vadd.f32 %v5116, %v5227
        %v5229 = vpop.f32.mrf.mxu0
        %5230 = vmatprep.mubr.bf16.mxu0 0
        %5231 = vmatmul.mubr.bf16.gmra.mxu0 %v5146
        %v5232 = vpop.f32.mrf.mxu0
        %v5233 = vadd.f32 %v5116, %v5232
        %v5234 = vpop.f32.mrf.mxu0
        %v5235 = vpop.f32.mrf.mxu0
        %v5236 = vadd.f32 %v5116, %v5235
        %v5237 = vpop.f32.mrf.mxu0
        %5238 = vmatprep.mubr.bf16.mxu0 0
        %5239 = vmatmul.mubr.bf16.gmra.mxu0 %v5149
        %v5240 = vpop.f32.mrf.mxu0
        %v5241 = vadd.f32 %v5116, %v5240
        %v5242 = vpop.f32.mrf.mxu0
        %v5243 = vpop.f32.mrf.mxu0
        %v5244 = vadd.f32 %v5116, %v5243
        %v5245 = vpop.f32.mrf.mxu0
        %5246 = vmatprep.mubr.bf16.mxu0 0
        %5247 = vmatmul.mubr.bf16.gmra.mxu0 %v5152
        %v5248 = vpop.f32.mrf.mxu0
        %v5249 = vadd.f32 %v5116, %v5248
        %v5250 = vpop.f32.mrf.mxu0
        %v5251 = vpop.f32.mrf.mxu0
        %v5252 = vadd.f32 %v5116, %v5251
        %v5253 = vpop.f32.mrf.mxu0
        %5254 = vmatprep.mubr.bf16.mxu0 0
        %5255 = vmatmul.mubr.bf16.gmra.mxu0 %v5155
        %v5256 = vpop.f32.mrf.mxu0
        %v5257 = vadd.f32 %v5116, %v5256
        %v5258 = vpop.f32.mrf.mxu0
        %v5259 = vpop.f32.mrf.mxu0
        %v5260 = vadd.f32 %v5116, %v5259
        %v5261 = vpop.f32.mrf.mxu0
        %5262 = vmatprep.mubr.bf16.mxu0 0
        %5263 = vmatmul.mubr.bf16.gmra.mxu0 %v5158
        %v5264 = vpop.f32.mrf.mxu0
        %v5265 = vadd.f32 %v5116, %v5264
        %v5266 = vpop.f32.mrf.mxu0
        %v5267 = vpop.f32.mrf.mxu0
        %v5268 = vadd.f32 %v5116, %v5267
        %v5269 = vpop.f32.mrf.mxu0
        %5270 = vmatprep.mubr.bf16.mxu0 0
        %5271 = vmatmul.mubr.bf16.gmra.mxu0 %v5161
        %v5272 = vpop.f32.mrf.mxu0
        %v5273 = vadd.f32 %v5116, %v5272
        %v5274 = vpop.f32.mrf.mxu0
        %v5275 = vpop.f32.mrf.mxu0
        %v5276 = vadd.f32 %v5116, %v5275
        %v5277 = vpop.f32.mrf.mxu0
        %5278 = vmatprep.mubr.bf16.mxu0 0
        %5279 = vmatmul.mubr.bf16.gmra.mxu0 %v5164
        %v5280 = vpop.f32.mrf.mxu0
        %v5281 = vadd.f32 %v5116, %v5280
        %v5282 = vpop.f32.mrf.mxu0
        %v5283 = vpop.f32.mrf.mxu0
        %v5284 = vadd.f32 %v5116, %v5283
        %v5285 = vpop.f32.mrf.mxu0
        %5286 = vmatprep.mubr.bf16.mxu0 0
        %5287 = vmatmul.mubr.bf16.gmra.mxu0 %v5167
        %v5288 = vpop.f32.mrf.mxu0
        %v5289 = vadd.f32 %v5116, %v5288
        %v5290 = vpop.f32.mrf.mxu0
        %v5291 = vpop.f32.mrf.mxu0
        %v5292 = vadd.f32 %v5116, %v5291
        %v5293 = vpop.f32.mrf.mxu0
        %5294 = vmatprep.mubr.bf16.mxu0 0
        %5295 = vmatmul.mubr.bf16.gmra.mxu0 %v5170
        %v5296 = vpop.f32.mrf.mxu0
        %v5297 = vadd.f32 %v5116, %v5296
        %v5298 = vpop.f32.mrf.mxu0
        %v5299 = vpop.f32.mrf.mxu0
        %v5300 = vadd.f32 %v5116, %v5299
        %v5301 = vpop.f32.mrf.mxu0
        %5302 = vmatprep.mubr.bf16.mxu0 0
        %5303 = vmatmul.mubr.bf16.gmra.mxu0 %v5173
        %v5304 = vpop.f32.mrf.mxu0
        %v5305 = vadd.f32 %v5116, %v5304
        %v5306 = vpop.f32.mrf.mxu0
        %v5307 = vpop.f32.mrf.mxu0
        %v5308 = vadd.f32 %v5116, %v5307
        %v5309 = vpop.f32.mrf.mxu0
        %5310 = vmatprep.mubr.bf16.mxu0 0
        %5311 = vmatmul.mubr.bf16.gmra.mxu0 %v5176
        %v5312 = vpop.f32.mrf.mxu0
        %v5313 = vadd.f32 %v5116, %v5312
        %v5314 = vpop.f32.mrf.mxu0
        %v5315 = vpop.f32.mrf.mxu0
        %v5316 = vadd.f32 %v5116, %v5315
        %v5317 = vpop.f32.mrf.mxu0
        %5318 = vmatprep.mubr.bf16.mxu0 0
        %5319 = vmatmul.mubr.bf16.gmra.mxu0 %v5179
        %v5320 = vpop.f32.mrf.mxu0
        %v5321 = vadd.f32 %v5116, %v5320
        %v5322 = vpop.f32.mrf.mxu0
        %v5323 = vpop.f32.mrf.mxu0
        %v5324 = vadd.f32 %v5116, %v5323
        %v5325 = vpop.f32.mrf.mxu0
        %5326 = vmatprep.mubr.bf16.mxu0 0
        %5327 = vmatmul.mubr.bf16.gmra.mxu0 %v5182
        %v5328 = vpop.f32.mrf.mxu0
        %v5329 = vadd.f32 %v5116, %v5328
        %v5330 = vpop.f32.mrf.mxu0
        %v5331 = vpop.f32.mrf.mxu0
        %v5332 = vadd.f32 %v5116, %v5331
        %v5333 = vpop.f32.mrf.mxu0
        %5334 = vmatprep.mubr.bf16.mxu0 0
        %5335 = vmatmul.mubr.bf16.gmra.mxu0 %v5185
        %v5336 = vpop.f32.mrf.mxu0
        %v5337 = vadd.f32 %v5116, %v5336
        %v5338 = vpop.f32.mrf.mxu0
        %v5339 = vpop.f32.mrf.mxu0
        %v5340 = vadd.f32 %v5116, %v5339
        %v5341 = vpop.f32.mrf.mxu0
        %5342 = vmatprep.mubr.bf16.mxu0 0
        %5343 = vmatmul.mubr.bf16.gmra.mxu0 %v5188
        %v5344 = vpop.f32.mrf.mxu0
        %v5345 = vadd.f32 %v5116, %v5344
        %v5346 = vpop.f32.mrf.mxu0
        %v5347 = vpop.f32.mrf.mxu0
        %v5348 = vadd.f32 %v5116, %v5347
        %v5349 = vpop.f32.mrf.mxu0
        %5350 = vdwg.mxu0
        %5351 = vst [vmem:[%s274] sm:$0xff] %v5225
        %5352 = vst [vmem:[%s274 + $0x8] sm:$0xff] %v5228
        %5353 = vst [vmem:[%s274 + $0x10] sm:$0xff] %v5233
        %5354 = vst [vmem:[%s274 + $0x18] sm:$0xff] %v5236
        %5355 = vst [vmem:[%s274 + $0x20] sm:$0xff] %v5241
        %5356 = vst [vmem:[%s274 + $0x28] sm:$0xff] %v5244
        %5357 = vst [vmem:[%s274 + $0x30] sm:$0xff] %v5249
        %5358 = vst [vmem:[%s274 + $0x38] sm:$0xff] %v5252
        %5359 = vst [vmem:[%s274 + $0x40] sm:$0xff] %v5257
        %5360 = vst [vmem:[%s274 + $0x48] sm:$0xff] %v5260
        %5361 = vst [vmem:[%s274 + $0x50] sm:$0xff] %v5265
        %5362 = vst [vmem:[%s274 + $0x58] sm:$0xff] %v5268
        %5363 = vst [vmem:[%s274 + $0x60] sm:$0xff] %v5273
        %5364 = vst [vmem:[%s274 + $0x68] sm:$0xff] %v5276
        %5365 = vst [vmem:[%s274 + $0x70] sm:$0xff] %v5281
        %5366 = vst [vmem:[%s274 + $0x78] sm:$0xff] %v5284
        %5367 = vst [vmem:[%s274 + $0x80] sm:$0xff] %v5289
        %5368 = vst [vmem:[%s274 + $0x88] sm:$0xff] %v5292
        %5369 = vst [vmem:[%s274 + $0x90] sm:$0xff] %v5297
        %5370 = vst [vmem:[%s274 + $0x98] sm:$0xff] %v5300
        %5371 = vst [vmem:[%s274 + $0xa0] sm:$0xff] %v5305
        %5372 = vst [vmem:[%s274 + $0xa8] sm:$0xff] %v5308
        %5373 = vst [vmem:[%s274 + $0xb0] sm:$0xff] %v5313
        %5374 = vst [vmem:[%s274 + $0xb8] sm:$0xff] %v5316
        %5375 = vst [vmem:[%s274 + $0xc0] sm:$0xff] %v5321
        %5376 = vst [vmem:[%s274 + $0xc8] sm:$0xff] %v5324
        %5377 = vst [vmem:[%s274 + $0xd0] sm:$0xff] %v5329
        %5378 = vst [vmem:[%s274 + $0xd8] sm:$0xff] %v5332
        %5379 = vst [vmem:[%s274 + $0xe0] sm:$0xff] %v5337
        %5380 = vst [vmem:[%s274 + $0xe8] sm:$0xff] %v5340
        %5381 = vst [vmem:[%s274 + $0xf0] sm:$0xff] %v5345
        %5382 = vst [vmem:[%s274 + $0xf8] sm:$0xff] %v5348
        %s5383 = sand.u32 %s181, 1
        %s5384 = scalar_lea.sflag [#allocation3], %s5383
        %s5385 = sand.u32 %s181, 1
        %s5386 = smul.addr %s5385, 256
        %s5387 = scalar_lea.vmem [#allocation2], %s5386
        // Predicated region
        $region49: #{graphsaint_forward.3} parent=47 // pred_check
          %p5388 = pneg %p191
        $region50: #{graphsaint_forward.3} parent=47 // pred_check_branch
          %5390 = sbr.rel (%p5388) target = $region52
        $region51: #{graphsaint_forward.3} parent=47 // pred_region
          %s5391 = smul.u32 32, %s21
          %s5393 = ssub.s32 4096, 4096
          %5394 = vsyncadd %s5384, %s5393
          %s5395 = smul.addr %s5391, 128
          %s5396 = scalar_lea.hbm %s7, %s5395
          %s5397 = sshll.u32 %s5387, 4
          %s5398 = int_to_ptr.vmem [resolvable:$true] %s5397
          %5403 = dma.vmem_to_hbm [thread:$0]  %s5398, 4096, %s5396, %s5384, 128, 128, 8
        $region52: #{graphsaint_forward.3} parent=47 // pred_fallthru
          _
      $region48: #{graphsaint_forward.3} parent=5 // pred_fallthru
        _
      %p5404 = scmp.le.s32.totalorder 2, %s16
      // Predicated region
      $region53: #{graphsaint_forward.3} parent=5 // pred_check
        %p5405 = pneg %p5404
      $region54: #{graphsaint_forward.3} parent=5 // pred_check_branch
        %5407 = sbr.rel (%p5405) target = $region56
      $region55: #{graphsaint_forward.3} parent=5 // pred_region
        %s5408 = ssub.s32 %s16, 2
        // Predicated region
        $region57: #{graphsaint_forward.3} parent=55 // pred_check
          %p5409 = pneg %p197
        $region58: #{graphsaint_forward.3} parent=55 // pred_check_branch
          %5411 = sbr.rel (%p5409) target = $region60
        $region59: #{graphsaint_forward.3} parent=55 // pred_region
          %s5412 = sand.u32 %s182, 1
          %s5413 = scalar_lea.sflag [#allocation3], %s5412
          %s5414 = sand.u32 %s182, 1
          %s5415 = smul.addr %s5414, 256
          %s5416 = scalar_lea.vmem [#allocation2], %s5415
          %5417 = dma.done %s5413, 4096
        $region60: #{graphsaint_forward.3} parent=55 // pred_fallthru
          _
      $region56: #{graphsaint_forward.3} parent=5 // pred_fallthru
        _
    $region6: #{graphsaint_forward.3} parent=1 // loop_footer
      %s20 = sadd.s32 1, %s16
    $region7: #{graphsaint_forward.3} parent=1 // loop_footer_branch
      %15 = sbr.rel target = $region3
    $region8: #{graphsaint_forward.3} parent=1 // loop_exit
      _
    %5418 = vsyncpa [#allocation3], 1
    %s5419 = scalar_lea.sflag [#allocation3], 1
    %5420 = vsyncpa %s5419, 1

</llo_original>
